<compile_context>
chip_gen: v5e
topology: v5e:2x2
jax: 0.10.0
libtpu: 0.0.40
codegen_flags: <defaults>
</compile_context>

<pallas_src>
import functools

import jax
import jax.numpy as jnp
from jax.experimental import pallas as pl
from jax.experimental.pallas import tpu as pltpu


# ---------------------------------------------------------------------------
# Fused conv3x3(pad=1) + bias + ReLU + 2x2 max-pool kernel (one image per step)
# ---------------------------------------------------------------------------
def _conv_relu_pool_kernel(x_ref, w_ref, b_ref, o_ref, s_ref, *, H, Wp, cin, cout):
    """
    x_ref : (1, (H+3)*Wp, cin)  flattened zero-padded image, rows enumerate (hp, wp)
    w_ref : (9, cout) if cin == 1 else (9, cin, cout), tap-major (kh, kw)
    b_ref : (1, cout)
    o_ref : (1, H//2, Wp, cout) pooled rows; valid columns are 0, 2, ..., W-2
    s_ref : (H*Wp + 8, cout) f32 VMEM scratch (conv rows + shift-guard rows)
    """
    L = H * Wp  # number of (extended) conv output rows

    # conv: 9 row-shifted contiguous slices of the padded image, accumulated.
    acc = jnp.zeros((L, cout), jnp.float32)
    for dh in range(3):
        for dw in range(3):
            t = dh * 3 + dw
            start = dh * Wp + dw
            xs = x_ref[0, start:start + L, :]                       # (L, cin)
            if cin == 1:
                acc += xs * w_ref[t:t + 1, :]                       # VPU broadcast
            else:
                acc += jnp.dot(xs, w_ref[t],
                               preferred_element_type=jnp.float32)  # MXU

    acc = jnp.maximum(acc + b_ref[...], 0.0)                        # bias + ReLU

    # 2x2/2 max-pool, fully vectorized:
    #   hmax[i] = max(A[i], A[i+1])   (horizontal max; row-boundary / padding
    #                                  columns only ever produce garbage in
    #                                  columns that are discarded later)
    #   out[ho]  = max(hmax[2*ho*Wp : ...], hmax[(2*ho+1)*Wp : ...])
    s_ref[0:L, :] = acc
    s_ref[L:L + 8, :] = jnp.zeros((8, cout), jnp.float32)           # shift guard rows
    hmax = jnp.maximum(s_ref[0:L, :], s_ref[1:L + 1, :])            # (L, cout)
    v = hmax.reshape(H // 2, 2 * Wp, cout)                          # group row pairs
    o_ref[0] = jnp.maximum(v[:, :Wp, :], v[:, Wp:, :])              # (H//2, Wp, cout)


def conv3x3_relu_pool(x_flat, w, b, *, H, Wp, cin, cout):
    """x_flat: (N, (H+3)*Wp, cin) flattened padded NHWC image rows."""
    N = x_flat.shape[0]
    Ho = H // 2
    kern = functools.partial(_conv_relu_pool_kernel, H=H, Wp=Wp, cin=cin, cout=cout)
    w_index_map = (lambda n: (0, 0)) if w.ndim == 2 else (lambda n: (0, 0, 0))
    return pl.pallas_call(
        kern,
        out_shape=jax.ShapeDtypeStruct((N, Ho, Wp, cout), jnp.float32),
        grid=(N,),
        in_specs=[
            pl.BlockSpec((1,) + tuple(x_flat.shape[1:]), lambda n: (n, 0, 0)),
            pl.BlockSpec(tuple(w.shape), w_index_map),
            pl.BlockSpec((1, cout), lambda n: (0, 0)),
        ],
        out_specs=pl.BlockSpec((1, Ho, Wp, cout), lambda n: (n, 0, 0, 0)),
        scratch_shapes=[pltpu.VMEM((H * Wp + 8, cout), jnp.float32)],
        compiler_params=pltpu.CompilerParams(dimension_semantics=("parallel",)),
    )(x_flat, w, b)


# ---------------------------------------------------------------------------
# Fused fc1 + ReLU + fc2 kernel (single block; batch is tiny)
# ---------------------------------------------------------------------------
def _mlp_kernel(x_ref, w1_ref, b1_ref, w2_ref, b2_ref, o_ref):
    h = jnp.dot(x_ref[...], w1_ref[...], preferred_element_type=jnp.float32)
    h = jnp.maximum(h + b1_ref[...], 0.0)
    o = jnp.dot(h, w2_ref[...], preferred_element_type=jnp.float32) + b2_ref[...]
    o_ref[...] = o.astype(o_ref.dtype)


def mlp_head(x, w1, b1, w2, b2):
    # Single-block head (weights ~1.6 MB, batch rows tiny). For large batches
    # this would be row-tiled with a grid, but that is unnecessary here.
    N, K = x.shape
    Hd = w1.shape[1]
    O = w2.shape[1]
    return pl.pallas_call(
        _mlp_kernel,
        out_shape=jax.ShapeDtypeStruct((N, O), jnp.float32),
        grid=(1,),
        in_specs=[
            pl.BlockSpec((N, K), lambda i: (0, 0)),
            pl.BlockSpec((K, Hd), lambda i: (0, 0)),
            pl.BlockSpec((1, Hd), lambda i: (0, 0)),
            pl.BlockSpec((Hd, O), lambda i: (0, 0)),
            pl.BlockSpec((1, O), lambda i: (0, 0)),
        ],
        out_specs=pl.BlockSpec((N, O), lambda i: (0, 0)),
        compiler_params=pltpu.CompilerParams(dimension_semantics=("arbitrary",)),
    )(x, w1, b1, w2, b2)


# ---------------------------------------------------------------------------
# Parameters (all layout work done once, here)
# ---------------------------------------------------------------------------
def init_params(key):
    ks = jax.random.split(key, 8)
    s = 0.05
    # PyTorch-native layouts
    w1 = jax.random.normal(ks[0], (32, 1, 3, 3), jnp.float32) * s
    b1 = jax.random.normal(ks[1], (32,), jnp.float32) * s
    w2 = jax.random.normal(ks[2], (64, 32, 3, 3), jnp.float32) * s
    b2 = jax.random.normal(ks[3], (64,), jnp.float32) * s
    wf1 = jax.random.normal(ks[4], (128, 64 * 7 * 7), jnp.float32) * s
    bf1 = jax.random.normal(ks[5], (128,), jnp.float32) * s
    wf2 = jax.random.normal(ks[6], (10, 128), jnp.float32) * s
    bf2 = jax.random.normal(ks[7], (10,), jnp.float32) * s
    return {
        # conv weights: tap-major (kh, kw), channels-last on lanes
        "w1": jnp.transpose(w1, (2, 3, 1, 0)).reshape(9, 32),          # (9, Cout)
        "b1": b1.reshape(1, 32),
        "w2": jnp.transpose(w2, (2, 3, 1, 0)).reshape(9, 32, 64),      # (9, Cin, Cout)
        "b2": b2.reshape(1, 64),
        # fc1 rows pre-permuted from PyTorch (c, h, w) flatten order to (h, w, c)
        "wf1": jnp.transpose(wf1.reshape(128, 64, 7, 7), (2, 3, 1, 0)).reshape(7 * 7 * 64, 128),
        "bf1": bf1.reshape(1, 128),
        "wf2": wf2.T,                                                  # (128, 10)
        "bf2": bf2.reshape(1, 10),
    }


# ---------------------------------------------------------------------------
# Forward pass
# ---------------------------------------------------------------------------
@jax.jit
def simple_cnn_forward(x_nchw, params):
    x = x_nchw.astype(jnp.float32)
    N = x.shape[0]
    H1, W1, Wp1 = 28, 28, 32   # conv1 spatial size, padded row width (mult of 8)
    H2, W2, Wp2 = 14, 14, 16   # conv2 spatial size, padded row width (mult of 8)

    # ---- conv1 (1 -> 32) + ReLU + 2x2 max-pool --------------------------------
    x0 = x[:, 0, :, :]                                               # (N, 28, 28)
    x0 = jnp.pad(x0, ((0, 0), (1, 2), (1, Wp1 - W1 - 1)))            # (N, 31, 32)
    x0 = x0.reshape(N, (H1 + 3) * Wp1, 1)
    y1 = conv3x3_relu_pool(x0, params["w1"], params["b1"],
                           H=H1, Wp=Wp1, cin=1, cout=32)             # (N, 14, 32, 32)
    p1 = y1[:, :, 0:W1:2, :]                                         # (N, 14, 14, 32)

    # ---- conv2 (32 -> 64) + ReLU + 2x2 max-pool -------------------------------
    x1 = jnp.pad(p1, ((0, 0), (1, 2), (1, Wp2 - W2 - 1), (0, 0)))    # (N, 17, 16, 32)
    x1 = x1.reshape(N, (H2 + 3) * Wp2, 32)
    y2 = conv3x3_relu_pool(x1, params["w2"], params["b2"],
                           H=H2, Wp=Wp2, cin=32, cout=64)            # (N, 7, 16, 64)
    p2 = y2[:, :, 0:W2:2, :]                                         # (N, 7, 7, 64)

    # ---- fc1 + ReLU + fc2 (single fused kernel) -------------------------------
    feat = p2.reshape(N, 7 * 7 * 64)      # (h, w, c) order; wf1 rows pre-permuted
    return mlp_head(feat, params["wf1"], params["bf1"],
                    params["wf2"], params["bf2"])


if __name__ == "__main__":
    key = jax.random.PRNGKey(0)
    k_x, k_p = jax.random.split(key)
    # 28x28 single-channel input is required by fc1's 64*7*7 flatten (MNIST-style).
    x = jax.random.normal(k_x, (2, 1, 28, 28), jnp.float32)
    params = init_params(k_p)

    logits = simple_cnn_forward(x, params)
    jax.block_until_ready(logits)
    assert logits.shape == (2, 10) and logits.dtype == jnp.float32
    print("KERNEL_OK")
</pallas_src>

<mosaic_0001>
module attributes {stable_mosaic.version = 11 : i64} {
  func.func @_conv_relu_pool_kernel(%arg0: i32, %arg1: memref<1x992x1xf32, #tpu.memory_space<vmem>>, %arg2: memref<9x32xf32, #tpu.memory_space<vmem>>, %arg3: memref<1x32xf32, #tpu.memory_space<vmem>>, %arg4: memref<1x14x32x32xf32, #tpu.memory_space<vmem>>, %arg5: memref<904x32xf32, #tpu.memory_space<vmem>>) attributes {dimension_semantics = [#tpu.dimension_semantics<parallel>], iteration_bounds = array<i64: 2>, scalar_prefetch = 0 : i64, scratch_operands = 1 : i64, tpu.core_type = #tpu.core_type<tc>, window_params = [{transform_indices = @transform_0, window_bounds = array<i64: 1, 992, 1>}, {pipeline_mode = #tpu.pipeline_mode<synchronous>, transform_indices = @transform_1, window_bounds = array<i64: 9, 32>}, {pipeline_mode = #tpu.pipeline_mode<synchronous>, transform_indices = @transform_2, window_bounds = array<i64: 1, 32>}, {transform_indices = @transform_3, window_bounds = array<i64: 1, 14, 32, 32>}]} {
    %cst = arith.constant 0.000000e+00 : f32
    %0 = vector.broadcast %cst : f32 to vector<896x32xf32>
    %c0 = arith.constant 0 : index
    %c0_0 = arith.constant 0 : index
    %c0_1 = arith.constant 0 : index
    %1 = vector.load %arg1[%c0, %c0_0, %c0_1] : memref<1x992x1xf32, #tpu.memory_space<vmem>>, vector<1x896x1xf32>
    %2 = vector.shape_cast %1 : vector<1x896x1xf32> to vector<896x1xf32>
    %c0_2 = arith.constant 0 : index
    %c0_3 = arith.constant 0 : index
    %3 = vector.load %arg2[%c0_2, %c0_3] : memref<9x32xf32, #tpu.memory_space<vmem>>, vector<1x32xf32>
    %4 = vector.broadcast %2 : vector<896x1xf32> to vector<896x32xf32>
    %5 = vector.broadcast %3 : vector<1x32xf32> to vector<896x32xf32>
    %6 = arith.mulf %4, %5 : vector<896x32xf32>
    %7 = arith.addf %0, %6 : vector<896x32xf32>
    %c0_4 = arith.constant 0 : index
    %c1 = arith.constant 1 : index
    %c0_5 = arith.constant 0 : index
    %8 = vector.load %arg1[%c0_4, %c1, %c0_5] : memref<1x992x1xf32, #tpu.memory_space<vmem>>, vector<1x896x1xf32>
    %9 = vector.shape_cast %8 : vector<1x896x1xf32> to vector<896x1xf32>
    %c1_6 = arith.constant 1 : index
    %c0_7 = arith.constant 0 : index
    %10 = vector.load %arg2[%c1_6, %c0_7] : memref<9x32xf32, #tpu.memory_space<vmem>>, vector<1x32xf32>
    %11 = vector.broadcast %9 : vector<896x1xf32> to vector<896x32xf32>
    %12 = vector.broadcast %10 : vector<1x32xf32> to vector<896x32xf32>
    %13 = arith.mulf %11, %12 : vector<896x32xf32>
    %14 = arith.addf %7, %13 : vector<896x32xf32>
    %c0_8 = arith.constant 0 : index
    %c2 = arith.constant 2 : index
    %c0_9 = arith.constant 0 : index
    %15 = vector.load %arg1[%c0_8, %c2, %c0_9] : memref<1x992x1xf32, #tpu.memory_space<vmem>>, vector<1x896x1xf32>
    %16 = vector.shape_cast %15 : vector<1x896x1xf32> to vector<896x1xf32>
    %c2_10 = arith.constant 2 : index
    %c0_11 = arith.constant 0 : index
    %17 = vector.load %arg2[%c2_10, %c0_11] : memref<9x32xf32, #tpu.memory_space<vmem>>, vector<1x32xf32>
    %18 = vector.broadcast %16 : vector<896x1xf32> to vector<896x32xf32>
    %19 = vector.broadcast %17 : vector<1x32xf32> to vector<896x32xf32>
    %20 = arith.mulf %18, %19 : vector<896x32xf32>
    %21 = arith.addf %14, %20 : vector<896x32xf32>
    %c0_12 = arith.constant 0 : index
    %c32 = arith.constant 32 : index
    %c0_13 = arith.constant 0 : index
    %22 = vector.load %arg1[%c0_12, %c32, %c0_13] : memref<1x992x1xf32, #tpu.memory_space<vmem>>, vector<1x896x1xf32>
    %23 = vector.shape_cast %22 : vector<1x896x1xf32> to vector<896x1xf32>
    %c3 = arith.constant 3 : index
    %c0_14 = arith.constant 0 : index
    %24 = vector.load %arg2[%c3, %c0_14] : memref<9x32xf32, #tpu.memory_space<vmem>>, vector<1x32xf32>
    %25 = vector.broadcast %23 : vector<896x1xf32> to vector<896x32xf32>
    %26 = vector.broadcast %24 : vector<1x32xf32> to vector<896x32xf32>
    %27 = arith.mulf %25, %26 : vector<896x32xf32>
    %28 = arith.addf %21, %27 : vector<896x32xf32>
    %c0_15 = arith.constant 0 : index
    %c33 = arith.constant 33 : index
    %c0_16 = arith.constant 0 : index
    %29 = vector.load %arg1[%c0_15, %c33, %c0_16] : memref<1x992x1xf32, #tpu.memory_space<vmem>>, vector<1x896x1xf32>
    %30 = vector.shape_cast %29 : vector<1x896x1xf32> to vector<896x1xf32>
    %c4 = arith.constant 4 : index
    %c0_17 = arith.constant 0 : index
    %31 = vector.load %arg2[%c4, %c0_17] : memref<9x32xf32, #tpu.memory_space<vmem>>, vector<1x32xf32>
    %32 = vector.broadcast %30 : vector<896x1xf32> to vector<896x32xf32>
    %33 = vector.broadcast %31 : vector<1x32xf32> to vector<896x32xf32>
    %34 = arith.mulf %32, %33 : vector<896x32xf32>
    %35 = arith.addf %28, %34 : vector<896x32xf32>
    %c0_18 = arith.constant 0 : index
    %c34 = arith.constant 34 : index
    %c0_19 = arith.constant 0 : index
    %36 = vector.load %arg1[%c0_18, %c34, %c0_19] : memref<1x992x1xf32, #tpu.memory_space<vmem>>, vector<1x896x1xf32>
    %37 = vector.shape_cast %36 : vector<1x896x1xf32> to vector<896x1xf32>
    %c5 = arith.constant 5 : index
    %c0_20 = arith.constant 0 : index
    %38 = vector.load %arg2[%c5, %c0_20] : memref<9x32xf32, #tpu.memory_space<vmem>>, vector<1x32xf32>
    %39 = vector.broadcast %37 : vector<896x1xf32> to vector<896x32xf32>
    %40 = vector.broadcast %38 : vector<1x32xf32> to vector<896x32xf32>
    %41 = arith.mulf %39, %40 : vector<896x32xf32>
    %42 = arith.addf %35, %41 : vector<896x32xf32>
    %c0_21 = arith.constant 0 : index
    %c64 = arith.constant 64 : index
    %c0_22 = arith.constant 0 : index
    %43 = vector.load %arg1[%c0_21, %c64, %c0_22] : memref<1x992x1xf32, #tpu.memory_space<vmem>>, vector<1x896x1xf32>
    %44 = vector.shape_cast %43 : vector<1x896x1xf32> to vector<896x1xf32>
    %c6 = arith.constant 6 : index
    %c0_23 = arith.constant 0 : index
    %45 = vector.load %arg2[%c6, %c0_23] : memref<9x32xf32, #tpu.memory_space<vmem>>, vector<1x32xf32>
    %46 = vector.broadcast %44 : vector<896x1xf32> to vector<896x32xf32>
    %47 = vector.broadcast %45 : vector<1x32xf32> to vector<896x32xf32>
    %48 = arith.mulf %46, %47 : vector<896x32xf32>
    %49 = arith.addf %42, %48 : vector<896x32xf32>
    %c0_24 = arith.constant 0 : index
    %c65 = arith.constant 65 : index
    %c0_25 = arith.constant 0 : index
    %50 = vector.load %arg1[%c0_24, %c65, %c0_25] : memref<1x992x1xf32, #tpu.memory_space<vmem>>, vector<1x896x1xf32>
    %51 = vector.shape_cast %50 : vector<1x896x1xf32> to vector<896x1xf32>
    %c7 = arith.constant 7 : index
    %c0_26 = arith.constant 0 : index
    %52 = vector.load %arg2[%c7, %c0_26] : memref<9x32xf32, #tpu.memory_space<vmem>>, vector<1x32xf32>
    %53 = vector.broadcast %51 : vector<896x1xf32> to vector<896x32xf32>
    %54 = vector.broadcast %52 : vector<1x32xf32> to vector<896x32xf32>
    %55 = arith.mulf %53, %54 : vector<896x32xf32>
    %56 = arith.addf %49, %55 : vector<896x32xf32>
    %c0_27 = arith.constant 0 : index
    %c66 = arith.constant 66 : index
    %c0_28 = arith.constant 0 : index
    %57 = vector.load %arg1[%c0_27, %c66, %c0_28] : memref<1x992x1xf32, #tpu.memory_space<vmem>>, vector<1x896x1xf32>
    %58 = vector.shape_cast %57 : vector<1x896x1xf32> to vector<896x1xf32>
    %c8 = arith.constant 8 : index
    %c0_29 = arith.constant 0 : index
    %59 = vector.load %arg2[%c8, %c0_29] : memref<9x32xf32, #tpu.memory_space<vmem>>, vector<1x32xf32>
    %60 = vector.broadcast %58 : vector<896x1xf32> to vector<896x32xf32>
    %61 = vector.broadcast %59 : vector<1x32xf32> to vector<896x32xf32>
    %62 = arith.mulf %60, %61 : vector<896x32xf32>
    %63 = arith.addf %56, %62 : vector<896x32xf32>
    %c0_30 = arith.constant 0 : index
    %c0_31 = arith.constant 0 : index
    %64 = vector.load %arg3[%c0_30, %c0_31] : memref<1x32xf32, #tpu.memory_space<vmem>>, vector<1x32xf32>
    %65 = vector.broadcast %64 : vector<1x32xf32> to vector<896x32xf32>
    %66 = arith.addf %63, %65 : vector<896x32xf32>
    %cst_32 = arith.constant 0.000000e+00 : f32
    %67 = vector.broadcast %cst_32 : f32 to vector<896x32xf32>
    %68 = arith.maximumf %66, %67 : vector<896x32xf32>
    %c0_33 = arith.constant 0 : index
    %c0_34 = arith.constant 0 : index
    %69 = vector.load %arg5[%c0_33, %c0_34] : memref<904x32xf32, #tpu.memory_space<vmem>>, vector<896x32xf32>
    tpu.vector_store %arg5[%c0_33, %c0_34], %68 {strides = array<i32>} : memref<904x32xf32, #tpu.memory_space<vmem>>, vector<896x32xf32>,
    %cst_35 = arith.constant 0.000000e+00 : f32
    %70 = vector.broadcast %cst_35 : f32 to vector<8x32xf32>
    %c896 = arith.constant 896 : index
    %c0_36 = arith.constant 0 : index
    %71 = vector.load %arg5[%c896, %c0_36] : memref<904x32xf32, #tpu.memory_space<vmem>>, vector<8x32xf32>
    tpu.vector_store %arg5[%c896, %c0_36], %70 {strides = array<i32>} : memref<904x32xf32, #tpu.memory_space<vmem>>, vector<8x32xf32>,
    %c0_37 = arith.constant 0 : index
    %c0_38 = arith.constant 0 : index
    %72 = vector.load %arg5[%c0_37, %c0_38] : memref<904x32xf32, #tpu.memory_space<vmem>>, vector<896x32xf32>
    %c1_39 = arith.constant 1 : index
    %c0_40 = arith.constant 0 : index
    %73 = vector.load %arg5[%c1_39, %c0_40] : memref<904x32xf32, #tpu.memory_space<vmem>>, vector<896x32xf32>
    %74 = arith.maximumf %72, %73 : vector<896x32xf32>
    %75 = vector.shape_cast %74 : vector<896x32xf32> to vector<14x64x32xf32>
    %76 = vector.extract_strided_slice %75 {offsets = [0, 0, 0], sizes = [14, 32, 32], strides = [1, 1, 1]} : vector<14x64x32xf32> to vector<14x32x32xf32>
    %77 = vector.extract_strided_slice %75 {offsets = [0, 32, 0], sizes = [14, 32, 32], strides = [1, 1, 1]} : vector<14x64x32xf32> to vector<14x32x32xf32>
    %78 = arith.maximumf %76, %77 : vector<14x32x32xf32>
    %c0_41 = arith.constant 0 : index
    %c0_42 = arith.constant 0 : index
    %c0_43 = arith.constant 0 : index
    %c0_44 = arith.constant 0 : index
    %79 = vector.load %arg4[%c0_41, %c0_42, %c0_43, %c0_44] : memref<1x14x32x32xf32, #tpu.memory_space<vmem>>, vector<1x14x32x32xf32>
    %80 = vector.shape_cast %79 : vector<1x14x32x32xf32> to vector<14x32x32xf32>
    %81 = vector.shape_cast %78 : vector<14x32x32xf32> to vector<1x14x32x32xf32>
    tpu.vector_store %arg4[%c0_41, %c0_42, %c0_43, %c0_44], %81 {strides = array<i32>} : memref<1x14x32x32xf32, #tpu.memory_space<vmem>>, vector<1x14x32x32xf32>,
    return
  }
  func.func @transform_0(%arg0: i32) -> (i32, i32, i32) {
    %c0_i32 = arith.constant 0 : i32
    %c0_i32_0 = arith.constant 0 : i32
    %c0_i32_1 = arith.constant 0 : i32
    return %arg0, %c0_i32, %c0_i32_0 : i32, i32, i32
  }
  func.func @transform_1(%arg0: i32) -> (i32, i32) {
    %c0_i32 = arith.constant 0 : i32
    %c0_i32_0 = arith.constant 0 : i32
    %c0_i32_1 = arith.constant 0 : i32
    return %c0_i32, %c0_i32_0 : i32, i32
  }
  func.func @transform_2(%arg0: i32) -> (i32, i32) {
    %c0_i32 = arith.constant 0 : i32
    %c0_i32_0 = arith.constant 0 : i32
    %c0_i32_1 = arith.constant 0 : i32
    return %c0_i32, %c0_i32_0 : i32, i32
  }
  func.func @transform_3(%arg0: i32) -> (i32, i32, i32, i32) {
    %c0_i32 = arith.constant 0 : i32
    %c0_i32_0 = arith.constant 0 : i32
    %c0_i32_1 = arith.constant 0 : i32
    %c0_i32_2 = arith.constant 0 : i32
    return %arg0, %c0_i32, %c0_i32_0, %c0_i32_1 : i32, i32, i32, i32
  }
}

module attributes {stable_mosaic.version = 11 : i64} {
  func.func @_conv_relu_pool_kernel(%arg0: i32, %arg1: memref<1x272x32xf32, #tpu.memory_space<vmem>>, %arg2: memref<9x32x64xf32, #tpu.memory_space<vmem>>, %arg3: memref<1x64xf32, #tpu.memory_space<vmem>>, %arg4: memref<1x7x16x64xf32, #tpu.memory_space<vmem>>, %arg5: memref<232x64xf32, #tpu.memory_space<vmem>>) attributes {dimension_semantics = [#tpu.dimension_semantics<parallel>], iteration_bounds = array<i64: 2>, scalar_prefetch = 0 : i64, scratch_operands = 1 : i64, tpu.core_type = #tpu.core_type<tc>, window_params = [{transform_indices = @transform_0, window_bounds = array<i64: 1, 272, 32>}, {pipeline_mode = #tpu.pipeline_mode<synchronous>, transform_indices = @transform_1, window_bounds = array<i64: 9, 32, 64>}, {pipeline_mode = #tpu.pipeline_mode<synchronous>, transform_indices = @transform_2, window_bounds = array<i64: 1, 64>}, {transform_indices = @transform_3, window_bounds = array<i64: 1, 7, 16, 64>}]} {
    %cst = arith.constant 0.000000e+00 : f32
    %0 = vector.broadcast %cst : f32 to vector<224x64xf32>
    %c0 = arith.constant 0 : index
    %c0_0 = arith.constant 0 : index
    %c0_1 = arith.constant 0 : index
    %1 = vector.load %arg1[%c0, %c0_0, %c0_1] : memref<1x272x32xf32, #tpu.memory_space<vmem>>, vector<1x224x32xf32>
    %2 = vector.shape_cast %1 : vector<1x224x32xf32> to vector<224x32xf32>
    %c0_2 = arith.constant 0 : index
    %c0_3 = arith.constant 0 : index
    %c0_4 = arith.constant 0 : index
    %3 = vector.load %arg2[%c0_2, %c0_3, %c0_4] : memref<9x32x64xf32, #tpu.memory_space<vmem>>, vector<1x32x64xf32>
    %4 = vector.shape_cast %3 : vector<1x32x64xf32> to vector<32x64xf32>
    %cst_5 = arith.constant dense<0.000000e+00> : vector<224x64xf32>
    %5 = tpu.matmul %2, %4, %cst_5 {dimension_numbers = #tpu.dot_dimension_numbers<[1], [0], [0], [1], [0, 0, 1, 1], [], []>} : vector<224x32xf32>, vector<32x64xf32>, vector<224x64xf32> -> vector<224x64xf32>
    %6 = arith.addf %0, %5 : vector<224x64xf32>
    %c0_6 = arith.constant 0 : index
    %c1 = arith.constant 1 : index
    %c0_7 = arith.constant 0 : index
    %7 = vector.load %arg1[%c0_6, %c1, %c0_7] : memref<1x272x32xf32, #tpu.memory_space<vmem>>, vector<1x224x32xf32>
    %8 = vector.shape_cast %7 : vector<1x224x32xf32> to vector<224x32xf32>
    %c1_8 = arith.constant 1 : index
    %c0_9 = arith.constant 0 : index
    %c0_10 = arith.constant 0 : index
    %9 = vector.load %arg2[%c1_8, %c0_9, %c0_10] : memref<9x32x64xf32, #tpu.memory_space<vmem>>, vector<1x32x64xf32>
    %10 = vector.shape_cast %9 : vector<1x32x64xf32> to vector<32x64xf32>
    %cst_11 = arith.constant dense<0.000000e+00> : vector<224x64xf32>
    %11 = tpu.matmul %8, %10, %cst_11 {dimension_numbers = #tpu.dot_dimension_numbers<[1], [0], [0], [1], [0, 0, 1, 1], [], []>} : vector<224x32xf32>, vector<32x64xf32>, vector<224x64xf32> -> vector<224x64xf32>
    %12 = arith.addf %6, %11 : vector<224x64xf32>
    %c0_12 = arith.constant 0 : index
    %c2 = arith.constant 2 : index
    %c0_13 = arith.constant 0 : index
    %13 = vector.load %arg1[%c0_12, %c2, %c0_13] : memref<1x272x32xf32, #tpu.memory_space<vmem>>, vector<1x224x32xf32>
    %14 = vector.shape_cast %13 : vector<1x224x32xf32> to vector<224x32xf32>
    %c2_14 = arith.constant 2 : index
    %c0_15 = arith.constant 0 : index
    %c0_16 = arith.constant 0 : index
    %15 = vector.load %arg2[%c2_14, %c0_15, %c0_16] : memref<9x32x64xf32, #tpu.memory_space<vmem>>, vector<1x32x64xf32>
    %16 = vector.shape_cast %15 : vector<1x32x64xf32> to vector<32x64xf32>
    %cst_17 = arith.constant dense<0.000000e+00> : vector<224x64xf32>
    %17 = tpu.matmul %14, %16, %cst_17 {dimension_numbers = #tpu.dot_dimension_numbers<[1], [0], [0], [1], [0, 0, 1, 1], [], []>} : vector<224x32xf32>, vector<32x64xf32>, vector<224x64xf32> -> vector<224x64xf32>
    %18 = arith.addf %12, %17 : vector<224x64xf32>
    %c0_18 = arith.constant 0 : index
    %c16 = arith.constant 16 : index
    %c0_19 = arith.constant 0 : index
    %19 = vector.load %arg1[%c0_18, %c16, %c0_19] : memref<1x272x32xf32, #tpu.memory_space<vmem>>, vector<1x224x32xf32>
    %20 = vector.shape_cast %19 : vector<1x224x32xf32> to vector<224x32xf32>
    %c3 = arith.constant 3 : index
    %c0_20 = arith.constant 0 : index
    %c0_21 = arith.constant 0 : index
    %21 = vector.load %arg2[%c3, %c0_20, %c0_21] : memref<9x32x64xf32, #tpu.memory_space<vmem>>, vector<1x32x64xf32>
    %22 = vector.shape_cast %21 : vector<1x32x64xf32> to vector<32x64xf32>
    %cst_22 = arith.constant dense<0.000000e+00> : vector<224x64xf32>
    %23 = tpu.matmul %20, %22, %cst_22 {dimension_numbers = #tpu.dot_dimension_numbers<[1], [0], [0], [1], [0, 0, 1, 1], [], []>} : vector<224x32xf32>, vector<32x64xf32>, vector<224x64xf32> -> vector<224x64xf32>
    %24 = arith.addf %18, %23 : vector<224x64xf32>
    %c0_23 = arith.constant 0 : index
    %c17 = arith.constant 17 : index
    %c0_24 = arith.constant 0 : index
    %25 = vector.load %arg1[%c0_23, %c17, %c0_24] : memref<1x272x32xf32, #tpu.memory_space<vmem>>, vector<1x224x32xf32>
    %26 = vector.shape_cast %25 : vector<1x224x32xf32> to vector<224x32xf32>
    %c4 = arith.constant 4 : index
    %c0_25 = arith.constant 0 : index
    %c0_26 = arith.constant 0 : index
    %27 = vector.load %arg2[%c4, %c0_25, %c0_26] : memref<9x32x64xf32, #tpu.memory_space<vmem>>, vector<1x32x64xf32>
    %28 = vector.shape_cast %27 : vector<1x32x64xf32> to vector<32x64xf32>
    %cst_27 = arith.constant dense<0.000000e+00> : vector<224x64xf32>
    %29 = tpu.matmul %26, %28, %cst_27 {dimension_numbers = #tpu.dot_dimension_numbers<[1], [0], [0], [1], [0, 0, 1, 1], [], []>} : vector<224x32xf32>, vector<32x64xf32>, vector<224x64xf32> -> vector<224x64xf32>
    %30 = arith.addf %24, %29 : vector<224x64xf32>
    %c0_28 = arith.constant 0 : index
    %c18 = arith.constant 18 : index
    %c0_29 = arith.constant 0 : index
    %31 = vector.load %arg1[%c0_28, %c18, %c0_29] : memref<1x272x32xf32, #tpu.memory_space<vmem>>, vector<1x224x32xf32>
    %32 = vector.shape_cast %31 : vector<1x224x32xf32> to vector<224x32xf32>
    %c5 = arith.constant 5 : index
    %c0_30 = arith.constant 0 : index
    %c0_31 = arith.constant 0 : index
    %33 = vector.load %arg2[%c5, %c0_30, %c0_31] : memref<9x32x64xf32, #tpu.memory_space<vmem>>, vector<1x32x64xf32>
    %34 = vector.shape_cast %33 : vector<1x32x64xf32> to vector<32x64xf32>
    %cst_32 = arith.constant dense<0.000000e+00> : vector<224x64xf32>
    %35 = tpu.matmul %32, %34, %cst_32 {dimension_numbers = #tpu.dot_dimension_numbers<[1], [0], [0], [1], [0, 0, 1, 1], [], []>} : vector<224x32xf32>, vector<32x64xf32>, vector<224x64xf32> -> vector<224x64xf32>
    %36 = arith.addf %30, %35 : vector<224x64xf32>
    %c0_33 = arith.constant 0 : index
    %c32 = arith.constant 32 : index
    %c0_34 = arith.constant 0 : index
    %37 = vector.load %arg1[%c0_33, %c32, %c0_34] : memref<1x272x32xf32, #tpu.memory_space<vmem>>, vector<1x224x32xf32>
    %38 = vector.shape_cast %37 : vector<1x224x32xf32> to vector<224x32xf32>
    %c6 = arith.constant 6 : index
    %c0_35 = arith.constant 0 : index
    %c0_36 = arith.constant 0 : index
    %39 = vector.load %arg2[%c6, %c0_35, %c0_36] : memref<9x32x64xf32, #tpu.memory_space<vmem>>, vector<1x32x64xf32>
    %40 = vector.shape_cast %39 : vector<1x32x64xf32> to vector<32x64xf32>
    %cst_37 = arith.constant dense<0.000000e+00> : vector<224x64xf32>
    %41 = tpu.matmul %38, %40, %cst_37 {dimension_numbers = #tpu.dot_dimension_numbers<[1], [0], [0], [1], [0, 0, 1, 1], [], []>} : vector<224x32xf32>, vector<32x64xf32>, vector<224x64xf32> -> vector<224x64xf32>
    %42 = arith.addf %36, %41 : vector<224x64xf32>
    %c0_38 = arith.constant 0 : index
    %c33 = arith.constant 33 : index
    %c0_39 = arith.constant 0 : index
    %43 = vector.load %arg1[%c0_38, %c33, %c0_39] : memref<1x272x32xf32, #tpu.memory_space<vmem>>, vector<1x224x32xf32>
    %44 = vector.shape_cast %43 : vector<1x224x32xf32> to vector<224x32xf32>
    %c7 = arith.constant 7 : index
    %c0_40 = arith.constant 0 : index
    %c0_41 = arith.constant 0 : index
    %45 = vector.load %arg2[%c7, %c0_40, %c0_41] : memref<9x32x64xf32, #tpu.memory_space<vmem>>, vector<1x32x64xf32>
    %46 = vector.shape_cast %45 : vector<1x32x64xf32> to vector<32x64xf32>
    %cst_42 = arith.constant dense<0.000000e+00> : vector<224x64xf32>
    %47 = tpu.matmul %44, %46, %cst_42 {dimension_numbers = #tpu.dot_dimension_numbers<[1], [0], [0], [1], [0, 0, 1, 1], [], []>} : vector<224x32xf32>, vector<32x64xf32>, vector<224x64xf32> -> vector<224x64xf32>
    %48 = arith.addf %42, %47 : vector<224x64xf32>
    %c0_43 = arith.constant 0 : index
    %c34 = arith.constant 34 : index
    %c0_44 = arith.constant 0 : index
    %49 = vector.load %arg1[%c0_43, %c34, %c0_44] : memref<1x272x32xf32, #tpu.memory_space<vmem>>, vector<1x224x32xf32>
    %50 = vector.shape_cast %49 : vector<1x224x32xf32> to vector<224x32xf32>
    %c8 = arith.constant 8 : index
    %c0_45 = arith.constant 0 : index
    %c0_46 = arith.constant 0 : index
    %51 = vector.load %arg2[%c8, %c0_45, %c0_46] : memref<9x32x64xf32, #tpu.memory_space<vmem>>, vector<1x32x64xf32>
    %52 = vector.shape_cast %51 : vector<1x32x64xf32> to vector<32x64xf32>
    %cst_47 = arith.constant dense<0.000000e+00> : vector<224x64xf32>
    %53 = tpu.matmul %50, %52, %cst_47 {dimension_numbers = #tpu.dot_dimension_numbers<[1], [0], [0], [1], [0, 0, 1, 1], [], []>} : vector<224x32xf32>, vector<32x64xf32>, vector<224x64xf32> -> vector<224x64xf32>
    %54 = arith.addf %48, %53 : vector<224x64xf32>
    %c0_48 = arith.constant 0 : index
    %c0_49 = arith.constant 0 : index
    %55 = vector.load %arg3[%c0_48, %c0_49] : memref<1x64xf32, #tpu.memory_space<vmem>>, vector<1x64xf32>
    %56 = vector.broadcast %55 : vector<1x64xf32> to vector<224x64xf32>
    %57 = arith.addf %54, %56 : vector<224x64xf32>
    %cst_50 = arith.constant 0.000000e+00 : f32
    %58 = vector.broadcast %cst_50 : f32 to vector<224x64xf32>
    %59 = arith.maximumf %57, %58 : vector<224x64xf32>
    %c0_51 = arith.constant 0 : index
    %c0_52 = arith.constant 0 : index
    %60 = vector.load %arg5[%c0_51, %c0_52] : memref<232x64xf32, #tpu.memory_space<vmem>>, vector<224x64xf32>
    tpu.vector_store %arg5[%c0_51, %c0_52], %59 {strides = array<i32>} : memref<232x64xf32, #tpu.memory_space<vmem>>, vector<224x64xf32>,
    %cst_53 = arith.constant 0.000000e+00 : f32
    %61 = vector.broadcast %cst_53 : f32 to vector<8x64xf32>
    %c224 = arith.constant 224 : index
    %c0_54 = arith.constant 0 : index
    %62 = vector.load %arg5[%c224, %c0_54] : memref<232x64xf32, #tpu.memory_space<vmem>>, vector<8x64xf32>
    tpu.vector_store %arg5[%c224, %c0_54], %61 {strides = array<i32>} : memref<232x64xf32, #tpu.memory_space<vmem>>, vector<8x64xf32>,
    %c0_55 = arith.constant 0 : index
    %c0_56 = arith.constant 0 : index
    %63 = vector.load %arg5[%c0_55, %c0_56] : memref<232x64xf32, #tpu.memory_space<vmem>>, vector<224x64xf32>
    %c1_57 = arith.constant 1 : index
    %c0_58 = arith.constant 0 : index
    %64 = vector.load %arg5[%c1_57, %c0_58] : memref<232x64xf32, #tpu.memory_space<vmem>>, vector<224x64xf32>
    %65 = arith.maximumf %63, %64 : vector<224x64xf32>
    %66 = vector.shape_cast %65 : vector<224x64xf32> to vector<7x32x64xf32>
    %67 = vector.extract_strided_slice %66 {offsets = [0, 0, 0], sizes = [7, 16, 64], strides = [1, 1, 1]} : vector<7x32x64xf32> to vector<7x16x64xf32>
    %68 = vector.extract_strided_slice %66 {offsets = [0, 16, 0], sizes = [7, 16, 64], strides = [1, 1, 1]} : vector<7x32x64xf32> to vector<7x16x64xf32>
    %69 = arith.maximumf %67, %68 : vector<7x16x64xf32>
    %c0_59 = arith.constant 0 : index
    %c0_60 = arith.constant 0 : index
    %c0_61 = arith.constant 0 : index
    %c0_62 = arith.constant 0 : index
    %70 = vector.load %arg4[%c0_59, %c0_60, %c0_61, %c0_62] : memref<1x7x16x64xf32, #tpu.memory_space<vmem>>, vector<1x7x16x64xf32>
    %71 = vector.shape_cast %70 : vector<1x7x16x64xf32> to vector<7x16x64xf32>
    %72 = vector.shape_cast %69 : vector<7x16x64xf32> to vector<1x7x16x64xf32>
    tpu.vector_store %arg4[%c0_59, %c0_60, %c0_61, %c0_62], %72 {strides = array<i32>} : memref<1x7x16x64xf32, #tpu.memory_space<vmem>>, vector<1x7x16x64xf32>,
    return
  }
  func.func @transform_0(%arg0: i32) -> (i32, i32, i32) {
    %c0_i32 = arith.constant 0 : i32
    %c0_i32_0 = arith.constant 0 : i32
    %c0_i32_1 = arith.constant 0 : i32
    return %arg0, %c0_i32, %c0_i32_0 : i32, i32, i32
  }
  func.func @transform_1(%arg0: i32) -> (i32, i32, i32) {
    %c0_i32 = arith.constant 0 : i32
    %c0_i32_0 = arith.constant 0 : i32
    %c0_i32_1 = arith.constant 0 : i32
    %c0_i32_2 = arith.constant 0 : i32
    return %c0_i32, %c0_i32_0, %c0_i32_1 : i32, i32, i32
  }
  func.func @transform_2(%arg0: i32) -> (i32, i32) {
    %c0_i32 = arith.constant 0 : i32
    %c0_i32_0 = arith.constant 0 : i32
    %c0_i32_1 = arith.constant 0 : i32
    return %c0_i32, %c0_i32_0 : i32, i32
  }
  func.func @transform_3(%arg0: i32) -> (i32, i32, i32, i32) {
    %c0_i32 = arith.constant 0 : i32
    %c0_i32_0 = arith.constant 0 : i32
    %c0_i32_1 = arith.constant 0 : i32
    %c0_i32_2 = arith.constant 0 : i32
    return %arg0, %c0_i32, %c0_i32_0, %c0_i32_1 : i32, i32, i32, i32
  }
}

module attributes {stable_mosaic.version = 11 : i64} {
  func.func @_mlp_kernel(%arg0: i32, %arg1: memref<2x3136xf32, #tpu.memory_space<vmem>>, %arg2: memref<3136x128xf32, #tpu.memory_space<vmem>>, %arg3: memref<1x128xf32, #tpu.memory_space<vmem>>, %arg4: memref<128x10xf32, #tpu.memory_space<vmem>>, %arg5: memref<1x10xf32, #tpu.memory_space<vmem>>, %arg6: memref<2x10xf32, #tpu.memory_space<vmem>>) attributes {dimension_semantics = [#tpu.dimension_semantics<arbitrary>], iteration_bounds = array<i64: 1>, scalar_prefetch = 0 : i64, scratch_operands = 0 : i64, tpu.core_type = #tpu.core_type<tc>, window_params = [{pipeline_mode = #tpu.pipeline_mode<synchronous>, transform_indices = @transform_0, window_bounds = array<i64: 2, 3136>}, {pipeline_mode = #tpu.pipeline_mode<synchronous>, transform_indices = @transform_1, window_bounds = array<i64: 3136, 128>}, {pipeline_mode = #tpu.pipeline_mode<synchronous>, transform_indices = @transform_2, window_bounds = array<i64: 1, 128>}, {pipeline_mode = #tpu.pipeline_mode<synchronous>, transform_indices = @transform_3, window_bounds = array<i64: 128, 10>}, {pipeline_mode = #tpu.pipeline_mode<synchronous>, transform_indices = @transform_4, window_bounds = array<i64: 1, 10>}, {pipeline_mode = #tpu.pipeline_mode<synchronous>, transform_indices = @transform_5, window_bounds = array<i64: 2, 10>}]} {
    %c0 = arith.constant 0 : index
    %c0_0 = arith.constant 0 : index
    %0 = vector.load %arg1[%c0, %c0_0] : memref<2x3136xf32, #tpu.memory_space<vmem>>, vector<2x3136xf32>
    %c0_1 = arith.constant 0 : index
    %c0_2 = arith.constant 0 : index
    %1 = vector.load %arg2[%c0_1, %c0_2] : memref<3136x128xf32, #tpu.memory_space<vmem>>, vector<3136x128xf32>
    %cst = arith.constant dense<0.000000e+00> : vector<2x128xf32>
    %2 = tpu.matmul %0, %1, %cst {dimension_numbers = #tpu.dot_dimension_numbers<[1], [0], [0], [1], [0, 0, 1, 1], [], []>} : vector<2x3136xf32>, vector<3136x128xf32>, vector<2x128xf32> -> vector<2x128xf32>
    %c0_3 = arith.constant 0 : index
    %c0_4 = arith.constant 0 : index
    %3 = vector.load %arg3[%c0_3, %c0_4] : memref<1x128xf32, #tpu.memory_space<vmem>>, vector<1x128xf32>
    %4 = vector.broadcast %3 : vector<1x128xf32> to vector<2x128xf32>
    %5 = arith.addf %2, %4 : vector<2x128xf32>
    %cst_5 = arith.constant 0.000000e+00 : f32
    %6 = vector.broadcast %cst_5 : f32 to vector<2x128xf32>
    %7 = arith.maximumf %5, %6 : vector<2x128xf32>
    %c0_6 = arith.constant 0 : index
    %c0_7 = arith.constant 0 : index
    %8 = vector.load %arg4[%c0_6, %c0_7] : memref<128x10xf32, #tpu.memory_space<vmem>>, vector<128x10xf32>
    %cst_8 = arith.constant dense<0.000000e+00> : vector<2x10xf32>
    %9 = tpu.matmul %7, %8, %cst_8 {dimension_numbers = #tpu.dot_dimension_numbers<[1], [0], [0], [1], [0, 0, 1, 1], [], []>} : vector<2x128xf32>, vector<128x10xf32>, vector<2x10xf32> -> vector<2x10xf32>
    %c0_9 = arith.constant 0 : index
    %c0_10 = arith.constant 0 : index
    %10 = vector.load %arg5[%c0_9, %c0_10] : memref<1x10xf32, #tpu.memory_space<vmem>>, vector<1x10xf32>
    %11 = vector.broadcast %10 : vector<1x10xf32> to vector<2x10xf32>
    %12 = arith.addf %9, %11 : vector<2x10xf32>
    %c0_11 = arith.constant 0 : index
    %c0_12 = arith.constant 0 : index
    %13 = vector.load %arg6[%c0_11, %c0_12] : memref<2x10xf32, #tpu.memory_space<vmem>>, vector<2x10xf32>
    tpu.vector_store %arg6[%c0_11, %c0_12], %12 {strides = array<i32>} : memref<2x10xf32, #tpu.memory_space<vmem>>, vector<2x10xf32>,
    return
  }
  func.func @transform_0(%arg0: i32) -> (i32, i32) {
    %c0_i32 = arith.constant 0 : i32
    %c0_i32_0 = arith.constant 0 : i32
    %c0_i32_1 = arith.constant 0 : i32
    return %c0_i32, %c0_i32_0 : i32, i32
  }
  func.func @transform_1(%arg0: i32) -> (i32, i32) {
    %c0_i32 = arith.constant 0 : i32
    %c0_i32_0 = arith.constant 0 : i32
    %c0_i32_1 = arith.constant 0 : i32
    return %c0_i32, %c0_i32_0 : i32, i32
  }
  func.func @transform_2(%arg0: i32) -> (i32, i32) {
    %c0_i32 = arith.constant 0 : i32
    %c0_i32_0 = arith.constant 0 : i32
    %c0_i32_1 = arith.constant 0 : i32
    return %c0_i32, %c0_i32_0 : i32, i32
  }
  func.func @transform_3(%arg0: i32) -> (i32, i32) {
    %c0_i32 = arith.constant 0 : i32
    %c0_i32_0 = arith.constant 0 : i32
    %c0_i32_1 = arith.constant 0 : i32
    return %c0_i32, %c0_i32_0 : i32, i32
  }
  func.func @transform_4(%arg0: i32) -> (i32, i32) {
    %c0_i32 = arith.constant 0 : i32
    %c0_i32_0 = arith.constant 0 : i32
    %c0_i32_1 = arith.constant 0 : i32
    return %c0_i32, %c0_i32_0 : i32, i32
  }
  func.func @transform_5(%arg0: i32) -> (i32, i32) {
    %c0_i32 = arith.constant 0 : i32
    %c0_i32_0 = arith.constant 0 : i32
    %c0_i32_1 = arith.constant 0 : i32
    return %c0_i32, %c0_i32_0 : i32, i32
  }
}

</mosaic_0001>

<llo_original>
// kernel: simple_cnn_forward.4
$region0: #{simple_cnn_forward.4}
  #allocation0 [shape = 'u32[]', space=smem, size = 0x4, offset = 0x4, fixed_abs, tag = 'smem constant byte address 0x4 - core index']
  #allocation1 [shape = 'u32[72,128]{1,0:T(1,128)}', space=vmem, size = 0x9000, scoped, tag = 'internal scratch']
  #allocation2 [shape = 'f32[232,64]{1,0:T(8,128)}', space=vmem, size = 0x1d000, scoped, tag = 'scratch operand']
  %s0 = inlined_call_operand.vmem [shape: f32[2,272,32], index: 0, kind: input, shape index: {}]
  %s1 = inlined_call_operand.vmem [shape: f32[9,32,64], index: 1, kind: input, shape index: {}]
  %s2 = inlined_call_operand.vmem [shape: f32[1,64], index: 2, kind: input, shape index: {}]
  %s3 = inlined_call_operand.vmem [shape: f32[2,7,16,64], index: 3, kind: output, shape index: {}]
  %s4 = sld [smem:[#allocation0]]
  $region45: #{simple_cnn_forward.4} parent=0
    _
  %s6 = ssub.s32 1, %s4
  %s7 = scalar_select 0, %s6, %s4
  loop: start=0, step=1, limit=4
  $region2: #{simple_cnn_forward.4} parent=0 // loop_pre_header
    _
  $region3: #{simple_cnn_forward.4} parent=0 // loop_header
    %s9 = sphi 0, %s13
    %p10 = scmp.ge.s32.totalorder %s9, 4
    %s19 = sphi 0, %s21
    %s22 = sphi 0, %s19
    %s23 = sphi 0, %s22
    %s39 = sphi 0, %s23
    %s43 = sphi 0, %s43
    %s45 = sphi 0, %s43
    %s46 = sphi 0, %s45
    %s60 = sphi 0, %s46
    %s64 = sphi 0, %s64
    %s66 = sphi 0, %s64
    %s67 = sphi 0, %s66
    %s81 = sphi 0, %s67
    %s87 = sphi 0, %s89
    %s90 = sphi 0, %s87
    %s91 = sphi 0, %s90
    %s107 = sphi 0, %s91
  $region4: #{simple_cnn_forward.4} parent=0 // loop_header_branch
    %12 = sbr.rel (%p10) target = $region8
  $region5: #{simple_cnn_forward.4} parent=0 // loop_body
    %s14 = ssub.s32 %s9, 1
    %s15 = ssub.s32 %s9, 2
    %s16 = sadd.s32 %s9, 1
    %s17 = ssub.s32 %s9, %s16
    %p18 = scmp.eq.s32.totalorder %s17, 0
    %s20 = sadd.s32 %s19, 1
    %s21 = scalar_select %p18, %s19, %s20
    %p24 = pneg %p18
    %p25 = scmp.eq.s32.totalorder %s9, 1
    %p26 = por %p24, %p25
    %p27 = scmp.ne.s32.totalorder %s19, %s22
    %p28 = scmp.eq.s32.totalorder %s9, 0
    %p29 = por %p27, %p28
    %p30 = scmp.ne.s32.totalorder %s19, %s22
    %p31 = scmp.eq.s32.totalorder %s14, 1
    %p32 = por %p30, %p31
    %p33 = scmp.ne.s32.totalorder %s22, %s23
    %p34 = scmp.eq.s32.totalorder %s14, 0
    %p35 = por %p33, %p34
    %p36 = scmp.ne.s32.totalorder %s22, %s23
    %p37 = scmp.eq.s32.totalorder %s15, 1
    %p38 = por %p36, %p37
    %p40 = scmp.ne.s32.totalorder %s23, %s39
    %p41 = scmp.eq.s32.totalorder %s15, 0
    %p42 = por %p40, %p41
    %s44 = sadd.s32 %s43, 1
    %p47 = scmp.eq.s32.totalorder %s9, 1
    %p48 = scmp.ne.s32.totalorder %s43, %s45
    %p49 = scmp.eq.s32.totalorder %s9, 0
    %p50 = por %p48, %p49
    %p51 = scmp.ne.s32.totalorder %s43, %s45
    %p52 = scmp.eq.s32.totalorder %s14, 1
    %p53 = por %p51, %p52
    %p54 = scmp.ne.s32.totalorder %s45, %s46
    %p55 = scmp.eq.s32.totalorder %s14, 0
    %p56 = por %p54, %p55
    %p57 = scmp.ne.s32.totalorder %s45, %s46
    %p58 = scmp.eq.s32.totalorder %s15, 1
    %p59 = por %p57, %p58
    %p61 = scmp.ne.s32.totalorder %s46, %s60
    %p62 = scmp.eq.s32.totalorder %s15, 0
    %p63 = por %p61, %p62
    %s65 = sadd.s32 %s64, 1
    %p68 = scmp.eq.s32.totalorder %s9, 1
    %p69 = scmp.ne.s32.totalorder %s64, %s66
    %p70 = scmp.eq.s32.totalorder %s9, 0
    %p71 = por %p69, %p70
    %p72 = scmp.ne.s32.totalorder %s64, %s66
    %p73 = scmp.eq.s32.totalorder %s14, 1
    %p74 = por %p72, %p73
    %p75 = scmp.ne.s32.totalorder %s66, %s67
    %p76 = scmp.eq.s32.totalorder %s14, 0
    %p77 = por %p75, %p76
    %p78 = scmp.ne.s32.totalorder %s66, %s67
    %p79 = scmp.eq.s32.totalorder %s15, 1
    %p80 = por %p78, %p79
    %p82 = scmp.ne.s32.totalorder %s67, %s81
    %p83 = scmp.eq.s32.totalorder %s15, 0
    %p84 = por %p82, %p83
    %s85 = ssub.s32 %s9, %s16
    %p86 = scmp.eq.s32.totalorder %s85, 0
    %s88 = sadd.s32 %s87, 1
    %s89 = scalar_select %p86, %s87, %s88
    %p92 = pneg %p86
    %p93 = scmp.eq.s32.totalorder %s9, 1
    %p94 = por %p92, %p93
    %p95 = scmp.ne.s32.totalorder %s87, %s90
    %p96 = scmp.eq.s32.totalorder %s9, 0
    %p97 = por %p95, %p96
    %p98 = scmp.ne.s32.totalorder %s87, %s90
    %p99 = scmp.eq.s32.totalorder %s14, 1
    %p100 = por %p98, %p99
    %p101 = scmp.ne.s32.totalorder %s90, %s91
    %p102 = scmp.eq.s32.totalorder %s14, 0
    %p103 = por %p101, %p102
    %p104 = scmp.ne.s32.totalorder %s90, %s91
    %p105 = scmp.eq.s32.totalorder %s15, 1
    %p106 = por %p104, %p105
    %p108 = scmp.ne.s32.totalorder %s91, %s107
    %p109 = scmp.eq.s32.totalorder %s15, 0
    %p110 = por %p108, %p109
    %p111 = scmp.le.s32.totalorder 1, %s9
    %p112 = scmp.lt.s32.totalorder %s9, 3
    %p113 = pnand %p111, %p112
    %p114 = pneg %p113
    // Predicated region
    $region9: #{simple_cnn_forward.4} parent=5 // pred_check
      _
    $region10: #{simple_cnn_forward.4} parent=5 // pred_check_branch
      %116 = sbr.rel (%p113) target = $region12
    $region11: #{simple_cnn_forward.4} parent=5 // pred_region
      %s117 = ssub.s32 %s9, 1
      // Predicated region
      $region13: #{simple_cnn_forward.4} parent=11 // pred_check
        %p118 = pneg %p56
      $region14: #{simple_cnn_forward.4} parent=11 // pred_check_branch
        %120 = sbr.rel (%p118) target = $region16
      $region15: #{simple_cnn_forward.4} parent=11 // pred_region
        _
      $region16: #{simple_cnn_forward.4} parent=11 // pred_fallthru
        _
      // Predicated region
      $region17: #{simple_cnn_forward.4} parent=11 // pred_check
        %p121 = pneg %p77
      $region18: #{simple_cnn_forward.4} parent=11 // pred_check_branch
        %123 = sbr.rel (%p121) target = $region20
      $region19: #{simple_cnn_forward.4} parent=11 // pred_region
        _
      $region20: #{simple_cnn_forward.4} parent=11 // pred_fallthru
        _
    $region12: #{simple_cnn_forward.4} parent=5 // pred_fallthru
      _
    %p124 = scmp.lt.s32.totalorder %s9, 2
    // Predicated region
    $region21: #{simple_cnn_forward.4} parent=5 // pred_check
      %p125 = pneg %p124
    $region22: #{simple_cnn_forward.4} parent=5 // pred_check_branch
      %127 = sbr.rel (%p125) target = $region24
    $region23: #{simple_cnn_forward.4} parent=5 // pred_region
      // Predicated region
      $region25: #{simple_cnn_forward.4} parent=23 // pred_check
        %p128 = pneg %p29
      $region26: #{simple_cnn_forward.4} parent=23 // pred_check_branch
        %130 = sbr.rel (%p128) target = $region28
      $region27: #{simple_cnn_forward.4} parent=23 // pred_region
        %p131 = scmp.lt.s32.totalorder %s9, 1
        %s132 = scalar_select %p131, %s9, 1
        %s133 = smul.addr %s132, 34
        %s134 = smul.addr %s133, 8
        %s135 = scalar_lea.vmem %s0, %s134
      $region28: #{simple_cnn_forward.4} parent=23 // pred_fallthru
        _
    $region24: #{simple_cnn_forward.4} parent=5 // pred_fallthru
      _
    %p136 = scmp.le.s32.totalorder 1, %s9
    %p137 = scmp.lt.s32.totalorder %s9, 3
    %p138 = pnand %p136, %p137
    %p139 = pneg %p138
    // Predicated region
    $region29: #{simple_cnn_forward.4} parent=5 // pred_check
      _
    $region30: #{simple_cnn_forward.4} parent=5 // pred_check_branch
      %141 = sbr.rel (%p138) target = $region32
    $region31: #{simple_cnn_forward.4} parent=5 // pred_region
      %s142 = ssub.s32 %s9, 1
      %p143 = scmp.lt.s32.totalorder %s14, 1
      %s144 = scalar_select %p143, %s14, 1
      %s145 = smul.addr %s144, 34
      %s146 = smul.addr %s145, 8
      %s147 = scalar_lea.vmem %s0, %s146
      %p148 = pneg %p35
      %p149 = pneg %p32
      %p150 = pneg %p56
      %p151 = pneg %p53
      %p152 = pneg %p77
      %p153 = pneg %p74
      %p154 = pneg %p103
      %p155 = pneg %p100
      %p156 = scmp.lt.s32.totalorder %s14, 1
      %s157 = scalar_select %p156, %s14, 1
      %s158 = smul.addr %s157, 14
      %s159 = smul.addr %s158, 8
      %s160 = scalar_lea.vmem %s3, %s159
      %p161 = scmp.lt.s32.totalorder %s14, 1
      %s162 = scalar_select %p161, %s14, 1
      %s163 = smul.addr %s162, 34
      %s164 = smul.addr %s163, 8
      %s165 = scalar_lea.vmem %s0, %s164
      %p166 = scmp.lt.s32.totalorder %s14, 1
      %s167 = scalar_select %p166, %s14, 1
      %s168 = smul.addr %s167, 14
      %s169 = smul.addr %s168, 8
      %s170 = scalar_lea.vmem %s3, %s169
      %v171 = vld [vmem:[%s165] sm:$0xff]
      %v172 = vld [vmem:[%s165 + $0x8] sm:$0xff]
      %v173 = vld [vmem:[%s165 + $0x10] sm:$0xff]
      %v174 = vld [vmem:[%s165 + $0x18] sm:$0xff]
      %v175 = vld [vmem:[%s165 + $0x20] sm:$0xff]
      %v176 = vld [vmem:[%s165 + $0x28] sm:$0xff]
      %v177 = vld [vmem:[%s165 + $0x30] sm:$0xff]
      %v178 = vld [vmem:[%s165 + $0x38] sm:$0xff]
      %v179 = vld [vmem:[%s165 + $0x40] sm:$0xff]
      %v180 = vld [vmem:[%s165 + $0x48] sm:$0xff]
      %v181 = vld [vmem:[%s165 + $0x50] sm:$0xff]
      %v182 = vld [vmem:[%s165 + $0x58] sm:$0xff]
      %v183 = vld [vmem:[%s165 + $0x60] sm:$0xff]
      %v184 = vld [vmem:[%s165 + $0x68] sm:$0xff]
      %v185 = vld [vmem:[%s165 + $0x70] sm:$0xff]
      %v186 = vld [vmem:[%s165 + $0x78] sm:$0xff]
      %v187 = vld [vmem:[%s165 + $0x80] sm:$0xff]
      %v188 = vld [vmem:[%s165 + $0x88] sm:$0xff]
      %v189 = vld [vmem:[%s165 + $0x90] sm:$0xff]
      %v190 = vld [vmem:[%s165 + $0x98] sm:$0xff]
      %v191 = vld [vmem:[%s165 + $0xa0] sm:$0xff]
      %v192 = vld [vmem:[%s165 + $0xa8] sm:$0xff]
      %v193 = vld [vmem:[%s165 + $0xb0] sm:$0xff]
      %v194 = vld [vmem:[%s165 + $0xb8] sm:$0xff]
      %v195 = vld [vmem:[%s165 + $0xc0] sm:$0xff]
      %v196 = vld [vmem:[%s165 + $0xc8] sm:$0xff]
      %v197 = vld [vmem:[%s165 + $0xd0] sm:$0xff]
      %v198 = vld [vmem:[%s165 + $0xd8] sm:$0xff]
      %v199 = vld [vmem:[%s1] sm:$0xff]
      %v200 = vld [vmem:[%s1 + $0x8] sm:$0xff]
      %v201 = vld [vmem:[%s1 + $0x10] sm:$0xff]
      %v202 = vld [vmem:[%s1 + $0x18] sm:$0xff]
      %v203 = vld [vmem:[%s165 + $0x1] sm:$0xff]
      %v204 = vld [vmem:[%s165 + $0x9] sm:$0xff]
      %v205 = vld [vmem:[%s165 + $0x11] sm:$0xff]
      %v206 = vld [vmem:[%s165 + $0x19] sm:$0xff]
      %v207 = vld [vmem:[%s165 + $0x21] sm:$0xff]
      %v208 = vld [vmem:[%s165 + $0x29] sm:$0xff]
      %v209 = vld [vmem:[%s165 + $0x31] sm:$0xff]
      %v210 = vld [vmem:[%s165 + $0x39] sm:$0xff]
      %v211 = vld [vmem:[%s165 + $0x41] sm:$0xff]
      %v212 = vld [vmem:[%s165 + $0x49] sm:$0xff]
      %v213 = vld [vmem:[%s165 + $0x51] sm:$0xff]
      %v214 = vld [vmem:[%s165 + $0x59] sm:$0xff]
      %v215 = vld [vmem:[%s165 + $0x61] sm:$0xff]
      %v216 = vld [vmem:[%s165 + $0x69] sm:$0xff]
      %v217 = vld [vmem:[%s165 + $0x71] sm:$0xff]
      %v218 = vld [vmem:[%s165 + $0x79] sm:$0xff]
      %v219 = vld [vmem:[%s165 + $0x81] sm:$0xff]
      %v220 = vld [vmem:[%s165 + $0x89] sm:$0xff]
      %v221 = vld [vmem:[%s165 + $0x91] sm:$0xff]
      %v222 = vld [vmem:[%s165 + $0x99] sm:$0xff]
      %v223 = vld [vmem:[%s165 + $0xa1] sm:$0xff]
      %v224 = vld [vmem:[%s165 + $0xa9] sm:$0xff]
      %v225 = vld [vmem:[%s165 + $0xb1] sm:$0xff]
      %v226 = vld [vmem:[%s165 + $0xb9] sm:$0xff]
      %v227 = vld [vmem:[%s165 + $0xc1] sm:$0xff]
      %v228 = vld [vmem:[%s165 + $0xc9] sm:$0xff]
      %v229 = vld [vmem:[%s165 + $0xd1] sm:$0xff]
      %v230 = vld [vmem:[%s165 + $0xd9] sm:$0xff]
      %s231 = scalar_lea.vmem %s1, 32
      %v232 = vld [vmem:[%s231] sm:$0xff]
      %v233 = vld [vmem:[%s231 + $0x8] sm:$0xff]
      %v234 = vld [vmem:[%s231 + $0x10] sm:$0xff]
      %v235 = vld [vmem:[%s231 + $0x18] sm:$0xff]
      %vm236 = vcmask 261120
      %v238 = vsel %vm236, %v203, 0
      %v241 = vsel %vm236, %v204, 0
      %v244 = vsel %vm236, %v205, 0
      %v247 = vsel %vm236, %v206, 0
      %v250 = vsel %vm236, %v207, 0
      %v253 = vsel %vm236, %v208, 0
      %v256 = vsel %vm236, %v209, 0
      %v259 = vsel %vm236, %v210, 0
      %v262 = vsel %vm236, %v211, 0
      %v265 = vsel %vm236, %v212, 0
      %v268 = vsel %vm236, %v213, 0
      %v271 = vsel %vm236, %v214, 0
      %v274 = vsel %vm236, %v215, 0
      %v277 = vsel %vm236, %v216, 0
      %v280 = vsel %vm236, %v217, 0
      %v283 = vsel %vm236, %v218, 0
      %v286 = vsel %vm236, %v219, 0
      %v289 = vsel %vm236, %v220, 0
      %v292 = vsel %vm236, %v221, 0
      %v295 = vsel %vm236, %v222, 0
      %v298 = vsel %vm236, %v223, 0
      %v301 = vsel %vm236, %v224, 0
      %v304 = vsel %vm236, %v225, 0
      %v307 = vsel %vm236, %v226, 0
      %v310 = vsel %vm236, %v227, 0
      %v313 = vsel %vm236, %v228, 0
      %v316 = vsel %vm236, %v229, 0
      %v319 = vsel %vm236, %v230, 0
      %321 = vmatpush.msra.mxu0 0.0
      %322 = vmatpush.msra.mxu0 0.0
      %323 = vmatpush.msra.mxu0 0.0
      %324 = vmatpush.msra.mxu0 0.0
      %325 = vmatpush.msra.mxu0 0.0
      %326 = vmatpush.msra.mxu0 0.0
      %327 = vmatpush.msra.mxu0 0.0
      %328 = vmatpush.msra.mxu0 0.0
      %329 = vmatpush.msra.mxu0 0.0
      %330 = vmatpush.msra.mxu0 0.0
      %331 = vmatpush.msra.mxu0 0.0
      %332 = vmatpush.msra.mxu0 0.0
      %333 = vmatpush.msra.mxu0 %v235
      %334 = vmatpush.msra.mxu0 %v234
      %335 = vmatpush.msra.mxu0 %v233
      %336 = vmatpush.msra.mxu0 %v232
      %337 = vmatmul.f32.gmra.mxu0 %v238
      %v338 = vpop.f32.mrf.mxu0
      %v339 = vadd.f32 0.0, %v338
      %340 = vmatmul.f32.gmra.mxu0 %v241
      %v341 = vpop.f32.mrf.mxu0
      %v342 = vadd.f32 0.0, %v341
      %343 = vmatmul.f32.gmra.mxu0 %v244
      %v344 = vpop.f32.mrf.mxu0
      %v345 = vadd.f32 0.0, %v344
      %346 = vmatmul.f32.gmra.mxu0 %v247
      %v347 = vpop.f32.mrf.mxu0
      %v348 = vadd.f32 0.0, %v347
      %349 = vmatmul.f32.gmra.mxu0 %v250
      %v350 = vpop.f32.mrf.mxu0
      %v351 = vadd.f32 0.0, %v350
      %352 = vmatmul.f32.gmra.mxu0 %v253
      %v353 = vpop.f32.mrf.mxu0
      %v354 = vadd.f32 0.0, %v353
      %355 = vmatmul.f32.gmra.mxu0 %v256
      %v356 = vpop.f32.mrf.mxu0
      %v357 = vadd.f32 0.0, %v356
      %358 = vmatmul.f32.gmra.mxu0 %v259
      %v359 = vpop.f32.mrf.mxu0
      %v360 = vadd.f32 0.0, %v359
      %361 = vmatmul.f32.gmra.mxu0 %v262
      %v362 = vpop.f32.mrf.mxu0
      %v363 = vadd.f32 0.0, %v362
      %364 = vmatmul.f32.gmra.mxu0 %v265
      %v365 = vpop.f32.mrf.mxu0
      %v366 = vadd.f32 0.0, %v365
      %367 = vmatmul.f32.gmra.mxu0 %v268
      %v368 = vpop.f32.mrf.mxu0
      %v369 = vadd.f32 0.0, %v368
      %370 = vmatmul.f32.gmra.mxu0 %v271
      %v371 = vpop.f32.mrf.mxu0
      %v372 = vadd.f32 0.0, %v371
      %373 = vmatmul.f32.gmra.mxu0 %v274
      %v374 = vpop.f32.mrf.mxu0
      %v375 = vadd.f32 0.0, %v374
      %376 = vmatmul.f32.gmra.mxu0 %v277
      %v377 = vpop.f32.mrf.mxu0
      %v378 = vadd.f32 0.0, %v377
      %379 = vmatmul.f32.gmra.mxu0 %v280
      %v380 = vpop.f32.mrf.mxu0
      %v381 = vadd.f32 0.0, %v380
      %382 = vmatmul.f32.gmra.mxu0 %v283
      %v383 = vpop.f32.mrf.mxu0
      %v384 = vadd.f32 0.0, %v383
      %385 = vmatmul.f32.gmra.mxu0 %v286
      %v386 = vpop.f32.mrf.mxu0
      %v387 = vadd.f32 0.0, %v386
      %388 = vmatmul.f32.gmra.mxu0 %v289
      %v389 = vpop.f32.mrf.mxu0
      %v390 = vadd.f32 0.0, %v389
      %391 = vmatmul.f32.gmra.mxu0 %v292
      %v392 = vpop.f32.mrf.mxu0
      %v393 = vadd.f32 0.0, %v392
      %394 = vmatmul.f32.gmra.mxu0 %v295
      %v395 = vpop.f32.mrf.mxu0
      %v396 = vadd.f32 0.0, %v395
      %397 = vmatmul.f32.gmra.mxu0 %v298
      %v398 = vpop.f32.mrf.mxu0
      %v399 = vadd.f32 0.0, %v398
      %400 = vmatmul.f32.gmra.mxu0 %v301
      %v401 = vpop.f32.mrf.mxu0
      %v402 = vadd.f32 0.0, %v401
      %403 = vmatmul.f32.gmra.mxu0 %v304
      %v404 = vpop.f32.mrf.mxu0
      %v405 = vadd.f32 0.0, %v404
      %406 = vmatmul.f32.gmra.mxu0 %v307
      %v407 = vpop.f32.mrf.mxu0
      %v408 = vadd.f32 0.0, %v407
      %409 = vmatmul.f32.gmra.mxu0 %v310
      %v410 = vpop.f32.mrf.mxu0
      %v411 = vadd.f32 0.0, %v410
      %412 = vmatmul.f32.gmra.mxu0 %v313
      %v413 = vpop.f32.mrf.mxu0
      %v414 = vadd.f32 0.0, %v413
      %415 = vmatmul.f32.gmra.mxu0 %v316
      %v416 = vpop.f32.mrf.mxu0
      %v417 = vadd.f32 0.0, %v416
      %418 = vmatmul.f32.gmra.mxu0 %v319
      %v419 = vpop.f32.mrf.mxu0
      %v420 = vadd.f32 0.0, %v419
      %421 = vdwg.mxu0
      %v423 = vsel %vm236, %v171, 0
      %v426 = vsel %vm236, %v172, 0
      %v429 = vsel %vm236, %v173, 0
      %v432 = vsel %vm236, %v174, 0
      %v435 = vsel %vm236, %v175, 0
      %v438 = vsel %vm236, %v176, 0
      %v441 = vsel %vm236, %v177, 0
      %v444 = vsel %vm236, %v178, 0
      %v447 = vsel %vm236, %v179, 0
      %v450 = vsel %vm236, %v180, 0
      %v453 = vsel %vm236, %v181, 0
      %v456 = vsel %vm236, %v182, 0
      %v459 = vsel %vm236, %v183, 0
      %v462 = vsel %vm236, %v184, 0
      %v465 = vsel %vm236, %v185, 0
      %v468 = vsel %vm236, %v186, 0
      %v471 = vsel %vm236, %v187, 0
      %v474 = vsel %vm236, %v188, 0
      %v477 = vsel %vm236, %v189, 0
      %v480 = vsel %vm236, %v190, 0
      %v483 = vsel %vm236, %v191, 0
      %v486 = vsel %vm236, %v192, 0
      %v489 = vsel %vm236, %v193, 0
      %v492 = vsel %vm236, %v194, 0
      %v495 = vsel %vm236, %v195, 0
      %v498 = vsel %vm236, %v196, 0
      %v501 = vsel %vm236, %v197, 0
      %v504 = vsel %vm236, %v198, 0
      %506 = vmatpush.msra.mxu0 0.0
      %507 = vmatpush.msra.mxu0 0.0
      %508 = vmatpush.msra.mxu0 0.0
      %509 = vmatpush.msra.mxu0 0.0
      %510 = vmatpush.msra.mxu0 0.0
      %511 = vmatpush.msra.mxu0 0.0
      %512 = vmatpush.msra.mxu0 0.0
      %513 = vmatpush.msra.mxu0 0.0
      %514 = vmatpush.msra.mxu0 0.0
      %515 = vmatpush.msra.mxu0 0.0
      %516 = vmatpush.msra.mxu0 0.0
      %517 = vmatpush.msra.mxu0 0.0
      %518 = vmatpush.msra.mxu0 %v202
      %519 = vmatpush.msra.mxu0 %v201
      %520 = vmatpush.msra.mxu0 %v200
      %521 = vmatpush.msra.mxu0 %v199
      %522 = vmatmul.f32.gmra.mxu0 %v423
      %v523 = vpop.f32.mrf.mxu0
      %v524 = vadd.f32 %v339, %v523
      %525 = vmatmul.f32.gmra.mxu0 %v426
      %v526 = vpop.f32.mrf.mxu0
      %v527 = vadd.f32 %v342, %v526
      %528 = vmatmul.f32.gmra.mxu0 %v429
      %v529 = vpop.f32.mrf.mxu0
      %v530 = vadd.f32 %v345, %v529
      %531 = vmatmul.f32.gmra.mxu0 %v432
      %v532 = vpop.f32.mrf.mxu0
      %v533 = vadd.f32 %v348, %v532
      %534 = vmatmul.f32.gmra.mxu0 %v435
      %v535 = vpop.f32.mrf.mxu0
      %v536 = vadd.f32 %v351, %v535
      %537 = vmatmul.f32.gmra.mxu0 %v438
      %v538 = vpop.f32.mrf.mxu0
      %v539 = vadd.f32 %v354, %v538
      %540 = vmatmul.f32.gmra.mxu0 %v441
      %v541 = vpop.f32.mrf.mxu0
      %v542 = vadd.f32 %v357, %v541
      %543 = vmatmul.f32.gmra.mxu0 %v444
      %v544 = vpop.f32.mrf.mxu0
      %v545 = vadd.f32 %v360, %v544
      %546 = vmatmul.f32.gmra.mxu0 %v447
      %v547 = vpop.f32.mrf.mxu0
      %v548 = vadd.f32 %v363, %v547
      %549 = vmatmul.f32.gmra.mxu0 %v450
      %v550 = vpop.f32.mrf.mxu0
      %v551 = vadd.f32 %v366, %v550
      %552 = vmatmul.f32.gmra.mxu0 %v453
      %v553 = vpop.f32.mrf.mxu0
      %v554 = vadd.f32 %v369, %v553
      %555 = vmatmul.f32.gmra.mxu0 %v456
      %v556 = vpop.f32.mrf.mxu0
      %v557 = vadd.f32 %v372, %v556
      %558 = vmatmul.f32.gmra.mxu0 %v459
      %v559 = vpop.f32.mrf.mxu0
      %v560 = vadd.f32 %v375, %v559
      %561 = vmatmul.f32.gmra.mxu0 %v462
      %v562 = vpop.f32.mrf.mxu0
      %v563 = vadd.f32 %v378, %v562
      %564 = vmatmul.f32.gmra.mxu0 %v465
      %v565 = vpop.f32.mrf.mxu0
      %v566 = vadd.f32 %v381, %v565
      %567 = vmatmul.f32.gmra.mxu0 %v468
      %v568 = vpop.f32.mrf.mxu0
      %v569 = vadd.f32 %v384, %v568
      %570 = vmatmul.f32.gmra.mxu0 %v471
      %v571 = vpop.f32.mrf.mxu0
      %v572 = vadd.f32 %v387, %v571
      %573 = vmatmul.f32.gmra.mxu0 %v474
      %v574 = vpop.f32.mrf.mxu0
      %v575 = vadd.f32 %v390, %v574
      %576 = vmatmul.f32.gmra.mxu0 %v477
      %v577 = vpop.f32.mrf.mxu0
      %v578 = vadd.f32 %v393, %v577
      %579 = vmatmul.f32.gmra.mxu0 %v480
      %v580 = vpop.f32.mrf.mxu0
      %v581 = vadd.f32 %v396, %v580
      %582 = vmatmul.f32.gmra.mxu0 %v483
      %v583 = vpop.f32.mrf.mxu0
      %v584 = vadd.f32 %v399, %v583
      %585 = vmatmul.f32.gmra.mxu0 %v486
      %v586 = vpop.f32.mrf.mxu0
      %v587 = vadd.f32 %v402, %v586
      %588 = vmatmul.f32.gmra.mxu0 %v489
      %v589 = vpop.f32.mrf.mxu0
      %v590 = vadd.f32 %v405, %v589
      %591 = vmatmul.f32.gmra.mxu0 %v492
      %v592 = vpop.f32.mrf.mxu0
      %v593 = vadd.f32 %v408, %v592
      %594 = vmatmul.f32.gmra.mxu0 %v495
      %v595 = vpop.f32.mrf.mxu0
      %v596 = vadd.f32 %v411, %v595
      %597 = vmatmul.f32.gmra.mxu0 %v498
      %v598 = vpop.f32.mrf.mxu0
      %v599 = vadd.f32 %v414, %v598
      %600 = vmatmul.f32.gmra.mxu0 %v501
      %v601 = vpop.f32.mrf.mxu0
      %v602 = vadd.f32 %v417, %v601
      %603 = vmatmul.f32.gmra.mxu0 %v504
      %v604 = vpop.f32.mrf.mxu0
      %v605 = vadd.f32 %v420, %v604
      %606 = vdwg.mxu0
      %v607 = vld [vmem:[%s165 + $0x2] sm:$0xff]
      %v608 = vld [vmem:[%s165 + $0xa] sm:$0xff]
      %v609 = vld [vmem:[%s165 + $0x12] sm:$0xff]
      %v610 = vld [vmem:[%s165 + $0x1a] sm:$0xff]
      %v611 = vld [vmem:[%s165 + $0x22] sm:$0xff]
      %v612 = vld [vmem:[%s165 + $0x2a] sm:$0xff]
      %v613 = vld [vmem:[%s165 + $0x32] sm:$0xff]
      %v614 = vld [vmem:[%s165 + $0x3a] sm:$0xff]
      %v615 = vld [vmem:[%s165 + $0x42] sm:$0xff]
      %v616 = vld [vmem:[%s165 + $0x4a] sm:$0xff]
      %v617 = vld [vmem:[%s165 + $0x52] sm:$0xff]
      %v618 = vld [vmem:[%s165 + $0x5a] sm:$0xff]
      %v619 = vld [vmem:[%s165 + $0x62] sm:$0xff]
      %v620 = vld [vmem:[%s165 + $0x6a] sm:$0xff]
      %v621 = vld [vmem:[%s165 + $0x72] sm:$0xff]
      %v622 = vld [vmem:[%s165 + $0x7a] sm:$0xff]
      %v623 = vld [vmem:[%s165 + $0x82] sm:$0xff]
      %v624 = vld [vmem:[%s165 + $0x8a] sm:$0xff]
      %v625 = vld [vmem:[%s165 + $0x92] sm:$0xff]
      %v626 = vld [vmem:[%s165 + $0x9a] sm:$0xff]
      %v627 = vld [vmem:[%s165 + $0xa2] sm:$0xff]
      %v628 = vld [vmem:[%s165 + $0xaa] sm:$0xff]
      %v629 = vld [vmem:[%s165 + $0xb2] sm:$0xff]
      %v630 = vld [vmem:[%s165 + $0xba] sm:$0xff]
      %v631 = vld [vmem:[%s165 + $0xc2] sm:$0xff]
      %v632 = vld [vmem:[%s165 + $0xca] sm:$0xff]
      %v633 = vld [vmem:[%s165 + $0xd2] sm:$0xff]
      %v634 = vld [vmem:[%s165 + $0xda] sm:$0xff]
      %s635 = scalar_lea.vmem %s1, 64
      %v636 = vld [vmem:[%s635] sm:$0xff]
      %v637 = vld [vmem:[%s635 + $0x8] sm:$0xff]
      %v638 = vld [vmem:[%s635 + $0x10] sm:$0xff]
      %v639 = vld [vmem:[%s635 + $0x18] sm:$0xff]
      %v641 = vsel %vm236, %v607, 0
      %v644 = vsel %vm236, %v608, 0
      %v647 = vsel %vm236, %v609, 0
      %v650 = vsel %vm236, %v610, 0
      %v653 = vsel %vm236, %v611, 0
      %v656 = vsel %vm236, %v612, 0
      %v659 = vsel %vm236, %v613, 0
      %v662 = vsel %vm236, %v614, 0
      %v665 = vsel %vm236, %v615, 0
      %v668 = vsel %vm236, %v616, 0
      %v671 = vsel %vm236, %v617, 0
      %v674 = vsel %vm236, %v618, 0
      %v677 = vsel %vm236, %v619, 0
      %v680 = vsel %vm236, %v620, 0
      %v683 = vsel %vm236, %v621, 0
      %v686 = vsel %vm236, %v622, 0
      %v689 = vsel %vm236, %v623, 0
      %v692 = vsel %vm236, %v624, 0
      %v695 = vsel %vm236, %v625, 0
      %v698 = vsel %vm236, %v626, 0
      %v701 = vsel %vm236, %v627, 0
      %v704 = vsel %vm236, %v628, 0
      %v707 = vsel %vm236, %v629, 0
      %v710 = vsel %vm236, %v630, 0
      %v713 = vsel %vm236, %v631, 0
      %v716 = vsel %vm236, %v632, 0
      %v719 = vsel %vm236, %v633, 0
      %v722 = vsel %vm236, %v634, 0
      %724 = vmatpush.msra.mxu0 0.0
      %725 = vmatpush.msra.mxu0 0.0
      %726 = vmatpush.msra.mxu0 0.0
      %727 = vmatpush.msra.mxu0 0.0
      %728 = vmatpush.msra.mxu0 0.0
      %729 = vmatpush.msra.mxu0 0.0
      %730 = vmatpush.msra.mxu0 0.0
      %731 = vmatpush.msra.mxu0 0.0
      %732 = vmatpush.msra.mxu0 0.0
      %733 = vmatpush.msra.mxu0 0.0
      %734 = vmatpush.msra.mxu0 0.0
      %735 = vmatpush.msra.mxu0 0.0
      %736 = vmatpush.msra.mxu0 %v639
      %737 = vmatpush.msra.mxu0 %v638
      %738 = vmatpush.msra.mxu0 %v637
      %739 = vmatpush.msra.mxu0 %v636
      %740 = vmatmul.f32.gmra.mxu0 %v641
      %v741 = vpop.f32.mrf.mxu0
      %v742 = vadd.f32 0.0, %v741
      %743 = vmatmul.f32.gmra.mxu0 %v644
      %v744 = vpop.f32.mrf.mxu0
      %v745 = vadd.f32 0.0, %v744
      %746 = vmatmul.f32.gmra.mxu0 %v647
      %v747 = vpop.f32.mrf.mxu0
      %v748 = vadd.f32 0.0, %v747
      %749 = vmatmul.f32.gmra.mxu0 %v650
      %v750 = vpop.f32.mrf.mxu0
      %v751 = vadd.f32 0.0, %v750
      %752 = vmatmul.f32.gmra.mxu0 %v653
      %v753 = vpop.f32.mrf.mxu0
      %v754 = vadd.f32 0.0, %v753
      %755 = vmatmul.f32.gmra.mxu0 %v656
      %v756 = vpop.f32.mrf.mxu0
      %v757 = vadd.f32 0.0, %v756
      %758 = vmatmul.f32.gmra.mxu0 %v659
      %v759 = vpop.f32.mrf.mxu0
      %v760 = vadd.f32 0.0, %v759
      %761 = vmatmul.f32.gmra.mxu0 %v662
      %v762 = vpop.f32.mrf.mxu0
      %v763 = vadd.f32 0.0, %v762
      %764 = vmatmul.f32.gmra.mxu0 %v665
      %v765 = vpop.f32.mrf.mxu0
      %v766 = vadd.f32 0.0, %v765
      %767 = vmatmul.f32.gmra.mxu0 %v668
      %v768 = vpop.f32.mrf.mxu0
      %v769 = vadd.f32 0.0, %v768
      %770 = vmatmul.f32.gmra.mxu0 %v671
      %v771 = vpop.f32.mrf.mxu0
      %v772 = vadd.f32 0.0, %v771
      %773 = vmatmul.f32.gmra.mxu0 %v674
      %v774 = vpop.f32.mrf.mxu0
      %v775 = vadd.f32 0.0, %v774
      %776 = vmatmul.f32.gmra.mxu0 %v677
      %v777 = vpop.f32.mrf.mxu0
      %v778 = vadd.f32 0.0, %v777
      %779 = vmatmul.f32.gmra.mxu0 %v680
      %v780 = vpop.f32.mrf.mxu0
      %v781 = vadd.f32 0.0, %v780
      %782 = vmatmul.f32.gmra.mxu0 %v683
      %v783 = vpop.f32.mrf.mxu0
      %v784 = vadd.f32 0.0, %v783
      %785 = vmatmul.f32.gmra.mxu0 %v686
      %v786 = vpop.f32.mrf.mxu0
      %v787 = vadd.f32 0.0, %v786
      %788 = vmatmul.f32.gmra.mxu0 %v689
      %v789 = vpop.f32.mrf.mxu0
      %v790 = vadd.f32 0.0, %v789
      %791 = vmatmul.f32.gmra.mxu0 %v692
      %v792 = vpop.f32.mrf.mxu0
      %v793 = vadd.f32 0.0, %v792
      %794 = vmatmul.f32.gmra.mxu0 %v695
      %v795 = vpop.f32.mrf.mxu0
      %v796 = vadd.f32 0.0, %v795
      %797 = vmatmul.f32.gmra.mxu0 %v698
      %v798 = vpop.f32.mrf.mxu0
      %v799 = vadd.f32 0.0, %v798
      %800 = vmatmul.f32.gmra.mxu0 %v701
      %v801 = vpop.f32.mrf.mxu0
      %v802 = vadd.f32 0.0, %v801
      %803 = vmatmul.f32.gmra.mxu0 %v704
      %v804 = vpop.f32.mrf.mxu0
      %v805 = vadd.f32 0.0, %v804
      %806 = vmatmul.f32.gmra.mxu0 %v707
      %v807 = vpop.f32.mrf.mxu0
      %v808 = vadd.f32 0.0, %v807
      %809 = vmatmul.f32.gmra.mxu0 %v710
      %v810 = vpop.f32.mrf.mxu0
      %v811 = vadd.f32 0.0, %v810
      %812 = vmatmul.f32.gmra.mxu0 %v713
      %v813 = vpop.f32.mrf.mxu0
      %v814 = vadd.f32 0.0, %v813
      %815 = vmatmul.f32.gmra.mxu0 %v716
      %v816 = vpop.f32.mrf.mxu0
      %v817 = vadd.f32 0.0, %v816
      %818 = vmatmul.f32.gmra.mxu0 %v719
      %v819 = vpop.f32.mrf.mxu0
      %v820 = vadd.f32 0.0, %v819
      %821 = vmatmul.f32.gmra.mxu0 %v722
      %v822 = vpop.f32.mrf.mxu0
      %v823 = vadd.f32 0.0, %v822
      %824 = vdwg.mxu0
      %v825 = vadd.f32 %v524, %v742
      %v826 = vadd.f32 %v527, %v745
      %v827 = vadd.f32 %v530, %v748
      %v828 = vadd.f32 %v533, %v751
      %v829 = vadd.f32 %v536, %v754
      %v830 = vadd.f32 %v539, %v757
      %v831 = vadd.f32 %v542, %v760
      %v832 = vadd.f32 %v545, %v763
      %v833 = vadd.f32 %v548, %v766
      %v834 = vadd.f32 %v551, %v769
      %v835 = vadd.f32 %v554, %v772
      %v836 = vadd.f32 %v557, %v775
      %v837 = vadd.f32 %v560, %v778
      %v838 = vadd.f32 %v563, %v781
      %v839 = vadd.f32 %v566, %v784
      %v840 = vadd.f32 %v569, %v787
      %v841 = vadd.f32 %v572, %v790
      %v842 = vadd.f32 %v575, %v793
      %v843 = vadd.f32 %v578, %v796
      %v844 = vadd.f32 %v581, %v799
      %v845 = vadd.f32 %v584, %v802
      %v846 = vadd.f32 %v587, %v805
      %v847 = vadd.f32 %v590, %v808
      %v848 = vadd.f32 %v593, %v811
      %v849 = vadd.f32 %v596, %v814
      %v850 = vadd.f32 %v599, %v817
      %v851 = vadd.f32 %v602, %v820
      %v852 = vadd.f32 %v605, %v823
      %v853 = vld [vmem:[%s165 + $0x10] sm:$0xff]
      %v854 = vld [vmem:[%s165 + $0x18] sm:$0xff]
      %v855 = vld [vmem:[%s165 + $0x20] sm:$0xff]
      %v856 = vld [vmem:[%s165 + $0x28] sm:$0xff]
      %v857 = vld [vmem:[%s165 + $0x30] sm:$0xff]
      %v858 = vld [vmem:[%s165 + $0x38] sm:$0xff]
      %v859 = vld [vmem:[%s165 + $0x40] sm:$0xff]
      %v860 = vld [vmem:[%s165 + $0x48] sm:$0xff]
      %v861 = vld [vmem:[%s165 + $0x50] sm:$0xff]
      %v862 = vld [vmem:[%s165 + $0x58] sm:$0xff]
      %v863 = vld [vmem:[%s165 + $0x60] sm:$0xff]
      %v864 = vld [vmem:[%s165 + $0x68] sm:$0xff]
      %v865 = vld [vmem:[%s165 + $0x70] sm:$0xff]
      %v866 = vld [vmem:[%s165 + $0x78] sm:$0xff]
      %v867 = vld [vmem:[%s165 + $0x80] sm:$0xff]
      %v868 = vld [vmem:[%s165 + $0x88] sm:$0xff]
      %v869 = vld [vmem:[%s165 + $0x90] sm:$0xff]
      %v870 = vld [vmem:[%s165 + $0x98] sm:$0xff]
      %v871 = vld [vmem:[%s165 + $0xa0] sm:$0xff]
      %v872 = vld [vmem:[%s165 + $0xa8] sm:$0xff]
      %v873 = vld [vmem:[%s165 + $0xb0] sm:$0xff]
      %v874 = vld [vmem:[%s165 + $0xb8] sm:$0xff]
      %v875 = vld [vmem:[%s165 + $0xc0] sm:$0xff]
      %v876 = vld [vmem:[%s165 + $0xc8] sm:$0xff]
      %v877 = vld [vmem:[%s165 + $0xd0] sm:$0xff]
      %v878 = vld [vmem:[%s165 + $0xd8] sm:$0xff]
      %v879 = vld [vmem:[%s165 + $0xe0] sm:$0xff]
      %v880 = vld [vmem:[%s165 + $0xe8] sm:$0xff]
      %s881 = scalar_lea.vmem %s1, 96
      %v882 = vld [vmem:[%s881] sm:$0xff]
      %v883 = vld [vmem:[%s881 + $0x8] sm:$0xff]
      %v884 = vld [vmem:[%s881 + $0x10] sm:$0xff]
      %v885 = vld [vmem:[%s881 + $0x18] sm:$0xff]
      %v887 = vsel %vm236, %v853, 0
      %v890 = vsel %vm236, %v854, 0
      %v893 = vsel %vm236, %v855, 0
      %v896 = vsel %vm236, %v856, 0
      %v899 = vsel %vm236, %v857, 0
      %v902 = vsel %vm236, %v858, 0
      %v905 = vsel %vm236, %v859, 0
      %v908 = vsel %vm236, %v860, 0
      %v911 = vsel %vm236, %v861, 0
      %v914 = vsel %vm236, %v862, 0
      %v917 = vsel %vm236, %v863, 0
      %v920 = vsel %vm236, %v864, 0
      %v923 = vsel %vm236, %v865, 0
      %v926 = vsel %vm236, %v866, 0
      %v929 = vsel %vm236, %v867, 0
      %v932 = vsel %vm236, %v868, 0
      %v935 = vsel %vm236, %v869, 0
      %v938 = vsel %vm236, %v870, 0
      %v941 = vsel %vm236, %v871, 0
      %v944 = vsel %vm236, %v872, 0
      %v947 = vsel %vm236, %v873, 0
      %v950 = vsel %vm236, %v874, 0
      %v953 = vsel %vm236, %v875, 0
      %v956 = vsel %vm236, %v876, 0
      %v959 = vsel %vm236, %v877, 0
      %v962 = vsel %vm236, %v878, 0
      %v965 = vsel %vm236, %v879, 0
      %v968 = vsel %vm236, %v880, 0
      %970 = vmatpush.msra.mxu0 0.0
      %971 = vmatpush.msra.mxu0 0.0
      %972 = vmatpush.msra.mxu0 0.0
      %973 = vmatpush.msra.mxu0 0.0
      %974 = vmatpush.msra.mxu0 0.0
      %975 = vmatpush.msra.mxu0 0.0
      %976 = vmatpush.msra.mxu0 0.0
      %977 = vmatpush.msra.mxu0 0.0
      %978 = vmatpush.msra.mxu0 0.0
      %979 = vmatpush.msra.mxu0 0.0
      %980 = vmatpush.msra.mxu0 0.0
      %981 = vmatpush.msra.mxu0 0.0
      %982 = vmatpush.msra.mxu0 %v885
      %983 = vmatpush.msra.mxu0 %v884
      %984 = vmatpush.msra.mxu0 %v883
      %985 = vmatpush.msra.mxu0 %v882
      %986 = vmatmul.f32.gmra.mxu0 %v887
      %v987 = vpop.f32.mrf.mxu0
      %v988 = vadd.f32 0.0, %v987
      %989 = vmatmul.f32.gmra.mxu0 %v890
      %v990 = vpop.f32.mrf.mxu0
      %v991 = vadd.f32 0.0, %v990
      %992 = vmatmul.f32.gmra.mxu0 %v893
      %v993 = vpop.f32.mrf.mxu0
      %v994 = vadd.f32 0.0, %v993
      %995 = vmatmul.f32.gmra.mxu0 %v896
      %v996 = vpop.f32.mrf.mxu0
      %v997 = vadd.f32 0.0, %v996
      %998 = vmatmul.f32.gmra.mxu0 %v899
      %v999 = vpop.f32.mrf.mxu0
      %v1000 = vadd.f32 0.0, %v999
      %1001 = vmatmul.f32.gmra.mxu0 %v902
      %v1002 = vpop.f32.mrf.mxu0
      %v1003 = vadd.f32 0.0, %v1002
      %1004 = vmatmul.f32.gmra.mxu0 %v905
      %v1005 = vpop.f32.mrf.mxu0
      %v1006 = vadd.f32 0.0, %v1005
      %1007 = vmatmul.f32.gmra.mxu0 %v908
      %v1008 = vpop.f32.mrf.mxu0
      %v1009 = vadd.f32 0.0, %v1008
      %1010 = vmatmul.f32.gmra.mxu0 %v911
      %v1011 = vpop.f32.mrf.mxu0
      %v1012 = vadd.f32 0.0, %v1011
      %1013 = vmatmul.f32.gmra.mxu0 %v914
      %v1014 = vpop.f32.mrf.mxu0
      %v1015 = vadd.f32 0.0, %v1014
      %1016 = vmatmul.f32.gmra.mxu0 %v917
      %v1017 = vpop.f32.mrf.mxu0
      %v1018 = vadd.f32 0.0, %v1017
      %1019 = vmatmul.f32.gmra.mxu0 %v920
      %v1020 = vpop.f32.mrf.mxu0
      %v1021 = vadd.f32 0.0, %v1020
      %1022 = vmatmul.f32.gmra.mxu0 %v923
      %v1023 = vpop.f32.mrf.mxu0
      %v1024 = vadd.f32 0.0, %v1023
      %1025 = vmatmul.f32.gmra.mxu0 %v926
      %v1026 = vpop.f32.mrf.mxu0
      %v1027 = vadd.f32 0.0, %v1026
      %1028 = vmatmul.f32.gmra.mxu0 %v929
      %v1029 = vpop.f32.mrf.mxu0
      %v1030 = vadd.f32 0.0, %v1029
      %1031 = vmatmul.f32.gmra.mxu0 %v932
      %v1032 = vpop.f32.mrf.mxu0
      %v1033 = vadd.f32 0.0, %v1032
      %1034 = vmatmul.f32.gmra.mxu0 %v935
      %v1035 = vpop.f32.mrf.mxu0
      %v1036 = vadd.f32 0.0, %v1035
      %1037 = vmatmul.f32.gmra.mxu0 %v938
      %v1038 = vpop.f32.mrf.mxu0
      %v1039 = vadd.f32 0.0, %v1038
      %1040 = vmatmul.f32.gmra.mxu0 %v941
      %v1041 = vpop.f32.mrf.mxu0
      %v1042 = vadd.f32 0.0, %v1041
      %1043 = vmatmul.f32.gmra.mxu0 %v944
      %v1044 = vpop.f32.mrf.mxu0
      %v1045 = vadd.f32 0.0, %v1044
      %1046 = vmatmul.f32.gmra.mxu0 %v947
      %v1047 = vpop.f32.mrf.mxu0
      %v1048 = vadd.f32 0.0, %v1047
      %1049 = vmatmul.f32.gmra.mxu0 %v950
      %v1050 = vpop.f32.mrf.mxu0
      %v1051 = vadd.f32 0.0, %v1050
      %1052 = vmatmul.f32.gmra.mxu0 %v953
      %v1053 = vpop.f32.mrf.mxu0
      %v1054 = vadd.f32 0.0, %v1053
      %1055 = vmatmul.f32.gmra.mxu0 %v956
      %v1056 = vpop.f32.mrf.mxu0
      %v1057 = vadd.f32 0.0, %v1056
      %1058 = vmatmul.f32.gmra.mxu0 %v959
      %v1059 = vpop.f32.mrf.mxu0
      %v1060 = vadd.f32 0.0, %v1059
      %1061 = vmatmul.f32.gmra.mxu0 %v962
      %v1062 = vpop.f32.mrf.mxu0
      %v1063 = vadd.f32 0.0, %v1062
      %1064 = vmatmul.f32.gmra.mxu0 %v965
      %v1065 = vpop.f32.mrf.mxu0
      %v1066 = vadd.f32 0.0, %v1065
      %1067 = vmatmul.f32.gmra.mxu0 %v968
      %v1068 = vpop.f32.mrf.mxu0
      %v1069 = vadd.f32 0.0, %v1068
      %1070 = vdwg.mxu0
      %v1071 = vadd.f32 %v825, %v988
      %v1072 = vadd.f32 %v826, %v991
      %v1073 = vadd.f32 %v827, %v994
      %v1074 = vadd.f32 %v828, %v997
      %v1075 = vadd.f32 %v829, %v1000
      %v1076 = vadd.f32 %v830, %v1003
      %v1077 = vadd.f32 %v831, %v1006
      %v1078 = vadd.f32 %v832, %v1009
      %v1079 = vadd.f32 %v833, %v1012
      %v1080 = vadd.f32 %v834, %v1015
      %v1081 = vadd.f32 %v835, %v1018
      %v1082 = vadd.f32 %v836, %v1021
      %v1083 = vadd.f32 %v837, %v1024
      %v1084 = vadd.f32 %v838, %v1027
      %v1085 = vadd.f32 %v839, %v1030
      %v1086 = vadd.f32 %v840, %v1033
      %v1087 = vadd.f32 %v841, %v1036
      %v1088 = vadd.f32 %v842, %v1039
      %v1089 = vadd.f32 %v843, %v1042
      %v1090 = vadd.f32 %v844, %v1045
      %v1091 = vadd.f32 %v845, %v1048
      %v1092 = vadd.f32 %v846, %v1051
      %v1093 = vadd.f32 %v847, %v1054
      %v1094 = vadd.f32 %v848, %v1057
      %v1095 = vadd.f32 %v849, %v1060
      %v1096 = vadd.f32 %v850, %v1063
      %v1097 = vadd.f32 %v851, %v1066
      %v1098 = vadd.f32 %v852, %v1069
      %v1099 = vld [vmem:[%s165 + $0x11] sm:$0xff]
      %v1100 = vld [vmem:[%s165 + $0x19] sm:$0xff]
      %v1101 = vld [vmem:[%s165 + $0x21] sm:$0xff]
      %v1102 = vld [vmem:[%s165 + $0x29] sm:$0xff]
      %v1103 = vld [vmem:[%s165 + $0x31] sm:$0xff]
      %v1104 = vld [vmem:[%s165 + $0x39] sm:$0xff]
      %v1105 = vld [vmem:[%s165 + $0x41] sm:$0xff]
      %v1106 = vld [vmem:[%s165 + $0x49] sm:$0xff]
      %v1107 = vld [vmem:[%s165 + $0x51] sm:$0xff]
      %v1108 = vld [vmem:[%s165 + $0x59] sm:$0xff]
      %v1109 = vld [vmem:[%s165 + $0x61] sm:$0xff]
      %v1110 = vld [vmem:[%s165 + $0x69] sm:$0xff]
      %v1111 = vld [vmem:[%s165 + $0x71] sm:$0xff]
      %v1112 = vld [vmem:[%s165 + $0x79] sm:$0xff]
      %v1113 = vld [vmem:[%s165 + $0x81] sm:$0xff]
      %v1114 = vld [vmem:[%s165 + $0x89] sm:$0xff]
      %v1115 = vld [vmem:[%s165 + $0x91] sm:$0xff]
      %v1116 = vld [vmem:[%s165 + $0x99] sm:$0xff]
      %v1117 = vld [vmem:[%s165 + $0xa1] sm:$0xff]
      %v1118 = vld [vmem:[%s165 + $0xa9] sm:$0xff]
      %v1119 = vld [vmem:[%s165 + $0xb1] sm:$0xff]
      %v1120 = vld [vmem:[%s165 + $0xb9] sm:$0xff]
      %v1121 = vld [vmem:[%s165 + $0xc1] sm:$0xff]
      %v1122 = vld [vmem:[%s165 + $0xc9] sm:$0xff]
      %v1123 = vld [vmem:[%s165 + $0xd1] sm:$0xff]
      %v1124 = vld [vmem:[%s165 + $0xd9] sm:$0xff]
      %v1125 = vld [vmem:[%s165 + $0xe1] sm:$0xff]
      %v1126 = vld [vmem:[%s165 + $0xe9] sm:$0xff]
      %s1127 = scalar_lea.vmem %s1, 128
      %v1128 = vld [vmem:[%s1127] sm:$0xff]
      %v1129 = vld [vmem:[%s1127 + $0x8] sm:$0xff]
      %v1130 = vld [vmem:[%s1127 + $0x10] sm:$0xff]
      %v1131 = vld [vmem:[%s1127 + $0x18] sm:$0xff]
      %v1133 = vsel %vm236, %v1099, 0
      %v1136 = vsel %vm236, %v1100, 0
      %v1139 = vsel %vm236, %v1101, 0
      %v1142 = vsel %vm236, %v1102, 0
      %v1145 = vsel %vm236, %v1103, 0
      %v1148 = vsel %vm236, %v1104, 0
      %v1151 = vsel %vm236, %v1105, 0
      %v1154 = vsel %vm236, %v1106, 0
      %v1157 = vsel %vm236, %v1107, 0
      %v1160 = vsel %vm236, %v1108, 0
      %v1163 = vsel %vm236, %v1109, 0
      %v1166 = vsel %vm236, %v1110, 0
      %v1169 = vsel %vm236, %v1111, 0
      %v1172 = vsel %vm236, %v1112, 0
      %v1175 = vsel %vm236, %v1113, 0
      %v1178 = vsel %vm236, %v1114, 0
      %v1181 = vsel %vm236, %v1115, 0
      %v1184 = vsel %vm236, %v1116, 0
      %v1187 = vsel %vm236, %v1117, 0
      %v1190 = vsel %vm236, %v1118, 0
      %v1193 = vsel %vm236, %v1119, 0
      %v1196 = vsel %vm236, %v1120, 0
      %v1199 = vsel %vm236, %v1121, 0
      %v1202 = vsel %vm236, %v1122, 0
      %v1205 = vsel %vm236, %v1123, 0
      %v1208 = vsel %vm236, %v1124, 0
      %v1211 = vsel %vm236, %v1125, 0
      %v1214 = vsel %vm236, %v1126, 0
      %1216 = vmatpush.msra.mxu0 0.0
      %1217 = vmatpush.msra.mxu0 0.0
      %1218 = vmatpush.msra.mxu0 0.0
      %1219 = vmatpush.msra.mxu0 0.0
      %1220 = vmatpush.msra.mxu0 0.0
      %1221 = vmatpush.msra.mxu0 0.0
      %1222 = vmatpush.msra.mxu0 0.0
      %1223 = vmatpush.msra.mxu0 0.0
      %1224 = vmatpush.msra.mxu0 0.0
      %1225 = vmatpush.msra.mxu0 0.0
      %1226 = vmatpush.msra.mxu0 0.0
      %1227 = vmatpush.msra.mxu0 0.0
      %1228 = vmatpush.msra.mxu0 %v1131
      %1229 = vmatpush.msra.mxu0 %v1130
      %1230 = vmatpush.msra.mxu0 %v1129
      %1231 = vmatpush.msra.mxu0 %v1128
      %1232 = vmatmul.f32.gmra.mxu0 %v1133
      %v1233 = vpop.f32.mrf.mxu0
      %v1234 = vadd.f32 0.0, %v1233
      %1235 = vmatmul.f32.gmra.mxu0 %v1136
      %v1236 = vpop.f32.mrf.mxu0
      %v1237 = vadd.f32 0.0, %v1236
      %1238 = vmatmul.f32.gmra.mxu0 %v1139
      %v1239 = vpop.f32.mrf.mxu0
      %v1240 = vadd.f32 0.0, %v1239
      %1241 = vmatmul.f32.gmra.mxu0 %v1142
      %v1242 = vpop.f32.mrf.mxu0
      %v1243 = vadd.f32 0.0, %v1242
      %1244 = vmatmul.f32.gmra.mxu0 %v1145
      %v1245 = vpop.f32.mrf.mxu0
      %v1246 = vadd.f32 0.0, %v1245
      %1247 = vmatmul.f32.gmra.mxu0 %v1148
      %v1248 = vpop.f32.mrf.mxu0
      %v1249 = vadd.f32 0.0, %v1248
      %1250 = vmatmul.f32.gmra.mxu0 %v1151
      %v1251 = vpop.f32.mrf.mxu0
      %v1252 = vadd.f32 0.0, %v1251
      %1253 = vmatmul.f32.gmra.mxu0 %v1154
      %v1254 = vpop.f32.mrf.mxu0
      %v1255 = vadd.f32 0.0, %v1254
      %1256 = vmatmul.f32.gmra.mxu0 %v1157
      %v1257 = vpop.f32.mrf.mxu0
      %v1258 = vadd.f32 0.0, %v1257
      %1259 = vmatmul.f32.gmra.mxu0 %v1160
      %v1260 = vpop.f32.mrf.mxu0
      %v1261 = vadd.f32 0.0, %v1260
      %1262 = vmatmul.f32.gmra.mxu0 %v1163
      %v1263 = vpop.f32.mrf.mxu0
      %v1264 = vadd.f32 0.0, %v1263
      %1265 = vmatmul.f32.gmra.mxu0 %v1166
      %v1266 = vpop.f32.mrf.mxu0
      %v1267 = vadd.f32 0.0, %v1266
      %1268 = vmatmul.f32.gmra.mxu0 %v1169
      %v1269 = vpop.f32.mrf.mxu0
      %v1270 = vadd.f32 0.0, %v1269
      %1271 = vmatmul.f32.gmra.mxu0 %v1172
      %v1272 = vpop.f32.mrf.mxu0
      %v1273 = vadd.f32 0.0, %v1272
      %1274 = vmatmul.f32.gmra.mxu0 %v1175
      %v1275 = vpop.f32.mrf.mxu0
      %v1276 = vadd.f32 0.0, %v1275
      %1277 = vmatmul.f32.gmra.mxu0 %v1178
      %v1278 = vpop.f32.mrf.mxu0
      %v1279 = vadd.f32 0.0, %v1278
      %1280 = vmatmul.f32.gmra.mxu0 %v1181
      %v1281 = vpop.f32.mrf.mxu0
      %v1282 = vadd.f32 0.0, %v1281
      %1283 = vmatmul.f32.gmra.mxu0 %v1184
      %v1284 = vpop.f32.mrf.mxu0
      %v1285 = vadd.f32 0.0, %v1284
      %1286 = vmatmul.f32.gmra.mxu0 %v1187
      %v1287 = vpop.f32.mrf.mxu0
      %v1288 = vadd.f32 0.0, %v1287
      %1289 = vmatmul.f32.gmra.mxu0 %v1190
      %v1290 = vpop.f32.mrf.mxu0
      %v1291 = vadd.f32 0.0, %v1290
      %1292 = vmatmul.f32.gmra.mxu0 %v1193
      %v1293 = vpop.f32.mrf.mxu0
      %v1294 = vadd.f32 0.0, %v1293
      %1295 = vmatmul.f32.gmra.mxu0 %v1196
      %v1296 = vpop.f32.mrf.mxu0
      %v1297 = vadd.f32 0.0, %v1296
      %1298 = vmatmul.f32.gmra.mxu0 %v1199
      %v1299 = vpop.f32.mrf.mxu0
      %v1300 = vadd.f32 0.0, %v1299
      %1301 = vmatmul.f32.gmra.mxu0 %v1202
      %v1302 = vpop.f32.mrf.mxu0
      %v1303 = vadd.f32 0.0, %v1302
      %1304 = vmatmul.f32.gmra.mxu0 %v1205
      %v1305 = vpop.f32.mrf.mxu0
      %v1306 = vadd.f32 0.0, %v1305
      %1307 = vmatmul.f32.gmra.mxu0 %v1208
      %v1308 = vpop.f32.mrf.mxu0
      %v1309 = vadd.f32 0.0, %v1308
      %1310 = vmatmul.f32.gmra.mxu0 %v1211
      %v1311 = vpop.f32.mrf.mxu0
      %v1312 = vadd.f32 0.0, %v1311
      %1313 = vmatmul.f32.gmra.mxu0 %v1214
      %v1314 = vpop.f32.mrf.mxu0
      %v1315 = vadd.f32 0.0, %v1314
      %1316 = vdwg.mxu0
      %v1317 = vadd.f32 %v1071, %v1234
      %v1318 = vadd.f32 %v1072, %v1237
      %v1319 = vadd.f32 %v1073, %v1240
      %v1320 = vadd.f32 %v1074, %v1243
      %v1321 = vadd.f32 %v1075, %v1246
      %v1322 = vadd.f32 %v1076, %v1249
      %v1323 = vadd.f32 %v1077, %v1252
      %v1324 = vadd.f32 %v1078, %v1255
      %v1325 = vadd.f32 %v1079, %v1258
      %v1326 = vadd.f32 %v1080, %v1261
      %v1327 = vadd.f32 %v1081, %v1264
      %v1328 = vadd.f32 %v1082, %v1267
      %v1329 = vadd.f32 %v1083, %v1270
      %v1330 = vadd.f32 %v1084, %v1273
      %v1331 = vadd.f32 %v1085, %v1276
      %v1332 = vadd.f32 %v1086, %v1279
      %v1333 = vadd.f32 %v1087, %v1282
      %v1334 = vadd.f32 %v1088, %v1285
      %v1335 = vadd.f32 %v1089, %v1288
      %v1336 = vadd.f32 %v1090, %v1291
      %v1337 = vadd.f32 %v1091, %v1294
      %v1338 = vadd.f32 %v1092, %v1297
      %v1339 = vadd.f32 %v1093, %v1300
      %v1340 = vadd.f32 %v1094, %v1303
      %v1341 = vadd.f32 %v1095, %v1306
      %v1342 = vadd.f32 %v1096, %v1309
      %v1343 = vadd.f32 %v1097, %v1312
      %v1344 = vadd.f32 %v1098, %v1315
      %v1345 = vld [vmem:[%s165 + $0x12] sm:$0xff]
      %v1346 = vld [vmem:[%s165 + $0x1a] sm:$0xff]
      %v1347 = vld [vmem:[%s165 + $0x22] sm:$0xff]
      %v1348 = vld [vmem:[%s165 + $0x2a] sm:$0xff]
      %v1349 = vld [vmem:[%s165 + $0x32] sm:$0xff]
      %v1350 = vld [vmem:[%s165 + $0x3a] sm:$0xff]
      %v1351 = vld [vmem:[%s165 + $0x42] sm:$0xff]
      %v1352 = vld [vmem:[%s165 + $0x4a] sm:$0xff]
      %v1353 = vld [vmem:[%s165 + $0x52] sm:$0xff]
      %v1354 = vld [vmem:[%s165 + $0x5a] sm:$0xff]
      %v1355 = vld [vmem:[%s165 + $0x62] sm:$0xff]
      %v1356 = vld [vmem:[%s165 + $0x6a] sm:$0xff]
      %v1357 = vld [vmem:[%s165 + $0x72] sm:$0xff]
      %v1358 = vld [vmem:[%s165 + $0x7a] sm:$0xff]
      %v1359 = vld [vmem:[%s165 + $0x82] sm:$0xff]
      %v1360 = vld [vmem:[%s165 + $0x8a] sm:$0xff]
      %v1361 = vld [vmem:[%s165 + $0x92] sm:$0xff]
      %v1362 = vld [vmem:[%s165 + $0x9a] sm:$0xff]
      %v1363 = vld [vmem:[%s165 + $0xa2] sm:$0xff]
      %v1364 = vld [vmem:[%s165 + $0xaa] sm:$0xff]
      %v1365 = vld [vmem:[%s165 + $0xb2] sm:$0xff]
      %v1366 = vld [vmem:[%s165 + $0xba] sm:$0xff]
      %v1367 = vld [vmem:[%s165 + $0xc2] sm:$0xff]
      %v1368 = vld [vmem:[%s165 + $0xca] sm:$0xff]
      %v1369 = vld [vmem:[%s165 + $0xd2] sm:$0xff]
      %v1370 = vld [vmem:[%s165 + $0xda] sm:$0xff]
      %v1371 = vld [vmem:[%s165 + $0xe2] sm:$0xff]
      %v1372 = vld [vmem:[%s165 + $0xea] sm:$0xff]
      %s1373 = scalar_lea.vmem %s1, 160
      %v1374 = vld [vmem:[%s1373] sm:$0xff]
      %v1375 = vld [vmem:[%s1373 + $0x8] sm:$0xff]
      %v1376 = vld [vmem:[%s1373 + $0x10] sm:$0xff]
      %v1377 = vld [vmem:[%s1373 + $0x18] sm:$0xff]
      %v1379 = vsel %vm236, %v1345, 0
      %v1382 = vsel %vm236, %v1346, 0
      %v1385 = vsel %vm236, %v1347, 0
      %v1388 = vsel %vm236, %v1348, 0
      %v1391 = vsel %vm236, %v1349, 0
      %v1394 = vsel %vm236, %v1350, 0
      %v1397 = vsel %vm236, %v1351, 0
      %v1400 = vsel %vm236, %v1352, 0
      %v1403 = vsel %vm236, %v1353, 0
      %v1406 = vsel %vm236, %v1354, 0
      %v1409 = vsel %vm236, %v1355, 0
      %v1412 = vsel %vm236, %v1356, 0
      %v1415 = vsel %vm236, %v1357, 0
      %v1418 = vsel %vm236, %v1358, 0
      %v1421 = vsel %vm236, %v1359, 0
      %v1424 = vsel %vm236, %v1360, 0
      %v1427 = vsel %vm236, %v1361, 0
      %v1430 = vsel %vm236, %v1362, 0
      %v1433 = vsel %vm236, %v1363, 0
      %v1436 = vsel %vm236, %v1364, 0
      %v1439 = vsel %vm236, %v1365, 0
      %v1442 = vsel %vm236, %v1366, 0
      %v1445 = vsel %vm236, %v1367, 0
      %v1448 = vsel %vm236, %v1368, 0
      %v1451 = vsel %vm236, %v1369, 0
      %v1454 = vsel %vm236, %v1370, 0
      %v1457 = vsel %vm236, %v1371, 0
      %v1460 = vsel %vm236, %v1372, 0
      %1462 = vmatpush.msra.mxu0 0.0
      %1463 = vmatpush.msra.mxu0 0.0
      %1464 = vmatpush.msra.mxu0 0.0
      %1465 = vmatpush.msra.mxu0 0.0
      %1466 = vmatpush.msra.mxu0 0.0
      %1467 = vmatpush.msra.mxu0 0.0
      %1468 = vmatpush.msra.mxu0 0.0
      %1469 = vmatpush.msra.mxu0 0.0
      %1470 = vmatpush.msra.mxu0 0.0
      %1471 = vmatpush.msra.mxu0 0.0
      %1472 = vmatpush.msra.mxu0 0.0
      %1473 = vmatpush.msra.mxu0 0.0
      %1474 = vmatpush.msra.mxu0 %v1377
      %1475 = vmatpush.msra.mxu0 %v1376
      %1476 = vmatpush.msra.mxu0 %v1375
      %1477 = vmatpush.msra.mxu0 %v1374
      %1478 = vmatmul.f32.gmra.mxu0 %v1379
      %v1479 = vpop.f32.mrf.mxu0
      %v1480 = vadd.f32 0.0, %v1479
      %1481 = vmatmul.f32.gmra.mxu0 %v1382
      %v1482 = vpop.f32.mrf.mxu0
      %v1483 = vadd.f32 0.0, %v1482
      %1484 = vmatmul.f32.gmra.mxu0 %v1385
      %v1485 = vpop.f32.mrf.mxu0
      %v1486 = vadd.f32 0.0, %v1485
      %1487 = vmatmul.f32.gmra.mxu0 %v1388
      %v1488 = vpop.f32.mrf.mxu0
      %v1489 = vadd.f32 0.0, %v1488
      %1490 = vmatmul.f32.gmra.mxu0 %v1391
      %v1491 = vpop.f32.mrf.mxu0
      %v1492 = vadd.f32 0.0, %v1491
      %1493 = vmatmul.f32.gmra.mxu0 %v1394
      %v1494 = vpop.f32.mrf.mxu0
      %v1495 = vadd.f32 0.0, %v1494
      %1496 = vmatmul.f32.gmra.mxu0 %v1397
      %v1497 = vpop.f32.mrf.mxu0
      %v1498 = vadd.f32 0.0, %v1497
      %1499 = vmatmul.f32.gmra.mxu0 %v1400
      %v1500 = vpop.f32.mrf.mxu0
      %v1501 = vadd.f32 0.0, %v1500
      %1502 = vmatmul.f32.gmra.mxu0 %v1403
      %v1503 = vpop.f32.mrf.mxu0
      %v1504 = vadd.f32 0.0, %v1503
      %1505 = vmatmul.f32.gmra.mxu0 %v1406
      %v1506 = vpop.f32.mrf.mxu0
      %v1507 = vadd.f32 0.0, %v1506
      %1508 = vmatmul.f32.gmra.mxu0 %v1409
      %v1509 = vpop.f32.mrf.mxu0
      %v1510 = vadd.f32 0.0, %v1509
      %1511 = vmatmul.f32.gmra.mxu0 %v1412
      %v1512 = vpop.f32.mrf.mxu0
      %v1513 = vadd.f32 0.0, %v1512
      %1514 = vmatmul.f32.gmra.mxu0 %v1415
      %v1515 = vpop.f32.mrf.mxu0
      %v1516 = vadd.f32 0.0, %v1515
      %1517 = vmatmul.f32.gmra.mxu0 %v1418
      %v1518 = vpop.f32.mrf.mxu0
      %v1519 = vadd.f32 0.0, %v1518
      %1520 = vmatmul.f32.gmra.mxu0 %v1421
      %v1521 = vpop.f32.mrf.mxu0
      %v1522 = vadd.f32 0.0, %v1521
      %1523 = vmatmul.f32.gmra.mxu0 %v1424
      %v1524 = vpop.f32.mrf.mxu0
      %v1525 = vadd.f32 0.0, %v1524
      %1526 = vmatmul.f32.gmra.mxu0 %v1427
      %v1527 = vpop.f32.mrf.mxu0
      %v1528 = vadd.f32 0.0, %v1527
      %1529 = vmatmul.f32.gmra.mxu0 %v1430
      %v1530 = vpop.f32.mrf.mxu0
      %v1531 = vadd.f32 0.0, %v1530
      %1532 = vmatmul.f32.gmra.mxu0 %v1433
      %v1533 = vpop.f32.mrf.mxu0
      %v1534 = vadd.f32 0.0, %v1533
      %1535 = vmatmul.f32.gmra.mxu0 %v1436
      %v1536 = vpop.f32.mrf.mxu0
      %v1537 = vadd.f32 0.0, %v1536
      %1538 = vmatmul.f32.gmra.mxu0 %v1439
      %v1539 = vpop.f32.mrf.mxu0
      %v1540 = vadd.f32 0.0, %v1539
      %1541 = vmatmul.f32.gmra.mxu0 %v1442
      %v1542 = vpop.f32.mrf.mxu0
      %v1543 = vadd.f32 0.0, %v1542
      %1544 = vmatmul.f32.gmra.mxu0 %v1445
      %v1545 = vpop.f32.mrf.mxu0
      %v1546 = vadd.f32 0.0, %v1545
      %1547 = vmatmul.f32.gmra.mxu0 %v1448
      %v1548 = vpop.f32.mrf.mxu0
      %v1549 = vadd.f32 0.0, %v1548
      %1550 = vmatmul.f32.gmra.mxu0 %v1451
      %v1551 = vpop.f32.mrf.mxu0
      %v1552 = vadd.f32 0.0, %v1551
      %1553 = vmatmul.f32.gmra.mxu0 %v1454
      %v1554 = vpop.f32.mrf.mxu0
      %v1555 = vadd.f32 0.0, %v1554
      %1556 = vmatmul.f32.gmra.mxu0 %v1457
      %v1557 = vpop.f32.mrf.mxu0
      %v1558 = vadd.f32 0.0, %v1557
      %1559 = vmatmul.f32.gmra.mxu0 %v1460
      %v1560 = vpop.f32.mrf.mxu0
      %v1561 = vadd.f32 0.0, %v1560
      %1562 = vdwg.mxu0
      %v1563 = vadd.f32 %v1317, %v1480
      %v1564 = vadd.f32 %v1318, %v1483
      %v1565 = vadd.f32 %v1319, %v1486
      %v1566 = vadd.f32 %v1320, %v1489
      %v1567 = vadd.f32 %v1321, %v1492
      %v1568 = vadd.f32 %v1322, %v1495
      %v1569 = vadd.f32 %v1323, %v1498
      %v1570 = vadd.f32 %v1324, %v1501
      %v1571 = vadd.f32 %v1325, %v1504
      %v1572 = vadd.f32 %v1326, %v1507
      %v1573 = vadd.f32 %v1327, %v1510
      %v1574 = vadd.f32 %v1328, %v1513
      %v1575 = vadd.f32 %v1329, %v1516
      %v1576 = vadd.f32 %v1330, %v1519
      %v1577 = vadd.f32 %v1331, %v1522
      %v1578 = vadd.f32 %v1332, %v1525
      %v1579 = vadd.f32 %v1333, %v1528
      %v1580 = vadd.f32 %v1334, %v1531
      %v1581 = vadd.f32 %v1335, %v1534
      %v1582 = vadd.f32 %v1336, %v1537
      %v1583 = vadd.f32 %v1337, %v1540
      %v1584 = vadd.f32 %v1338, %v1543
      %v1585 = vadd.f32 %v1339, %v1546
      %v1586 = vadd.f32 %v1340, %v1549
      %v1587 = vadd.f32 %v1341, %v1552
      %v1588 = vadd.f32 %v1342, %v1555
      %v1589 = vadd.f32 %v1343, %v1558
      %v1590 = vadd.f32 %v1344, %v1561
      %v1591 = vld [vmem:[%s165 + $0x20] sm:$0xff]
      %v1592 = vld [vmem:[%s165 + $0x28] sm:$0xff]
      %v1593 = vld [vmem:[%s165 + $0x30] sm:$0xff]
      %v1594 = vld [vmem:[%s165 + $0x38] sm:$0xff]
      %v1595 = vld [vmem:[%s165 + $0x40] sm:$0xff]
      %v1596 = vld [vmem:[%s165 + $0x48] sm:$0xff]
      %v1597 = vld [vmem:[%s165 + $0x50] sm:$0xff]
      %v1598 = vld [vmem:[%s165 + $0x58] sm:$0xff]
      %v1599 = vld [vmem:[%s165 + $0x60] sm:$0xff]
      %v1600 = vld [vmem:[%s165 + $0x68] sm:$0xff]
      %v1601 = vld [vmem:[%s165 + $0x70] sm:$0xff]
      %v1602 = vld [vmem:[%s165 + $0x78] sm:$0xff]
      %v1603 = vld [vmem:[%s165 + $0x80] sm:$0xff]
      %v1604 = vld [vmem:[%s165 + $0x88] sm:$0xff]
      %v1605 = vld [vmem:[%s165 + $0x90] sm:$0xff]
      %v1606 = vld [vmem:[%s165 + $0x98] sm:$0xff]
      %v1607 = vld [vmem:[%s165 + $0xa0] sm:$0xff]
      %v1608 = vld [vmem:[%s165 + $0xa8] sm:$0xff]
      %v1609 = vld [vmem:[%s165 + $0xb0] sm:$0xff]
      %v1610 = vld [vmem:[%s165 + $0xb8] sm:$0xff]
      %v1611 = vld [vmem:[%s165 + $0xc0] sm:$0xff]
      %v1612 = vld [vmem:[%s165 + $0xc8] sm:$0xff]
      %v1613 = vld [vmem:[%s165 + $0xd0] sm:$0xff]
      %v1614 = vld [vmem:[%s165 + $0xd8] sm:$0xff]
      %v1615 = vld [vmem:[%s165 + $0xe0] sm:$0xff]
      %v1616 = vld [vmem:[%s165 + $0xe8] sm:$0xff]
      %v1617 = vld [vmem:[%s165 + $0xf0] sm:$0xff]
      %v1618 = vld [vmem:[%s165 + $0xf8] sm:$0xff]
      %s1619 = scalar_lea.vmem %s1, 192
      %v1620 = vld [vmem:[%s1619] sm:$0xff]
      %v1621 = vld [vmem:[%s1619 + $0x8] sm:$0xff]
      %v1622 = vld [vmem:[%s1619 + $0x10] sm:$0xff]
      %v1623 = vld [vmem:[%s1619 + $0x18] sm:$0xff]
      %v1625 = vsel %vm236, %v1591, 0
      %v1628 = vsel %vm236, %v1592, 0
      %v1631 = vsel %vm236, %v1593, 0
      %v1634 = vsel %vm236, %v1594, 0
      %v1637 = vsel %vm236, %v1595, 0
      %v1640 = vsel %vm236, %v1596, 0
      %v1643 = vsel %vm236, %v1597, 0
      %v1646 = vsel %vm236, %v1598, 0
      %v1649 = vsel %vm236, %v1599, 0
      %v1652 = vsel %vm236, %v1600, 0
      %v1655 = vsel %vm236, %v1601, 0
      %v1658 = vsel %vm236, %v1602, 0
      %v1661 = vsel %vm236, %v1603, 0
      %v1664 = vsel %vm236, %v1604, 0
      %v1667 = vsel %vm236, %v1605, 0
      %v1670 = vsel %vm236, %v1606, 0
      %v1673 = vsel %vm236, %v1607, 0
      %v1676 = vsel %vm236, %v1608, 0
      %v1679 = vsel %vm236, %v1609, 0
      %v1682 = vsel %vm236, %v1610, 0
      %v1685 = vsel %vm236, %v1611, 0
      %v1688 = vsel %vm236, %v1612, 0
      %v1691 = vsel %vm236, %v1613, 0
      %v1694 = vsel %vm236, %v1614, 0
      %v1697 = vsel %vm236, %v1615, 0
      %v1700 = vsel %vm236, %v1616, 0
      %v1703 = vsel %vm236, %v1617, 0
      %v1706 = vsel %vm236, %v1618, 0
      %1708 = vmatpush.msra.mxu0 0.0
      %1709 = vmatpush.msra.mxu0 0.0
      %1710 = vmatpush.msra.mxu0 0.0
      %1711 = vmatpush.msra.mxu0 0.0
      %1712 = vmatpush.msra.mxu0 0.0
      %1713 = vmatpush.msra.mxu0 0.0
      %1714 = vmatpush.msra.mxu0 0.0
      %1715 = vmatpush.msra.mxu0 0.0
      %1716 = vmatpush.msra.mxu0 0.0
      %1717 = vmatpush.msra.mxu0 0.0
      %1718 = vmatpush.msra.mxu0 0.0
      %1719 = vmatpush.msra.mxu0 0.0
      %1720 = vmatpush.msra.mxu0 %v1623
      %1721 = vmatpush.msra.mxu0 %v1622
      %1722 = vmatpush.msra.mxu0 %v1621
      %1723 = vmatpush.msra.mxu0 %v1620
      %1724 = vmatmul.f32.gmra.mxu0 %v1625
      %v1725 = vpop.f32.mrf.mxu0
      %v1726 = vadd.f32 0.0, %v1725
      %1727 = vmatmul.f32.gmra.mxu0 %v1628
      %v1728 = vpop.f32.mrf.mxu0
      %v1729 = vadd.f32 0.0, %v1728
      %1730 = vmatmul.f32.gmra.mxu0 %v1631
      %v1731 = vpop.f32.mrf.mxu0
      %v1732 = vadd.f32 0.0, %v1731
      %1733 = vmatmul.f32.gmra.mxu0 %v1634
      %v1734 = vpop.f32.mrf.mxu0
      %v1735 = vadd.f32 0.0, %v1734
      %1736 = vmatmul.f32.gmra.mxu0 %v1637
      %v1737 = vpop.f32.mrf.mxu0
      %v1738 = vadd.f32 0.0, %v1737
      %1739 = vmatmul.f32.gmra.mxu0 %v1640
      %v1740 = vpop.f32.mrf.mxu0
      %v1741 = vadd.f32 0.0, %v1740
      %1742 = vmatmul.f32.gmra.mxu0 %v1643
      %v1743 = vpop.f32.mrf.mxu0
      %v1744 = vadd.f32 0.0, %v1743
      %1745 = vmatmul.f32.gmra.mxu0 %v1646
      %v1746 = vpop.f32.mrf.mxu0
      %v1747 = vadd.f32 0.0, %v1746
      %1748 = vmatmul.f32.gmra.mxu0 %v1649
      %v1749 = vpop.f32.mrf.mxu0
      %v1750 = vadd.f32 0.0, %v1749
      %1751 = vmatmul.f32.gmra.mxu0 %v1652
      %v1752 = vpop.f32.mrf.mxu0
      %v1753 = vadd.f32 0.0, %v1752
      %1754 = vmatmul.f32.gmra.mxu0 %v1655
      %v1755 = vpop.f32.mrf.mxu0
      %v1756 = vadd.f32 0.0, %v1755
      %1757 = vmatmul.f32.gmra.mxu0 %v1658
      %v1758 = vpop.f32.mrf.mxu0
      %v1759 = vadd.f32 0.0, %v1758
      %1760 = vmatmul.f32.gmra.mxu0 %v1661
      %v1761 = vpop.f32.mrf.mxu0
      %v1762 = vadd.f32 0.0, %v1761
      %1763 = vmatmul.f32.gmra.mxu0 %v1664
      %v1764 = vpop.f32.mrf.mxu0
      %v1765 = vadd.f32 0.0, %v1764
      %1766 = vmatmul.f32.gmra.mxu0 %v1667
      %v1767 = vpop.f32.mrf.mxu0
      %v1768 = vadd.f32 0.0, %v1767
      %1769 = vmatmul.f32.gmra.mxu0 %v1670
      %v1770 = vpop.f32.mrf.mxu0
      %v1771 = vadd.f32 0.0, %v1770
      %1772 = vmatmul.f32.gmra.mxu0 %v1673
      %v1773 = vpop.f32.mrf.mxu0
      %v1774 = vadd.f32 0.0, %v1773
      %1775 = vmatmul.f32.gmra.mxu0 %v1676
      %v1776 = vpop.f32.mrf.mxu0
      %v1777 = vadd.f32 0.0, %v1776
      %1778 = vmatmul.f32.gmra.mxu0 %v1679
      %v1779 = vpop.f32.mrf.mxu0
      %v1780 = vadd.f32 0.0, %v1779
      %1781 = vmatmul.f32.gmra.mxu0 %v1682
      %v1782 = vpop.f32.mrf.mxu0
      %v1783 = vadd.f32 0.0, %v1782
      %1784 = vmatmul.f32.gmra.mxu0 %v1685
      %v1785 = vpop.f32.mrf.mxu0
      %v1786 = vadd.f32 0.0, %v1785
      %1787 = vmatmul.f32.gmra.mxu0 %v1688
      %v1788 = vpop.f32.mrf.mxu0
      %v1789 = vadd.f32 0.0, %v1788
      %1790 = vmatmul.f32.gmra.mxu0 %v1691
      %v1791 = vpop.f32.mrf.mxu0
      %v1792 = vadd.f32 0.0, %v1791
      %1793 = vmatmul.f32.gmra.mxu0 %v1694
      %v1794 = vpop.f32.mrf.mxu0
      %v1795 = vadd.f32 0.0, %v1794
      %1796 = vmatmul.f32.gmra.mxu0 %v1697
      %v1797 = vpop.f32.mrf.mxu0
      %v1798 = vadd.f32 0.0, %v1797
      %1799 = vmatmul.f32.gmra.mxu0 %v1700
      %v1800 = vpop.f32.mrf.mxu0
      %v1801 = vadd.f32 0.0, %v1800
      %1802 = vmatmul.f32.gmra.mxu0 %v1703
      %v1803 = vpop.f32.mrf.mxu0
      %v1804 = vadd.f32 0.0, %v1803
      %1805 = vmatmul.f32.gmra.mxu0 %v1706
      %v1806 = vpop.f32.mrf.mxu0
      %v1807 = vadd.f32 0.0, %v1806
      %1808 = vdwg.mxu0
      %v1809 = vadd.f32 %v1563, %v1726
      %v1810 = vadd.f32 %v1564, %v1729
      %v1811 = vadd.f32 %v1565, %v1732
      %v1812 = vadd.f32 %v1566, %v1735
      %v1813 = vadd.f32 %v1567, %v1738
      %v1814 = vadd.f32 %v1568, %v1741
      %v1815 = vadd.f32 %v1569, %v1744
      %v1816 = vadd.f32 %v1570, %v1747
      %v1817 = vadd.f32 %v1571, %v1750
      %v1818 = vadd.f32 %v1572, %v1753
      %v1819 = vadd.f32 %v1573, %v1756
      %v1820 = vadd.f32 %v1574, %v1759
      %v1821 = vadd.f32 %v1575, %v1762
      %v1822 = vadd.f32 %v1576, %v1765
      %v1823 = vadd.f32 %v1577, %v1768
      %v1824 = vadd.f32 %v1578, %v1771
      %v1825 = vadd.f32 %v1579, %v1774
      %v1826 = vadd.f32 %v1580, %v1777
      %v1827 = vadd.f32 %v1581, %v1780
      %v1828 = vadd.f32 %v1582, %v1783
      %v1829 = vadd.f32 %v1583, %v1786
      %v1830 = vadd.f32 %v1584, %v1789
      %v1831 = vadd.f32 %v1585, %v1792
      %v1832 = vadd.f32 %v1586, %v1795
      %v1833 = vadd.f32 %v1587, %v1798
      %v1834 = vadd.f32 %v1588, %v1801
      %v1835 = vadd.f32 %v1589, %v1804
      %v1836 = vadd.f32 %v1590, %v1807
      %v1837 = vld [vmem:[%s165 + $0x21] sm:$0xff]
      %v1838 = vld [vmem:[%s165 + $0x29] sm:$0xff]
      %v1839 = vld [vmem:[%s165 + $0x31] sm:$0xff]
      %v1840 = vld [vmem:[%s165 + $0x39] sm:$0xff]
      %v1841 = vld [vmem:[%s165 + $0x41] sm:$0xff]
      %v1842 = vld [vmem:[%s165 + $0x49] sm:$0xff]
      %v1843 = vld [vmem:[%s165 + $0x51] sm:$0xff]
      %v1844 = vld [vmem:[%s165 + $0x59] sm:$0xff]
      %v1845 = vld [vmem:[%s165 + $0x61] sm:$0xff]
      %v1846 = vld [vmem:[%s165 + $0x69] sm:$0xff]
      %v1847 = vld [vmem:[%s165 + $0x71] sm:$0xff]
      %v1848 = vld [vmem:[%s165 + $0x79] sm:$0xff]
      %v1849 = vld [vmem:[%s165 + $0x81] sm:$0xff]
      %v1850 = vld [vmem:[%s165 + $0x89] sm:$0xff]
      %v1851 = vld [vmem:[%s165 + $0x91] sm:$0xff]
      %v1852 = vld [vmem:[%s165 + $0x99] sm:$0xff]
      %v1853 = vld [vmem:[%s165 + $0xa1] sm:$0xff]
      %v1854 = vld [vmem:[%s165 + $0xa9] sm:$0xff]
      %v1855 = vld [vmem:[%s165 + $0xb1] sm:$0xff]
      %v1856 = vld [vmem:[%s165 + $0xb9] sm:$0xff]
      %v1857 = vld [vmem:[%s165 + $0xc1] sm:$0xff]
      %v1858 = vld [vmem:[%s165 + $0xc9] sm:$0xff]
      %v1859 = vld [vmem:[%s165 + $0xd1] sm:$0xff]
      %v1860 = vld [vmem:[%s165 + $0xd9] sm:$0xff]
      %v1861 = vld [vmem:[%s165 + $0xe1] sm:$0xff]
      %v1862 = vld [vmem:[%s165 + $0xe9] sm:$0xff]
      %v1863 = vld [vmem:[%s165 + $0xf1] sm:$0xff]
      %v1864 = vld [vmem:[%s165 + $0xf9] sm:$0xff]
      %s1865 = scalar_lea.vmem %s1, 224
      %v1866 = vld [vmem:[%s1865] sm:$0xff]
      %v1867 = vld [vmem:[%s1865 + $0x8] sm:$0xff]
      %v1868 = vld [vmem:[%s1865 + $0x10] sm:$0xff]
      %v1869 = vld [vmem:[%s1865 + $0x18] sm:$0xff]
      %v1871 = vsel %vm236, %v1837, 0
      %v1874 = vsel %vm236, %v1838, 0
      %v1877 = vsel %vm236, %v1839, 0
      %v1880 = vsel %vm236, %v1840, 0
      %v1883 = vsel %vm236, %v1841, 0
      %v1886 = vsel %vm236, %v1842, 0
      %v1889 = vsel %vm236, %v1843, 0
      %v1892 = vsel %vm236, %v1844, 0
      %v1895 = vsel %vm236, %v1845, 0
      %v1898 = vsel %vm236, %v1846, 0
      %v1901 = vsel %vm236, %v1847, 0
      %v1904 = vsel %vm236, %v1848, 0
      %v1907 = vsel %vm236, %v1849, 0
      %v1910 = vsel %vm236, %v1850, 0
      %v1913 = vsel %vm236, %v1851, 0
      %v1916 = vsel %vm236, %v1852, 0
      %v1919 = vsel %vm236, %v1853, 0
      %v1922 = vsel %vm236, %v1854, 0
      %v1925 = vsel %vm236, %v1855, 0
      %v1928 = vsel %vm236, %v1856, 0
      %v1931 = vsel %vm236, %v1857, 0
      %v1934 = vsel %vm236, %v1858, 0
      %v1937 = vsel %vm236, %v1859, 0
      %v1940 = vsel %vm236, %v1860, 0
      %v1943 = vsel %vm236, %v1861, 0
      %v1946 = vsel %vm236, %v1862, 0
      %v1949 = vsel %vm236, %v1863, 0
      %v1952 = vsel %vm236, %v1864, 0
      %1954 = vmatpush.msra.mxu0 0.0
      %1955 = vmatpush.msra.mxu0 0.0
      %1956 = vmatpush.msra.mxu0 0.0
      %1957 = vmatpush.msra.mxu0 0.0
      %1958 = vmatpush.msra.mxu0 0.0
      %1959 = vmatpush.msra.mxu0 0.0
      %1960 = vmatpush.msra.mxu0 0.0
      %1961 = vmatpush.msra.mxu0 0.0
      %1962 = vmatpush.msra.mxu0 0.0
      %1963 = vmatpush.msra.mxu0 0.0
      %1964 = vmatpush.msra.mxu0 0.0
      %1965 = vmatpush.msra.mxu0 0.0
      %1966 = vmatpush.msra.mxu0 %v1869
      %1967 = vmatpush.msra.mxu0 %v1868
      %1968 = vmatpush.msra.mxu0 %v1867
      %1969 = vmatpush.msra.mxu0 %v1866
      %1970 = vmatmul.f32.gmra.mxu0 %v1871
      %v1971 = vpop.f32.mrf.mxu0
      %v1972 = vadd.f32 0.0, %v1971
      %1973 = vmatmul.f32.gmra.mxu0 %v1874
      %v1974 = vpop.f32.mrf.mxu0
      %v1975 = vadd.f32 0.0, %v1974
      %1976 = vmatmul.f32.gmra.mxu0 %v1877
      %v1977 = vpop.f32.mrf.mxu0
      %v1978 = vadd.f32 0.0, %v1977
      %1979 = vmatmul.f32.gmra.mxu0 %v1880
      %v1980 = vpop.f32.mrf.mxu0
      %v1981 = vadd.f32 0.0, %v1980
      %1982 = vmatmul.f32.gmra.mxu0 %v1883
      %v1983 = vpop.f32.mrf.mxu0
      %v1984 = vadd.f32 0.0, %v1983
      %1985 = vmatmul.f32.gmra.mxu0 %v1886
      %v1986 = vpop.f32.mrf.mxu0
      %v1987 = vadd.f32 0.0, %v1986
      %1988 = vmatmul.f32.gmra.mxu0 %v1889
      %v1989 = vpop.f32.mrf.mxu0
      %v1990 = vadd.f32 0.0, %v1989
      %1991 = vmatmul.f32.gmra.mxu0 %v1892
      %v1992 = vpop.f32.mrf.mxu0
      %v1993 = vadd.f32 0.0, %v1992
      %1994 = vmatmul.f32.gmra.mxu0 %v1895
      %v1995 = vpop.f32.mrf.mxu0
      %v1996 = vadd.f32 0.0, %v1995
      %1997 = vmatmul.f32.gmra.mxu0 %v1898
      %v1998 = vpop.f32.mrf.mxu0
      %v1999 = vadd.f32 0.0, %v1998
      %2000 = vmatmul.f32.gmra.mxu0 %v1901
      %v2001 = vpop.f32.mrf.mxu0
      %v2002 = vadd.f32 0.0, %v2001
      %2003 = vmatmul.f32.gmra.mxu0 %v1904
      %v2004 = vpop.f32.mrf.mxu0
      %v2005 = vadd.f32 0.0, %v2004
      %2006 = vmatmul.f32.gmra.mxu0 %v1907
      %v2007 = vpop.f32.mrf.mxu0
      %v2008 = vadd.f32 0.0, %v2007
      %2009 = vmatmul.f32.gmra.mxu0 %v1910
      %v2010 = vpop.f32.mrf.mxu0
      %v2011 = vadd.f32 0.0, %v2010
      %2012 = vmatmul.f32.gmra.mxu0 %v1913
      %v2013 = vpop.f32.mrf.mxu0
      %v2014 = vadd.f32 0.0, %v2013
      %2015 = vmatmul.f32.gmra.mxu0 %v1916
      %v2016 = vpop.f32.mrf.mxu0
      %v2017 = vadd.f32 0.0, %v2016
      %2018 = vmatmul.f32.gmra.mxu0 %v1919
      %v2019 = vpop.f32.mrf.mxu0
      %v2020 = vadd.f32 0.0, %v2019
      %2021 = vmatmul.f32.gmra.mxu0 %v1922
      %v2022 = vpop.f32.mrf.mxu0
      %v2023 = vadd.f32 0.0, %v2022
      %2024 = vmatmul.f32.gmra.mxu0 %v1925
      %v2025 = vpop.f32.mrf.mxu0
      %v2026 = vadd.f32 0.0, %v2025
      %2027 = vmatmul.f32.gmra.mxu0 %v1928
      %v2028 = vpop.f32.mrf.mxu0
      %v2029 = vadd.f32 0.0, %v2028
      %2030 = vmatmul.f32.gmra.mxu0 %v1931
      %v2031 = vpop.f32.mrf.mxu0
      %v2032 = vadd.f32 0.0, %v2031
      %2033 = vmatmul.f32.gmra.mxu0 %v1934
      %v2034 = vpop.f32.mrf.mxu0
      %v2035 = vadd.f32 0.0, %v2034
      %2036 = vmatmul.f32.gmra.mxu0 %v1937
      %v2037 = vpop.f32.mrf.mxu0
      %v2038 = vadd.f32 0.0, %v2037
      %2039 = vmatmul.f32.gmra.mxu0 %v1940
      %v2040 = vpop.f32.mrf.mxu0
      %v2041 = vadd.f32 0.0, %v2040
      %2042 = vmatmul.f32.gmra.mxu0 %v1943
      %v2043 = vpop.f32.mrf.mxu0
      %v2044 = vadd.f32 0.0, %v2043
      %2045 = vmatmul.f32.gmra.mxu0 %v1946
      %v2046 = vpop.f32.mrf.mxu0
      %v2047 = vadd.f32 0.0, %v2046
      %2048 = vmatmul.f32.gmra.mxu0 %v1949
      %v2049 = vpop.f32.mrf.mxu0
      %v2050 = vadd.f32 0.0, %v2049
      %2051 = vmatmul.f32.gmra.mxu0 %v1952
      %v2052 = vpop.f32.mrf.mxu0
      %v2053 = vadd.f32 0.0, %v2052
      %2054 = vdwg.mxu0
      %v2055 = vadd.f32 %v1809, %v1972
      %v2056 = vadd.f32 %v1810, %v1975
      %v2057 = vadd.f32 %v1811, %v1978
      %v2058 = vadd.f32 %v1812, %v1981
      %v2059 = vadd.f32 %v1813, %v1984
      %v2060 = vadd.f32 %v1814, %v1987
      %v2061 = vadd.f32 %v1815, %v1990
      %v2062 = vadd.f32 %v1816, %v1993
      %v2063 = vadd.f32 %v1817, %v1996
      %v2064 = vadd.f32 %v1818, %v1999
      %v2065 = vadd.f32 %v1819, %v2002
      %v2066 = vadd.f32 %v1820, %v2005
      %v2067 = vadd.f32 %v1821, %v2008
      %v2068 = vadd.f32 %v1822, %v2011
      %v2069 = vadd.f32 %v1823, %v2014
      %v2070 = vadd.f32 %v1824, %v2017
      %v2071 = vadd.f32 %v1825, %v2020
      %v2072 = vadd.f32 %v1826, %v2023
      %v2073 = vadd.f32 %v1827, %v2026
      %v2074 = vadd.f32 %v1828, %v2029
      %v2075 = vadd.f32 %v1829, %v2032
      %v2076 = vadd.f32 %v1830, %v2035
      %v2077 = vadd.f32 %v1831, %v2038
      %v2078 = vadd.f32 %v1832, %v2041
      %v2079 = vadd.f32 %v1833, %v2044
      %v2080 = vadd.f32 %v1834, %v2047
      %v2081 = vadd.f32 %v1835, %v2050
      %v2082 = vadd.f32 %v1836, %v2053
      %v2083 = vld [vmem:[%s165 + $0x22] sm:$0xff]
      %v2084 = vld [vmem:[%s165 + $0x2a] sm:$0xff]
      %v2085 = vld [vmem:[%s165 + $0x32] sm:$0xff]
      %v2086 = vld [vmem:[%s165 + $0x3a] sm:$0xff]
      %v2087 = vld [vmem:[%s165 + $0x42] sm:$0xff]
      %v2088 = vld [vmem:[%s165 + $0x4a] sm:$0xff]
      %v2089 = vld [vmem:[%s165 + $0x52] sm:$0xff]
      %v2090 = vld [vmem:[%s165 + $0x5a] sm:$0xff]
      %v2091 = vld [vmem:[%s165 + $0x62] sm:$0xff]
      %v2092 = vld [vmem:[%s165 + $0x6a] sm:$0xff]
      %v2093 = vld [vmem:[%s165 + $0x72] sm:$0xff]
      %v2094 = vld [vmem:[%s165 + $0x7a] sm:$0xff]
      %v2095 = vld [vmem:[%s165 + $0x82] sm:$0xff]
      %v2096 = vld [vmem:[%s165 + $0x8a] sm:$0xff]
      %v2097 = vld [vmem:[%s165 + $0x92] sm:$0xff]
      %v2098 = vld [vmem:[%s165 + $0x9a] sm:$0xff]
      %v2099 = vld [vmem:[%s165 + $0xa2] sm:$0xff]
      %v2100 = vld [vmem:[%s165 + $0xaa] sm:$0xff]
      %v2101 = vld [vmem:[%s165 + $0xb2] sm:$0xff]
      %v2102 = vld [vmem:[%s165 + $0xba] sm:$0xff]
      %v2103 = vld [vmem:[%s165 + $0xc2] sm:$0xff]
      %v2104 = vld [vmem:[%s165 + $0xca] sm:$0xff]
      %v2105 = vld [vmem:[%s165 + $0xd2] sm:$0xff]
      %v2106 = vld [vmem:[%s165 + $0xda] sm:$0xff]
      %v2107 = vld [vmem:[%s165 + $0xe2] sm:$0xff]
      %v2108 = vld [vmem:[%s165 + $0xea] sm:$0xff]
      %v2109 = vld [vmem:[%s165 + $0xf2] sm:$0xff]
      %v2110 = vld [vmem:[%s165 + $0xfa] sm:$0xff]
      %s2111 = scalar_lea.vmem %s1, 256
      %v2112 = vld [vmem:[%s2111] sm:$0xff]
      %v2113 = vld [vmem:[%s2111 + $0x8] sm:$0xff]
      %v2114 = vld [vmem:[%s2111 + $0x10] sm:$0xff]
      %v2115 = vld [vmem:[%s2111 + $0x18] sm:$0xff]
      %v2117 = vsel %vm236, %v2083, 0
      %v2120 = vsel %vm236, %v2084, 0
      %v2123 = vsel %vm236, %v2085, 0
      %v2126 = vsel %vm236, %v2086, 0
      %v2129 = vsel %vm236, %v2087, 0
      %v2132 = vsel %vm236, %v2088, 0
      %v2135 = vsel %vm236, %v2089, 0
      %v2138 = vsel %vm236, %v2090, 0
      %v2141 = vsel %vm236, %v2091, 0
      %v2144 = vsel %vm236, %v2092, 0
      %v2147 = vsel %vm236, %v2093, 0
      %v2150 = vsel %vm236, %v2094, 0
      %v2153 = vsel %vm236, %v2095, 0
      %v2156 = vsel %vm236, %v2096, 0
      %v2159 = vsel %vm236, %v2097, 0
      %v2162 = vsel %vm236, %v2098, 0
      %v2165 = vsel %vm236, %v2099, 0
      %v2168 = vsel %vm236, %v2100, 0
      %v2171 = vsel %vm236, %v2101, 0
      %v2174 = vsel %vm236, %v2102, 0
      %v2177 = vsel %vm236, %v2103, 0
      %v2180 = vsel %vm236, %v2104, 0
      %v2183 = vsel %vm236, %v2105, 0
      %v2186 = vsel %vm236, %v2106, 0
      %v2189 = vsel %vm236, %v2107, 0
      %v2192 = vsel %vm236, %v2108, 0
      %v2195 = vsel %vm236, %v2109, 0
      %v2198 = vsel %vm236, %v2110, 0
      %2200 = vmatpush.msra.mxu0 0.0
      %2201 = vmatpush.msra.mxu0 0.0
      %2202 = vmatpush.msra.mxu0 0.0
      %2203 = vmatpush.msra.mxu0 0.0
      %2204 = vmatpush.msra.mxu0 0.0
      %2205 = vmatpush.msra.mxu0 0.0
      %2206 = vmatpush.msra.mxu0 0.0
      %2207 = vmatpush.msra.mxu0 0.0
      %2208 = vmatpush.msra.mxu0 0.0
      %2209 = vmatpush.msra.mxu0 0.0
      %2210 = vmatpush.msra.mxu0 0.0
      %2211 = vmatpush.msra.mxu0 0.0
      %2212 = vmatpush.msra.mxu0 %v2115
      %2213 = vmatpush.msra.mxu0 %v2114
      %2214 = vmatpush.msra.mxu0 %v2113
      %2215 = vmatpush.msra.mxu0 %v2112
      %2216 = vmatmul.f32.gmra.mxu0 %v2117
      %v2217 = vpop.f32.mrf.mxu0
      %v2218 = vadd.f32 0.0, %v2217
      %2219 = vmatmul.f32.gmra.mxu0 %v2120
      %v2220 = vpop.f32.mrf.mxu0
      %v2221 = vadd.f32 0.0, %v2220
      %2222 = vmatmul.f32.gmra.mxu0 %v2123
      %v2223 = vpop.f32.mrf.mxu0
      %v2224 = vadd.f32 0.0, %v2223
      %2225 = vmatmul.f32.gmra.mxu0 %v2126
      %v2226 = vpop.f32.mrf.mxu0
      %v2227 = vadd.f32 0.0, %v2226
      %2228 = vmatmul.f32.gmra.mxu0 %v2129
      %v2229 = vpop.f32.mrf.mxu0
      %v2230 = vadd.f32 0.0, %v2229
      %2231 = vmatmul.f32.gmra.mxu0 %v2132
      %v2232 = vpop.f32.mrf.mxu0
      %v2233 = vadd.f32 0.0, %v2232
      %2234 = vmatmul.f32.gmra.mxu0 %v2135
      %v2235 = vpop.f32.mrf.mxu0
      %v2236 = vadd.f32 0.0, %v2235
      %2237 = vmatmul.f32.gmra.mxu0 %v2138
      %v2238 = vpop.f32.mrf.mxu0
      %v2239 = vadd.f32 0.0, %v2238
      %2240 = vmatmul.f32.gmra.mxu0 %v2141
      %v2241 = vpop.f32.mrf.mxu0
      %v2242 = vadd.f32 0.0, %v2241
      %2243 = vmatmul.f32.gmra.mxu0 %v2144
      %v2244 = vpop.f32.mrf.mxu0
      %v2245 = vadd.f32 0.0, %v2244
      %2246 = vmatmul.f32.gmra.mxu0 %v2147
      %v2247 = vpop.f32.mrf.mxu0
      %v2248 = vadd.f32 0.0, %v2247
      %2249 = vmatmul.f32.gmra.mxu0 %v2150
      %v2250 = vpop.f32.mrf.mxu0
      %v2251 = vadd.f32 0.0, %v2250
      %2252 = vmatmul.f32.gmra.mxu0 %v2153
      %v2253 = vpop.f32.mrf.mxu0
      %v2254 = vadd.f32 0.0, %v2253
      %2255 = vmatmul.f32.gmra.mxu0 %v2156
      %v2256 = vpop.f32.mrf.mxu0
      %v2257 = vadd.f32 0.0, %v2256
      %2258 = vmatmul.f32.gmra.mxu0 %v2159
      %v2259 = vpop.f32.mrf.mxu0
      %v2260 = vadd.f32 0.0, %v2259
      %2261 = vmatmul.f32.gmra.mxu0 %v2162
      %v2262 = vpop.f32.mrf.mxu0
      %v2263 = vadd.f32 0.0, %v2262
      %2264 = vmatmul.f32.gmra.mxu0 %v2165
      %v2265 = vpop.f32.mrf.mxu0
      %v2266 = vadd.f32 0.0, %v2265
      %2267 = vmatmul.f32.gmra.mxu0 %v2168
      %v2268 = vpop.f32.mrf.mxu0
      %v2269 = vadd.f32 0.0, %v2268
      %2270 = vmatmul.f32.gmra.mxu0 %v2171
      %v2271 = vpop.f32.mrf.mxu0
      %v2272 = vadd.f32 0.0, %v2271
      %2273 = vmatmul.f32.gmra.mxu0 %v2174
      %v2274 = vpop.f32.mrf.mxu0
      %v2275 = vadd.f32 0.0, %v2274
      %2276 = vmatmul.f32.gmra.mxu0 %v2177
      %v2277 = vpop.f32.mrf.mxu0
      %v2278 = vadd.f32 0.0, %v2277
      %2279 = vmatmul.f32.gmra.mxu0 %v2180
      %v2280 = vpop.f32.mrf.mxu0
      %v2281 = vadd.f32 0.0, %v2280
      %2282 = vmatmul.f32.gmra.mxu0 %v2183
      %v2283 = vpop.f32.mrf.mxu0
      %v2284 = vadd.f32 0.0, %v2283
      %2285 = vmatmul.f32.gmra.mxu0 %v2186
      %v2286 = vpop.f32.mrf.mxu0
      %v2287 = vadd.f32 0.0, %v2286
      %2288 = vmatmul.f32.gmra.mxu0 %v2189
      %v2289 = vpop.f32.mrf.mxu0
      %v2290 = vadd.f32 0.0, %v2289
      %2291 = vmatmul.f32.gmra.mxu0 %v2192
      %v2292 = vpop.f32.mrf.mxu0
      %v2293 = vadd.f32 0.0, %v2292
      %2294 = vmatmul.f32.gmra.mxu0 %v2195
      %v2295 = vpop.f32.mrf.mxu0
      %v2296 = vadd.f32 0.0, %v2295
      %2297 = vmatmul.f32.gmra.mxu0 %v2198
      %v2298 = vpop.f32.mrf.mxu0
      %v2299 = vadd.f32 0.0, %v2298
      %2300 = vdwg.mxu0
      %v2301 = vadd.f32 %v2055, %v2218
      %v2302 = vadd.f32 %v2056, %v2221
      %v2303 = vadd.f32 %v2057, %v2224
      %v2304 = vadd.f32 %v2058, %v2227
      %v2305 = vadd.f32 %v2059, %v2230
      %v2306 = vadd.f32 %v2060, %v2233
      %v2307 = vadd.f32 %v2061, %v2236
      %v2308 = vadd.f32 %v2062, %v2239
      %v2309 = vadd.f32 %v2063, %v2242
      %v2310 = vadd.f32 %v2064, %v2245
      %v2311 = vadd.f32 %v2065, %v2248
      %v2312 = vadd.f32 %v2066, %v2251
      %v2313 = vadd.f32 %v2067, %v2254
      %v2314 = vadd.f32 %v2068, %v2257
      %v2315 = vadd.f32 %v2069, %v2260
      %v2316 = vadd.f32 %v2070, %v2263
      %v2317 = vadd.f32 %v2071, %v2266
      %v2318 = vadd.f32 %v2072, %v2269
      %v2319 = vadd.f32 %v2073, %v2272
      %v2320 = vadd.f32 %v2074, %v2275
      %v2321 = vadd.f32 %v2075, %v2278
      %v2322 = vadd.f32 %v2076, %v2281
      %v2323 = vadd.f32 %v2077, %v2284
      %v2324 = vadd.f32 %v2078, %v2287
      %v2325 = vadd.f32 %v2079, %v2290
      %v2326 = vadd.f32 %v2080, %v2293
      %v2327 = vadd.f32 %v2081, %v2296
      %v2328 = vadd.f32 %v2082, %v2299
      %v2329 = vld [vmem:[%s2] sm:$0x1]
      %v2331 = vperm.slane %v2329, 0
      %v2333 = vadd.f32 %v2301, %v2331
      %v2334 = vadd.f32 %v2302, %v2331
      %v2335 = vadd.f32 %v2303, %v2331
      %v2336 = vadd.f32 %v2304, %v2331
      %v2337 = vadd.f32 %v2305, %v2331
      %v2338 = vadd.f32 %v2306, %v2331
      %v2339 = vadd.f32 %v2307, %v2331
      %v2340 = vadd.f32 %v2308, %v2331
      %v2341 = vadd.f32 %v2309, %v2331
      %v2342 = vadd.f32 %v2310, %v2331
      %v2343 = vadd.f32 %v2311, %v2331
      %v2344 = vadd.f32 %v2312, %v2331
      %v2345 = vadd.f32 %v2313, %v2331
      %v2346 = vadd.f32 %v2314, %v2331
      %v2347 = vadd.f32 %v2315, %v2331
      %v2348 = vadd.f32 %v2316, %v2331
      %v2349 = vadd.f32 %v2317, %v2331
      %v2350 = vadd.f32 %v2318, %v2331
      %v2351 = vadd.f32 %v2319, %v2331
      %v2352 = vadd.f32 %v2320, %v2331
      %v2353 = vadd.f32 %v2321, %v2331
      %v2354 = vadd.f32 %v2322, %v2331
      %v2355 = vadd.f32 %v2323, %v2331
      %v2356 = vadd.f32 %v2324, %v2331
      %v2357 = vadd.f32 %v2325, %v2331
      %v2358 = vadd.f32 %v2326, %v2331
      %v2359 = vadd.f32 %v2327, %v2331
      %v2360 = vadd.f32 %v2328, %v2331
      %v2361 = vmax.f32 %v2333, 0.0
      %v2362 = vmax.f32 %v2334, 0.0
      %v2363 = vmax.f32 %v2335, 0.0
      %v2364 = vmax.f32 %v2336, 0.0
      %v2365 = vmax.f32 %v2337, 0.0
      %v2366 = vmax.f32 %v2338, 0.0
      %v2367 = vmax.f32 %v2339, 0.0
      %v2368 = vmax.f32 %v2340, 0.0
      %v2369 = vmax.f32 %v2341, 0.0
      %v2370 = vmax.f32 %v2342, 0.0
      %v2371 = vmax.f32 %v2343, 0.0
      %v2372 = vmax.f32 %v2344, 0.0
      %v2373 = vmax.f32 %v2345, 0.0
      %v2374 = vmax.f32 %v2346, 0.0
      %v2375 = vmax.f32 %v2347, 0.0
      %v2376 = vmax.f32 %v2348, 0.0
      %v2377 = vmax.f32 %v2349, 0.0
      %v2378 = vmax.f32 %v2350, 0.0
      %v2379 = vmax.f32 %v2351, 0.0
      %v2380 = vmax.f32 %v2352, 0.0
      %v2381 = vmax.f32 %v2353, 0.0
      %v2382 = vmax.f32 %v2354, 0.0
      %v2383 = vmax.f32 %v2355, 0.0
      %v2384 = vmax.f32 %v2356, 0.0
      %v2385 = vmax.f32 %v2357, 0.0
      %v2386 = vmax.f32 %v2358, 0.0
      %v2387 = vmax.f32 %v2359, 0.0
      %v2388 = vmax.f32 %v2360, 0.0
      %vm2389 = vcmask 523264
      %2390 = vst.msk [vmem:[#allocation2] sm:$0xff] %vm2389, %v2361
      %2391 = vst.msk [vmem:[#allocation2 + $0x8] sm:$0xff] %vm2389, %v2362
      %2392 = vst.msk [vmem:[#allocation2 + $0x10] sm:$0xff] %vm2389, %v2363
      %2393 = vst.msk [vmem:[#allocation2 + $0x18] sm:$0xff] %vm2389, %v2364
      %2394 = vst.msk [vmem:[#allocation2 + $0x20] sm:$0xff] %vm2389, %v2365
      %2395 = vst.msk [vmem:[#allocation2 + $0x28] sm:$0xff] %vm2389, %v2366
      %2396 = vst.msk [vmem:[#allocation2 + $0x30] sm:$0xff] %vm2389, %v2367
      %2397 = vst.msk [vmem:[#allocation2 + $0x38] sm:$0xff] %vm2389, %v2368
      %2398 = vst.msk [vmem:[#allocation2 + $0x40] sm:$0xff] %vm2389, %v2369
      %2399 = vst.msk [vmem:[#allocation2 + $0x48] sm:$0xff] %vm2389, %v2370
      %2400 = vst.msk [vmem:[#allocation2 + $0x50] sm:$0xff] %vm2389, %v2371
      %2401 = vst.msk [vmem:[#allocation2 + $0x58] sm:$0xff] %vm2389, %v2372
      %2402 = vst.msk [vmem:[#allocation2 + $0x60] sm:$0xff] %vm2389, %v2373
      %2403 = vst.msk [vmem:[#allocation2 + $0x68] sm:$0xff] %vm2389, %v2374
      %2404 = vst.msk [vmem:[#allocation2 + $0x70] sm:$0xff] %vm2389, %v2375
      %2405 = vst.msk [vmem:[#allocation2 + $0x78] sm:$0xff] %vm2389, %v2376
      %2406 = vst.msk [vmem:[#allocation2 + $0x80] sm:$0xff] %vm2389, %v2377
      %2407 = vst.msk [vmem:[#allocation2 + $0x88] sm:$0xff] %vm2389, %v2378
      %2408 = vst.msk [vmem:[#allocation2 + $0x90] sm:$0xff] %vm2389, %v2379
      %2409 = vst.msk [vmem:[#allocation2 + $0x98] sm:$0xff] %vm2389, %v2380
      %2410 = vst.msk [vmem:[#allocation2 + $0xa0] sm:$0xff] %vm2389, %v2381
      %2411 = vst.msk [vmem:[#allocation2 + $0xa8] sm:$0xff] %vm2389, %v2382
      %2412 = vst.msk [vmem:[#allocation2 + $0xb0] sm:$0xff] %vm2389, %v2383
      %2413 = vst.msk [vmem:[#allocation2 + $0xb8] sm:$0xff] %vm2389, %v2384
      %2414 = vst.msk [vmem:[#allocation2 + $0xc0] sm:$0xff] %vm2389, %v2385
      %2415 = vst.msk [vmem:[#allocation2 + $0xc8] sm:$0xff] %vm2389, %v2386
      %2416 = vst.msk [vmem:[#allocation2 + $0xd0] sm:$0xff] %vm2389, %v2387
      %2417 = vst.msk [vmem:[#allocation2 + $0xd8] sm:$0xff] %vm2389, %v2388
      %2418 = vst.msk [vmem:[#allocation2 + $0xe0] sm:$0xff] %vm2389, 0.0
      %v2419 = vld [vmem:[#allocation2] sm:$0xff]
      %v2420 = vld [vmem:[#allocation2 + $0x8] sm:$0xff]
      %v2421 = vld [vmem:[#allocation2 + $0x10] sm:$0xff]
      %v2422 = vld [vmem:[#allocation2 + $0x18] sm:$0xff]
      %v2423 = vld [vmem:[#allocation2 + $0x20] sm:$0xff]
      %v2424 = vld [vmem:[#allocation2 + $0x28] sm:$0xff]
      %v2425 = vld [vmem:[#allocation2 + $0x30] sm:$0xff]
      %v2426 = vld [vmem:[#allocation2 + $0x38] sm:$0xff]
      %v2427 = vld [vmem:[#allocation2 + $0x40] sm:$0xff]
      %v2428 = vld [vmem:[#allocation2 + $0x48] sm:$0xff]
      %v2429 = vld [vmem:[#allocation2 + $0x50] sm:$0xff]
      %v2430 = vld [vmem:[#allocation2 + $0x58] sm:$0xff]
      %v2431 = vld [vmem:[#allocation2 + $0x60] sm:$0xff]
      %v2432 = vld [vmem:[#allocation2 + $0x68] sm:$0xff]
      %v2433 = vld [vmem:[#allocation2 + $0x70] sm:$0xff]
      %v2434 = vld [vmem:[#allocation2 + $0x78] sm:$0xff]
      %v2435 = vld [vmem:[#allocation2 + $0x80] sm:$0xff]
      %v2436 = vld [vmem:[#allocation2 + $0x88] sm:$0xff]
      %v2437 = vld [vmem:[#allocation2 + $0x90] sm:$0xff]
      %v2438 = vld [vmem:[#allocation2 + $0x98] sm:$0xff]
      %v2439 = vld [vmem:[#allocation2 + $0xa0] sm:$0xff]
      %v2440 = vld [vmem:[#allocation2 + $0xa8] sm:$0xff]
      %v2441 = vld [vmem:[#allocation2 + $0xb0] sm:$0xff]
      %v2442 = vld [vmem:[#allocation2 + $0xb8] sm:$0xff]
      %v2443 = vld [vmem:[#allocation2 + $0xc0] sm:$0xff]
      %v2444 = vld [vmem:[#allocation2 + $0xc8] sm:$0xff]
      %v2445 = vld [vmem:[#allocation2 + $0xd0] sm:$0xff]
      %v2446 = vld [vmem:[#allocation2 + $0xd8] sm:$0xff]
      %v2447 = vld [vmem:[#allocation2 + $0x1] sm:$0xff]
      %v2448 = vld [vmem:[#allocation2 + $0x9] sm:$0xff]
      %v2449 = vld [vmem:[#allocation2 + $0x11] sm:$0xff]
      %v2450 = vld [vmem:[#allocation2 + $0x19] sm:$0xff]
      %v2451 = vld [vmem:[#allocation2 + $0x21] sm:$0xff]
      %v2452 = vld [vmem:[#allocation2 + $0x29] sm:$0xff]
      %v2453 = vld [vmem:[#allocation2 + $0x31] sm:$0xff]
      %v2454 = vld [vmem:[#allocation2 + $0x39] sm:$0xff]
      %v2455 = vld [vmem:[#allocation2 + $0x41] sm:$0xff]
      %v2456 = vld [vmem:[#allocation2 + $0x49] sm:$0xff]
      %v2457 = vld [vmem:[#allocation2 + $0x51] sm:$0xff]
      %v2458 = vld [vmem:[#allocation2 + $0x59] sm:$0xff]
      %v2459 = vld [vmem:[#allocation2 + $0x61] sm:$0xff]
      %v2460 = vld [vmem:[#allocation2 + $0x69] sm:$0xff]
      %v2461 = vld [vmem:[#allocation2 + $0x71] sm:$0xff]
      %v2462 = vld [vmem:[#allocation2 + $0x79] sm:$0xff]
      %v2463 = vld [vmem:[#allocation2 + $0x81] sm:$0xff]
      %v2464 = vld [vmem:[#allocation2 + $0x89] sm:$0xff]
      %v2465 = vld [vmem:[#allocation2 + $0x91] sm:$0xff]
      %v2466 = vld [vmem:[#allocation2 + $0x99] sm:$0xff]
      %v2467 = vld [vmem:[#allocation2 + $0xa1] sm:$0xff]
      %v2468 = vld [vmem:[#allocation2 + $0xa9] sm:$0xff]
      %v2469 = vld [vmem:[#allocation2 + $0xb1] sm:$0xff]
      %v2470 = vld [vmem:[#allocation2 + $0xb9] sm:$0xff]
      %v2471 = vld [vmem:[#allocation2 + $0xc1] sm:$0xff]
      %v2472 = vld [vmem:[#allocation2 + $0xc9] sm:$0xff]
      %v2473 = vld [vmem:[#allocation2 + $0xd1] sm:$0xff]
      %v2474 = vld [vmem:[#allocation2 + $0xd9] sm:$0xff]
      %v2475 = vmax.f32 %v2419, %v2447
      %v2476 = vmax.f32 %v2420, %v2448
      %v2477 = vmax.f32 %v2421, %v2449
      %v2478 = vmax.f32 %v2422, %v2450
      %v2479 = vmax.f32 %v2423, %v2451
      %v2480 = vmax.f32 %v2424, %v2452
      %v2481 = vmax.f32 %v2425, %v2453
      %v2482 = vmax.f32 %v2426, %v2454
      %v2483 = vmax.f32 %v2427, %v2455
      %v2484 = vmax.f32 %v2428, %v2456
      %v2485 = vmax.f32 %v2429, %v2457
      %v2486 = vmax.f32 %v2430, %v2458
      %v2487 = vmax.f32 %v2431, %v2459
      %v2488 = vmax.f32 %v2432, %v2460
      %v2489 = vmax.f32 %v2433, %v2461
      %v2490 = vmax.f32 %v2434, %v2462
      %v2491 = vmax.f32 %v2435, %v2463
      %v2492 = vmax.f32 %v2436, %v2464
      %v2493 = vmax.f32 %v2437, %v2465
      %v2494 = vmax.f32 %v2438, %v2466
      %v2495 = vmax.f32 %v2439, %v2467
      %v2496 = vmax.f32 %v2440, %v2468
      %v2497 = vmax.f32 %v2441, %v2469
      %v2498 = vmax.f32 %v2442, %v2470
      %v2499 = vmax.f32 %v2443, %v2471
      %v2500 = vmax.f32 %v2444, %v2472
      %v2501 = vmax.f32 %v2445, %v2473
      %v2502 = vmax.f32 %v2446, %v2474
      %v2503 = vmax.f32 %v2475, %v2477
      %v2504 = vmax.f32 %v2476, %v2478
      %v2505 = vmax.f32 %v2479, %v2481
      %v2506 = vmax.f32 %v2480, %v2482
      %v2507 = vmax.f32 %v2483, %v2485
      %v2508 = vmax.f32 %v2484, %v2486
      %v2509 = vmax.f32 %v2487, %v2489
      %v2510 = vmax.f32 %v2488, %v2490
      %v2511 = vmax.f32 %v2491, %v2493
      %v2512 = vmax.f32 %v2492, %v2494
      %v2513 = vmax.f32 %v2495, %v2497
      %v2514 = vmax.f32 %v2496, %v2498
      %v2515 = vmax.f32 %v2499, %v2501
      %v2516 = vmax.f32 %v2500, %v2502
      %2517 = vst.msk [vmem:[%s170] sm:$0xff] %vm2389, %v2503
      %2518 = vst.msk [vmem:[%s170 + $0x8] sm:$0xff] %vm2389, %v2504
      %2519 = vst.msk [vmem:[%s170 + $0x10] sm:$0xff] %vm2389, %v2505
      %2520 = vst.msk [vmem:[%s170 + $0x18] sm:$0xff] %vm2389, %v2506
      %2521 = vst.msk [vmem:[%s170 + $0x20] sm:$0xff] %vm2389, %v2507
      %2522 = vst.msk [vmem:[%s170 + $0x28] sm:$0xff] %vm2389, %v2508
      %2523 = vst.msk [vmem:[%s170 + $0x30] sm:$0xff] %vm2389, %v2509
      %2524 = vst.msk [vmem:[%s170 + $0x38] sm:$0xff] %vm2389, %v2510
      %2525 = vst.msk [vmem:[%s170 + $0x40] sm:$0xff] %vm2389, %v2511
      %2526 = vst.msk [vmem:[%s170 + $0x48] sm:$0xff] %vm2389, %v2512
      %2527 = vst.msk [vmem:[%s170 + $0x50] sm:$0xff] %vm2389, %v2513
      %2528 = vst.msk [vmem:[%s170 + $0x58] sm:$0xff] %vm2389, %v2514
      %2529 = vst.msk [vmem:[%s170 + $0x60] sm:$0xff] %vm2389, %v2515
      %2530 = vst.msk [vmem:[%s170 + $0x68] sm:$0xff] %vm2389, %v2516
      %p2531 = scmp.lt.s32.totalorder %s14, 1
      %s2532 = scalar_select %p2531, %s14, 1
      %s2533 = smul.addr %s2532, 14
      %s2534 = smul.addr %s2533, 8
      %s2535 = scalar_lea.vmem %s3, %s2534
      // Predicated region
      $region33: #{simple_cnn_forward.4} parent=31 // pred_check
        %p2536 = pneg %p100
      $region34: #{simple_cnn_forward.4} parent=31 // pred_check_branch
        %2538 = sbr.rel (%p2536) target = $region36
      $region35: #{simple_cnn_forward.4} parent=31 // pred_region
        _
      $region36: #{simple_cnn_forward.4} parent=31 // pred_fallthru
        _
    $region32: #{simple_cnn_forward.4} parent=5 // pred_fallthru
      _
    %p2539 = scmp.le.s32.totalorder 2, %s9
    // Predicated region
    $region37: #{simple_cnn_forward.4} parent=5 // pred_check
      %p2540 = pneg %p2539
    $region38: #{simple_cnn_forward.4} parent=5 // pred_check_branch
      %2542 = sbr.rel (%p2540) target = $region40
    $region39: #{simple_cnn_forward.4} parent=5 // pred_region
      %s2543 = ssub.s32 %s9, 2
      // Predicated region
      $region41: #{simple_cnn_forward.4} parent=39 // pred_check
        %p2544 = pneg %p106
      $region42: #{simple_cnn_forward.4} parent=39 // pred_check_branch
        %2546 = sbr.rel (%p2544) target = $region44
      $region43: #{simple_cnn_forward.4} parent=39 // pred_region
        %p2547 = scmp.lt.s32.totalorder %s15, 1
        %s2548 = scalar_select %p2547, %s15, 1
        %s2549 = smul.addr %s2548, 14
        %s2550 = smul.addr %s2549, 8
        %s2551 = scalar_lea.vmem %s3, %s2550
      $region44: #{simple_cnn_forward.4} parent=39 // pred_fallthru
        _
    $region40: #{simple_cnn_forward.4} parent=5 // pred_fallthru
      _
  $region6: #{simple_cnn_forward.4} parent=0 // loop_footer
    %s13 = sadd.s32 1, %s9
  $region7: #{simple_cnn_forward.4} parent=0 // loop_footer_branch
    %8 = sbr.rel target = $region3
  $region8: #{simple_cnn_forward.4} parent=0 // loop_exit
    _

// kernel: simple_cnn_forward.5
$region0: #{simple_cnn_forward.5}
  #allocation0 [shape = 'u32[]', space=smem, size = 0x4, offset = 0x4, fixed_abs, tag = 'smem constant byte address 0x4 - core index']
  #allocation1 [shape = 'u32[72,128]{1,0:T(1,128)}', space=vmem, size = 0x9000, scoped, tag = 'internal scratch']
  %s0 = inlined_call_operand.vmem [shape: f32[2,3136], index: 0, kind: input, shape index: {}]
  %s1 = inlined_call_operand.vmem [shape: f32[3136,128], index: 1, kind: input, shape index: {}]
  %s2 = inlined_call_operand.vmem [shape: f32[1,128], index: 2, kind: input, shape index: {}]
  %s3 = inlined_call_operand.vmem [shape: f32[128,10], index: 3, kind: input, shape index: {}]
  %s4 = inlined_call_operand.vmem [shape: f32[1,10], index: 4, kind: input, shape index: {}]
  %s5 = inlined_call_operand.hbm [shape: f32[2,10], index: 5, kind: output, shape index: {}]
  %s6 = sld [smem:[#allocation0]]
  $region30: #{simple_cnn_forward.5} parent=0
    _
  %s8 = ssub.s32 1, %s6
  %s9 = scalar_select 0, %s8, %s6
  $region1: #{simple_cnn_forward.5} parent=0
    #allocation2 [shape = 'u8[1024]{0}', space=vmem, size = 0x400, scoped, tag = 'output window, operand 0, single buffered']
    #allocation3 [shape = 's32[1]{0}', space=sflag, size = 0x4, scoped, tag = 'scoped memory for simple_cnn_forward.5']
    %10 = vsyncpa [#allocation3], 0
    // Predicated region
    $region2: #{simple_cnn_forward.5} parent=1 // pred_check
      _
    $region3: #{simple_cnn_forward.5} parent=1 // pred_check_branch
      %12 = sbr.rel (0) target = $region5
    $region4: #{simple_cnn_forward.5} parent=1 // pred_region
      _
    $region5: #{simple_cnn_forward.5} parent=1 // pred_fallthru
      _
    // Predicated region
    $region6: #{simple_cnn_forward.5} parent=1 // pred_check
      _
    $region7: #{simple_cnn_forward.5} parent=1 // pred_check_branch
      %14 = sbr.rel (0) target = $region9
    $region8: #{simple_cnn_forward.5} parent=1 // pred_region
      _
    $region9: #{simple_cnn_forward.5} parent=1 // pred_fallthru
      _
    // Predicated region
    $region10: #{simple_cnn_forward.5} parent=1 // pred_check
      _
    $region11: #{simple_cnn_forward.5} parent=1 // pred_check_branch
      %16 = sbr.rel (0) target = $region13
    $region12: #{simple_cnn_forward.5} parent=1 // pred_region
      _
    $region13: #{simple_cnn_forward.5} parent=1 // pred_fallthru
      _
    // Predicated region
    $region14: #{simple_cnn_forward.5} parent=1 // pred_check
      _
    $region15: #{simple_cnn_forward.5} parent=1 // pred_check_branch
      %18 = sbr.rel (0) target = $region17
    $region16: #{simple_cnn_forward.5} parent=1 // pred_region
      _
    $region17: #{simple_cnn_forward.5} parent=1 // pred_fallthru
      _
    // Predicated region
    $region18: #{simple_cnn_forward.5} parent=1 // pred_check
      _
    $region19: #{simple_cnn_forward.5} parent=1 // pred_check_branch
      %20 = sbr.rel (0) target = $region21
    $region20: #{simple_cnn_forward.5} parent=1 // pred_region
      _
    $region21: #{simple_cnn_forward.5} parent=1 // pred_fallthru
      _
    %v21 = vld [vmem:[%s0] sm:$0xff]
    %v22 = vld [vmem:[%s0 + $0x8] sm:$0xff]
    %v23 = vld [vmem:[%s0 + $0x10] sm:$0xff]
    %v24 = vld [vmem:[%s0 + $0x18] sm:$0xff]
    %v25 = vld [vmem:[%s0 + $0x20] sm:$0xff]
    %v26 = vld [vmem:[%s0 + $0x28] sm:$0xff]
    %v27 = vld [vmem:[%s0 + $0x30] sm:$0x3]
    %v28 = vld [vmem:[%s1] sm:$0xff]
    %v29 = vld [vmem:[%s1 + $0x8] sm:$0xff]
    %v30 = vld [vmem:[%s1 + $0x10] sm:$0xff]
    %v31 = vld [vmem:[%s1 + $0x18] sm:$0xff]
    %v32 = vld [vmem:[%s1 + $0x20] sm:$0xff]
    %v33 = vld [vmem:[%s1 + $0x28] sm:$0xff]
    %v34 = vld [vmem:[%s1 + $0x30] sm:$0xff]
    %v35 = vld [vmem:[%s1 + $0x38] sm:$0xff]
    %v36 = vld [vmem:[%s1 + $0x40] sm:$0xff]
    %v37 = vld [vmem:[%s1 + $0x48] sm:$0xff]
    %v38 = vld [vmem:[%s1 + $0x50] sm:$0xff]
    %v39 = vld [vmem:[%s1 + $0x58] sm:$0xff]
    %v40 = vld [vmem:[%s1 + $0x60] sm:$0xff]
    %v41 = vld [vmem:[%s1 + $0x68] sm:$0xff]
    %v42 = vld [vmem:[%s1 + $0x70] sm:$0xff]
    %v43 = vld [vmem:[%s1 + $0x78] sm:$0xff]
    %v44 = vld [vmem:[%s1 + $0x80] sm:$0xff]
    %v45 = vld [vmem:[%s1 + $0x88] sm:$0xff]
    %v46 = vld [vmem:[%s1 + $0x90] sm:$0xff]
    %v47 = vld [vmem:[%s1 + $0x98] sm:$0xff]
    %v48 = vld [vmem:[%s1 + $0xa0] sm:$0xff]
    %v49 = vld [vmem:[%s1 + $0xa8] sm:$0xff]
    %v50 = vld [vmem:[%s1 + $0xb0] sm:$0xff]
    %v51 = vld [vmem:[%s1 + $0xb8] sm:$0xff]
    %v52 = vld [vmem:[%s1 + $0xc0] sm:$0xff]
    %v53 = vld [vmem:[%s1 + $0xc8] sm:$0xff]
    %v54 = vld [vmem:[%s1 + $0xd0] sm:$0xff]
    %v55 = vld [vmem:[%s1 + $0xd8] sm:$0xff]
    %v56 = vld [vmem:[%s1 + $0xe0] sm:$0xff]
    %v57 = vld [vmem:[%s1 + $0xe8] sm:$0xff]
    %v58 = vld [vmem:[%s1 + $0xf0] sm:$0xff]
    %v59 = vld [vmem:[%s1 + $0xf8] sm:$0xff]
    %v60 = vld [vmem:[%s1 + $0x100] sm:$0xff]
    %v61 = vld [vmem:[%s1 + $0x108] sm:$0xff]
    %v62 = vld [vmem:[%s1 + $0x110] sm:$0xff]
    %v63 = vld [vmem:[%s1 + $0x118] sm:$0xff]
    %v64 = vld [vmem:[%s1 + $0x120] sm:$0xff]
    %v65 = vld [vmem:[%s1 + $0x128] sm:$0xff]
    %v66 = vld [vmem:[%s1 + $0x130] sm:$0xff]
    %v67 = vld [vmem:[%s1 + $0x138] sm:$0xff]
    %v68 = vld [vmem:[%s1 + $0x140] sm:$0xff]
    %v69 = vld [vmem:[%s1 + $0x148] sm:$0xff]
    %v70 = vld [vmem:[%s1 + $0x150] sm:$0xff]
    %v71 = vld [vmem:[%s1 + $0x158] sm:$0xff]
    %v72 = vld [vmem:[%s1 + $0x160] sm:$0xff]
    %v73 = vld [vmem:[%s1 + $0x168] sm:$0xff]
    %v74 = vld [vmem:[%s1 + $0x170] sm:$0xff]
    %v75 = vld [vmem:[%s1 + $0x178] sm:$0xff]
    %v76 = vld [vmem:[%s1 + $0x180] sm:$0xff]
    %v77 = vld [vmem:[%s1 + $0x188] sm:$0xff]
    %v78 = vld [vmem:[%s1 + $0x190] sm:$0xff]
    %v79 = vld [vmem:[%s1 + $0x198] sm:$0xff]
    %v80 = vld [vmem:[%s1 + $0x1a0] sm:$0xff]
    %v81 = vld [vmem:[%s1 + $0x1a8] sm:$0xff]
    %v82 = vld [vmem:[%s1 + $0x1b0] sm:$0xff]
    %v83 = vld [vmem:[%s1 + $0x1b8] sm:$0xff]
    %v84 = vld [vmem:[%s1 + $0x1c0] sm:$0xff]
    %v85 = vld [vmem:[%s1 + $0x1c8] sm:$0xff]
    %v86 = vld [vmem:[%s1 + $0x1d0] sm:$0xff]
    %v87 = vld [vmem:[%s1 + $0x1d8] sm:$0xff]
    %v88 = vld [vmem:[%s1 + $0x1e0] sm:$0xff]
    %v89 = vld [vmem:[%s1 + $0x1e8] sm:$0xff]
    %v90 = vld [vmem:[%s1 + $0x1f0] sm:$0xff]
    %v91 = vld [vmem:[%s1 + $0x1f8] sm:$0xff]
    %v92 = vld [vmem:[%s1 + $0x200] sm:$0xff]
    %v93 = vld [vmem:[%s1 + $0x208] sm:$0xff]
    %v94 = vld [vmem:[%s1 + $0x210] sm:$0xff]
    %v95 = vld [vmem:[%s1 + $0x218] sm:$0xff]
    %v96 = vld [vmem:[%s1 + $0x220] sm:$0xff]
    %v97 = vld [vmem:[%s1 + $0x228] sm:$0xff]
    %v98 = vld [vmem:[%s1 + $0x230] sm:$0xff]
    %v99 = vld [vmem:[%s1 + $0x238] sm:$0xff]
    %v100 = vld [vmem:[%s1 + $0x240] sm:$0xff]
    %v101 = vld [vmem:[%s1 + $0x248] sm:$0xff]
    %v102 = vld [vmem:[%s1 + $0x250] sm:$0xff]
    %v103 = vld [vmem:[%s1 + $0x258] sm:$0xff]
    %v104 = vld [vmem:[%s1 + $0x260] sm:$0xff]
    %v105 = vld [vmem:[%s1 + $0x268] sm:$0xff]
    %v106 = vld [vmem:[%s1 + $0x270] sm:$0xff]
    %v107 = vld [vmem:[%s1 + $0x278] sm:$0xff]
    %v108 = vld [vmem:[%s1 + $0x280] sm:$0xff]
    %v109 = vld [vmem:[%s1 + $0x288] sm:$0xff]
    %v110 = vld [vmem:[%s1 + $0x290] sm:$0xff]
    %v111 = vld [vmem:[%s1 + $0x298] sm:$0xff]
    %v112 = vld [vmem:[%s1 + $0x2a0] sm:$0xff]
    %v113 = vld [vmem:[%s1 + $0x2a8] sm:$0xff]
    %v114 = vld [vmem:[%s1 + $0x2b0] sm:$0xff]
    %v115 = vld [vmem:[%s1 + $0x2b8] sm:$0xff]
    %v116 = vld [vmem:[%s1 + $0x2c0] sm:$0xff]
    %v117 = vld [vmem:[%s1 + $0x2c8] sm:$0xff]
    %v118 = vld [vmem:[%s1 + $0x2d0] sm:$0xff]
    %v119 = vld [vmem:[%s1 + $0x2d8] sm:$0xff]
    %v120 = vld [vmem:[%s1 + $0x2e0] sm:$0xff]
    %v121 = vld [vmem:[%s1 + $0x2e8] sm:$0xff]
    %v122 = vld [vmem:[%s1 + $0x2f0] sm:$0xff]
    %v123 = vld [vmem:[%s1 + $0x2f8] sm:$0xff]
    %v124 = vld [vmem:[%s1 + $0x300] sm:$0xff]
    %v125 = vld [vmem:[%s1 + $0x308] sm:$0xff]
    %v126 = vld [vmem:[%s1 + $0x310] sm:$0xff]
    %v127 = vld [vmem:[%s1 + $0x318] sm:$0xff]
    %v128 = vld [vmem:[%s1 + $0x320] sm:$0xff]
    %v129 = vld [vmem:[%s1 + $0x328] sm:$0xff]
    %v130 = vld [vmem:[%s1 + $0x330] sm:$0xff]
    %v131 = vld [vmem:[%s1 + $0x338] sm:$0xff]
    %v132 = vld [vmem:[%s1 + $0x340] sm:$0xff]
    %v133 = vld [vmem:[%s1 + $0x348] sm:$0xff]
    %v134 = vld [vmem:[%s1 + $0x350] sm:$0xff]
    %v135 = vld [vmem:[%s1 + $0x358] sm:$0xff]
    %v136 = vld [vmem:[%s1 + $0x360] sm:$0xff]
    %v137 = vld [vmem:[%s1 + $0x368] sm:$0xff]
    %v138 = vld [vmem:[%s1 + $0x370] sm:$0xff]
    %v139 = vld [vmem:[%s1 + $0x378] sm:$0xff]
    %v140 = vld [vmem:[%s1 + $0x380] sm:$0xff]
    %v141 = vld [vmem:[%s1 + $0x388] sm:$0xff]
    %v142 = vld [vmem:[%s1 + $0x390] sm:$0xff]
    %v143 = vld [vmem:[%s1 + $0x398] sm:$0xff]
    %v144 = vld [vmem:[%s1 + $0x3a0] sm:$0xff]
    %v145 = vld [vmem:[%s1 + $0x3a8] sm:$0xff]
    %v146 = vld [vmem:[%s1 + $0x3b0] sm:$0xff]
    %v147 = vld [vmem:[%s1 + $0x3b8] sm:$0xff]
    %v148 = vld [vmem:[%s1 + $0x3c0] sm:$0xff]
    %v149 = vld [vmem:[%s1 + $0x3c8] sm:$0xff]
    %v150 = vld [vmem:[%s1 + $0x3d0] sm:$0xff]
    %v151 = vld [vmem:[%s1 + $0x3d8] sm:$0xff]
    %v152 = vld [vmem:[%s1 + $0x3e0] sm:$0xff]
    %v153 = vld [vmem:[%s1 + $0x3e8] sm:$0xff]
    %v154 = vld [vmem:[%s1 + $0x3f0] sm:$0xff]
    %v155 = vld [vmem:[%s1 + $0x3f8] sm:$0xff]
    %v156 = vld [vmem:[%s1 + $0x400] sm:$0xff]
    %v157 = vld [vmem:[%s1 + $0x408] sm:$0xff]
    %v158 = vld [vmem:[%s1 + $0x410] sm:$0xff]
    %v159 = vld [vmem:[%s1 + $0x418] sm:$0xff]
    %v160 = vld [vmem:[%s1 + $0x420] sm:$0xff]
    %v161 = vld [vmem:[%s1 + $0x428] sm:$0xff]
    %v162 = vld [vmem:[%s1 + $0x430] sm:$0xff]
    %v163 = vld [vmem:[%s1 + $0x438] sm:$0xff]
    %v164 = vld [vmem:[%s1 + $0x440] sm:$0xff]
    %v165 = vld [vmem:[%s1 + $0x448] sm:$0xff]
    %v166 = vld [vmem:[%s1 + $0x450] sm:$0xff]
    %v167 = vld [vmem:[%s1 + $0x458] sm:$0xff]
    %v168 = vld [vmem:[%s1 + $0x460] sm:$0xff]
    %v169 = vld [vmem:[%s1 + $0x468] sm:$0xff]
    %v170 = vld [vmem:[%s1 + $0x470] sm:$0xff]
    %v171 = vld [vmem:[%s1 + $0x478] sm:$0xff]
    %v172 = vld [vmem:[%s1 + $0x480] sm:$0xff]
    %v173 = vld [vmem:[%s1 + $0x488] sm:$0xff]
    %v174 = vld [vmem:[%s1 + $0x490] sm:$0xff]
    %v175 = vld [vmem:[%s1 + $0x498] sm:$0xff]
    %v176 = vld [vmem:[%s1 + $0x4a0] sm:$0xff]
    %v177 = vld [vmem:[%s1 + $0x4a8] sm:$0xff]
    %v178 = vld [vmem:[%s1 + $0x4b0] sm:$0xff]
    %v179 = vld [vmem:[%s1 + $0x4b8] sm:$0xff]
    %v180 = vld [vmem:[%s1 + $0x4c0] sm:$0xff]
    %v181 = vld [vmem:[%s1 + $0x4c8] sm:$0xff]
    %v182 = vld [vmem:[%s1 + $0x4d0] sm:$0xff]
    %v183 = vld [vmem:[%s1 + $0x4d8] sm:$0xff]
    %v184 = vld [vmem:[%s1 + $0x4e0] sm:$0xff]
    %v185 = vld [vmem:[%s1 + $0x4e8] sm:$0xff]
    %v186 = vld [vmem:[%s1 + $0x4f0] sm:$0xff]
    %v187 = vld [vmem:[%s1 + $0x4f8] sm:$0xff]
    %v188 = vld [vmem:[%s1 + $0x500] sm:$0xff]
    %v189 = vld [vmem:[%s1 + $0x508] sm:$0xff]
    %v190 = vld [vmem:[%s1 + $0x510] sm:$0xff]
    %v191 = vld [vmem:[%s1 + $0x518] sm:$0xff]
    %v192 = vld [vmem:[%s1 + $0x520] sm:$0xff]
    %v193 = vld [vmem:[%s1 + $0x528] sm:$0xff]
    %v194 = vld [vmem:[%s1 + $0x530] sm:$0xff]
    %v195 = vld [vmem:[%s1 + $0x538] sm:$0xff]
    %v196 = vld [vmem:[%s1 + $0x540] sm:$0xff]
    %v197 = vld [vmem:[%s1 + $0x548] sm:$0xff]
    %v198 = vld [vmem:[%s1 + $0x550] sm:$0xff]
    %v199 = vld [vmem:[%s1 + $0x558] sm:$0xff]
    %v200 = vld [vmem:[%s1 + $0x560] sm:$0xff]
    %v201 = vld [vmem:[%s1 + $0x568] sm:$0xff]
    %v202 = vld [vmem:[%s1 + $0x570] sm:$0xff]
    %v203 = vld [vmem:[%s1 + $0x578] sm:$0xff]
    %v204 = vld [vmem:[%s1 + $0x580] sm:$0xff]
    %v205 = vld [vmem:[%s1 + $0x588] sm:$0xff]
    %v206 = vld [vmem:[%s1 + $0x590] sm:$0xff]
    %v207 = vld [vmem:[%s1 + $0x598] sm:$0xff]
    %v208 = vld [vmem:[%s1 + $0x5a0] sm:$0xff]
    %v209 = vld [vmem:[%s1 + $0x5a8] sm:$0xff]
    %v210 = vld [vmem:[%s1 + $0x5b0] sm:$0xff]
    %v211 = vld [vmem:[%s1 + $0x5b8] sm:$0xff]
    %v212 = vld [vmem:[%s1 + $0x5c0] sm:$0xff]
    %v213 = vld [vmem:[%s1 + $0x5c8] sm:$0xff]
    %v214 = vld [vmem:[%s1 + $0x5d0] sm:$0xff]
    %v215 = vld [vmem:[%s1 + $0x5d8] sm:$0xff]
    %v216 = vld [vmem:[%s1 + $0x5e0] sm:$0xff]
    %v217 = vld [vmem:[%s1 + $0x5e8] sm:$0xff]
    %v218 = vld [vmem:[%s1 + $0x5f0] sm:$0xff]
    %v219 = vld [vmem:[%s1 + $0x5f8] sm:$0xff]
    %v220 = vld [vmem:[%s1 + $0x600] sm:$0xff]
    %v221 = vld [vmem:[%s1 + $0x608] sm:$0xff]
    %v222 = vld [vmem:[%s1 + $0x610] sm:$0xff]
    %v223 = vld [vmem:[%s1 + $0x618] sm:$0xff]
    %v224 = vld [vmem:[%s1 + $0x620] sm:$0xff]
    %v225 = vld [vmem:[%s1 + $0x628] sm:$0xff]
    %v226 = vld [vmem:[%s1 + $0x630] sm:$0xff]
    %v227 = vld [vmem:[%s1 + $0x638] sm:$0xff]
    %v228 = vld [vmem:[%s1 + $0x640] sm:$0xff]
    %v229 = vld [vmem:[%s1 + $0x648] sm:$0xff]
    %v230 = vld [vmem:[%s1 + $0x650] sm:$0xff]
    %v231 = vld [vmem:[%s1 + $0x658] sm:$0xff]
    %v232 = vld [vmem:[%s1 + $0x660] sm:$0xff]
    %v233 = vld [vmem:[%s1 + $0x668] sm:$0xff]
    %v234 = vld [vmem:[%s1 + $0x670] sm:$0xff]
    %v235 = vld [vmem:[%s1 + $0x678] sm:$0xff]
    %v236 = vld [vmem:[%s1 + $0x680] sm:$0xff]
    %v237 = vld [vmem:[%s1 + $0x688] sm:$0xff]
    %v238 = vld [vmem:[%s1 + $0x690] sm:$0xff]
    %v239 = vld [vmem:[%s1 + $0x698] sm:$0xff]
    %v240 = vld [vmem:[%s1 + $0x6a0] sm:$0xff]
    %v241 = vld [vmem:[%s1 + $0x6a8] sm:$0xff]
    %v242 = vld [vmem:[%s1 + $0x6b0] sm:$0xff]
    %v243 = vld [vmem:[%s1 + $0x6b8] sm:$0xff]
    %v244 = vld [vmem:[%s1 + $0x6c0] sm:$0xff]
    %v245 = vld [vmem:[%s1 + $0x6c8] sm:$0xff]
    %v246 = vld [vmem:[%s1 + $0x6d0] sm:$0xff]
    %v247 = vld [vmem:[%s1 + $0x6d8] sm:$0xff]
    %v248 = vld [vmem:[%s1 + $0x6e0] sm:$0xff]
    %v249 = vld [vmem:[%s1 + $0x6e8] sm:$0xff]
    %v250 = vld [vmem:[%s1 + $0x6f0] sm:$0xff]
    %v251 = vld [vmem:[%s1 + $0x6f8] sm:$0xff]
    %v252 = vld [vmem:[%s1 + $0x700] sm:$0xff]
    %v253 = vld [vmem:[%s1 + $0x708] sm:$0xff]
    %v254 = vld [vmem:[%s1 + $0x710] sm:$0xff]
    %v255 = vld [vmem:[%s1 + $0x718] sm:$0xff]
    %v256 = vld [vmem:[%s1 + $0x720] sm:$0xff]
    %v257 = vld [vmem:[%s1 + $0x728] sm:$0xff]
    %v258 = vld [vmem:[%s1 + $0x730] sm:$0xff]
    %v259 = vld [vmem:[%s1 + $0x738] sm:$0xff]
    %v260 = vld [vmem:[%s1 + $0x740] sm:$0xff]
    %v261 = vld [vmem:[%s1 + $0x748] sm:$0xff]
    %v262 = vld [vmem:[%s1 + $0x750] sm:$0xff]
    %v263 = vld [vmem:[%s1 + $0x758] sm:$0xff]
    %v264 = vld [vmem:[%s1 + $0x760] sm:$0xff]
    %v265 = vld [vmem:[%s1 + $0x768] sm:$0xff]
    %v266 = vld [vmem:[%s1 + $0x770] sm:$0xff]
    %v267 = vld [vmem:[%s1 + $0x778] sm:$0xff]
    %v268 = vld [vmem:[%s1 + $0x780] sm:$0xff]
    %v269 = vld [vmem:[%s1 + $0x788] sm:$0xff]
    %v270 = vld [vmem:[%s1 + $0x790] sm:$0xff]
    %v271 = vld [vmem:[%s1 + $0x798] sm:$0xff]
    %v272 = vld [vmem:[%s1 + $0x7a0] sm:$0xff]
    %v273 = vld [vmem:[%s1 + $0x7a8] sm:$0xff]
    %v274 = vld [vmem:[%s1 + $0x7b0] sm:$0xff]
    %v275 = vld [vmem:[%s1 + $0x7b8] sm:$0xff]
    %v276 = vld [vmem:[%s1 + $0x7c0] sm:$0xff]
    %v277 = vld [vmem:[%s1 + $0x7c8] sm:$0xff]
    %v278 = vld [vmem:[%s1 + $0x7d0] sm:$0xff]
    %v279 = vld [vmem:[%s1 + $0x7d8] sm:$0xff]
    %v280 = vld [vmem:[%s1 + $0x7e0] sm:$0xff]
    %v281 = vld [vmem:[%s1 + $0x7e8] sm:$0xff]
    %v282 = vld [vmem:[%s1 + $0x7f0] sm:$0xff]
    %v283 = vld [vmem:[%s1 + $0x7f8] sm:$0xff]
    %v284 = vld [vmem:[%s1 + $0x800] sm:$0xff]
    %v285 = vld [vmem:[%s1 + $0x808] sm:$0xff]
    %v286 = vld [vmem:[%s1 + $0x810] sm:$0xff]
    %v287 = vld [vmem:[%s1 + $0x818] sm:$0xff]
    %v288 = vld [vmem:[%s1 + $0x820] sm:$0xff]
    %v289 = vld [vmem:[%s1 + $0x828] sm:$0xff]
    %v290 = vld [vmem:[%s1 + $0x830] sm:$0xff]
    %v291 = vld [vmem:[%s1 + $0x838] sm:$0xff]
    %v292 = vld [vmem:[%s1 + $0x840] sm:$0xff]
    %v293 = vld [vmem:[%s1 + $0x848] sm:$0xff]
    %v294 = vld [vmem:[%s1 + $0x850] sm:$0xff]
    %v295 = vld [vmem:[%s1 + $0x858] sm:$0xff]
    %v296 = vld [vmem:[%s1 + $0x860] sm:$0xff]
    %v297 = vld [vmem:[%s1 + $0x868] sm:$0xff]
    %v298 = vld [vmem:[%s1 + $0x870] sm:$0xff]
    %v299 = vld [vmem:[%s1 + $0x878] sm:$0xff]
    %v300 = vld [vmem:[%s1 + $0x880] sm:$0xff]
    %v301 = vld [vmem:[%s1 + $0x888] sm:$0xff]
    %v302 = vld [vmem:[%s1 + $0x890] sm:$0xff]
    %v303 = vld [vmem:[%s1 + $0x898] sm:$0xff]
    %v304 = vld [vmem:[%s1 + $0x8a0] sm:$0xff]
    %v305 = vld [vmem:[%s1 + $0x8a8] sm:$0xff]
    %v306 = vld [vmem:[%s1 + $0x8b0] sm:$0xff]
    %v307 = vld [vmem:[%s1 + $0x8b8] sm:$0xff]
    %v308 = vld [vmem:[%s1 + $0x8c0] sm:$0xff]
    %v309 = vld [vmem:[%s1 + $0x8c8] sm:$0xff]
    %v310 = vld [vmem:[%s1 + $0x8d0] sm:$0xff]
    %v311 = vld [vmem:[%s1 + $0x8d8] sm:$0xff]
    %v312 = vld [vmem:[%s1 + $0x8e0] sm:$0xff]
    %v313 = vld [vmem:[%s1 + $0x8e8] sm:$0xff]
    %v314 = vld [vmem:[%s1 + $0x8f0] sm:$0xff]
    %v315 = vld [vmem:[%s1 + $0x8f8] sm:$0xff]
    %v316 = vld [vmem:[%s1 + $0x900] sm:$0xff]
    %v317 = vld [vmem:[%s1 + $0x908] sm:$0xff]
    %v318 = vld [vmem:[%s1 + $0x910] sm:$0xff]
    %v319 = vld [vmem:[%s1 + $0x918] sm:$0xff]
    %v320 = vld [vmem:[%s1 + $0x920] sm:$0xff]
    %v321 = vld [vmem:[%s1 + $0x928] sm:$0xff]
    %v322 = vld [vmem:[%s1 + $0x930] sm:$0xff]
    %v323 = vld [vmem:[%s1 + $0x938] sm:$0xff]
    %v324 = vld [vmem:[%s1 + $0x940] sm:$0xff]
    %v325 = vld [vmem:[%s1 + $0x948] sm:$0xff]
    %v326 = vld [vmem:[%s1 + $0x950] sm:$0xff]
    %v327 = vld [vmem:[%s1 + $0x958] sm:$0xff]
    %v328 = vld [vmem:[%s1 + $0x960] sm:$0xff]
    %v329 = vld [vmem:[%s1 + $0x968] sm:$0xff]
    %v330 = vld [vmem:[%s1 + $0x970] sm:$0xff]
    %v331 = vld [vmem:[%s1 + $0x978] sm:$0xff]
    %v332 = vld [vmem:[%s1 + $0x980] sm:$0xff]
    %v333 = vld [vmem:[%s1 + $0x988] sm:$0xff]
    %v334 = vld [vmem:[%s1 + $0x990] sm:$0xff]
    %v335 = vld [vmem:[%s1 + $0x998] sm:$0xff]
    %v336 = vld [vmem:[%s1 + $0x9a0] sm:$0xff]
    %v337 = vld [vmem:[%s1 + $0x9a8] sm:$0xff]
    %v338 = vld [vmem:[%s1 + $0x9b0] sm:$0xff]
    %v339 = vld [vmem:[%s1 + $0x9b8] sm:$0xff]
    %v340 = vld [vmem:[%s1 + $0x9c0] sm:$0xff]
    %v341 = vld [vmem:[%s1 + $0x9c8] sm:$0xff]
    %v342 = vld [vmem:[%s1 + $0x9d0] sm:$0xff]
    %v343 = vld [vmem:[%s1 + $0x9d8] sm:$0xff]
    %v344 = vld [vmem:[%s1 + $0x9e0] sm:$0xff]
    %v345 = vld [vmem:[%s1 + $0x9e8] sm:$0xff]
    %v346 = vld [vmem:[%s1 + $0x9f0] sm:$0xff]
    %v347 = vld [vmem:[%s1 + $0x9f8] sm:$0xff]
    %v348 = vld [vmem:[%s1 + $0xa00] sm:$0xff]
    %v349 = vld [vmem:[%s1 + $0xa08] sm:$0xff]
    %v350 = vld [vmem:[%s1 + $0xa10] sm:$0xff]
    %v351 = vld [vmem:[%s1 + $0xa18] sm:$0xff]
    %v352 = vld [vmem:[%s1 + $0xa20] sm:$0xff]
    %v353 = vld [vmem:[%s1 + $0xa28] sm:$0xff]
    %v354 = vld [vmem:[%s1 + $0xa30] sm:$0xff]
    %v355 = vld [vmem:[%s1 + $0xa38] sm:$0xff]
    %v356 = vld [vmem:[%s1 + $0xa40] sm:$0xff]
    %v357 = vld [vmem:[%s1 + $0xa48] sm:$0xff]
    %v358 = vld [vmem:[%s1 + $0xa50] sm:$0xff]
    %v359 = vld [vmem:[%s1 + $0xa58] sm:$0xff]
    %v360 = vld [vmem:[%s1 + $0xa60] sm:$0xff]
    %v361 = vld [vmem:[%s1 + $0xa68] sm:$0xff]
    %v362 = vld [vmem:[%s1 + $0xa70] sm:$0xff]
    %v363 = vld [vmem:[%s1 + $0xa78] sm:$0xff]
    %v364 = vld [vmem:[%s1 + $0xa80] sm:$0xff]
    %v365 = vld [vmem:[%s1 + $0xa88] sm:$0xff]
    %v366 = vld [vmem:[%s1 + $0xa90] sm:$0xff]
    %v367 = vld [vmem:[%s1 + $0xa98] sm:$0xff]
    %v368 = vld [vmem:[%s1 + $0xaa0] sm:$0xff]
    %v369 = vld [vmem:[%s1 + $0xaa8] sm:$0xff]
    %v370 = vld [vmem:[%s1 + $0xab0] sm:$0xff]
    %v371 = vld [vmem:[%s1 + $0xab8] sm:$0xff]
    %v372 = vld [vmem:[%s1 + $0xac0] sm:$0xff]
    %v373 = vld [vmem:[%s1 + $0xac8] sm:$0xff]
    %v374 = vld [vmem:[%s1 + $0xad0] sm:$0xff]
    %v375 = vld [vmem:[%s1 + $0xad8] sm:$0xff]
    %v376 = vld [vmem:[%s1 + $0xae0] sm:$0xff]
    %v377 = vld [vmem:[%s1 + $0xae8] sm:$0xff]
    %v378 = vld [vmem:[%s1 + $0xaf0] sm:$0xff]
    %v379 = vld [vmem:[%s1 + $0xaf8] sm:$0xff]
    %v380 = vld [vmem:[%s1 + $0xb00] sm:$0xff]
    %v381 = vld [vmem:[%s1 + $0xb08] sm:$0xff]
    %v382 = vld [vmem:[%s1 + $0xb10] sm:$0xff]
    %v383 = vld [vmem:[%s1 + $0xb18] sm:$0xff]
    %v384 = vld [vmem:[%s1 + $0xb20] sm:$0xff]
    %v385 = vld [vmem:[%s1 + $0xb28] sm:$0xff]
    %v386 = vld [vmem:[%s1 + $0xb30] sm:$0xff]
    %v387 = vld [vmem:[%s1 + $0xb38] sm:$0xff]
    %v388 = vld [vmem:[%s1 + $0xb40] sm:$0xff]
    %v389 = vld [vmem:[%s1 + $0xb48] sm:$0xff]
    %v390 = vld [vmem:[%s1 + $0xb50] sm:$0xff]
    %v391 = vld [vmem:[%s1 + $0xb58] sm:$0xff]
    %v392 = vld [vmem:[%s1 + $0xb60] sm:$0xff]
    %v393 = vld [vmem:[%s1 + $0xb68] sm:$0xff]
    %v394 = vld [vmem:[%s1 + $0xb70] sm:$0xff]
    %v395 = vld [vmem:[%s1 + $0xb78] sm:$0xff]
    %v396 = vld [vmem:[%s1 + $0xb80] sm:$0xff]
    %v397 = vld [vmem:[%s1 + $0xb88] sm:$0xff]
    %v398 = vld [vmem:[%s1 + $0xb90] sm:$0xff]
    %v399 = vld [vmem:[%s1 + $0xb98] sm:$0xff]
    %v400 = vld [vmem:[%s1 + $0xba0] sm:$0xff]
    %v401 = vld [vmem:[%s1 + $0xba8] sm:$0xff]
    %v402 = vld [vmem:[%s1 + $0xbb0] sm:$0xff]
    %v403 = vld [vmem:[%s1 + $0xbb8] sm:$0xff]
    %v404 = vld [vmem:[%s1 + $0xbc0] sm:$0xff]
    %v405 = vld [vmem:[%s1 + $0xbc8] sm:$0xff]
    %v406 = vld [vmem:[%s1 + $0xbd0] sm:$0xff]
    %v407 = vld [vmem:[%s1 + $0xbd8] sm:$0xff]
    %v408 = vld [vmem:[%s1 + $0xbe0] sm:$0xff]
    %v409 = vld [vmem:[%s1 + $0xbe8] sm:$0xff]
    %v410 = vld [vmem:[%s1 + $0xbf0] sm:$0xff]
    %v411 = vld [vmem:[%s1 + $0xbf8] sm:$0xff]
    %v412 = vld [vmem:[%s1 + $0xc00] sm:$0xff]
    %v413 = vld [vmem:[%s1 + $0xc08] sm:$0xff]
    %v414 = vld [vmem:[%s1 + $0xc10] sm:$0xff]
    %v415 = vld [vmem:[%s1 + $0xc18] sm:$0xff]
    %v416 = vld [vmem:[%s1 + $0xc20] sm:$0xff]
    %v417 = vld [vmem:[%s1 + $0xc28] sm:$0xff]
    %v418 = vld [vmem:[%s1 + $0xc30] sm:$0xff]
    %v419 = vld [vmem:[%s1 + $0xc38] sm:$0xff]
    %v420 = vld [vmem:[%s2] sm:$0x1]
    %v422 = vperm.slane %v420, 0
    %431 = vst [vmem:[#allocation1] ss:$4 sm:$0xff] %v21
    %s432 = scalar_lea.vmem [#allocation1], 32
    %433 = vst [vmem:[%s432] ss:$4 sm:$0xff] %v22
    %v434 = vld.sshfl [vmem:[#allocation1] sm:$0xff pattern:$0x73625140]
    %v435 = vld.sshfl [vmem:[#allocation1 + $0x8] sm:$0xff pattern:$0x73625140]
    %v436 = vld.sshfl [vmem:[#allocation1 + $0x10] sm:$0xff pattern:$0x73625140]
    %v437 = vld.sshfl [vmem:[#allocation1 + $0x18] sm:$0xff pattern:$0x73625140]
    %v438 = vld.sshfl [vmem:[#allocation1 + $0x20] sm:$0xff pattern:$0x73625140]
    %v439 = vld.sshfl [vmem:[#allocation1 + $0x28] sm:$0xff pattern:$0x73625140]
    %v440 = vld.sshfl [vmem:[#allocation1 + $0x30] sm:$0xff pattern:$0x73625140]
    %v441 = vld.sshfl [vmem:[#allocation1 + $0x38] sm:$0xff pattern:$0x73625140]
    %442 = vst [vmem:[#allocation1] ss:$4 sm:$0xff] %v23
    %443 = vst [vmem:[%s432] ss:$4 sm:$0xff] %v24
    %v444 = vld.sshfl [vmem:[#allocation1] sm:$0xff pattern:$0x73625140]
    %v445 = vld.sshfl [vmem:[#allocation1 + $0x8] sm:$0xff pattern:$0x73625140]
    %v446 = vld.sshfl [vmem:[#allocation1 + $0x10] sm:$0xff pattern:$0x73625140]
    %v447 = vld.sshfl [vmem:[#allocation1 + $0x18] sm:$0xff pattern:$0x73625140]
    %v448 = vld.sshfl [vmem:[#allocation1 + $0x20] sm:$0xff pattern:$0x73625140]
    %v449 = vld.sshfl [vmem:[#allocation1 + $0x28] sm:$0xff pattern:$0x73625140]
    %v450 = vld.sshfl [vmem:[#allocation1 + $0x30] sm:$0xff pattern:$0x73625140]
    %v451 = vld.sshfl [vmem:[#allocation1 + $0x38] sm:$0xff pattern:$0x73625140]
    %452 = vst [vmem:[#allocation1] ss:$4 sm:$0xff] %v25
    %453 = vst [vmem:[%s432] ss:$4 sm:$0xff] %v26
    %v454 = vld.sshfl [vmem:[#allocation1] sm:$0xff pattern:$0x73625140]
    %v455 = vld.sshfl [vmem:[#allocation1 + $0x8] sm:$0xff pattern:$0x73625140]
    %v456 = vld.sshfl [vmem:[#allocation1 + $0x10] sm:$0xff pattern:$0x73625140]
    %v457 = vld.sshfl [vmem:[#allocation1 + $0x18] sm:$0xff pattern:$0x73625140]
    %v458 = vld.sshfl [vmem:[#allocation1 + $0x20] sm:$0xff pattern:$0x73625140]
    %v459 = vld.sshfl [vmem:[#allocation1 + $0x28] sm:$0xff pattern:$0x73625140]
    %v460 = vld.sshfl [vmem:[#allocation1 + $0x30] sm:$0xff pattern:$0x73625140]
    %v461 = vld.sshfl [vmem:[#allocation1 + $0x38] sm:$0xff pattern:$0x73625140]
    %462 = vst [vmem:[#allocation1] ss:$4 sm:$0xff] %v27
    %v463 = vld.sshfl [vmem:[#allocation1] sm:$0xff pattern:$0x73625140]
    %vm488 = vcmask 523264
    %v489 = vsel %vm488, %v463, 0
    %491 = vmatpush.msra.mxu0 %v43
    %492 = vmatpush.msra.mxu0 %v42
    %493 = vmatpush.msra.mxu0 %v41
    %494 = vmatpush.msra.mxu0 %v40
    %495 = vmatpush.msra.mxu0 %v39
    %496 = vmatpush.msra.mxu0 %v38
    %497 = vmatpush.msra.mxu0 %v37
    %498 = vmatpush.msra.mxu0 %v36
    %499 = vmatpush.msra.mxu0 %v35
    %500 = vmatpush.msra.mxu0 %v34
    %501 = vmatpush.msra.mxu0 %v33
    %502 = vmatpush.msra.mxu0 %v32
    %503 = vmatpush.msra.mxu0 %v31
    %504 = vmatpush.msra.mxu0 %v30
    %505 = vmatpush.msra.mxu0 %v29
    %506 = vmatpush.msra.mxu0 %v28
    %507 = vmatmul.f32.gmra.mxu0 %v434
    %v508 = vpop.f32.mrf.mxu0
    %v509 = vadd.f32 %v422, %v508
    %510 = vdwg.mxu0
    %511 = vmatpush.msra.mxu0 %v59
    %512 = vmatpush.msra.mxu0 %v58
    %513 = vmatpush.msra.mxu0 %v57
    %514 = vmatpush.msra.mxu0 %v56
    %515 = vmatpush.msra.mxu0 %v55
    %516 = vmatpush.msra.mxu0 %v54
    %517 = vmatpush.msra.mxu0 %v53
    %518 = vmatpush.msra.mxu0 %v52
    %519 = vmatpush.msra.mxu0 %v51
    %520 = vmatpush.msra.mxu0 %v50
    %521 = vmatpush.msra.mxu0 %v49
    %522 = vmatpush.msra.mxu0 %v48
    %523 = vmatpush.msra.mxu0 %v47
    %524 = vmatpush.msra.mxu0 %v46
    %525 = vmatpush.msra.mxu0 %v45
    %526 = vmatpush.msra.mxu0 %v44
    %527 = vmatmul.f32.gmra.mxu0 %v435
    %v528 = vpop.f32.mrf.mxu0
    %v529 = vadd.f32 %v509, %v528
    %530 = vdwg.mxu0
    %531 = vmatpush.msra.mxu0 %v75
    %532 = vmatpush.msra.mxu0 %v74
    %533 = vmatpush.msra.mxu0 %v73
    %534 = vmatpush.msra.mxu0 %v72
    %535 = vmatpush.msra.mxu0 %v71
    %536 = vmatpush.msra.mxu0 %v70
    %537 = vmatpush.msra.mxu0 %v69
    %538 = vmatpush.msra.mxu0 %v68
    %539 = vmatpush.msra.mxu0 %v67
    %540 = vmatpush.msra.mxu0 %v66
    %541 = vmatpush.msra.mxu0 %v65
    %542 = vmatpush.msra.mxu0 %v64
    %543 = vmatpush.msra.mxu0 %v63
    %544 = vmatpush.msra.mxu0 %v62
    %545 = vmatpush.msra.mxu0 %v61
    %546 = vmatpush.msra.mxu0 %v60
    %547 = vmatmul.f32.gmra.mxu0 %v436
    %v548 = vpop.f32.mrf.mxu0
    %v549 = vadd.f32 %v529, %v548
    %550 = vdwg.mxu0
    %551 = vmatpush.msra.mxu0 %v91
    %552 = vmatpush.msra.mxu0 %v90
    %553 = vmatpush.msra.mxu0 %v89
    %554 = vmatpush.msra.mxu0 %v88
    %555 = vmatpush.msra.mxu0 %v87
    %556 = vmatpush.msra.mxu0 %v86
    %557 = vmatpush.msra.mxu0 %v85
    %558 = vmatpush.msra.mxu0 %v84
    %559 = vmatpush.msra.mxu0 %v83
    %560 = vmatpush.msra.mxu0 %v82
    %561 = vmatpush.msra.mxu0 %v81
    %562 = vmatpush.msra.mxu0 %v80
    %563 = vmatpush.msra.mxu0 %v79
    %564 = vmatpush.msra.mxu0 %v78
    %565 = vmatpush.msra.mxu0 %v77
    %566 = vmatpush.msra.mxu0 %v76
    %567 = vmatmul.f32.gmra.mxu0 %v437
    %v568 = vpop.f32.mrf.mxu0
    %v569 = vadd.f32 %v549, %v568
    %570 = vdwg.mxu0
    %571 = vmatpush.msra.mxu0 %v107
    %572 = vmatpush.msra.mxu0 %v106
    %573 = vmatpush.msra.mxu0 %v105
    %574 = vmatpush.msra.mxu0 %v104
    %575 = vmatpush.msra.mxu0 %v103
    %576 = vmatpush.msra.mxu0 %v102
    %577 = vmatpush.msra.mxu0 %v101
    %578 = vmatpush.msra.mxu0 %v100
    %579 = vmatpush.msra.mxu0 %v99
    %580 = vmatpush.msra.mxu0 %v98
    %581 = vmatpush.msra.mxu0 %v97
    %582 = vmatpush.msra.mxu0 %v96
    %583 = vmatpush.msra.mxu0 %v95
    %584 = vmatpush.msra.mxu0 %v94
    %585 = vmatpush.msra.mxu0 %v93
    %586 = vmatpush.msra.mxu0 %v92
    %587 = vmatmul.f32.gmra.mxu0 %v438
    %v588 = vpop.f32.mrf.mxu0
    %v589 = vadd.f32 %v569, %v588
    %590 = vdwg.mxu0
    %591 = vmatpush.msra.mxu0 %v123
    %592 = vmatpush.msra.mxu0 %v122
    %593 = vmatpush.msra.mxu0 %v121
    %594 = vmatpush.msra.mxu0 %v120
    %595 = vmatpush.msra.mxu0 %v119
    %596 = vmatpush.msra.mxu0 %v118
    %597 = vmatpush.msra.mxu0 %v117
    %598 = vmatpush.msra.mxu0 %v116
    %599 = vmatpush.msra.mxu0 %v115
    %600 = vmatpush.msra.mxu0 %v114
    %601 = vmatpush.msra.mxu0 %v113
    %602 = vmatpush.msra.mxu0 %v112
    %603 = vmatpush.msra.mxu0 %v111
    %604 = vmatpush.msra.mxu0 %v110
    %605 = vmatpush.msra.mxu0 %v109
    %606 = vmatpush.msra.mxu0 %v108
    %607 = vmatmul.f32.gmra.mxu0 %v439
    %v608 = vpop.f32.mrf.mxu0
    %v609 = vadd.f32 %v589, %v608
    %610 = vdwg.mxu0
    %611 = vmatpush.msra.mxu0 %v139
    %612 = vmatpush.msra.mxu0 %v138
    %613 = vmatpush.msra.mxu0 %v137
    %614 = vmatpush.msra.mxu0 %v136
    %615 = vmatpush.msra.mxu0 %v135
    %616 = vmatpush.msra.mxu0 %v134
    %617 = vmatpush.msra.mxu0 %v133
    %618 = vmatpush.msra.mxu0 %v132
    %619 = vmatpush.msra.mxu0 %v131
    %620 = vmatpush.msra.mxu0 %v130
    %621 = vmatpush.msra.mxu0 %v129
    %622 = vmatpush.msra.mxu0 %v128
    %623 = vmatpush.msra.mxu0 %v127
    %624 = vmatpush.msra.mxu0 %v126
    %625 = vmatpush.msra.mxu0 %v125
    %626 = vmatpush.msra.mxu0 %v124
    %627 = vmatmul.f32.gmra.mxu0 %v440
    %v628 = vpop.f32.mrf.mxu0
    %v629 = vadd.f32 %v609, %v628
    %630 = vdwg.mxu0
    %631 = vmatpush.msra.mxu0 %v155
    %632 = vmatpush.msra.mxu0 %v154
    %633 = vmatpush.msra.mxu0 %v153
    %634 = vmatpush.msra.mxu0 %v152
    %635 = vmatpush.msra.mxu0 %v151
    %636 = vmatpush.msra.mxu0 %v150
    %637 = vmatpush.msra.mxu0 %v149
    %638 = vmatpush.msra.mxu0 %v148
    %639 = vmatpush.msra.mxu0 %v147
    %640 = vmatpush.msra.mxu0 %v146
    %641 = vmatpush.msra.mxu0 %v145
    %642 = vmatpush.msra.mxu0 %v144
    %643 = vmatpush.msra.mxu0 %v143
    %644 = vmatpush.msra.mxu0 %v142
    %645 = vmatpush.msra.mxu0 %v141
    %646 = vmatpush.msra.mxu0 %v140
    %647 = vmatmul.f32.gmra.mxu0 %v441
    %v648 = vpop.f32.mrf.mxu0
    %v649 = vadd.f32 %v629, %v648
    %650 = vdwg.mxu0
    %651 = vmatpush.msra.mxu0 %v171
    %652 = vmatpush.msra.mxu0 %v170
    %653 = vmatpush.msra.mxu0 %v169
    %654 = vmatpush.msra.mxu0 %v168
    %655 = vmatpush.msra.mxu0 %v167
    %656 = vmatpush.msra.mxu0 %v166
    %657 = vmatpush.msra.mxu0 %v165
    %658 = vmatpush.msra.mxu0 %v164
    %659 = vmatpush.msra.mxu0 %v163
    %660 = vmatpush.msra.mxu0 %v162
    %661 = vmatpush.msra.mxu0 %v161
    %662 = vmatpush.msra.mxu0 %v160
    %663 = vmatpush.msra.mxu0 %v159
    %664 = vmatpush.msra.mxu0 %v158
    %665 = vmatpush.msra.mxu0 %v157
    %666 = vmatpush.msra.mxu0 %v156
    %667 = vmatmul.f32.gmra.mxu0 %v444
    %v668 = vpop.f32.mrf.mxu0
    %v669 = vadd.f32 %v649, %v668
    %670 = vdwg.mxu0
    %671 = vmatpush.msra.mxu0 %v187
    %672 = vmatpush.msra.mxu0 %v186
    %673 = vmatpush.msra.mxu0 %v185
    %674 = vmatpush.msra.mxu0 %v184
    %675 = vmatpush.msra.mxu0 %v183
    %676 = vmatpush.msra.mxu0 %v182
    %677 = vmatpush.msra.mxu0 %v181
    %678 = vmatpush.msra.mxu0 %v180
    %679 = vmatpush.msra.mxu0 %v179
    %680 = vmatpush.msra.mxu0 %v178
    %681 = vmatpush.msra.mxu0 %v177
    %682 = vmatpush.msra.mxu0 %v176
    %683 = vmatpush.msra.mxu0 %v175
    %684 = vmatpush.msra.mxu0 %v174
    %685 = vmatpush.msra.mxu0 %v173
    %686 = vmatpush.msra.mxu0 %v172
    %687 = vmatmul.f32.gmra.mxu0 %v445
    %v688 = vpop.f32.mrf.mxu0
    %v689 = vadd.f32 %v669, %v688
    %690 = vdwg.mxu0
    %691 = vmatpush.msra.mxu0 %v203
    %692 = vmatpush.msra.mxu0 %v202
    %693 = vmatpush.msra.mxu0 %v201
    %694 = vmatpush.msra.mxu0 %v200
    %695 = vmatpush.msra.mxu0 %v199
    %696 = vmatpush.msra.mxu0 %v198
    %697 = vmatpush.msra.mxu0 %v197
    %698 = vmatpush.msra.mxu0 %v196
    %699 = vmatpush.msra.mxu0 %v195
    %700 = vmatpush.msra.mxu0 %v194
    %701 = vmatpush.msra.mxu0 %v193
    %702 = vmatpush.msra.mxu0 %v192
    %703 = vmatpush.msra.mxu0 %v191
    %704 = vmatpush.msra.mxu0 %v190
    %705 = vmatpush.msra.mxu0 %v189
    %706 = vmatpush.msra.mxu0 %v188
    %707 = vmatmul.f32.gmra.mxu0 %v446
    %v708 = vpop.f32.mrf.mxu0
    %v709 = vadd.f32 %v689, %v708
    %710 = vdwg.mxu0
    %711 = vmatpush.msra.mxu0 %v219
    %712 = vmatpush.msra.mxu0 %v218
    %713 = vmatpush.msra.mxu0 %v217
    %714 = vmatpush.msra.mxu0 %v216
    %715 = vmatpush.msra.mxu0 %v215
    %716 = vmatpush.msra.mxu0 %v214
    %717 = vmatpush.msra.mxu0 %v213
    %718 = vmatpush.msra.mxu0 %v212
    %719 = vmatpush.msra.mxu0 %v211
    %720 = vmatpush.msra.mxu0 %v210
    %721 = vmatpush.msra.mxu0 %v209
    %722 = vmatpush.msra.mxu0 %v208
    %723 = vmatpush.msra.mxu0 %v207
    %724 = vmatpush.msra.mxu0 %v206
    %725 = vmatpush.msra.mxu0 %v205
    %726 = vmatpush.msra.mxu0 %v204
    %727 = vmatmul.f32.gmra.mxu0 %v447
    %v728 = vpop.f32.mrf.mxu0
    %v729 = vadd.f32 %v709, %v728
    %730 = vdwg.mxu0
    %731 = vmatpush.msra.mxu0 %v235
    %732 = vmatpush.msra.mxu0 %v234
    %733 = vmatpush.msra.mxu0 %v233
    %734 = vmatpush.msra.mxu0 %v232
    %735 = vmatpush.msra.mxu0 %v231
    %736 = vmatpush.msra.mxu0 %v230
    %737 = vmatpush.msra.mxu0 %v229
    %738 = vmatpush.msra.mxu0 %v228
    %739 = vmatpush.msra.mxu0 %v227
    %740 = vmatpush.msra.mxu0 %v226
    %741 = vmatpush.msra.mxu0 %v225
    %742 = vmatpush.msra.mxu0 %v224
    %743 = vmatpush.msra.mxu0 %v223
    %744 = vmatpush.msra.mxu0 %v222
    %745 = vmatpush.msra.mxu0 %v221
    %746 = vmatpush.msra.mxu0 %v220
    %747 = vmatmul.f32.gmra.mxu0 %v448
    %v748 = vpop.f32.mrf.mxu0
    %v749 = vadd.f32 %v729, %v748
    %750 = vdwg.mxu0
    %751 = vmatpush.msra.mxu0 %v251
    %752 = vmatpush.msra.mxu0 %v250
    %753 = vmatpush.msra.mxu0 %v249
    %754 = vmatpush.msra.mxu0 %v248
    %755 = vmatpush.msra.mxu0 %v247
    %756 = vmatpush.msra.mxu0 %v246
    %757 = vmatpush.msra.mxu0 %v245
    %758 = vmatpush.msra.mxu0 %v244
    %759 = vmatpush.msra.mxu0 %v243
    %760 = vmatpush.msra.mxu0 %v242
    %761 = vmatpush.msra.mxu0 %v241
    %762 = vmatpush.msra.mxu0 %v240
    %763 = vmatpush.msra.mxu0 %v239
    %764 = vmatpush.msra.mxu0 %v238
    %765 = vmatpush.msra.mxu0 %v237
    %766 = vmatpush.msra.mxu0 %v236
    %767 = vmatmul.f32.gmra.mxu0 %v449
    %v768 = vpop.f32.mrf.mxu0
    %v769 = vadd.f32 %v749, %v768
    %770 = vdwg.mxu0
    %771 = vmatpush.msra.mxu0 %v267
    %772 = vmatpush.msra.mxu0 %v266
    %773 = vmatpush.msra.mxu0 %v265
    %774 = vmatpush.msra.mxu0 %v264
    %775 = vmatpush.msra.mxu0 %v263
    %776 = vmatpush.msra.mxu0 %v262
    %777 = vmatpush.msra.mxu0 %v261
    %778 = vmatpush.msra.mxu0 %v260
    %779 = vmatpush.msra.mxu0 %v259
    %780 = vmatpush.msra.mxu0 %v258
    %781 = vmatpush.msra.mxu0 %v257
    %782 = vmatpush.msra.mxu0 %v256
    %783 = vmatpush.msra.mxu0 %v255
    %784 = vmatpush.msra.mxu0 %v254
    %785 = vmatpush.msra.mxu0 %v253
    %786 = vmatpush.msra.mxu0 %v252
    %787 = vmatmul.f32.gmra.mxu0 %v450
    %v788 = vpop.f32.mrf.mxu0
    %v789 = vadd.f32 %v769, %v788
    %790 = vdwg.mxu0
    %791 = vmatpush.msra.mxu0 %v283
    %792 = vmatpush.msra.mxu0 %v282
    %793 = vmatpush.msra.mxu0 %v281
    %794 = vmatpush.msra.mxu0 %v280
    %795 = vmatpush.msra.mxu0 %v279
    %796 = vmatpush.msra.mxu0 %v278
    %797 = vmatpush.msra.mxu0 %v277
    %798 = vmatpush.msra.mxu0 %v276
    %799 = vmatpush.msra.mxu0 %v275
    %800 = vmatpush.msra.mxu0 %v274
    %801 = vmatpush.msra.mxu0 %v273
    %802 = vmatpush.msra.mxu0 %v272
    %803 = vmatpush.msra.mxu0 %v271
    %804 = vmatpush.msra.mxu0 %v270
    %805 = vmatpush.msra.mxu0 %v269
    %806 = vmatpush.msra.mxu0 %v268
    %807 = vmatmul.f32.gmra.mxu0 %v451
    %v808 = vpop.f32.mrf.mxu0
    %v809 = vadd.f32 %v789, %v808
    %810 = vdwg.mxu0
    %811 = vmatpush.msra.mxu0 %v299
    %812 = vmatpush.msra.mxu0 %v298
    %813 = vmatpush.msra.mxu0 %v297
    %814 = vmatpush.msra.mxu0 %v296
    %815 = vmatpush.msra.mxu0 %v295
    %816 = vmatpush.msra.mxu0 %v294
    %817 = vmatpush.msra.mxu0 %v293
    %818 = vmatpush.msra.mxu0 %v292
    %819 = vmatpush.msra.mxu0 %v291
    %820 = vmatpush.msra.mxu0 %v290
    %821 = vmatpush.msra.mxu0 %v289
    %822 = vmatpush.msra.mxu0 %v288
    %823 = vmatpush.msra.mxu0 %v287
    %824 = vmatpush.msra.mxu0 %v286
    %825 = vmatpush.msra.mxu0 %v285
    %826 = vmatpush.msra.mxu0 %v284
    %827 = vmatmul.f32.gmra.mxu0 %v454
    %v828 = vpop.f32.mrf.mxu0
    %v829 = vadd.f32 %v809, %v828
    %830 = vdwg.mxu0
    %831 = vmatpush.msra.mxu0 %v315
    %832 = vmatpush.msra.mxu0 %v314
    %833 = vmatpush.msra.mxu0 %v313
    %834 = vmatpush.msra.mxu0 %v312
    %835 = vmatpush.msra.mxu0 %v311
    %836 = vmatpush.msra.mxu0 %v310
    %837 = vmatpush.msra.mxu0 %v309
    %838 = vmatpush.msra.mxu0 %v308
    %839 = vmatpush.msra.mxu0 %v307
    %840 = vmatpush.msra.mxu0 %v306
    %841 = vmatpush.msra.mxu0 %v305
    %842 = vmatpush.msra.mxu0 %v304
    %843 = vmatpush.msra.mxu0 %v303
    %844 = vmatpush.msra.mxu0 %v302
    %845 = vmatpush.msra.mxu0 %v301
    %846 = vmatpush.msra.mxu0 %v300
    %847 = vmatmul.f32.gmra.mxu0 %v455
    %v848 = vpop.f32.mrf.mxu0
    %v849 = vadd.f32 %v829, %v848
    %850 = vdwg.mxu0
    %851 = vmatpush.msra.mxu0 %v331
    %852 = vmatpush.msra.mxu0 %v330
    %853 = vmatpush.msra.mxu0 %v329
    %854 = vmatpush.msra.mxu0 %v328
    %855 = vmatpush.msra.mxu0 %v327
    %856 = vmatpush.msra.mxu0 %v326
    %857 = vmatpush.msra.mxu0 %v325
    %858 = vmatpush.msra.mxu0 %v324
    %859 = vmatpush.msra.mxu0 %v323
    %860 = vmatpush.msra.mxu0 %v322
    %861 = vmatpush.msra.mxu0 %v321
    %862 = vmatpush.msra.mxu0 %v320
    %863 = vmatpush.msra.mxu0 %v319
    %864 = vmatpush.msra.mxu0 %v318
    %865 = vmatpush.msra.mxu0 %v317
    %866 = vmatpush.msra.mxu0 %v316
    %867 = vmatmul.f32.gmra.mxu0 %v456
    %v868 = vpop.f32.mrf.mxu0
    %v869 = vadd.f32 %v849, %v868
    %870 = vdwg.mxu0
    %871 = vmatpush.msra.mxu0 %v347
    %872 = vmatpush.msra.mxu0 %v346
    %873 = vmatpush.msra.mxu0 %v345
    %874 = vmatpush.msra.mxu0 %v344
    %875 = vmatpush.msra.mxu0 %v343
    %876 = vmatpush.msra.mxu0 %v342
    %877 = vmatpush.msra.mxu0 %v341
    %878 = vmatpush.msra.mxu0 %v340
    %879 = vmatpush.msra.mxu0 %v339
    %880 = vmatpush.msra.mxu0 %v338
    %881 = vmatpush.msra.mxu0 %v337
    %882 = vmatpush.msra.mxu0 %v336
    %883 = vmatpush.msra.mxu0 %v335
    %884 = vmatpush.msra.mxu0 %v334
    %885 = vmatpush.msra.mxu0 %v333
    %886 = vmatpush.msra.mxu0 %v332
    %887 = vmatmul.f32.gmra.mxu0 %v457
    %v888 = vpop.f32.mrf.mxu0
    %v889 = vadd.f32 %v869, %v888
    %890 = vdwg.mxu0
    %891 = vmatpush.msra.mxu0 %v363
    %892 = vmatpush.msra.mxu0 %v362
    %893 = vmatpush.msra.mxu0 %v361
    %894 = vmatpush.msra.mxu0 %v360
    %895 = vmatpush.msra.mxu0 %v359
    %896 = vmatpush.msra.mxu0 %v358
    %897 = vmatpush.msra.mxu0 %v357
    %898 = vmatpush.msra.mxu0 %v356
    %899 = vmatpush.msra.mxu0 %v355
    %900 = vmatpush.msra.mxu0 %v354
    %901 = vmatpush.msra.mxu0 %v353
    %902 = vmatpush.msra.mxu0 %v352
    %903 = vmatpush.msra.mxu0 %v351
    %904 = vmatpush.msra.mxu0 %v350
    %905 = vmatpush.msra.mxu0 %v349
    %906 = vmatpush.msra.mxu0 %v348
    %907 = vmatmul.f32.gmra.mxu0 %v458
    %v908 = vpop.f32.mrf.mxu0
    %v909 = vadd.f32 %v889, %v908
    %910 = vdwg.mxu0
    %911 = vmatpush.msra.mxu0 %v379
    %912 = vmatpush.msra.mxu0 %v378
    %913 = vmatpush.msra.mxu0 %v377
    %914 = vmatpush.msra.mxu0 %v376
    %915 = vmatpush.msra.mxu0 %v375
    %916 = vmatpush.msra.mxu0 %v374
    %917 = vmatpush.msra.mxu0 %v373
    %918 = vmatpush.msra.mxu0 %v372
    %919 = vmatpush.msra.mxu0 %v371
    %920 = vmatpush.msra.mxu0 %v370
    %921 = vmatpush.msra.mxu0 %v369
    %922 = vmatpush.msra.mxu0 %v368
    %923 = vmatpush.msra.mxu0 %v367
    %924 = vmatpush.msra.mxu0 %v366
    %925 = vmatpush.msra.mxu0 %v365
    %926 = vmatpush.msra.mxu0 %v364
    %927 = vmatmul.f32.gmra.mxu0 %v459
    %v928 = vpop.f32.mrf.mxu0
    %v929 = vadd.f32 %v909, %v928
    %930 = vdwg.mxu0
    %931 = vmatpush.msra.mxu0 %v395
    %932 = vmatpush.msra.mxu0 %v394
    %933 = vmatpush.msra.mxu0 %v393
    %934 = vmatpush.msra.mxu0 %v392
    %935 = vmatpush.msra.mxu0 %v391
    %936 = vmatpush.msra.mxu0 %v390
    %937 = vmatpush.msra.mxu0 %v389
    %938 = vmatpush.msra.mxu0 %v388
    %939 = vmatpush.msra.mxu0 %v387
    %940 = vmatpush.msra.mxu0 %v386
    %941 = vmatpush.msra.mxu0 %v385
    %942 = vmatpush.msra.mxu0 %v384
    %943 = vmatpush.msra.mxu0 %v383
    %944 = vmatpush.msra.mxu0 %v382
    %945 = vmatpush.msra.mxu0 %v381
    %946 = vmatpush.msra.mxu0 %v380
    %947 = vmatmul.f32.gmra.mxu0 %v460
    %v948 = vpop.f32.mrf.mxu0
    %v949 = vadd.f32 %v929, %v948
    %950 = vdwg.mxu0
    %951 = vmatpush.msra.mxu0 %v411
    %952 = vmatpush.msra.mxu0 %v410
    %953 = vmatpush.msra.mxu0 %v409
    %954 = vmatpush.msra.mxu0 %v408
    %955 = vmatpush.msra.mxu0 %v407
    %956 = vmatpush.msra.mxu0 %v406
    %957 = vmatpush.msra.mxu0 %v405
    %958 = vmatpush.msra.mxu0 %v404
    %959 = vmatpush.msra.mxu0 %v403
    %960 = vmatpush.msra.mxu0 %v402
    %961 = vmatpush.msra.mxu0 %v401
    %962 = vmatpush.msra.mxu0 %v400
    %963 = vmatpush.msra.mxu0 %v399
    %964 = vmatpush.msra.mxu0 %v398
    %965 = vmatpush.msra.mxu0 %v397
    %966 = vmatpush.msra.mxu0 %v396
    %967 = vmatmul.f32.gmra.mxu0 %v461
    %v968 = vpop.f32.mrf.mxu0
    %v969 = vadd.f32 %v949, %v968
    %970 = vdwg.mxu0
    %971 = vmatpush.msra.mxu0 0.0
    %972 = vmatpush.msra.mxu0 0.0
    %973 = vmatpush.msra.mxu0 0.0
    %974 = vmatpush.msra.mxu0 0.0
    %975 = vmatpush.msra.mxu0 0.0
    %976 = vmatpush.msra.mxu0 0.0
    %977 = vmatpush.msra.mxu0 0.0
    %978 = vmatpush.msra.mxu0 0.0
    %979 = vmatpush.msra.mxu0 %v419
    %980 = vmatpush.msra.mxu0 %v418
    %981 = vmatpush.msra.mxu0 %v417
    %982 = vmatpush.msra.mxu0 %v416
    %983 = vmatpush.msra.mxu0 %v415
    %984 = vmatpush.msra.mxu0 %v414
    %985 = vmatpush.msra.mxu0 %v413
    %986 = vmatpush.msra.mxu0 %v412
    %987 = vmatmul.f32.gmra.mxu0 %v489
    %v988 = vpop.f32.mrf.mxu0
    %v989 = vadd.f32 %v969, %v988
    %990 = vdwg.mxu0
    %v991 = vmax.f32 %v989, 0.0
    %v992 = vld [vmem:[%s3] sm:$0xff]
    %v993 = vld [vmem:[%s3 + $0x8] sm:$0xff]
    %v994 = vld [vmem:[%s3 + $0x10] sm:$0xff]
    %v995 = vld [vmem:[%s3 + $0x18] sm:$0xff]
    %v996 = vld [vmem:[%s3 + $0x20] sm:$0xff]
    %v997 = vld [vmem:[%s3 + $0x28] sm:$0xff]
    %v998 = vld [vmem:[%s3 + $0x30] sm:$0xff]
    %v999 = vld [vmem:[%s3 + $0x38] sm:$0xff]
    %v1000 = vld [vmem:[%s3 + $0x40] sm:$0xff]
    %v1001 = vld [vmem:[%s3 + $0x48] sm:$0xff]
    %v1002 = vld [vmem:[%s3 + $0x50] sm:$0xff]
    %v1003 = vld [vmem:[%s3 + $0x58] sm:$0xff]
    %v1004 = vld [vmem:[%s3 + $0x60] sm:$0xff]
    %v1005 = vld [vmem:[%s3 + $0x68] sm:$0xff]
    %v1006 = vld [vmem:[%s3 + $0x70] sm:$0xff]
    %v1007 = vld [vmem:[%s3 + $0x78] sm:$0xff]
    %v1008 = vld [vmem:[%s4] sm:$0x1]
    %v1010 = vperm.slane %v1008, 0
    %1012 = vmatpush.msra.mxu0 %v1007
    %1013 = vmatpush.msra.mxu0 %v1006
    %1014 = vmatpush.msra.mxu0 %v1005
    %1015 = vmatpush.msra.mxu0 %v1004
    %1016 = vmatpush.msra.mxu0 %v1003
    %1017 = vmatpush.msra.mxu0 %v1002
    %1018 = vmatpush.msra.mxu0 %v1001
    %1019 = vmatpush.msra.mxu0 %v1000
    %1020 = vmatpush.msra.mxu0 %v999
    %1021 = vmatpush.msra.mxu0 %v998
    %1022 = vmatpush.msra.mxu0 %v997
    %1023 = vmatpush.msra.mxu0 %v996
    %1024 = vmatpush.msra.mxu0 %v995
    %1025 = vmatpush.msra.mxu0 %v994
    %1026 = vmatpush.msra.mxu0 %v993
    %1027 = vmatpush.msra.mxu0 %v992
    %1028 = vmatmul.f32.gmra.mxu0 %v991
    %v1029 = vpop.f32.mrf.mxu0
    %v1030 = vadd.f32 %v1010, %v1029
    %1031 = vdwg.mxu0
    %vm1032 = vcmask 74752
    %1033 = vst.msk [vmem:[#allocation2] sm:$0x3] %vm1032, %v1030
    // Predicated region
    $region22: #{simple_cnn_forward.5} parent=1 // pred_check
      _
    $region23: #{simple_cnn_forward.5} parent=1 // pred_check_branch
      %1035 = sbr.rel (0) target = $region25
    $region24: #{simple_cnn_forward.5} parent=1 // pred_region
      %1037 = vsyncadd [#allocation3], 0
      %s1039 = sshll.u32 [#allocation2], 4
      %s1040 = int_to_ptr.vmem [resolvable:$true] %s1039
      %s1041 = sshll.u32 %s5, 4
      %s1042 = int_to_ptr.hbm [resolvable:$true] %s1041
      %1044 = dma.vmem_to_hbm [thread:$0]  %s1040, 32, %s1042, [#allocation3]
    $region25: #{simple_cnn_forward.5} parent=1 // pred_fallthru
      _
    // Predicated region
    $region26: #{simple_cnn_forward.5} parent=1 // pred_check
      _
    $region27: #{simple_cnn_forward.5} parent=1 // pred_check_branch
      %1046 = sbr.rel (0) target = $region29
    $region28: #{simple_cnn_forward.5} parent=1 // pred_region
      %1048 = dma.done [#allocation3], 32
    $region29: #{simple_cnn_forward.5} parent=1 // pred_fallthru
      _
    %1049 = vsyncpa [#allocation3], 1

// kernel: simple_cnn_forward.3
$region0: #{simple_cnn_forward.3}
  #allocation0 [shape = 'u32[]', space=smem, size = 0x4, offset = 0x4, fixed_abs, tag = 'smem constant byte address 0x4 - core index']
  #allocation1 [shape = 'u32[72,128]{1,0:T(1,128)}', space=vmem, size = 0x9000, scoped, tag = 'internal scratch']
  #allocation2 [shape = 'f32[904,32]{1,0:T(8,128)}', space=vmem, size = 0x71000, scoped, tag = 'scratch operand']
  %s0 = inlined_call_operand.vmem [shape: f32[2,992,1], index: 0, kind: input, shape index: {}]
  %s1 = inlined_call_operand.hbm [shape: f32[9,32], index: 1, kind: input, shape index: {}]
  %s2 = inlined_call_operand.hbm [shape: f32[1,32], index: 2, kind: input, shape index: {}]
  %s3 = inlined_call_operand.vmem [shape: f32[2,14,32,32], index: 3, kind: output, shape index: {}]
  %s4 = sld [smem:[#allocation0]]
  $region53: #{simple_cnn_forward.3} parent=0
    _
  %s6 = ssub.s32 1, %s4
  %s7 = scalar_select 0, %s6, %s4
  $region1: #{simple_cnn_forward.3} parent=0
    #allocation3 [shape = 'u8[8192]{0}', space=vmem, size = 0x2000, scoped, tag = 'input window, operand 1, single buffered']
    #allocation4 [shape = 's32[2]{0}', space=sflag, size = 0x8, scoped, tag = 'scoped memory for simple_cnn_forward.3']
    #allocation5 [shape = 'u8[512]{0}', space=vmem, size = 0x400, scoped, tag = 'input window, operand 2, single buffered']
    #allocation6 [shape = 's32[1]{0}', space=sflag, size = 0x4, scoped, tag = 'scoped memory for simple_cnn_forward.3']
    %8 = vsyncpa [#allocation4], 0
    %9 = vsyncpa [#allocation6], 0
    loop: start=0, step=1, limit=4
    $region2: #{simple_cnn_forward.3} parent=1 // loop_pre_header
      _
    $region3: #{simple_cnn_forward.3} parent=1 // loop_header
      %s11 = sphi 0, %s15
      %p12 = scmp.ge.s32.totalorder %s11, 4
      %s21 = sphi 0, %s23
      %s24 = sphi 0, %s21
      %s25 = sphi 0, %s24
      %s41 = sphi 0, %s25
      %s45 = sphi 0, %s45
      %s47 = sphi 0, %s45
      %s48 = sphi 0, %s47
      %s62 = sphi 0, %s48
      %s66 = sphi 0, %s66
      %s68 = sphi 0, %s66
      %s69 = sphi 0, %s68
      %s83 = sphi 0, %s69
      %s89 = sphi 0, %s91
      %s92 = sphi 0, %s89
      %s93 = sphi 0, %s92
      %s109 = sphi 0, %s93
    $region4: #{simple_cnn_forward.3} parent=1 // loop_header_branch
      %14 = sbr.rel (%p12) target = $region8
    $region5: #{simple_cnn_forward.3} parent=1 // loop_body
      %s16 = ssub.s32 %s11, 1
      %s17 = ssub.s32 %s11, 2
      %s18 = sadd.s32 %s11, 1
      %s19 = ssub.s32 %s11, %s18
      %p20 = scmp.eq.s32.totalorder %s19, 0
      %s22 = sadd.s32 %s21, 1
      %s23 = scalar_select %p20, %s21, %s22
      %p26 = pneg %p20
      %p27 = scmp.eq.s32.totalorder %s11, 1
      %p28 = por %p26, %p27
      %p29 = scmp.ne.s32.totalorder %s21, %s24
      %p30 = scmp.eq.s32.totalorder %s11, 0
      %p31 = por %p29, %p30
      %p32 = scmp.ne.s32.totalorder %s21, %s24
      %p33 = scmp.eq.s32.totalorder %s16, 1
      %p34 = por %p32, %p33
      %p35 = scmp.ne.s32.totalorder %s24, %s25
      %p36 = scmp.eq.s32.totalorder %s16, 0
      %p37 = por %p35, %p36
      %p38 = scmp.ne.s32.totalorder %s24, %s25
      %p39 = scmp.eq.s32.totalorder %s17, 1
      %p40 = por %p38, %p39
      %p42 = scmp.ne.s32.totalorder %s25, %s41
      %p43 = scmp.eq.s32.totalorder %s17, 0
      %p44 = por %p42, %p43
      %s46 = sadd.s32 %s45, 1
      %p49 = scmp.eq.s32.totalorder %s11, 1
      %p50 = scmp.ne.s32.totalorder %s45, %s47
      %p51 = scmp.eq.s32.totalorder %s11, 0
      %p52 = por %p50, %p51
      %p53 = scmp.ne.s32.totalorder %s45, %s47
      %p54 = scmp.eq.s32.totalorder %s16, 1
      %p55 = por %p53, %p54
      %p56 = scmp.ne.s32.totalorder %s47, %s48
      %p57 = scmp.eq.s32.totalorder %s16, 0
      %p58 = por %p56, %p57
      %p59 = scmp.ne.s32.totalorder %s47, %s48
      %p60 = scmp.eq.s32.totalorder %s17, 1
      %p61 = por %p59, %p60
      %p63 = scmp.ne.s32.totalorder %s48, %s62
      %p64 = scmp.eq.s32.totalorder %s17, 0
      %p65 = por %p63, %p64
      %s67 = sadd.s32 %s66, 1
      %p70 = scmp.eq.s32.totalorder %s11, 1
      %p71 = scmp.ne.s32.totalorder %s66, %s68
      %p72 = scmp.eq.s32.totalorder %s11, 0
      %p73 = por %p71, %p72
      %p74 = scmp.ne.s32.totalorder %s66, %s68
      %p75 = scmp.eq.s32.totalorder %s16, 1
      %p76 = por %p74, %p75
      %p77 = scmp.ne.s32.totalorder %s68, %s69
      %p78 = scmp.eq.s32.totalorder %s16, 0
      %p79 = por %p77, %p78
      %p80 = scmp.ne.s32.totalorder %s68, %s69
      %p81 = scmp.eq.s32.totalorder %s17, 1
      %p82 = por %p80, %p81
      %p84 = scmp.ne.s32.totalorder %s69, %s83
      %p85 = scmp.eq.s32.totalorder %s17, 0
      %p86 = por %p84, %p85
      %s87 = ssub.s32 %s11, %s18
      %p88 = scmp.eq.s32.totalorder %s87, 0
      %s90 = sadd.s32 %s89, 1
      %s91 = scalar_select %p88, %s89, %s90
      %p94 = pneg %p88
      %p95 = scmp.eq.s32.totalorder %s11, 1
      %p96 = por %p94, %p95
      %p97 = scmp.ne.s32.totalorder %s89, %s92
      %p98 = scmp.eq.s32.totalorder %s11, 0
      %p99 = por %p97, %p98
      %p100 = scmp.ne.s32.totalorder %s89, %s92
      %p101 = scmp.eq.s32.totalorder %s16, 1
      %p102 = por %p100, %p101
      %p103 = scmp.ne.s32.totalorder %s92, %s93
      %p104 = scmp.eq.s32.totalorder %s16, 0
      %p105 = por %p103, %p104
      %p106 = scmp.ne.s32.totalorder %s92, %s93
      %p107 = scmp.eq.s32.totalorder %s17, 1
      %p108 = por %p106, %p107
      %p110 = scmp.ne.s32.totalorder %s93, %s109
      %p111 = scmp.eq.s32.totalorder %s17, 0
      %p112 = por %p110, %p111
      %p113 = scmp.le.s32.totalorder 1, %s11
      %p114 = scmp.lt.s32.totalorder %s11, 3
      %p115 = pnand %p113, %p114
      %p116 = pneg %p115
      // Predicated region
      $region9: #{simple_cnn_forward.3} parent=5 // pred_check
        _
      $region10: #{simple_cnn_forward.3} parent=5 // pred_check_branch
        %118 = sbr.rel (%p115) target = $region12
      $region11: #{simple_cnn_forward.3} parent=5 // pred_region
        %s119 = ssub.s32 %s11, 1
        // Predicated region
        $region13: #{simple_cnn_forward.3} parent=11 // pred_check
          %p120 = pneg %p58
        $region14: #{simple_cnn_forward.3} parent=11 // pred_check_branch
          %122 = sbr.rel (%p120) target = $region16
        $region15: #{simple_cnn_forward.3} parent=11 // pred_region
          %124 = vsyncadd [#allocation4], 0
          %s125 = sshll.u32 %s1, 4
          %s126 = int_to_ptr.hbm [resolvable:$true] %s125
          %s127 = sshll.u32 [#allocation3], 4
          %s128 = int_to_ptr.vmem [resolvable:$true] %s127
          %133 = dma.hbm_to_vmem [thread:$0]  %s126, 256, %s128, [#allocation4], 128, 128, 8
        $region16: #{simple_cnn_forward.3} parent=11 // pred_fallthru
          _
        // Predicated region
        $region17: #{simple_cnn_forward.3} parent=11 // pred_check
          %p134 = pneg %p79
        $region18: #{simple_cnn_forward.3} parent=11 // pred_check_branch
          %136 = sbr.rel (%p134) target = $region20
        $region19: #{simple_cnn_forward.3} parent=11 // pred_region
          %138 = vsyncadd [#allocation6], 0
          %s140 = sshll.u32 %s2, 4
          %s141 = int_to_ptr.hbm [resolvable:$true] %s140
          %s142 = sshll.u32 [#allocation5], 4
          %s143 = int_to_ptr.vmem [resolvable:$true] %s142
          %145 = dma.hbm_to_vmem [thread:$0]  %s141, 16, %s143, [#allocation6]
        $region20: #{simple_cnn_forward.3} parent=11 // pred_fallthru
          _
      $region12: #{simple_cnn_forward.3} parent=5 // pred_fallthru
        _
      %p146 = scmp.lt.s32.totalorder %s11, 2
      // Predicated region
      $region21: #{simple_cnn_forward.3} parent=5 // pred_check
        %p147 = pneg %p146
      $region22: #{simple_cnn_forward.3} parent=5 // pred_check_branch
        %149 = sbr.rel (%p147) target = $region24
      $region23: #{simple_cnn_forward.3} parent=5 // pred_region
        // Predicated region
        $region25: #{simple_cnn_forward.3} parent=23 // pred_check
          %p150 = pneg %p31
        $region26: #{simple_cnn_forward.3} parent=23 // pred_check_branch
          %152 = sbr.rel (%p150) target = $region28
        $region27: #{simple_cnn_forward.3} parent=23 // pred_region
          %p153 = scmp.lt.s32.totalorder %s11, 1
          %s154 = scalar_select %p153, %s11, 1
          %s155 = smul.addr %s154, 124
          %s156 = smul.addr %s155, 8
          %s157 = scalar_lea.vmem %s0, %s156
        $region28: #{simple_cnn_forward.3} parent=23 // pred_fallthru
          _
      $region24: #{simple_cnn_forward.3} parent=5 // pred_fallthru
        _
      %p158 = scmp.le.s32.totalorder 1, %s11
      %p159 = scmp.lt.s32.totalorder %s11, 3
      %p160 = pnand %p158, %p159
      %p161 = pneg %p160
      // Predicated region
      $region29: #{simple_cnn_forward.3} parent=5 // pred_check
        _
      $region30: #{simple_cnn_forward.3} parent=5 // pred_check_branch
        %163 = sbr.rel (%p160) target = $region32
      $region31: #{simple_cnn_forward.3} parent=5 // pred_region
        %s164 = ssub.s32 %s11, 1
        // Predicated region
        $region33: #{simple_cnn_forward.3} parent=31 // pred_check
          %p165 = pneg %p58
        $region34: #{simple_cnn_forward.3} parent=31 // pred_check_branch
          %167 = sbr.rel (%p165) target = $region36
        $region35: #{simple_cnn_forward.3} parent=31 // pred_region
          %169 = dma.done [#allocation4], 256
        $region36: #{simple_cnn_forward.3} parent=31 // pred_fallthru
          _
        // Predicated region
        $region37: #{simple_cnn_forward.3} parent=31 // pred_check
          %p170 = pneg %p79
        $region38: #{simple_cnn_forward.3} parent=31 // pred_check_branch
          %172 = sbr.rel (%p170) target = $region40
        $region39: #{simple_cnn_forward.3} parent=31 // pred_region
          %174 = dma.done [#allocation6], 16
        $region40: #{simple_cnn_forward.3} parent=31 // pred_fallthru
          _
        %p175 = scmp.lt.s32.totalorder %s16, 1
        %s176 = scalar_select %p175, %s16, 1
        %s177 = smul.addr %s176, 124
        %s178 = smul.addr %s177, 8
        %s179 = scalar_lea.vmem %s0, %s178
        %p180 = pneg %p37
        %p181 = pneg %p34
        %p182 = pneg %p58
        %p183 = pneg %p55
        %p184 = pneg %p79
        %p185 = pneg %p76
        %p186 = pneg %p105
        %p187 = pneg %p102
        %p188 = scmp.lt.s32.totalorder %s16, 1
        %s189 = scalar_select %p188, %s16, 1
        %s190 = smul.addr %s189, 56
        %s191 = smul.addr %s190, 8
        %s192 = scalar_lea.vmem %s3, %s191
        %p193 = scmp.lt.s32.totalorder %s16, 1
        %s194 = scalar_select %p193, %s16, 1
        %s195 = smul.addr %s194, 124
        %s196 = smul.addr %s195, 8
        %s197 = scalar_lea.vmem %s0, %s196
        %p198 = scmp.lt.s32.totalorder %s16, 1
        %s199 = scalar_select %p198, %s16, 1
        %s200 = smul.addr %s199, 56
        %s201 = smul.addr %s200, 8
        %s202 = scalar_lea.vmem %s3, %s201
        %v203 = vld [vmem:[%s197] sm:$0xff]
        %v204 = vld [vmem:[%s197 + $0x8] sm:$0xff]
        %v205 = vld [vmem:[%s197 + $0x10] sm:$0xff]
        %v206 = vld [vmem:[%s197 + $0x18] sm:$0xff]
        %v207 = vld [vmem:[%s197 + $0x20] sm:$0xff]
        %v208 = vld [vmem:[%s197 + $0x28] sm:$0xff]
        %v209 = vld [vmem:[%s197 + $0x30] sm:$0xff]
        %v210 = vld [vmem:[%s197 + $0x38] sm:$0xff]
        %v211 = vld [vmem:[%s197 + $0x40] sm:$0xff]
        %v212 = vld [vmem:[%s197 + $0x48] sm:$0xff]
        %v213 = vld [vmem:[%s197 + $0x50] sm:$0xff]
        %v214 = vld [vmem:[%s197 + $0x58] sm:$0xff]
        %v215 = vld [vmem:[%s197 + $0x60] sm:$0xff]
        %v216 = vld [vmem:[%s197 + $0x68] sm:$0xff]
        %v217 = vld [vmem:[%s197 + $0x70] sm:$0xff]
        %v218 = vld [vmem:[%s197 + $0x78] sm:$0xff]
        %v219 = vld [vmem:[%s197 + $0x80] sm:$0xff]
        %v220 = vld [vmem:[%s197 + $0x88] sm:$0xff]
        %v221 = vld [vmem:[%s197 + $0x90] sm:$0xff]
        %v222 = vld [vmem:[%s197 + $0x98] sm:$0xff]
        %v223 = vld [vmem:[%s197 + $0xa0] sm:$0xff]
        %v224 = vld [vmem:[%s197 + $0xa8] sm:$0xff]
        %v225 = vld [vmem:[%s197 + $0xb0] sm:$0xff]
        %v226 = vld [vmem:[%s197 + $0xb8] sm:$0xff]
        %v227 = vld [vmem:[%s197 + $0xc0] sm:$0xff]
        %v228 = vld [vmem:[%s197 + $0xc8] sm:$0xff]
        %v229 = vld [vmem:[%s197 + $0xd0] sm:$0xff]
        %v230 = vld [vmem:[%s197 + $0xd8] sm:$0xff]
        %v231 = vld [vmem:[%s197 + $0xe0] sm:$0xff]
        %v232 = vld [vmem:[%s197 + $0xe8] sm:$0xff]
        %v233 = vld [vmem:[%s197 + $0xf0] sm:$0xff]
        %v234 = vld [vmem:[%s197 + $0xf8] sm:$0xff]
        %v235 = vld [vmem:[%s197 + $0x100] sm:$0xff]
        %v236 = vld [vmem:[%s197 + $0x108] sm:$0xff]
        %v237 = vld [vmem:[%s197 + $0x110] sm:$0xff]
        %v238 = vld [vmem:[%s197 + $0x118] sm:$0xff]
        %v239 = vld [vmem:[%s197 + $0x120] sm:$0xff]
        %v240 = vld [vmem:[%s197 + $0x128] sm:$0xff]
        %v241 = vld [vmem:[%s197 + $0x130] sm:$0xff]
        %v242 = vld [vmem:[%s197 + $0x138] sm:$0xff]
        %v243 = vld [vmem:[%s197 + $0x140] sm:$0xff]
        %v244 = vld [vmem:[%s197 + $0x148] sm:$0xff]
        %v245 = vld [vmem:[%s197 + $0x150] sm:$0xff]
        %v246 = vld [vmem:[%s197 + $0x158] sm:$0xff]
        %v247 = vld [vmem:[%s197 + $0x160] sm:$0xff]
        %v248 = vld [vmem:[%s197 + $0x168] sm:$0xff]
        %v249 = vld [vmem:[%s197 + $0x170] sm:$0xff]
        %v250 = vld [vmem:[%s197 + $0x178] sm:$0xff]
        %v251 = vld [vmem:[%s197 + $0x180] sm:$0xff]
        %v252 = vld [vmem:[%s197 + $0x188] sm:$0xff]
        %v253 = vld [vmem:[%s197 + $0x190] sm:$0xff]
        %v254 = vld [vmem:[%s197 + $0x198] sm:$0xff]
        %v255 = vld [vmem:[%s197 + $0x1a0] sm:$0xff]
        %v256 = vld [vmem:[%s197 + $0x1a8] sm:$0xff]
        %v257 = vld [vmem:[%s197 + $0x1b0] sm:$0xff]
        %v258 = vld [vmem:[%s197 + $0x1b8] sm:$0xff]
        %v259 = vld [vmem:[%s197 + $0x1c0] sm:$0xff]
        %v260 = vld [vmem:[%s197 + $0x1c8] sm:$0xff]
        %v261 = vld [vmem:[%s197 + $0x1d0] sm:$0xff]
        %v262 = vld [vmem:[%s197 + $0x1d8] sm:$0xff]
        %v263 = vld [vmem:[%s197 + $0x1e0] sm:$0xff]
        %v264 = vld [vmem:[%s197 + $0x1e8] sm:$0xff]
        %v265 = vld [vmem:[%s197 + $0x1f0] sm:$0xff]
        %v266 = vld [vmem:[%s197 + $0x1f8] sm:$0xff]
        %v267 = vld [vmem:[%s197 + $0x200] sm:$0xff]
        %v268 = vld [vmem:[%s197 + $0x208] sm:$0xff]
        %v269 = vld [vmem:[%s197 + $0x210] sm:$0xff]
        %v270 = vld [vmem:[%s197 + $0x218] sm:$0xff]
        %v271 = vld [vmem:[%s197 + $0x220] sm:$0xff]
        %v272 = vld [vmem:[%s197 + $0x228] sm:$0xff]
        %v273 = vld [vmem:[%s197 + $0x230] sm:$0xff]
        %v274 = vld [vmem:[%s197 + $0x238] sm:$0xff]
        %v275 = vld [vmem:[%s197 + $0x240] sm:$0xff]
        %v276 = vld [vmem:[%s197 + $0x248] sm:$0xff]
        %v277 = vld [vmem:[%s197 + $0x250] sm:$0xff]
        %v278 = vld [vmem:[%s197 + $0x258] sm:$0xff]
        %v279 = vld [vmem:[%s197 + $0x260] sm:$0xff]
        %v280 = vld [vmem:[%s197 + $0x268] sm:$0xff]
        %v281 = vld [vmem:[%s197 + $0x270] sm:$0xff]
        %v282 = vld [vmem:[%s197 + $0x278] sm:$0xff]
        %v283 = vld [vmem:[%s197 + $0x280] sm:$0xff]
        %v284 = vld [vmem:[%s197 + $0x288] sm:$0xff]
        %v285 = vld [vmem:[%s197 + $0x290] sm:$0xff]
        %v286 = vld [vmem:[%s197 + $0x298] sm:$0xff]
        %v287 = vld [vmem:[%s197 + $0x2a0] sm:$0xff]
        %v288 = vld [vmem:[%s197 + $0x2a8] sm:$0xff]
        %v289 = vld [vmem:[%s197 + $0x2b0] sm:$0xff]
        %v290 = vld [vmem:[%s197 + $0x2b8] sm:$0xff]
        %v291 = vld [vmem:[%s197 + $0x2c0] sm:$0xff]
        %v292 = vld [vmem:[%s197 + $0x2c8] sm:$0xff]
        %v293 = vld [vmem:[%s197 + $0x2d0] sm:$0xff]
        %v294 = vld [vmem:[%s197 + $0x2d8] sm:$0xff]
        %v295 = vld [vmem:[%s197 + $0x2e0] sm:$0xff]
        %v296 = vld [vmem:[%s197 + $0x2e8] sm:$0xff]
        %v297 = vld [vmem:[%s197 + $0x2f0] sm:$0xff]
        %v298 = vld [vmem:[%s197 + $0x2f8] sm:$0xff]
        %v299 = vld [vmem:[%s197 + $0x300] sm:$0xff]
        %v300 = vld [vmem:[%s197 + $0x308] sm:$0xff]
        %v301 = vld [vmem:[%s197 + $0x310] sm:$0xff]
        %v302 = vld [vmem:[%s197 + $0x318] sm:$0xff]
        %v303 = vld [vmem:[%s197 + $0x320] sm:$0xff]
        %v304 = vld [vmem:[%s197 + $0x328] sm:$0xff]
        %v305 = vld [vmem:[%s197 + $0x330] sm:$0xff]
        %v306 = vld [vmem:[%s197 + $0x338] sm:$0xff]
        %v307 = vld [vmem:[%s197 + $0x340] sm:$0xff]
        %v308 = vld [vmem:[%s197 + $0x348] sm:$0xff]
        %v309 = vld [vmem:[%s197 + $0x350] sm:$0xff]
        %v310 = vld [vmem:[%s197 + $0x358] sm:$0xff]
        %v311 = vld [vmem:[%s197 + $0x360] sm:$0xff]
        %v312 = vld [vmem:[%s197 + $0x368] sm:$0xff]
        %v313 = vld [vmem:[%s197 + $0x370] sm:$0xff]
        %v314 = vld [vmem:[%s197 + $0x378] sm:$0xff]
        %v315 = vld [vmem:[#allocation3] sm:$0x1]
        %317 = vset.pattern.permute.xlu0 0
        %318 = vperm.xlu0 %317, %v203
        %v319 = vpop.permute.xlu0 %318
        %322 = vset.pattern.permute.xlu0 0
        %323 = vperm.xlu0 %322, %v204
        %v324 = vpop.permute.xlu0 %323
        %327 = vset.pattern.permute.xlu0 0
        %328 = vperm.xlu0 %327, %v205
        %v329 = vpop.permute.xlu0 %328
        %332 = vset.pattern.permute.xlu0 0
        %333 = vperm.xlu0 %332, %v206
        %v334 = vpop.permute.xlu0 %333
        %337 = vset.pattern.permute.xlu0 0
        %338 = vperm.xlu0 %337, %v207
        %v339 = vpop.permute.xlu0 %338
        %342 = vset.pattern.permute.xlu0 0
        %343 = vperm.xlu0 %342, %v208
        %v344 = vpop.permute.xlu0 %343
        %347 = vset.pattern.permute.xlu0 0
        %348 = vperm.xlu0 %347, %v209
        %v349 = vpop.permute.xlu0 %348
        %352 = vset.pattern.permute.xlu0 0
        %353 = vperm.xlu0 %352, %v210
        %v354 = vpop.permute.xlu0 %353
        %357 = vset.pattern.permute.xlu0 0
        %358 = vperm.xlu0 %357, %v211
        %v359 = vpop.permute.xlu0 %358
        %362 = vset.pattern.permute.xlu0 0
        %363 = vperm.xlu0 %362, %v212
        %v364 = vpop.permute.xlu0 %363
        %367 = vset.pattern.permute.xlu0 0
        %368 = vperm.xlu0 %367, %v213
        %v369 = vpop.permute.xlu0 %368
        %372 = vset.pattern.permute.xlu0 0
        %373 = vperm.xlu0 %372, %v214
        %v374 = vpop.permute.xlu0 %373
        %377 = vset.pattern.permute.xlu0 0
        %378 = vperm.xlu0 %377, %v215
        %v379 = vpop.permute.xlu0 %378
        %382 = vset.pattern.permute.xlu0 0
        %383 = vperm.xlu0 %382, %v216
        %v384 = vpop.permute.xlu0 %383
        %387 = vset.pattern.permute.xlu0 0
        %388 = vperm.xlu0 %387, %v217
        %v389 = vpop.permute.xlu0 %388
        %392 = vset.pattern.permute.xlu0 0
        %393 = vperm.xlu0 %392, %v218
        %v394 = vpop.permute.xlu0 %393
        %397 = vset.pattern.permute.xlu0 0
        %398 = vperm.xlu0 %397, %v219
        %v399 = vpop.permute.xlu0 %398
        %402 = vset.pattern.permute.xlu0 0
        %403 = vperm.xlu0 %402, %v220
        %v404 = vpop.permute.xlu0 %403
        %407 = vset.pattern.permute.xlu0 0
        %408 = vperm.xlu0 %407, %v221
        %v409 = vpop.permute.xlu0 %408
        %412 = vset.pattern.permute.xlu0 0
        %413 = vperm.xlu0 %412, %v222
        %v414 = vpop.permute.xlu0 %413
        %417 = vset.pattern.permute.xlu0 0
        %418 = vperm.xlu0 %417, %v223
        %v419 = vpop.permute.xlu0 %418
        %422 = vset.pattern.permute.xlu0 0
        %423 = vperm.xlu0 %422, %v224
        %v424 = vpop.permute.xlu0 %423
        %427 = vset.pattern.permute.xlu0 0
        %428 = vperm.xlu0 %427, %v225
        %v429 = vpop.permute.xlu0 %428
        %432 = vset.pattern.permute.xlu0 0
        %433 = vperm.xlu0 %432, %v226
        %v434 = vpop.permute.xlu0 %433
        %437 = vset.pattern.permute.xlu0 0
        %438 = vperm.xlu0 %437, %v227
        %v439 = vpop.permute.xlu0 %438
        %442 = vset.pattern.permute.xlu0 0
        %443 = vperm.xlu0 %442, %v228
        %v444 = vpop.permute.xlu0 %443
        %447 = vset.pattern.permute.xlu0 0
        %448 = vperm.xlu0 %447, %v229
        %v449 = vpop.permute.xlu0 %448
        %452 = vset.pattern.permute.xlu0 0
        %453 = vperm.xlu0 %452, %v230
        %v454 = vpop.permute.xlu0 %453
        %457 = vset.pattern.permute.xlu0 0
        %458 = vperm.xlu0 %457, %v231
        %v459 = vpop.permute.xlu0 %458
        %462 = vset.pattern.permute.xlu0 0
        %463 = vperm.xlu0 %462, %v232
        %v464 = vpop.permute.xlu0 %463
        %467 = vset.pattern.permute.xlu0 0
        %468 = vperm.xlu0 %467, %v233
        %v469 = vpop.permute.xlu0 %468
        %472 = vset.pattern.permute.xlu0 0
        %473 = vperm.xlu0 %472, %v234
        %v474 = vpop.permute.xlu0 %473
        %477 = vset.pattern.permute.xlu0 0
        %478 = vperm.xlu0 %477, %v235
        %v479 = vpop.permute.xlu0 %478
        %482 = vset.pattern.permute.xlu0 0
        %483 = vperm.xlu0 %482, %v236
        %v484 = vpop.permute.xlu0 %483
        %487 = vset.pattern.permute.xlu0 0
        %488 = vperm.xlu0 %487, %v237
        %v489 = vpop.permute.xlu0 %488
        %492 = vset.pattern.permute.xlu0 0
        %493 = vperm.xlu0 %492, %v238
        %v494 = vpop.permute.xlu0 %493
        %497 = vset.pattern.permute.xlu0 0
        %498 = vperm.xlu0 %497, %v239
        %v499 = vpop.permute.xlu0 %498
        %502 = vset.pattern.permute.xlu0 0
        %503 = vperm.xlu0 %502, %v240
        %v504 = vpop.permute.xlu0 %503
        %507 = vset.pattern.permute.xlu0 0
        %508 = vperm.xlu0 %507, %v241
        %v509 = vpop.permute.xlu0 %508
        %512 = vset.pattern.permute.xlu0 0
        %513 = vperm.xlu0 %512, %v242
        %v514 = vpop.permute.xlu0 %513
        %517 = vset.pattern.permute.xlu0 0
        %518 = vperm.xlu0 %517, %v243
        %v519 = vpop.permute.xlu0 %518
        %522 = vset.pattern.permute.xlu0 0
        %523 = vperm.xlu0 %522, %v244
        %v524 = vpop.permute.xlu0 %523
        %527 = vset.pattern.permute.xlu0 0
        %528 = vperm.xlu0 %527, %v245
        %v529 = vpop.permute.xlu0 %528
        %532 = vset.pattern.permute.xlu0 0
        %533 = vperm.xlu0 %532, %v246
        %v534 = vpop.permute.xlu0 %533
        %537 = vset.pattern.permute.xlu0 0
        %538 = vperm.xlu0 %537, %v247
        %v539 = vpop.permute.xlu0 %538
        %542 = vset.pattern.permute.xlu0 0
        %543 = vperm.xlu0 %542, %v248
        %v544 = vpop.permute.xlu0 %543
        %547 = vset.pattern.permute.xlu0 0
        %548 = vperm.xlu0 %547, %v249
        %v549 = vpop.permute.xlu0 %548
        %552 = vset.pattern.permute.xlu0 0
        %553 = vperm.xlu0 %552, %v250
        %v554 = vpop.permute.xlu0 %553
        %557 = vset.pattern.permute.xlu0 0
        %558 = vperm.xlu0 %557, %v251
        %v559 = vpop.permute.xlu0 %558
        %562 = vset.pattern.permute.xlu0 0
        %563 = vperm.xlu0 %562, %v252
        %v564 = vpop.permute.xlu0 %563
        %567 = vset.pattern.permute.xlu0 0
        %568 = vperm.xlu0 %567, %v253
        %v569 = vpop.permute.xlu0 %568
        %572 = vset.pattern.permute.xlu0 0
        %573 = vperm.xlu0 %572, %v254
        %v574 = vpop.permute.xlu0 %573
        %577 = vset.pattern.permute.xlu0 0
        %578 = vperm.xlu0 %577, %v255
        %v579 = vpop.permute.xlu0 %578
        %582 = vset.pattern.permute.xlu0 0
        %583 = vperm.xlu0 %582, %v256
        %v584 = vpop.permute.xlu0 %583
        %587 = vset.pattern.permute.xlu0 0
        %588 = vperm.xlu0 %587, %v257
        %v589 = vpop.permute.xlu0 %588
        %592 = vset.pattern.permute.xlu0 0
        %593 = vperm.xlu0 %592, %v258
        %v594 = vpop.permute.xlu0 %593
        %597 = vset.pattern.permute.xlu0 0
        %598 = vperm.xlu0 %597, %v259
        %v599 = vpop.permute.xlu0 %598
        %602 = vset.pattern.permute.xlu0 0
        %603 = vperm.xlu0 %602, %v260
        %v604 = vpop.permute.xlu0 %603
        %607 = vset.pattern.permute.xlu0 0
        %608 = vperm.xlu0 %607, %v261
        %v609 = vpop.permute.xlu0 %608
        %612 = vset.pattern.permute.xlu0 0
        %613 = vperm.xlu0 %612, %v262
        %v614 = vpop.permute.xlu0 %613
        %617 = vset.pattern.permute.xlu0 0
        %618 = vperm.xlu0 %617, %v263
        %v619 = vpop.permute.xlu0 %618
        %622 = vset.pattern.permute.xlu0 0
        %623 = vperm.xlu0 %622, %v264
        %v624 = vpop.permute.xlu0 %623
        %627 = vset.pattern.permute.xlu0 0
        %628 = vperm.xlu0 %627, %v265
        %v629 = vpop.permute.xlu0 %628
        %632 = vset.pattern.permute.xlu0 0
        %633 = vperm.xlu0 %632, %v266
        %v634 = vpop.permute.xlu0 %633
        %637 = vset.pattern.permute.xlu0 0
        %638 = vperm.xlu0 %637, %v267
        %v639 = vpop.permute.xlu0 %638
        %642 = vset.pattern.permute.xlu0 0
        %643 = vperm.xlu0 %642, %v268
        %v644 = vpop.permute.xlu0 %643
        %647 = vset.pattern.permute.xlu0 0
        %648 = vperm.xlu0 %647, %v269
        %v649 = vpop.permute.xlu0 %648
        %652 = vset.pattern.permute.xlu0 0
        %653 = vperm.xlu0 %652, %v270
        %v654 = vpop.permute.xlu0 %653
        %657 = vset.pattern.permute.xlu0 0
        %658 = vperm.xlu0 %657, %v271
        %v659 = vpop.permute.xlu0 %658
        %662 = vset.pattern.permute.xlu0 0
        %663 = vperm.xlu0 %662, %v272
        %v664 = vpop.permute.xlu0 %663
        %667 = vset.pattern.permute.xlu0 0
        %668 = vperm.xlu0 %667, %v273
        %v669 = vpop.permute.xlu0 %668
        %672 = vset.pattern.permute.xlu0 0
        %673 = vperm.xlu0 %672, %v274
        %v674 = vpop.permute.xlu0 %673
        %677 = vset.pattern.permute.xlu0 0
        %678 = vperm.xlu0 %677, %v275
        %v679 = vpop.permute.xlu0 %678
        %682 = vset.pattern.permute.xlu0 0
        %683 = vperm.xlu0 %682, %v276
        %v684 = vpop.permute.xlu0 %683
        %687 = vset.pattern.permute.xlu0 0
        %688 = vperm.xlu0 %687, %v277
        %v689 = vpop.permute.xlu0 %688
        %692 = vset.pattern.permute.xlu0 0
        %693 = vperm.xlu0 %692, %v278
        %v694 = vpop.permute.xlu0 %693
        %697 = vset.pattern.permute.xlu0 0
        %698 = vperm.xlu0 %697, %v279
        %v699 = vpop.permute.xlu0 %698
        %702 = vset.pattern.permute.xlu0 0
        %703 = vperm.xlu0 %702, %v280
        %v704 = vpop.permute.xlu0 %703
        %707 = vset.pattern.permute.xlu0 0
        %708 = vperm.xlu0 %707, %v281
        %v709 = vpop.permute.xlu0 %708
        %712 = vset.pattern.permute.xlu0 0
        %713 = vperm.xlu0 %712, %v282
        %v714 = vpop.permute.xlu0 %713
        %717 = vset.pattern.permute.xlu0 0
        %718 = vperm.xlu0 %717, %v283
        %v719 = vpop.permute.xlu0 %718
        %722 = vset.pattern.permute.xlu0 0
        %723 = vperm.xlu0 %722, %v284
        %v724 = vpop.permute.xlu0 %723
        %727 = vset.pattern.permute.xlu0 0
        %728 = vperm.xlu0 %727, %v285
        %v729 = vpop.permute.xlu0 %728
        %732 = vset.pattern.permute.xlu0 0
        %733 = vperm.xlu0 %732, %v286
        %v734 = vpop.permute.xlu0 %733
        %737 = vset.pattern.permute.xlu0 0
        %738 = vperm.xlu0 %737, %v287
        %v739 = vpop.permute.xlu0 %738
        %742 = vset.pattern.permute.xlu0 0
        %743 = vperm.xlu0 %742, %v288
        %v744 = vpop.permute.xlu0 %743
        %747 = vset.pattern.permute.xlu0 0
        %748 = vperm.xlu0 %747, %v289
        %v749 = vpop.permute.xlu0 %748
        %752 = vset.pattern.permute.xlu0 0
        %753 = vperm.xlu0 %752, %v290
        %v754 = vpop.permute.xlu0 %753
        %757 = vset.pattern.permute.xlu0 0
        %758 = vperm.xlu0 %757, %v291
        %v759 = vpop.permute.xlu0 %758
        %762 = vset.pattern.permute.xlu0 0
        %763 = vperm.xlu0 %762, %v292
        %v764 = vpop.permute.xlu0 %763
        %767 = vset.pattern.permute.xlu0 0
        %768 = vperm.xlu0 %767, %v293
        %v769 = vpop.permute.xlu0 %768
        %772 = vset.pattern.permute.xlu0 0
        %773 = vperm.xlu0 %772, %v294
        %v774 = vpop.permute.xlu0 %773
        %777 = vset.pattern.permute.xlu0 0
        %778 = vperm.xlu0 %777, %v295
        %v779 = vpop.permute.xlu0 %778
        %782 = vset.pattern.permute.xlu0 0
        %783 = vperm.xlu0 %782, %v296
        %v784 = vpop.permute.xlu0 %783
        %787 = vset.pattern.permute.xlu0 0
        %788 = vperm.xlu0 %787, %v297
        %v789 = vpop.permute.xlu0 %788
        %792 = vset.pattern.permute.xlu0 0
        %793 = vperm.xlu0 %792, %v298
        %v794 = vpop.permute.xlu0 %793
        %797 = vset.pattern.permute.xlu0 0
        %798 = vperm.xlu0 %797, %v299
        %v799 = vpop.permute.xlu0 %798
        %802 = vset.pattern.permute.xlu0 0
        %803 = vperm.xlu0 %802, %v300
        %v804 = vpop.permute.xlu0 %803
        %807 = vset.pattern.permute.xlu0 0
        %808 = vperm.xlu0 %807, %v301
        %v809 = vpop.permute.xlu0 %808
        %812 = vset.pattern.permute.xlu0 0
        %813 = vperm.xlu0 %812, %v302
        %v814 = vpop.permute.xlu0 %813
        %817 = vset.pattern.permute.xlu0 0
        %818 = vperm.xlu0 %817, %v303
        %v819 = vpop.permute.xlu0 %818
        %822 = vset.pattern.permute.xlu0 0
        %823 = vperm.xlu0 %822, %v304
        %v824 = vpop.permute.xlu0 %823
        %827 = vset.pattern.permute.xlu0 0
        %828 = vperm.xlu0 %827, %v305
        %v829 = vpop.permute.xlu0 %828
        %832 = vset.pattern.permute.xlu0 0
        %833 = vperm.xlu0 %832, %v306
        %v834 = vpop.permute.xlu0 %833
        %837 = vset.pattern.permute.xlu0 0
        %838 = vperm.xlu0 %837, %v307
        %v839 = vpop.permute.xlu0 %838
        %842 = vset.pattern.permute.xlu0 0
        %843 = vperm.xlu0 %842, %v308
        %v844 = vpop.permute.xlu0 %843
        %847 = vset.pattern.permute.xlu0 0
        %848 = vperm.xlu0 %847, %v309
        %v849 = vpop.permute.xlu0 %848
        %852 = vset.pattern.permute.xlu0 0
        %853 = vperm.xlu0 %852, %v310
        %v854 = vpop.permute.xlu0 %853
        %857 = vset.pattern.permute.xlu0 0
        %858 = vperm.xlu0 %857, %v311
        %v859 = vpop.permute.xlu0 %858
        %862 = vset.pattern.permute.xlu0 0
        %863 = vperm.xlu0 %862, %v312
        %v864 = vpop.permute.xlu0 %863
        %867 = vset.pattern.permute.xlu0 0
        %868 = vperm.xlu0 %867, %v313
        %v869 = vpop.permute.xlu0 %868
        %872 = vset.pattern.permute.xlu0 0
        %873 = vperm.xlu0 %872, %v314
        %v874 = vpop.permute.xlu0 %873
        %v876 = vperm.slane %v315, 0
        %v877 = vmul.f32 %v319, %v876
        %v878 = vmul.f32 %v324, %v876
        %v879 = vmul.f32 %v329, %v876
        %v880 = vmul.f32 %v334, %v876
        %v881 = vmul.f32 %v339, %v876
        %v882 = vmul.f32 %v344, %v876
        %v883 = vmul.f32 %v349, %v876
        %v884 = vmul.f32 %v354, %v876
        %v885 = vmul.f32 %v359, %v876
        %v886 = vmul.f32 %v364, %v876
        %v887 = vmul.f32 %v369, %v876
        %v888 = vmul.f32 %v374, %v876
        %v889 = vmul.f32 %v379, %v876
        %v890 = vmul.f32 %v384, %v876
        %v891 = vmul.f32 %v389, %v876
        %v892 = vmul.f32 %v394, %v876
        %v893 = vmul.f32 %v399, %v876
        %v894 = vmul.f32 %v404, %v876
        %v895 = vmul.f32 %v409, %v876
        %v896 = vmul.f32 %v414, %v876
        %v897 = vmul.f32 %v419, %v876
        %v898 = vmul.f32 %v424, %v876
        %v899 = vmul.f32 %v429, %v876
        %v900 = vmul.f32 %v434, %v876
        %v901 = vmul.f32 %v439, %v876
        %v902 = vmul.f32 %v444, %v876
        %v903 = vmul.f32 %v449, %v876
        %v904 = vmul.f32 %v454, %v876
        %v905 = vmul.f32 %v459, %v876
        %v906 = vmul.f32 %v464, %v876
        %v907 = vmul.f32 %v469, %v876
        %v908 = vmul.f32 %v474, %v876
        %v909 = vmul.f32 %v479, %v876
        %v910 = vmul.f32 %v484, %v876
        %v911 = vmul.f32 %v489, %v876
        %v912 = vmul.f32 %v494, %v876
        %v913 = vmul.f32 %v499, %v876
        %v914 = vmul.f32 %v504, %v876
        %v915 = vmul.f32 %v509, %v876
        %v916 = vmul.f32 %v514, %v876
        %v917 = vmul.f32 %v519, %v876
        %v918 = vmul.f32 %v524, %v876
        %v919 = vmul.f32 %v529, %v876
        %v920 = vmul.f32 %v534, %v876
        %v921 = vmul.f32 %v539, %v876
        %v922 = vmul.f32 %v544, %v876
        %v923 = vmul.f32 %v549, %v876
        %v924 = vmul.f32 %v554, %v876
        %v925 = vmul.f32 %v559, %v876
        %v926 = vmul.f32 %v564, %v876
        %v927 = vmul.f32 %v569, %v876
        %v928 = vmul.f32 %v574, %v876
        %v929 = vmul.f32 %v579, %v876
        %v930 = vmul.f32 %v584, %v876
        %v931 = vmul.f32 %v589, %v876
        %v932 = vmul.f32 %v594, %v876
        %v933 = vmul.f32 %v599, %v876
        %v934 = vmul.f32 %v604, %v876
        %v935 = vmul.f32 %v609, %v876
        %v936 = vmul.f32 %v614, %v876
        %v937 = vmul.f32 %v619, %v876
        %v938 = vmul.f32 %v624, %v876
        %v939 = vmul.f32 %v629, %v876
        %v940 = vmul.f32 %v634, %v876
        %v941 = vmul.f32 %v639, %v876
        %v942 = vmul.f32 %v644, %v876
        %v943 = vmul.f32 %v649, %v876
        %v944 = vmul.f32 %v654, %v876
        %v945 = vmul.f32 %v659, %v876
        %v946 = vmul.f32 %v664, %v876
        %v947 = vmul.f32 %v669, %v876
        %v948 = vmul.f32 %v674, %v876
        %v949 = vmul.f32 %v679, %v876
        %v950 = vmul.f32 %v684, %v876
        %v951 = vmul.f32 %v689, %v876
        %v952 = vmul.f32 %v694, %v876
        %v953 = vmul.f32 %v699, %v876
        %v954 = vmul.f32 %v704, %v876
        %v955 = vmul.f32 %v709, %v876
        %v956 = vmul.f32 %v714, %v876
        %v957 = vmul.f32 %v719, %v876
        %v958 = vmul.f32 %v724, %v876
        %v959 = vmul.f32 %v729, %v876
        %v960 = vmul.f32 %v734, %v876
        %v961 = vmul.f32 %v739, %v876
        %v962 = vmul.f32 %v744, %v876
        %v963 = vmul.f32 %v749, %v876
        %v964 = vmul.f32 %v754, %v876
        %v965 = vmul.f32 %v759, %v876
        %v966 = vmul.f32 %v764, %v876
        %v967 = vmul.f32 %v769, %v876
        %v968 = vmul.f32 %v774, %v876
        %v969 = vmul.f32 %v779, %v876
        %v970 = vmul.f32 %v784, %v876
        %v971 = vmul.f32 %v789, %v876
        %v972 = vmul.f32 %v794, %v876
        %v973 = vmul.f32 %v799, %v876
        %v974 = vmul.f32 %v804, %v876
        %v975 = vmul.f32 %v809, %v876
        %v976 = vmul.f32 %v814, %v876
        %v977 = vmul.f32 %v819, %v876
        %v978 = vmul.f32 %v824, %v876
        %v979 = vmul.f32 %v829, %v876
        %v980 = vmul.f32 %v834, %v876
        %v981 = vmul.f32 %v839, %v876
        %v982 = vmul.f32 %v844, %v876
        %v983 = vmul.f32 %v849, %v876
        %v984 = vmul.f32 %v854, %v876
        %v985 = vmul.f32 %v859, %v876
        %v986 = vmul.f32 %v864, %v876
        %v987 = vmul.f32 %v869, %v876
        %v988 = vmul.f32 %v874, %v876
        %v989 = vadd.f32 %v877, 0.0
        %v990 = vadd.f32 %v878, 0.0
        %v991 = vadd.f32 %v879, 0.0
        %v992 = vadd.f32 %v880, 0.0
        %v993 = vadd.f32 %v881, 0.0
        %v994 = vadd.f32 %v882, 0.0
        %v995 = vadd.f32 %v883, 0.0
        %v996 = vadd.f32 %v884, 0.0
        %v997 = vadd.f32 %v885, 0.0
        %v998 = vadd.f32 %v886, 0.0
        %v999 = vadd.f32 %v887, 0.0
        %v1000 = vadd.f32 %v888, 0.0
        %v1001 = vadd.f32 %v889, 0.0
        %v1002 = vadd.f32 %v890, 0.0
        %v1003 = vadd.f32 %v891, 0.0
        %v1004 = vadd.f32 %v892, 0.0
        %v1005 = vadd.f32 %v893, 0.0
        %v1006 = vadd.f32 %v894, 0.0
        %v1007 = vadd.f32 %v895, 0.0
        %v1008 = vadd.f32 %v896, 0.0
        %v1009 = vadd.f32 %v897, 0.0
        %v1010 = vadd.f32 %v898, 0.0
        %v1011 = vadd.f32 %v899, 0.0
        %v1012 = vadd.f32 %v900, 0.0
        %v1013 = vadd.f32 %v901, 0.0
        %v1014 = vadd.f32 %v902, 0.0
        %v1015 = vadd.f32 %v903, 0.0
        %v1016 = vadd.f32 %v904, 0.0
        %v1017 = vadd.f32 %v905, 0.0
        %v1018 = vadd.f32 %v906, 0.0
        %v1019 = vadd.f32 %v907, 0.0
        %v1020 = vadd.f32 %v908, 0.0
        %v1021 = vadd.f32 %v909, 0.0
        %v1022 = vadd.f32 %v910, 0.0
        %v1023 = vadd.f32 %v911, 0.0
        %v1024 = vadd.f32 %v912, 0.0
        %v1025 = vadd.f32 %v913, 0.0
        %v1026 = vadd.f32 %v914, 0.0
        %v1027 = vadd.f32 %v915, 0.0
        %v1028 = vadd.f32 %v916, 0.0
        %v1029 = vadd.f32 %v917, 0.0
        %v1030 = vadd.f32 %v918, 0.0
        %v1031 = vadd.f32 %v919, 0.0
        %v1032 = vadd.f32 %v920, 0.0
        %v1033 = vadd.f32 %v921, 0.0
        %v1034 = vadd.f32 %v922, 0.0
        %v1035 = vadd.f32 %v923, 0.0
        %v1036 = vadd.f32 %v924, 0.0
        %v1037 = vadd.f32 %v925, 0.0
        %v1038 = vadd.f32 %v926, 0.0
        %v1039 = vadd.f32 %v927, 0.0
        %v1040 = vadd.f32 %v928, 0.0
        %v1041 = vadd.f32 %v929, 0.0
        %v1042 = vadd.f32 %v930, 0.0
        %v1043 = vadd.f32 %v931, 0.0
        %v1044 = vadd.f32 %v932, 0.0
        %v1045 = vadd.f32 %v933, 0.0
        %v1046 = vadd.f32 %v934, 0.0
        %v1047 = vadd.f32 %v935, 0.0
        %v1048 = vadd.f32 %v936, 0.0
        %v1049 = vadd.f32 %v937, 0.0
        %v1050 = vadd.f32 %v938, 0.0
        %v1051 = vadd.f32 %v939, 0.0
        %v1052 = vadd.f32 %v940, 0.0
        %v1053 = vadd.f32 %v941, 0.0
        %v1054 = vadd.f32 %v942, 0.0
        %v1055 = vadd.f32 %v943, 0.0
        %v1056 = vadd.f32 %v944, 0.0
        %v1057 = vadd.f32 %v945, 0.0
        %v1058 = vadd.f32 %v946, 0.0
        %v1059 = vadd.f32 %v947, 0.0
        %v1060 = vadd.f32 %v948, 0.0
        %v1061 = vadd.f32 %v949, 0.0
        %v1062 = vadd.f32 %v950, 0.0
        %v1063 = vadd.f32 %v951, 0.0
        %v1064 = vadd.f32 %v952, 0.0
        %v1065 = vadd.f32 %v953, 0.0
        %v1066 = vadd.f32 %v954, 0.0
        %v1067 = vadd.f32 %v955, 0.0
        %v1068 = vadd.f32 %v956, 0.0
        %v1069 = vadd.f32 %v957, 0.0
        %v1070 = vadd.f32 %v958, 0.0
        %v1071 = vadd.f32 %v959, 0.0
        %v1072 = vadd.f32 %v960, 0.0
        %v1073 = vadd.f32 %v961, 0.0
        %v1074 = vadd.f32 %v962, 0.0
        %v1075 = vadd.f32 %v963, 0.0
        %v1076 = vadd.f32 %v964, 0.0
        %v1077 = vadd.f32 %v965, 0.0
        %v1078 = vadd.f32 %v966, 0.0
        %v1079 = vadd.f32 %v967, 0.0
        %v1080 = vadd.f32 %v968, 0.0
        %v1081 = vadd.f32 %v969, 0.0
        %v1082 = vadd.f32 %v970, 0.0
        %v1083 = vadd.f32 %v971, 0.0
        %v1084 = vadd.f32 %v972, 0.0
        %v1085 = vadd.f32 %v973, 0.0
        %v1086 = vadd.f32 %v974, 0.0
        %v1087 = vadd.f32 %v975, 0.0
        %v1088 = vadd.f32 %v976, 0.0
        %v1089 = vadd.f32 %v977, 0.0
        %v1090 = vadd.f32 %v978, 0.0
        %v1091 = vadd.f32 %v979, 0.0
        %v1092 = vadd.f32 %v980, 0.0
        %v1093 = vadd.f32 %v981, 0.0
        %v1094 = vadd.f32 %v982, 0.0
        %v1095 = vadd.f32 %v983, 0.0
        %v1096 = vadd.f32 %v984, 0.0
        %v1097 = vadd.f32 %v985, 0.0
        %v1098 = vadd.f32 %v986, 0.0
        %v1099 = vadd.f32 %v987, 0.0
        %v1100 = vadd.f32 %v988, 0.0
        %v1101 = vld [vmem:[%s197 + $0x1] sm:$0xff]
        %v1102 = vld [vmem:[%s197 + $0x9] sm:$0xff]
        %v1103 = vld [vmem:[%s197 + $0x11] sm:$0xff]
        %v1104 = vld [vmem:[%s197 + $0x19] sm:$0xff]
        %v1105 = vld [vmem:[%s197 + $0x21] sm:$0xff]
        %v1106 = vld [vmem:[%s197 + $0x29] sm:$0xff]
        %v1107 = vld [vmem:[%s197 + $0x31] sm:$0xff]
        %v1108 = vld [vmem:[%s197 + $0x39] sm:$0xff]
        %v1109 = vld [vmem:[%s197 + $0x41] sm:$0xff]
        %v1110 = vld [vmem:[%s197 + $0x49] sm:$0xff]
        %v1111 = vld [vmem:[%s197 + $0x51] sm:$0xff]
        %v1112 = vld [vmem:[%s197 + $0x59] sm:$0xff]
        %v1113 = vld [vmem:[%s197 + $0x61] sm:$0xff]
        %v1114 = vld [vmem:[%s197 + $0x69] sm:$0xff]
        %v1115 = vld [vmem:[%s197 + $0x71] sm:$0xff]
        %v1116 = vld [vmem:[%s197 + $0x79] sm:$0xff]
        %v1117 = vld [vmem:[%s197 + $0x81] sm:$0xff]
        %v1118 = vld [vmem:[%s197 + $0x89] sm:$0xff]
        %v1119 = vld [vmem:[%s197 + $0x91] sm:$0xff]
        %v1120 = vld [vmem:[%s197 + $0x99] sm:$0xff]
        %v1121 = vld [vmem:[%s197 + $0xa1] sm:$0xff]
        %v1122 = vld [vmem:[%s197 + $0xa9] sm:$0xff]
        %v1123 = vld [vmem:[%s197 + $0xb1] sm:$0xff]
        %v1124 = vld [vmem:[%s197 + $0xb9] sm:$0xff]
        %v1125 = vld [vmem:[%s197 + $0xc1] sm:$0xff]
        %v1126 = vld [vmem:[%s197 + $0xc9] sm:$0xff]
        %v1127 = vld [vmem:[%s197 + $0xd1] sm:$0xff]
        %v1128 = vld [vmem:[%s197 + $0xd9] sm:$0xff]
        %v1129 = vld [vmem:[%s197 + $0xe1] sm:$0xff]
        %v1130 = vld [vmem:[%s197 + $0xe9] sm:$0xff]
        %v1131 = vld [vmem:[%s197 + $0xf1] sm:$0xff]
        %v1132 = vld [vmem:[%s197 + $0xf9] sm:$0xff]
        %v1133 = vld [vmem:[%s197 + $0x101] sm:$0xff]
        %v1134 = vld [vmem:[%s197 + $0x109] sm:$0xff]
        %v1135 = vld [vmem:[%s197 + $0x111] sm:$0xff]
        %v1136 = vld [vmem:[%s197 + $0x119] sm:$0xff]
        %v1137 = vld [vmem:[%s197 + $0x121] sm:$0xff]
        %v1138 = vld [vmem:[%s197 + $0x129] sm:$0xff]
        %v1139 = vld [vmem:[%s197 + $0x131] sm:$0xff]
        %v1140 = vld [vmem:[%s197 + $0x139] sm:$0xff]
        %v1141 = vld [vmem:[%s197 + $0x141] sm:$0xff]
        %v1142 = vld [vmem:[%s197 + $0x149] sm:$0xff]
        %v1143 = vld [vmem:[%s197 + $0x151] sm:$0xff]
        %v1144 = vld [vmem:[%s197 + $0x159] sm:$0xff]
        %v1145 = vld [vmem:[%s197 + $0x161] sm:$0xff]
        %v1146 = vld [vmem:[%s197 + $0x169] sm:$0xff]
        %v1147 = vld [vmem:[%s197 + $0x171] sm:$0xff]
        %v1148 = vld [vmem:[%s197 + $0x179] sm:$0xff]
        %v1149 = vld [vmem:[%s197 + $0x181] sm:$0xff]
        %v1150 = vld [vmem:[%s197 + $0x189] sm:$0xff]
        %v1151 = vld [vmem:[%s197 + $0x191] sm:$0xff]
        %v1152 = vld [vmem:[%s197 + $0x199] sm:$0xff]
        %v1153 = vld [vmem:[%s197 + $0x1a1] sm:$0xff]
        %v1154 = vld [vmem:[%s197 + $0x1a9] sm:$0xff]
        %v1155 = vld [vmem:[%s197 + $0x1b1] sm:$0xff]
        %v1156 = vld [vmem:[%s197 + $0x1b9] sm:$0xff]
        %v1157 = vld [vmem:[%s197 + $0x1c1] sm:$0xff]
        %v1158 = vld [vmem:[%s197 + $0x1c9] sm:$0xff]
        %v1159 = vld [vmem:[%s197 + $0x1d1] sm:$0xff]
        %v1160 = vld [vmem:[%s197 + $0x1d9] sm:$0xff]
        %v1161 = vld [vmem:[%s197 + $0x1e1] sm:$0xff]
        %v1162 = vld [vmem:[%s197 + $0x1e9] sm:$0xff]
        %v1163 = vld [vmem:[%s197 + $0x1f1] sm:$0xff]
        %v1164 = vld [vmem:[%s197 + $0x1f9] sm:$0xff]
        %v1165 = vld [vmem:[%s197 + $0x201] sm:$0xff]
        %v1166 = vld [vmem:[%s197 + $0x209] sm:$0xff]
        %v1167 = vld [vmem:[%s197 + $0x211] sm:$0xff]
        %v1168 = vld [vmem:[%s197 + $0x219] sm:$0xff]
        %v1169 = vld [vmem:[%s197 + $0x221] sm:$0xff]
        %v1170 = vld [vmem:[%s197 + $0x229] sm:$0xff]
        %v1171 = vld [vmem:[%s197 + $0x231] sm:$0xff]
        %v1172 = vld [vmem:[%s197 + $0x239] sm:$0xff]
        %v1173 = vld [vmem:[%s197 + $0x241] sm:$0xff]
        %v1174 = vld [vmem:[%s197 + $0x249] sm:$0xff]
        %v1175 = vld [vmem:[%s197 + $0x251] sm:$0xff]
        %v1176 = vld [vmem:[%s197 + $0x259] sm:$0xff]
        %v1177 = vld [vmem:[%s197 + $0x261] sm:$0xff]
        %v1178 = vld [vmem:[%s197 + $0x269] sm:$0xff]
        %v1179 = vld [vmem:[%s197 + $0x271] sm:$0xff]
        %v1180 = vld [vmem:[%s197 + $0x279] sm:$0xff]
        %v1181 = vld [vmem:[%s197 + $0x281] sm:$0xff]
        %v1182 = vld [vmem:[%s197 + $0x289] sm:$0xff]
        %v1183 = vld [vmem:[%s197 + $0x291] sm:$0xff]
        %v1184 = vld [vmem:[%s197 + $0x299] sm:$0xff]
        %v1185 = vld [vmem:[%s197 + $0x2a1] sm:$0xff]
        %v1186 = vld [vmem:[%s197 + $0x2a9] sm:$0xff]
        %v1187 = vld [vmem:[%s197 + $0x2b1] sm:$0xff]
        %v1188 = vld [vmem:[%s197 + $0x2b9] sm:$0xff]
        %v1189 = vld [vmem:[%s197 + $0x2c1] sm:$0xff]
        %v1190 = vld [vmem:[%s197 + $0x2c9] sm:$0xff]
        %v1191 = vld [vmem:[%s197 + $0x2d1] sm:$0xff]
        %v1192 = vld [vmem:[%s197 + $0x2d9] sm:$0xff]
        %v1193 = vld [vmem:[%s197 + $0x2e1] sm:$0xff]
        %v1194 = vld [vmem:[%s197 + $0x2e9] sm:$0xff]
        %v1195 = vld [vmem:[%s197 + $0x2f1] sm:$0xff]
        %v1196 = vld [vmem:[%s197 + $0x2f9] sm:$0xff]
        %v1197 = vld [vmem:[%s197 + $0x301] sm:$0xff]
        %v1198 = vld [vmem:[%s197 + $0x309] sm:$0xff]
        %v1199 = vld [vmem:[%s197 + $0x311] sm:$0xff]
        %v1200 = vld [vmem:[%s197 + $0x319] sm:$0xff]
        %v1201 = vld [vmem:[%s197 + $0x321] sm:$0xff]
        %v1202 = vld [vmem:[%s197 + $0x329] sm:$0xff]
        %v1203 = vld [vmem:[%s197 + $0x331] sm:$0xff]
        %v1204 = vld [vmem:[%s197 + $0x339] sm:$0xff]
        %v1205 = vld [vmem:[%s197 + $0x341] sm:$0xff]
        %v1206 = vld [vmem:[%s197 + $0x349] sm:$0xff]
        %v1207 = vld [vmem:[%s197 + $0x351] sm:$0xff]
        %v1208 = vld [vmem:[%s197 + $0x359] sm:$0xff]
        %v1209 = vld [vmem:[%s197 + $0x361] sm:$0xff]
        %v1210 = vld [vmem:[%s197 + $0x369] sm:$0xff]
        %v1211 = vld [vmem:[%s197 + $0x371] sm:$0xff]
        %v1212 = vld [vmem:[%s197 + $0x379] sm:$0xff]
        %v1213 = vld [vmem:[#allocation3 + $0x1] sm:$0x1]
        %1215 = vset.pattern.permute.xlu0 0
        %1216 = vperm.xlu0 %1215, %v1101
        %v1217 = vpop.permute.xlu0 %1216
        %1220 = vset.pattern.permute.xlu0 0
        %1221 = vperm.xlu0 %1220, %v1102
        %v1222 = vpop.permute.xlu0 %1221
        %1225 = vset.pattern.permute.xlu0 0
        %1226 = vperm.xlu0 %1225, %v1103
        %v1227 = vpop.permute.xlu0 %1226
        %1230 = vset.pattern.permute.xlu0 0
        %1231 = vperm.xlu0 %1230, %v1104
        %v1232 = vpop.permute.xlu0 %1231
        %1235 = vset.pattern.permute.xlu0 0
        %1236 = vperm.xlu0 %1235, %v1105
        %v1237 = vpop.permute.xlu0 %1236
        %1240 = vset.pattern.permute.xlu0 0
        %1241 = vperm.xlu0 %1240, %v1106
        %v1242 = vpop.permute.xlu0 %1241
        %1245 = vset.pattern.permute.xlu0 0
        %1246 = vperm.xlu0 %1245, %v1107
        %v1247 = vpop.permute.xlu0 %1246
        %1250 = vset.pattern.permute.xlu0 0
        %1251 = vperm.xlu0 %1250, %v1108
        %v1252 = vpop.permute.xlu0 %1251
        %1255 = vset.pattern.permute.xlu0 0
        %1256 = vperm.xlu0 %1255, %v1109
        %v1257 = vpop.permute.xlu0 %1256
        %1260 = vset.pattern.permute.xlu0 0
        %1261 = vperm.xlu0 %1260, %v1110
        %v1262 = vpop.permute.xlu0 %1261
        %1265 = vset.pattern.permute.xlu0 0
        %1266 = vperm.xlu0 %1265, %v1111
        %v1267 = vpop.permute.xlu0 %1266
        %1270 = vset.pattern.permute.xlu0 0
        %1271 = vperm.xlu0 %1270, %v1112
        %v1272 = vpop.permute.xlu0 %1271
        %1275 = vset.pattern.permute.xlu0 0
        %1276 = vperm.xlu0 %1275, %v1113
        %v1277 = vpop.permute.xlu0 %1276
        %1280 = vset.pattern.permute.xlu0 0
        %1281 = vperm.xlu0 %1280, %v1114
        %v1282 = vpop.permute.xlu0 %1281
        %1285 = vset.pattern.permute.xlu0 0
        %1286 = vperm.xlu0 %1285, %v1115
        %v1287 = vpop.permute.xlu0 %1286
        %1290 = vset.pattern.permute.xlu0 0
        %1291 = vperm.xlu0 %1290, %v1116
        %v1292 = vpop.permute.xlu0 %1291
        %1295 = vset.pattern.permute.xlu0 0
        %1296 = vperm.xlu0 %1295, %v1117
        %v1297 = vpop.permute.xlu0 %1296
        %1300 = vset.pattern.permute.xlu0 0
        %1301 = vperm.xlu0 %1300, %v1118
        %v1302 = vpop.permute.xlu0 %1301
        %1305 = vset.pattern.permute.xlu0 0
        %1306 = vperm.xlu0 %1305, %v1119
        %v1307 = vpop.permute.xlu0 %1306
        %1310 = vset.pattern.permute.xlu0 0
        %1311 = vperm.xlu0 %1310, %v1120
        %v1312 = vpop.permute.xlu0 %1311
        %1315 = vset.pattern.permute.xlu0 0
        %1316 = vperm.xlu0 %1315, %v1121
        %v1317 = vpop.permute.xlu0 %1316
        %1320 = vset.pattern.permute.xlu0 0
        %1321 = vperm.xlu0 %1320, %v1122
        %v1322 = vpop.permute.xlu0 %1321
        %1325 = vset.pattern.permute.xlu0 0
        %1326 = vperm.xlu0 %1325, %v1123
        %v1327 = vpop.permute.xlu0 %1326
        %1330 = vset.pattern.permute.xlu0 0
        %1331 = vperm.xlu0 %1330, %v1124
        %v1332 = vpop.permute.xlu0 %1331
        %1335 = vset.pattern.permute.xlu0 0
        %1336 = vperm.xlu0 %1335, %v1125
        %v1337 = vpop.permute.xlu0 %1336
        %1340 = vset.pattern.permute.xlu0 0
        %1341 = vperm.xlu0 %1340, %v1126
        %v1342 = vpop.permute.xlu0 %1341
        %1345 = vset.pattern.permute.xlu0 0
        %1346 = vperm.xlu0 %1345, %v1127
        %v1347 = vpop.permute.xlu0 %1346
        %1350 = vset.pattern.permute.xlu0 0
        %1351 = vperm.xlu0 %1350, %v1128
        %v1352 = vpop.permute.xlu0 %1351
        %1355 = vset.pattern.permute.xlu0 0
        %1356 = vperm.xlu0 %1355, %v1129
        %v1357 = vpop.permute.xlu0 %1356
        %1360 = vset.pattern.permute.xlu0 0
        %1361 = vperm.xlu0 %1360, %v1130
        %v1362 = vpop.permute.xlu0 %1361
        %1365 = vset.pattern.permute.xlu0 0
        %1366 = vperm.xlu0 %1365, %v1131
        %v1367 = vpop.permute.xlu0 %1366
        %1370 = vset.pattern.permute.xlu0 0
        %1371 = vperm.xlu0 %1370, %v1132
        %v1372 = vpop.permute.xlu0 %1371
        %1375 = vset.pattern.permute.xlu0 0
        %1376 = vperm.xlu0 %1375, %v1133
        %v1377 = vpop.permute.xlu0 %1376
        %1380 = vset.pattern.permute.xlu0 0
        %1381 = vperm.xlu0 %1380, %v1134
        %v1382 = vpop.permute.xlu0 %1381
        %1385 = vset.pattern.permute.xlu0 0
        %1386 = vperm.xlu0 %1385, %v1135
        %v1387 = vpop.permute.xlu0 %1386
        %1390 = vset.pattern.permute.xlu0 0
        %1391 = vperm.xlu0 %1390, %v1136
        %v1392 = vpop.permute.xlu0 %1391
        %1395 = vset.pattern.permute.xlu0 0
        %1396 = vperm.xlu0 %1395, %v1137
        %v1397 = vpop.permute.xlu0 %1396
        %1400 = vset.pattern.permute.xlu0 0
        %1401 = vperm.xlu0 %1400, %v1138
        %v1402 = vpop.permute.xlu0 %1401
        %1405 = vset.pattern.permute.xlu0 0
        %1406 = vperm.xlu0 %1405, %v1139
        %v1407 = vpop.permute.xlu0 %1406
        %1410 = vset.pattern.permute.xlu0 0
        %1411 = vperm.xlu0 %1410, %v1140
        %v1412 = vpop.permute.xlu0 %1411
        %1415 = vset.pattern.permute.xlu0 0
        %1416 = vperm.xlu0 %1415, %v1141
        %v1417 = vpop.permute.xlu0 %1416
        %1420 = vset.pattern.permute.xlu0 0
        %1421 = vperm.xlu0 %1420, %v1142
        %v1422 = vpop.permute.xlu0 %1421
        %1425 = vset.pattern.permute.xlu0 0
        %1426 = vperm.xlu0 %1425, %v1143
        %v1427 = vpop.permute.xlu0 %1426
        %1430 = vset.pattern.permute.xlu0 0
        %1431 = vperm.xlu0 %1430, %v1144
        %v1432 = vpop.permute.xlu0 %1431
        %1435 = vset.pattern.permute.xlu0 0
        %1436 = vperm.xlu0 %1435, %v1145
        %v1437 = vpop.permute.xlu0 %1436
        %1440 = vset.pattern.permute.xlu0 0
        %1441 = vperm.xlu0 %1440, %v1146
        %v1442 = vpop.permute.xlu0 %1441
        %1445 = vset.pattern.permute.xlu0 0
        %1446 = vperm.xlu0 %1445, %v1147
        %v1447 = vpop.permute.xlu0 %1446
        %1450 = vset.pattern.permute.xlu0 0
        %1451 = vperm.xlu0 %1450, %v1148
        %v1452 = vpop.permute.xlu0 %1451
        %1455 = vset.pattern.permute.xlu0 0
        %1456 = vperm.xlu0 %1455, %v1149
        %v1457 = vpop.permute.xlu0 %1456
        %1460 = vset.pattern.permute.xlu0 0
        %1461 = vperm.xlu0 %1460, %v1150
        %v1462 = vpop.permute.xlu0 %1461
        %1465 = vset.pattern.permute.xlu0 0
        %1466 = vperm.xlu0 %1465, %v1151
        %v1467 = vpop.permute.xlu0 %1466
        %1470 = vset.pattern.permute.xlu0 0
        %1471 = vperm.xlu0 %1470, %v1152
        %v1472 = vpop.permute.xlu0 %1471
        %1475 = vset.pattern.permute.xlu0 0
        %1476 = vperm.xlu0 %1475, %v1153
        %v1477 = vpop.permute.xlu0 %1476
        %1480 = vset.pattern.permute.xlu0 0
        %1481 = vperm.xlu0 %1480, %v1154
        %v1482 = vpop.permute.xlu0 %1481
        %1485 = vset.pattern.permute.xlu0 0
        %1486 = vperm.xlu0 %1485, %v1155
        %v1487 = vpop.permute.xlu0 %1486
        %1490 = vset.pattern.permute.xlu0 0
        %1491 = vperm.xlu0 %1490, %v1156
        %v1492 = vpop.permute.xlu0 %1491
        %1495 = vset.pattern.permute.xlu0 0
        %1496 = vperm.xlu0 %1495, %v1157
        %v1497 = vpop.permute.xlu0 %1496
        %1500 = vset.pattern.permute.xlu0 0
        %1501 = vperm.xlu0 %1500, %v1158
        %v1502 = vpop.permute.xlu0 %1501
        %1505 = vset.pattern.permute.xlu0 0
        %1506 = vperm.xlu0 %1505, %v1159
        %v1507 = vpop.permute.xlu0 %1506
        %1510 = vset.pattern.permute.xlu0 0
        %1511 = vperm.xlu0 %1510, %v1160
        %v1512 = vpop.permute.xlu0 %1511
        %1515 = vset.pattern.permute.xlu0 0
        %1516 = vperm.xlu0 %1515, %v1161
        %v1517 = vpop.permute.xlu0 %1516
        %1520 = vset.pattern.permute.xlu0 0
        %1521 = vperm.xlu0 %1520, %v1162
        %v1522 = vpop.permute.xlu0 %1521
        %1525 = vset.pattern.permute.xlu0 0
        %1526 = vperm.xlu0 %1525, %v1163
        %v1527 = vpop.permute.xlu0 %1526
        %1530 = vset.pattern.permute.xlu0 0
        %1531 = vperm.xlu0 %1530, %v1164
        %v1532 = vpop.permute.xlu0 %1531
        %1535 = vset.pattern.permute.xlu0 0
        %1536 = vperm.xlu0 %1535, %v1165
        %v1537 = vpop.permute.xlu0 %1536
        %1540 = vset.pattern.permute.xlu0 0
        %1541 = vperm.xlu0 %1540, %v1166
        %v1542 = vpop.permute.xlu0 %1541
        %1545 = vset.pattern.permute.xlu0 0
        %1546 = vperm.xlu0 %1545, %v1167
        %v1547 = vpop.permute.xlu0 %1546
        %1550 = vset.pattern.permute.xlu0 0
        %1551 = vperm.xlu0 %1550, %v1168
        %v1552 = vpop.permute.xlu0 %1551
        %1555 = vset.pattern.permute.xlu0 0
        %1556 = vperm.xlu0 %1555, %v1169
        %v1557 = vpop.permute.xlu0 %1556
        %1560 = vset.pattern.permute.xlu0 0
        %1561 = vperm.xlu0 %1560, %v1170
        %v1562 = vpop.permute.xlu0 %1561
        %1565 = vset.pattern.permute.xlu0 0
        %1566 = vperm.xlu0 %1565, %v1171
        %v1567 = vpop.permute.xlu0 %1566
        %1570 = vset.pattern.permute.xlu0 0
        %1571 = vperm.xlu0 %1570, %v1172
        %v1572 = vpop.permute.xlu0 %1571
        %1575 = vset.pattern.permute.xlu0 0
        %1576 = vperm.xlu0 %1575, %v1173
        %v1577 = vpop.permute.xlu0 %1576
        %1580 = vset.pattern.permute.xlu0 0
        %1581 = vperm.xlu0 %1580, %v1174
        %v1582 = vpop.permute.xlu0 %1581
        %1585 = vset.pattern.permute.xlu0 0
        %1586 = vperm.xlu0 %1585, %v1175
        %v1587 = vpop.permute.xlu0 %1586
        %1590 = vset.pattern.permute.xlu0 0
        %1591 = vperm.xlu0 %1590, %v1176
        %v1592 = vpop.permute.xlu0 %1591
        %1595 = vset.pattern.permute.xlu0 0
        %1596 = vperm.xlu0 %1595, %v1177
        %v1597 = vpop.permute.xlu0 %1596
        %1600 = vset.pattern.permute.xlu0 0
        %1601 = vperm.xlu0 %1600, %v1178
        %v1602 = vpop.permute.xlu0 %1601
        %1605 = vset.pattern.permute.xlu0 0
        %1606 = vperm.xlu0 %1605, %v1179
        %v1607 = vpop.permute.xlu0 %1606
        %1610 = vset.pattern.permute.xlu0 0
        %1611 = vperm.xlu0 %1610, %v1180
        %v1612 = vpop.permute.xlu0 %1611
        %1615 = vset.pattern.permute.xlu0 0
        %1616 = vperm.xlu0 %1615, %v1181
        %v1617 = vpop.permute.xlu0 %1616
        %1620 = vset.pattern.permute.xlu0 0
        %1621 = vperm.xlu0 %1620, %v1182
        %v1622 = vpop.permute.xlu0 %1621
        %1625 = vset.pattern.permute.xlu0 0
        %1626 = vperm.xlu0 %1625, %v1183
        %v1627 = vpop.permute.xlu0 %1626
        %1630 = vset.pattern.permute.xlu0 0
        %1631 = vperm.xlu0 %1630, %v1184
        %v1632 = vpop.permute.xlu0 %1631
        %1635 = vset.pattern.permute.xlu0 0
        %1636 = vperm.xlu0 %1635, %v1185
        %v1637 = vpop.permute.xlu0 %1636
        %1640 = vset.pattern.permute.xlu0 0
        %1641 = vperm.xlu0 %1640, %v1186
        %v1642 = vpop.permute.xlu0 %1641
        %1645 = vset.pattern.permute.xlu0 0
        %1646 = vperm.xlu0 %1645, %v1187
        %v1647 = vpop.permute.xlu0 %1646
        %1650 = vset.pattern.permute.xlu0 0
        %1651 = vperm.xlu0 %1650, %v1188
        %v1652 = vpop.permute.xlu0 %1651
        %1655 = vset.pattern.permute.xlu0 0
        %1656 = vperm.xlu0 %1655, %v1189
        %v1657 = vpop.permute.xlu0 %1656
        %1660 = vset.pattern.permute.xlu0 0
        %1661 = vperm.xlu0 %1660, %v1190
        %v1662 = vpop.permute.xlu0 %1661
        %1665 = vset.pattern.permute.xlu0 0
        %1666 = vperm.xlu0 %1665, %v1191
        %v1667 = vpop.permute.xlu0 %1666
        %1670 = vset.pattern.permute.xlu0 0
        %1671 = vperm.xlu0 %1670, %v1192
        %v1672 = vpop.permute.xlu0 %1671
        %1675 = vset.pattern.permute.xlu0 0
        %1676 = vperm.xlu0 %1675, %v1193
        %v1677 = vpop.permute.xlu0 %1676
        %1680 = vset.pattern.permute.xlu0 0
        %1681 = vperm.xlu0 %1680, %v1194
        %v1682 = vpop.permute.xlu0 %1681
        %1685 = vset.pattern.permute.xlu0 0
        %1686 = vperm.xlu0 %1685, %v1195
        %v1687 = vpop.permute.xlu0 %1686
        %1690 = vset.pattern.permute.xlu0 0
        %1691 = vperm.xlu0 %1690, %v1196
        %v1692 = vpop.permute.xlu0 %1691
        %1695 = vset.pattern.permute.xlu0 0
        %1696 = vperm.xlu0 %1695, %v1197
        %v1697 = vpop.permute.xlu0 %1696
        %1700 = vset.pattern.permute.xlu0 0
        %1701 = vperm.xlu0 %1700, %v1198
        %v1702 = vpop.permute.xlu0 %1701
        %1705 = vset.pattern.permute.xlu0 0
        %1706 = vperm.xlu0 %1705, %v1199
        %v1707 = vpop.permute.xlu0 %1706
        %1710 = vset.pattern.permute.xlu0 0
        %1711 = vperm.xlu0 %1710, %v1200
        %v1712 = vpop.permute.xlu0 %1711
        %1715 = vset.pattern.permute.xlu0 0
        %1716 = vperm.xlu0 %1715, %v1201
        %v1717 = vpop.permute.xlu0 %1716
        %1720 = vset.pattern.permute.xlu0 0
        %1721 = vperm.xlu0 %1720, %v1202
        %v1722 = vpop.permute.xlu0 %1721
        %1725 = vset.pattern.permute.xlu0 0
        %1726 = vperm.xlu0 %1725, %v1203
        %v1727 = vpop.permute.xlu0 %1726
        %1730 = vset.pattern.permute.xlu0 0
        %1731 = vperm.xlu0 %1730, %v1204
        %v1732 = vpop.permute.xlu0 %1731
        %1735 = vset.pattern.permute.xlu0 0
        %1736 = vperm.xlu0 %1735, %v1205
        %v1737 = vpop.permute.xlu0 %1736
        %1740 = vset.pattern.permute.xlu0 0
        %1741 = vperm.xlu0 %1740, %v1206
        %v1742 = vpop.permute.xlu0 %1741
        %1745 = vset.pattern.permute.xlu0 0
        %1746 = vperm.xlu0 %1745, %v1207
        %v1747 = vpop.permute.xlu0 %1746
        %1750 = vset.pattern.permute.xlu0 0
        %1751 = vperm.xlu0 %1750, %v1208
        %v1752 = vpop.permute.xlu0 %1751
        %1755 = vset.pattern.permute.xlu0 0
        %1756 = vperm.xlu0 %1755, %v1209
        %v1757 = vpop.permute.xlu0 %1756
        %1760 = vset.pattern.permute.xlu0 0
        %1761 = vperm.xlu0 %1760, %v1210
        %v1762 = vpop.permute.xlu0 %1761
        %1765 = vset.pattern.permute.xlu0 0
        %1766 = vperm.xlu0 %1765, %v1211
        %v1767 = vpop.permute.xlu0 %1766
        %1770 = vset.pattern.permute.xlu0 0
        %1771 = vperm.xlu0 %1770, %v1212
        %v1772 = vpop.permute.xlu0 %1771
        %v1774 = vperm.slane %v1213, 0
        %v1775 = vmul.f32 %v1217, %v1774
        %v1776 = vmul.f32 %v1222, %v1774
        %v1777 = vmul.f32 %v1227, %v1774
        %v1778 = vmul.f32 %v1232, %v1774
        %v1779 = vmul.f32 %v1237, %v1774
        %v1780 = vmul.f32 %v1242, %v1774
        %v1781 = vmul.f32 %v1247, %v1774
        %v1782 = vmul.f32 %v1252, %v1774
        %v1783 = vmul.f32 %v1257, %v1774
        %v1784 = vmul.f32 %v1262, %v1774
        %v1785 = vmul.f32 %v1267, %v1774
        %v1786 = vmul.f32 %v1272, %v1774
        %v1787 = vmul.f32 %v1277, %v1774
        %v1788 = vmul.f32 %v1282, %v1774
        %v1789 = vmul.f32 %v1287, %v1774
        %v1790 = vmul.f32 %v1292, %v1774
        %v1791 = vmul.f32 %v1297, %v1774
        %v1792 = vmul.f32 %v1302, %v1774
        %v1793 = vmul.f32 %v1307, %v1774
        %v1794 = vmul.f32 %v1312, %v1774
        %v1795 = vmul.f32 %v1317, %v1774
        %v1796 = vmul.f32 %v1322, %v1774
        %v1797 = vmul.f32 %v1327, %v1774
        %v1798 = vmul.f32 %v1332, %v1774
        %v1799 = vmul.f32 %v1337, %v1774
        %v1800 = vmul.f32 %v1342, %v1774
        %v1801 = vmul.f32 %v1347, %v1774
        %v1802 = vmul.f32 %v1352, %v1774
        %v1803 = vmul.f32 %v1357, %v1774
        %v1804 = vmul.f32 %v1362, %v1774
        %v1805 = vmul.f32 %v1367, %v1774
        %v1806 = vmul.f32 %v1372, %v1774
        %v1807 = vmul.f32 %v1377, %v1774
        %v1808 = vmul.f32 %v1382, %v1774
        %v1809 = vmul.f32 %v1387, %v1774
        %v1810 = vmul.f32 %v1392, %v1774
        %v1811 = vmul.f32 %v1397, %v1774
        %v1812 = vmul.f32 %v1402, %v1774
        %v1813 = vmul.f32 %v1407, %v1774
        %v1814 = vmul.f32 %v1412, %v1774
        %v1815 = vmul.f32 %v1417, %v1774
        %v1816 = vmul.f32 %v1422, %v1774
        %v1817 = vmul.f32 %v1427, %v1774
        %v1818 = vmul.f32 %v1432, %v1774
        %v1819 = vmul.f32 %v1437, %v1774
        %v1820 = vmul.f32 %v1442, %v1774
        %v1821 = vmul.f32 %v1447, %v1774
        %v1822 = vmul.f32 %v1452, %v1774
        %v1823 = vmul.f32 %v1457, %v1774
        %v1824 = vmul.f32 %v1462, %v1774
        %v1825 = vmul.f32 %v1467, %v1774
        %v1826 = vmul.f32 %v1472, %v1774
        %v1827 = vmul.f32 %v1477, %v1774
        %v1828 = vmul.f32 %v1482, %v1774
        %v1829 = vmul.f32 %v1487, %v1774
        %v1830 = vmul.f32 %v1492, %v1774
        %v1831 = vmul.f32 %v1497, %v1774
        %v1832 = vmul.f32 %v1502, %v1774
        %v1833 = vmul.f32 %v1507, %v1774
        %v1834 = vmul.f32 %v1512, %v1774
        %v1835 = vmul.f32 %v1517, %v1774
        %v1836 = vmul.f32 %v1522, %v1774
        %v1837 = vmul.f32 %v1527, %v1774
        %v1838 = vmul.f32 %v1532, %v1774
        %v1839 = vmul.f32 %v1537, %v1774
        %v1840 = vmul.f32 %v1542, %v1774
        %v1841 = vmul.f32 %v1547, %v1774
        %v1842 = vmul.f32 %v1552, %v1774
        %v1843 = vmul.f32 %v1557, %v1774
        %v1844 = vmul.f32 %v1562, %v1774
        %v1845 = vmul.f32 %v1567, %v1774
        %v1846 = vmul.f32 %v1572, %v1774
        %v1847 = vmul.f32 %v1577, %v1774
        %v1848 = vmul.f32 %v1582, %v1774
        %v1849 = vmul.f32 %v1587, %v1774
        %v1850 = vmul.f32 %v1592, %v1774
        %v1851 = vmul.f32 %v1597, %v1774
        %v1852 = vmul.f32 %v1602, %v1774
        %v1853 = vmul.f32 %v1607, %v1774
        %v1854 = vmul.f32 %v1612, %v1774
        %v1855 = vmul.f32 %v1617, %v1774
        %v1856 = vmul.f32 %v1622, %v1774
        %v1857 = vmul.f32 %v1627, %v1774
        %v1858 = vmul.f32 %v1632, %v1774
        %v1859 = vmul.f32 %v1637, %v1774
        %v1860 = vmul.f32 %v1642, %v1774
        %v1861 = vmul.f32 %v1647, %v1774
        %v1862 = vmul.f32 %v1652, %v1774
        %v1863 = vmul.f32 %v1657, %v1774
        %v1864 = vmul.f32 %v1662, %v1774
        %v1865 = vmul.f32 %v1667, %v1774
        %v1866 = vmul.f32 %v1672, %v1774
        %v1867 = vmul.f32 %v1677, %v1774
        %v1868 = vmul.f32 %v1682, %v1774
        %v1869 = vmul.f32 %v1687, %v1774
        %v1870 = vmul.f32 %v1692, %v1774
        %v1871 = vmul.f32 %v1697, %v1774
        %v1872 = vmul.f32 %v1702, %v1774
        %v1873 = vmul.f32 %v1707, %v1774
        %v1874 = vmul.f32 %v1712, %v1774
        %v1875 = vmul.f32 %v1717, %v1774
        %v1876 = vmul.f32 %v1722, %v1774
        %v1877 = vmul.f32 %v1727, %v1774
        %v1878 = vmul.f32 %v1732, %v1774
        %v1879 = vmul.f32 %v1737, %v1774
        %v1880 = vmul.f32 %v1742, %v1774
        %v1881 = vmul.f32 %v1747, %v1774
        %v1882 = vmul.f32 %v1752, %v1774
        %v1883 = vmul.f32 %v1757, %v1774
        %v1884 = vmul.f32 %v1762, %v1774
        %v1885 = vmul.f32 %v1767, %v1774
        %v1886 = vmul.f32 %v1772, %v1774
        %v1887 = vadd.f32 %v989, %v1775
        %v1888 = vadd.f32 %v990, %v1776
        %v1889 = vadd.f32 %v991, %v1777
        %v1890 = vadd.f32 %v992, %v1778
        %v1891 = vadd.f32 %v993, %v1779
        %v1892 = vadd.f32 %v994, %v1780
        %v1893 = vadd.f32 %v995, %v1781
        %v1894 = vadd.f32 %v996, %v1782
        %v1895 = vadd.f32 %v997, %v1783
        %v1896 = vadd.f32 %v998, %v1784
        %v1897 = vadd.f32 %v999, %v1785
        %v1898 = vadd.f32 %v1000, %v1786
        %v1899 = vadd.f32 %v1001, %v1787
        %v1900 = vadd.f32 %v1002, %v1788
        %v1901 = vadd.f32 %v1003, %v1789
        %v1902 = vadd.f32 %v1004, %v1790
        %v1903 = vadd.f32 %v1005, %v1791
        %v1904 = vadd.f32 %v1006, %v1792
        %v1905 = vadd.f32 %v1007, %v1793
        %v1906 = vadd.f32 %v1008, %v1794
        %v1907 = vadd.f32 %v1009, %v1795
        %v1908 = vadd.f32 %v1010, %v1796
        %v1909 = vadd.f32 %v1011, %v1797
        %v1910 = vadd.f32 %v1012, %v1798
        %v1911 = vadd.f32 %v1013, %v1799
        %v1912 = vadd.f32 %v1014, %v1800
        %v1913 = vadd.f32 %v1015, %v1801
        %v1914 = vadd.f32 %v1016, %v1802
        %v1915 = vadd.f32 %v1017, %v1803
        %v1916 = vadd.f32 %v1018, %v1804
        %v1917 = vadd.f32 %v1019, %v1805
        %v1918 = vadd.f32 %v1020, %v1806
        %v1919 = vadd.f32 %v1021, %v1807
        %v1920 = vadd.f32 %v1022, %v1808
        %v1921 = vadd.f32 %v1023, %v1809
        %v1922 = vadd.f32 %v1024, %v1810
        %v1923 = vadd.f32 %v1025, %v1811
        %v1924 = vadd.f32 %v1026, %v1812
        %v1925 = vadd.f32 %v1027, %v1813
        %v1926 = vadd.f32 %v1028, %v1814
        %v1927 = vadd.f32 %v1029, %v1815
        %v1928 = vadd.f32 %v1030, %v1816
        %v1929 = vadd.f32 %v1031, %v1817
        %v1930 = vadd.f32 %v1032, %v1818
        %v1931 = vadd.f32 %v1033, %v1819
        %v1932 = vadd.f32 %v1034, %v1820
        %v1933 = vadd.f32 %v1035, %v1821
        %v1934 = vadd.f32 %v1036, %v1822
        %v1935 = vadd.f32 %v1037, %v1823
        %v1936 = vadd.f32 %v1038, %v1824
        %v1937 = vadd.f32 %v1039, %v1825
        %v1938 = vadd.f32 %v1040, %v1826
        %v1939 = vadd.f32 %v1041, %v1827
        %v1940 = vadd.f32 %v1042, %v1828
        %v1941 = vadd.f32 %v1043, %v1829
        %v1942 = vadd.f32 %v1044, %v1830
        %v1943 = vadd.f32 %v1045, %v1831
        %v1944 = vadd.f32 %v1046, %v1832
        %v1945 = vadd.f32 %v1047, %v1833
        %v1946 = vadd.f32 %v1048, %v1834
        %v1947 = vadd.f32 %v1049, %v1835
        %v1948 = vadd.f32 %v1050, %v1836
        %v1949 = vadd.f32 %v1051, %v1837
        %v1950 = vadd.f32 %v1052, %v1838
        %v1951 = vadd.f32 %v1053, %v1839
        %v1952 = vadd.f32 %v1054, %v1840
        %v1953 = vadd.f32 %v1055, %v1841
        %v1954 = vadd.f32 %v1056, %v1842
        %v1955 = vadd.f32 %v1057, %v1843
        %v1956 = vadd.f32 %v1058, %v1844
        %v1957 = vadd.f32 %v1059, %v1845
        %v1958 = vadd.f32 %v1060, %v1846
        %v1959 = vadd.f32 %v1061, %v1847
        %v1960 = vadd.f32 %v1062, %v1848
        %v1961 = vadd.f32 %v1063, %v1849
        %v1962 = vadd.f32 %v1064, %v1850
        %v1963 = vadd.f32 %v1065, %v1851
        %v1964 = vadd.f32 %v1066, %v1852
        %v1965 = vadd.f32 %v1067, %v1853
        %v1966 = vadd.f32 %v1068, %v1854
        %v1967 = vadd.f32 %v1069, %v1855
        %v1968 = vadd.f32 %v1070, %v1856
        %v1969 = vadd.f32 %v1071, %v1857
        %v1970 = vadd.f32 %v1072, %v1858
        %v1971 = vadd.f32 %v1073, %v1859
        %v1972 = vadd.f32 %v1074, %v1860
        %v1973 = vadd.f32 %v1075, %v1861
        %v1974 = vadd.f32 %v1076, %v1862
        %v1975 = vadd.f32 %v1077, %v1863
        %v1976 = vadd.f32 %v1078, %v1864
        %v1977 = vadd.f32 %v1079, %v1865
        %v1978 = vadd.f32 %v1080, %v1866
        %v1979 = vadd.f32 %v1081, %v1867
        %v1980 = vadd.f32 %v1082, %v1868
        %v1981 = vadd.f32 %v1083, %v1869
        %v1982 = vadd.f32 %v1084, %v1870
        %v1983 = vadd.f32 %v1085, %v1871
        %v1984 = vadd.f32 %v1086, %v1872
        %v1985 = vadd.f32 %v1087, %v1873
        %v1986 = vadd.f32 %v1088, %v1874
        %v1987 = vadd.f32 %v1089, %v1875
        %v1988 = vadd.f32 %v1090, %v1876
        %v1989 = vadd.f32 %v1091, %v1877
        %v1990 = vadd.f32 %v1092, %v1878
        %v1991 = vadd.f32 %v1093, %v1879
        %v1992 = vadd.f32 %v1094, %v1880
        %v1993 = vadd.f32 %v1095, %v1881
        %v1994 = vadd.f32 %v1096, %v1882
        %v1995 = vadd.f32 %v1097, %v1883
        %v1996 = vadd.f32 %v1098, %v1884
        %v1997 = vadd.f32 %v1099, %v1885
        %v1998 = vadd.f32 %v1100, %v1886
        %v1999 = vld [vmem:[%s197 + $0x2] sm:$0xff]
        %v2000 = vld [vmem:[%s197 + $0xa] sm:$0xff]
        %v2001 = vld [vmem:[%s197 + $0x12] sm:$0xff]
        %v2002 = vld [vmem:[%s197 + $0x1a] sm:$0xff]
        %v2003 = vld [vmem:[%s197 + $0x22] sm:$0xff]
        %v2004 = vld [vmem:[%s197 + $0x2a] sm:$0xff]
        %v2005 = vld [vmem:[%s197 + $0x32] sm:$0xff]
        %v2006 = vld [vmem:[%s197 + $0x3a] sm:$0xff]
        %v2007 = vld [vmem:[%s197 + $0x42] sm:$0xff]
        %v2008 = vld [vmem:[%s197 + $0x4a] sm:$0xff]
        %v2009 = vld [vmem:[%s197 + $0x52] sm:$0xff]
        %v2010 = vld [vmem:[%s197 + $0x5a] sm:$0xff]
        %v2011 = vld [vmem:[%s197 + $0x62] sm:$0xff]
        %v2012 = vld [vmem:[%s197 + $0x6a] sm:$0xff]
        %v2013 = vld [vmem:[%s197 + $0x72] sm:$0xff]
        %v2014 = vld [vmem:[%s197 + $0x7a] sm:$0xff]
        %v2015 = vld [vmem:[%s197 + $0x82] sm:$0xff]
        %v2016 = vld [vmem:[%s197 + $0x8a] sm:$0xff]
        %v2017 = vld [vmem:[%s197 + $0x92] sm:$0xff]
        %v2018 = vld [vmem:[%s197 + $0x9a] sm:$0xff]
        %v2019 = vld [vmem:[%s197 + $0xa2] sm:$0xff]
        %v2020 = vld [vmem:[%s197 + $0xaa] sm:$0xff]
        %v2021 = vld [vmem:[%s197 + $0xb2] sm:$0xff]
        %v2022 = vld [vmem:[%s197 + $0xba] sm:$0xff]
        %v2023 = vld [vmem:[%s197 + $0xc2] sm:$0xff]
        %v2024 = vld [vmem:[%s197 + $0xca] sm:$0xff]
        %v2025 = vld [vmem:[%s197 + $0xd2] sm:$0xff]
        %v2026 = vld [vmem:[%s197 + $0xda] sm:$0xff]
        %v2027 = vld [vmem:[%s197 + $0xe2] sm:$0xff]
        %v2028 = vld [vmem:[%s197 + $0xea] sm:$0xff]
        %v2029 = vld [vmem:[%s197 + $0xf2] sm:$0xff]
        %v2030 = vld [vmem:[%s197 + $0xfa] sm:$0xff]
        %v2031 = vld [vmem:[%s197 + $0x102] sm:$0xff]
        %v2032 = vld [vmem:[%s197 + $0x10a] sm:$0xff]
        %v2033 = vld [vmem:[%s197 + $0x112] sm:$0xff]
        %v2034 = vld [vmem:[%s197 + $0x11a] sm:$0xff]
        %v2035 = vld [vmem:[%s197 + $0x122] sm:$0xff]
        %v2036 = vld [vmem:[%s197 + $0x12a] sm:$0xff]
        %v2037 = vld [vmem:[%s197 + $0x132] sm:$0xff]
        %v2038 = vld [vmem:[%s197 + $0x13a] sm:$0xff]
        %v2039 = vld [vmem:[%s197 + $0x142] sm:$0xff]
        %v2040 = vld [vmem:[%s197 + $0x14a] sm:$0xff]
        %v2041 = vld [vmem:[%s197 + $0x152] sm:$0xff]
        %v2042 = vld [vmem:[%s197 + $0x15a] sm:$0xff]
        %v2043 = vld [vmem:[%s197 + $0x162] sm:$0xff]
        %v2044 = vld [vmem:[%s197 + $0x16a] sm:$0xff]
        %v2045 = vld [vmem:[%s197 + $0x172] sm:$0xff]
        %v2046 = vld [vmem:[%s197 + $0x17a] sm:$0xff]
        %v2047 = vld [vmem:[%s197 + $0x182] sm:$0xff]
        %v2048 = vld [vmem:[%s197 + $0x18a] sm:$0xff]
        %v2049 = vld [vmem:[%s197 + $0x192] sm:$0xff]
        %v2050 = vld [vmem:[%s197 + $0x19a] sm:$0xff]
        %v2051 = vld [vmem:[%s197 + $0x1a2] sm:$0xff]
        %v2052 = vld [vmem:[%s197 + $0x1aa] sm:$0xff]
        %v2053 = vld [vmem:[%s197 + $0x1b2] sm:$0xff]
        %v2054 = vld [vmem:[%s197 + $0x1ba] sm:$0xff]
        %v2055 = vld [vmem:[%s197 + $0x1c2] sm:$0xff]
        %v2056 = vld [vmem:[%s197 + $0x1ca] sm:$0xff]
        %v2057 = vld [vmem:[%s197 + $0x1d2] sm:$0xff]
        %v2058 = vld [vmem:[%s197 + $0x1da] sm:$0xff]
        %v2059 = vld [vmem:[%s197 + $0x1e2] sm:$0xff]
        %v2060 = vld [vmem:[%s197 + $0x1ea] sm:$0xff]
        %v2061 = vld [vmem:[%s197 + $0x1f2] sm:$0xff]
        %v2062 = vld [vmem:[%s197 + $0x1fa] sm:$0xff]
        %v2063 = vld [vmem:[%s197 + $0x202] sm:$0xff]
        %v2064 = vld [vmem:[%s197 + $0x20a] sm:$0xff]
        %v2065 = vld [vmem:[%s197 + $0x212] sm:$0xff]
        %v2066 = vld [vmem:[%s197 + $0x21a] sm:$0xff]
        %v2067 = vld [vmem:[%s197 + $0x222] sm:$0xff]
        %v2068 = vld [vmem:[%s197 + $0x22a] sm:$0xff]
        %v2069 = vld [vmem:[%s197 + $0x232] sm:$0xff]
        %v2070 = vld [vmem:[%s197 + $0x23a] sm:$0xff]
        %v2071 = vld [vmem:[%s197 + $0x242] sm:$0xff]
        %v2072 = vld [vmem:[%s197 + $0x24a] sm:$0xff]
        %v2073 = vld [vmem:[%s197 + $0x252] sm:$0xff]
        %v2074 = vld [vmem:[%s197 + $0x25a] sm:$0xff]
        %v2075 = vld [vmem:[%s197 + $0x262] sm:$0xff]
        %v2076 = vld [vmem:[%s197 + $0x26a] sm:$0xff]
        %v2077 = vld [vmem:[%s197 + $0x272] sm:$0xff]
        %v2078 = vld [vmem:[%s197 + $0x27a] sm:$0xff]
        %v2079 = vld [vmem:[%s197 + $0x282] sm:$0xff]
        %v2080 = vld [vmem:[%s197 + $0x28a] sm:$0xff]
        %v2081 = vld [vmem:[%s197 + $0x292] sm:$0xff]
        %v2082 = vld [vmem:[%s197 + $0x29a] sm:$0xff]
        %v2083 = vld [vmem:[%s197 + $0x2a2] sm:$0xff]
        %v2084 = vld [vmem:[%s197 + $0x2aa] sm:$0xff]
        %v2085 = vld [vmem:[%s197 + $0x2b2] sm:$0xff]
        %v2086 = vld [vmem:[%s197 + $0x2ba] sm:$0xff]
        %v2087 = vld [vmem:[%s197 + $0x2c2] sm:$0xff]
        %v2088 = vld [vmem:[%s197 + $0x2ca] sm:$0xff]
        %v2089 = vld [vmem:[%s197 + $0x2d2] sm:$0xff]
        %v2090 = vld [vmem:[%s197 + $0x2da] sm:$0xff]
        %v2091 = vld [vmem:[%s197 + $0x2e2] sm:$0xff]
        %v2092 = vld [vmem:[%s197 + $0x2ea] sm:$0xff]
        %v2093 = vld [vmem:[%s197 + $0x2f2] sm:$0xff]
        %v2094 = vld [vmem:[%s197 + $0x2fa] sm:$0xff]
        %v2095 = vld [vmem:[%s197 + $0x302] sm:$0xff]
        %v2096 = vld [vmem:[%s197 + $0x30a] sm:$0xff]
        %v2097 = vld [vmem:[%s197 + $0x312] sm:$0xff]
        %v2098 = vld [vmem:[%s197 + $0x31a] sm:$0xff]
        %v2099 = vld [vmem:[%s197 + $0x322] sm:$0xff]
        %v2100 = vld [vmem:[%s197 + $0x32a] sm:$0xff]
        %v2101 = vld [vmem:[%s197 + $0x332] sm:$0xff]
        %v2102 = vld [vmem:[%s197 + $0x33a] sm:$0xff]
        %v2103 = vld [vmem:[%s197 + $0x342] sm:$0xff]
        %v2104 = vld [vmem:[%s197 + $0x34a] sm:$0xff]
        %v2105 = vld [vmem:[%s197 + $0x352] sm:$0xff]
        %v2106 = vld [vmem:[%s197 + $0x35a] sm:$0xff]
        %v2107 = vld [vmem:[%s197 + $0x362] sm:$0xff]
        %v2108 = vld [vmem:[%s197 + $0x36a] sm:$0xff]
        %v2109 = vld [vmem:[%s197 + $0x372] sm:$0xff]
        %v2110 = vld [vmem:[%s197 + $0x37a] sm:$0xff]
        %v2111 = vld [vmem:[#allocation3 + $0x2] sm:$0x1]
        %2113 = vset.pattern.permute.xlu0 0
        %2114 = vperm.xlu0 %2113, %v1999
        %v2115 = vpop.permute.xlu0 %2114
        %2118 = vset.pattern.permute.xlu0 0
        %2119 = vperm.xlu0 %2118, %v2000
        %v2120 = vpop.permute.xlu0 %2119
        %2123 = vset.pattern.permute.xlu0 0
        %2124 = vperm.xlu0 %2123, %v2001
        %v2125 = vpop.permute.xlu0 %2124
        %2128 = vset.pattern.permute.xlu0 0
        %2129 = vperm.xlu0 %2128, %v2002
        %v2130 = vpop.permute.xlu0 %2129
        %2133 = vset.pattern.permute.xlu0 0
        %2134 = vperm.xlu0 %2133, %v2003
        %v2135 = vpop.permute.xlu0 %2134
        %2138 = vset.pattern.permute.xlu0 0
        %2139 = vperm.xlu0 %2138, %v2004
        %v2140 = vpop.permute.xlu0 %2139
        %2143 = vset.pattern.permute.xlu0 0
        %2144 = vperm.xlu0 %2143, %v2005
        %v2145 = vpop.permute.xlu0 %2144
        %2148 = vset.pattern.permute.xlu0 0
        %2149 = vperm.xlu0 %2148, %v2006
        %v2150 = vpop.permute.xlu0 %2149
        %2153 = vset.pattern.permute.xlu0 0
        %2154 = vperm.xlu0 %2153, %v2007
        %v2155 = vpop.permute.xlu0 %2154
        %2158 = vset.pattern.permute.xlu0 0
        %2159 = vperm.xlu0 %2158, %v2008
        %v2160 = vpop.permute.xlu0 %2159
        %2163 = vset.pattern.permute.xlu0 0
        %2164 = vperm.xlu0 %2163, %v2009
        %v2165 = vpop.permute.xlu0 %2164
        %2168 = vset.pattern.permute.xlu0 0
        %2169 = vperm.xlu0 %2168, %v2010
        %v2170 = vpop.permute.xlu0 %2169
        %2173 = vset.pattern.permute.xlu0 0
        %2174 = vperm.xlu0 %2173, %v2011
        %v2175 = vpop.permute.xlu0 %2174
        %2178 = vset.pattern.permute.xlu0 0
        %2179 = vperm.xlu0 %2178, %v2012
        %v2180 = vpop.permute.xlu0 %2179
        %2183 = vset.pattern.permute.xlu0 0
        %2184 = vperm.xlu0 %2183, %v2013
        %v2185 = vpop.permute.xlu0 %2184
        %2188 = vset.pattern.permute.xlu0 0
        %2189 = vperm.xlu0 %2188, %v2014
        %v2190 = vpop.permute.xlu0 %2189
        %2193 = vset.pattern.permute.xlu0 0
        %2194 = vperm.xlu0 %2193, %v2015
        %v2195 = vpop.permute.xlu0 %2194
        %2198 = vset.pattern.permute.xlu0 0
        %2199 = vperm.xlu0 %2198, %v2016
        %v2200 = vpop.permute.xlu0 %2199
        %2203 = vset.pattern.permute.xlu0 0
        %2204 = vperm.xlu0 %2203, %v2017
        %v2205 = vpop.permute.xlu0 %2204
        %2208 = vset.pattern.permute.xlu0 0
        %2209 = vperm.xlu0 %2208, %v2018
        %v2210 = vpop.permute.xlu0 %2209
        %2213 = vset.pattern.permute.xlu0 0
        %2214 = vperm.xlu0 %2213, %v2019
        %v2215 = vpop.permute.xlu0 %2214
        %2218 = vset.pattern.permute.xlu0 0
        %2219 = vperm.xlu0 %2218, %v2020
        %v2220 = vpop.permute.xlu0 %2219
        %2223 = vset.pattern.permute.xlu0 0
        %2224 = vperm.xlu0 %2223, %v2021
        %v2225 = vpop.permute.xlu0 %2224
        %2228 = vset.pattern.permute.xlu0 0
        %2229 = vperm.xlu0 %2228, %v2022
        %v2230 = vpop.permute.xlu0 %2229
        %2233 = vset.pattern.permute.xlu0 0
        %2234 = vperm.xlu0 %2233, %v2023
        %v2235 = vpop.permute.xlu0 %2234
        %2238 = vset.pattern.permute.xlu0 0
        %2239 = vperm.xlu0 %2238, %v2024
        %v2240 = vpop.permute.xlu0 %2239
        %2243 = vset.pattern.permute.xlu0 0
        %2244 = vperm.xlu0 %2243, %v2025
        %v2245 = vpop.permute.xlu0 %2244
        %2248 = vset.pattern.permute.xlu0 0
        %2249 = vperm.xlu0 %2248, %v2026
        %v2250 = vpop.permute.xlu0 %2249
        %2253 = vset.pattern.permute.xlu0 0
        %2254 = vperm.xlu0 %2253, %v2027
        %v2255 = vpop.permute.xlu0 %2254
        %2258 = vset.pattern.permute.xlu0 0
        %2259 = vperm.xlu0 %2258, %v2028
        %v2260 = vpop.permute.xlu0 %2259
        %2263 = vset.pattern.permute.xlu0 0
        %2264 = vperm.xlu0 %2263, %v2029
        %v2265 = vpop.permute.xlu0 %2264
        %2268 = vset.pattern.permute.xlu0 0
        %2269 = vperm.xlu0 %2268, %v2030
        %v2270 = vpop.permute.xlu0 %2269
        %2273 = vset.pattern.permute.xlu0 0
        %2274 = vperm.xlu0 %2273, %v2031
        %v2275 = vpop.permute.xlu0 %2274
        %2278 = vset.pattern.permute.xlu0 0
        %2279 = vperm.xlu0 %2278, %v2032
        %v2280 = vpop.permute.xlu0 %2279
        %2283 = vset.pattern.permute.xlu0 0
        %2284 = vperm.xlu0 %2283, %v2033
        %v2285 = vpop.permute.xlu0 %2284
        %2288 = vset.pattern.permute.xlu0 0
        %2289 = vperm.xlu0 %2288, %v2034
        %v2290 = vpop.permute.xlu0 %2289
        %2293 = vset.pattern.permute.xlu0 0
        %2294 = vperm.xlu0 %2293, %v2035
        %v2295 = vpop.permute.xlu0 %2294
        %2298 = vset.pattern.permute.xlu0 0
        %2299 = vperm.xlu0 %2298, %v2036
        %v2300 = vpop.permute.xlu0 %2299
        %2303 = vset.pattern.permute.xlu0 0
        %2304 = vperm.xlu0 %2303, %v2037
        %v2305 = vpop.permute.xlu0 %2304
        %2308 = vset.pattern.permute.xlu0 0
        %2309 = vperm.xlu0 %2308, %v2038
        %v2310 = vpop.permute.xlu0 %2309
        %2313 = vset.pattern.permute.xlu0 0
        %2314 = vperm.xlu0 %2313, %v2039
        %v2315 = vpop.permute.xlu0 %2314
        %2318 = vset.pattern.permute.xlu0 0
        %2319 = vperm.xlu0 %2318, %v2040
        %v2320 = vpop.permute.xlu0 %2319
        %2323 = vset.pattern.permute.xlu0 0
        %2324 = vperm.xlu0 %2323, %v2041
        %v2325 = vpop.permute.xlu0 %2324
        %2328 = vset.pattern.permute.xlu0 0
        %2329 = vperm.xlu0 %2328, %v2042
        %v2330 = vpop.permute.xlu0 %2329
        %2333 = vset.pattern.permute.xlu0 0
        %2334 = vperm.xlu0 %2333, %v2043
        %v2335 = vpop.permute.xlu0 %2334
        %2338 = vset.pattern.permute.xlu0 0
        %2339 = vperm.xlu0 %2338, %v2044
        %v2340 = vpop.permute.xlu0 %2339
        %2343 = vset.pattern.permute.xlu0 0
        %2344 = vperm.xlu0 %2343, %v2045
        %v2345 = vpop.permute.xlu0 %2344
        %2348 = vset.pattern.permute.xlu0 0
        %2349 = vperm.xlu0 %2348, %v2046
        %v2350 = vpop.permute.xlu0 %2349
        %2353 = vset.pattern.permute.xlu0 0
        %2354 = vperm.xlu0 %2353, %v2047
        %v2355 = vpop.permute.xlu0 %2354
        %2358 = vset.pattern.permute.xlu0 0
        %2359 = vperm.xlu0 %2358, %v2048
        %v2360 = vpop.permute.xlu0 %2359
        %2363 = vset.pattern.permute.xlu0 0
        %2364 = vperm.xlu0 %2363, %v2049
        %v2365 = vpop.permute.xlu0 %2364
        %2368 = vset.pattern.permute.xlu0 0
        %2369 = vperm.xlu0 %2368, %v2050
        %v2370 = vpop.permute.xlu0 %2369
        %2373 = vset.pattern.permute.xlu0 0
        %2374 = vperm.xlu0 %2373, %v2051
        %v2375 = vpop.permute.xlu0 %2374
        %2378 = vset.pattern.permute.xlu0 0
        %2379 = vperm.xlu0 %2378, %v2052
        %v2380 = vpop.permute.xlu0 %2379
        %2383 = vset.pattern.permute.xlu0 0
        %2384 = vperm.xlu0 %2383, %v2053
        %v2385 = vpop.permute.xlu0 %2384
        %2388 = vset.pattern.permute.xlu0 0
        %2389 = vperm.xlu0 %2388, %v2054
        %v2390 = vpop.permute.xlu0 %2389
        %2393 = vset.pattern.permute.xlu0 0
        %2394 = vperm.xlu0 %2393, %v2055
        %v2395 = vpop.permute.xlu0 %2394
        %2398 = vset.pattern.permute.xlu0 0
        %2399 = vperm.xlu0 %2398, %v2056
        %v2400 = vpop.permute.xlu0 %2399
        %2403 = vset.pattern.permute.xlu0 0
        %2404 = vperm.xlu0 %2403, %v2057
        %v2405 = vpop.permute.xlu0 %2404
        %2408 = vset.pattern.permute.xlu0 0
        %2409 = vperm.xlu0 %2408, %v2058
        %v2410 = vpop.permute.xlu0 %2409
        %2413 = vset.pattern.permute.xlu0 0
        %2414 = vperm.xlu0 %2413, %v2059
        %v2415 = vpop.permute.xlu0 %2414
        %2418 = vset.pattern.permute.xlu0 0
        %2419 = vperm.xlu0 %2418, %v2060
        %v2420 = vpop.permute.xlu0 %2419
        %2423 = vset.pattern.permute.xlu0 0
        %2424 = vperm.xlu0 %2423, %v2061
        %v2425 = vpop.permute.xlu0 %2424
        %2428 = vset.pattern.permute.xlu0 0
        %2429 = vperm.xlu0 %2428, %v2062
        %v2430 = vpop.permute.xlu0 %2429
        %2433 = vset.pattern.permute.xlu0 0
        %2434 = vperm.xlu0 %2433, %v2063
        %v2435 = vpop.permute.xlu0 %2434
        %2438 = vset.pattern.permute.xlu0 0
        %2439 = vperm.xlu0 %2438, %v2064
        %v2440 = vpop.permute.xlu0 %2439
        %2443 = vset.pattern.permute.xlu0 0
        %2444 = vperm.xlu0 %2443, %v2065
        %v2445 = vpop.permute.xlu0 %2444
        %2448 = vset.pattern.permute.xlu0 0
        %2449 = vperm.xlu0 %2448, %v2066
        %v2450 = vpop.permute.xlu0 %2449
        %2453 = vset.pattern.permute.xlu0 0
        %2454 = vperm.xlu0 %2453, %v2067
        %v2455 = vpop.permute.xlu0 %2454
        %2458 = vset.pattern.permute.xlu0 0
        %2459 = vperm.xlu0 %2458, %v2068
        %v2460 = vpop.permute.xlu0 %2459
        %2463 = vset.pattern.permute.xlu0 0
        %2464 = vperm.xlu0 %2463, %v2069
        %v2465 = vpop.permute.xlu0 %2464
        %2468 = vset.pattern.permute.xlu0 0
        %2469 = vperm.xlu0 %2468, %v2070
        %v2470 = vpop.permute.xlu0 %2469
        %2473 = vset.pattern.permute.xlu0 0
        %2474 = vperm.xlu0 %2473, %v2071
        %v2475 = vpop.permute.xlu0 %2474
        %2478 = vset.pattern.permute.xlu0 0
        %2479 = vperm.xlu0 %2478, %v2072
        %v2480 = vpop.permute.xlu0 %2479
        %2483 = vset.pattern.permute.xlu0 0
        %2484 = vperm.xlu0 %2483, %v2073
        %v2485 = vpop.permute.xlu0 %2484
        %2488 = vset.pattern.permute.xlu0 0
        %2489 = vperm.xlu0 %2488, %v2074
        %v2490 = vpop.permute.xlu0 %2489
        %2493 = vset.pattern.permute.xlu0 0
        %2494 = vperm.xlu0 %2493, %v2075
        %v2495 = vpop.permute.xlu0 %2494
        %2498 = vset.pattern.permute.xlu0 0
        %2499 = vperm.xlu0 %2498, %v2076
        %v2500 = vpop.permute.xlu0 %2499
        %2503 = vset.pattern.permute.xlu0 0
        %2504 = vperm.xlu0 %2503, %v2077
        %v2505 = vpop.permute.xlu0 %2504
        %2508 = vset.pattern.permute.xlu0 0
        %2509 = vperm.xlu0 %2508, %v2078
        %v2510 = vpop.permute.xlu0 %2509
        %2513 = vset.pattern.permute.xlu0 0
        %2514 = vperm.xlu0 %2513, %v2079
        %v2515 = vpop.permute.xlu0 %2514
        %2518 = vset.pattern.permute.xlu0 0
        %2519 = vperm.xlu0 %2518, %v2080
        %v2520 = vpop.permute.xlu0 %2519
        %2523 = vset.pattern.permute.xlu0 0
        %2524 = vperm.xlu0 %2523, %v2081
        %v2525 = vpop.permute.xlu0 %2524
        %2528 = vset.pattern.permute.xlu0 0
        %2529 = vperm.xlu0 %2528, %v2082
        %v2530 = vpop.permute.xlu0 %2529
        %2533 = vset.pattern.permute.xlu0 0
        %2534 = vperm.xlu0 %2533, %v2083
        %v2535 = vpop.permute.xlu0 %2534
        %2538 = vset.pattern.permute.xlu0 0
        %2539 = vperm.xlu0 %2538, %v2084
        %v2540 = vpop.permute.xlu0 %2539
        %2543 = vset.pattern.permute.xlu0 0
        %2544 = vperm.xlu0 %2543, %v2085
        %v2545 = vpop.permute.xlu0 %2544
        %2548 = vset.pattern.permute.xlu0 0
        %2549 = vperm.xlu0 %2548, %v2086
        %v2550 = vpop.permute.xlu0 %2549
        %2553 = vset.pattern.permute.xlu0 0
        %2554 = vperm.xlu0 %2553, %v2087
        %v2555 = vpop.permute.xlu0 %2554
        %2558 = vset.pattern.permute.xlu0 0
        %2559 = vperm.xlu0 %2558, %v2088
        %v2560 = vpop.permute.xlu0 %2559
        %2563 = vset.pattern.permute.xlu0 0
        %2564 = vperm.xlu0 %2563, %v2089
        %v2565 = vpop.permute.xlu0 %2564
        %2568 = vset.pattern.permute.xlu0 0
        %2569 = vperm.xlu0 %2568, %v2090
        %v2570 = vpop.permute.xlu0 %2569
        %2573 = vset.pattern.permute.xlu0 0
        %2574 = vperm.xlu0 %2573, %v2091
        %v2575 = vpop.permute.xlu0 %2574
        %2578 = vset.pattern.permute.xlu0 0
        %2579 = vperm.xlu0 %2578, %v2092
        %v2580 = vpop.permute.xlu0 %2579
        %2583 = vset.pattern.permute.xlu0 0
        %2584 = vperm.xlu0 %2583, %v2093
        %v2585 = vpop.permute.xlu0 %2584
        %2588 = vset.pattern.permute.xlu0 0
        %2589 = vperm.xlu0 %2588, %v2094
        %v2590 = vpop.permute.xlu0 %2589
        %2593 = vset.pattern.permute.xlu0 0
        %2594 = vperm.xlu0 %2593, %v2095
        %v2595 = vpop.permute.xlu0 %2594
        %2598 = vset.pattern.permute.xlu0 0
        %2599 = vperm.xlu0 %2598, %v2096
        %v2600 = vpop.permute.xlu0 %2599
        %2603 = vset.pattern.permute.xlu0 0
        %2604 = vperm.xlu0 %2603, %v2097
        %v2605 = vpop.permute.xlu0 %2604
        %2608 = vset.pattern.permute.xlu0 0
        %2609 = vperm.xlu0 %2608, %v2098
        %v2610 = vpop.permute.xlu0 %2609
        %2613 = vset.pattern.permute.xlu0 0
        %2614 = vperm.xlu0 %2613, %v2099
        %v2615 = vpop.permute.xlu0 %2614
        %2618 = vset.pattern.permute.xlu0 0
        %2619 = vperm.xlu0 %2618, %v2100
        %v2620 = vpop.permute.xlu0 %2619
        %2623 = vset.pattern.permute.xlu0 0
        %2624 = vperm.xlu0 %2623, %v2101
        %v2625 = vpop.permute.xlu0 %2624
        %2628 = vset.pattern.permute.xlu0 0
        %2629 = vperm.xlu0 %2628, %v2102
        %v2630 = vpop.permute.xlu0 %2629
        %2633 = vset.pattern.permute.xlu0 0
        %2634 = vperm.xlu0 %2633, %v2103
        %v2635 = vpop.permute.xlu0 %2634
        %2638 = vset.pattern.permute.xlu0 0
        %2639 = vperm.xlu0 %2638, %v2104
        %v2640 = vpop.permute.xlu0 %2639
        %2643 = vset.pattern.permute.xlu0 0
        %2644 = vperm.xlu0 %2643, %v2105
        %v2645 = vpop.permute.xlu0 %2644
        %2648 = vset.pattern.permute.xlu0 0
        %2649 = vperm.xlu0 %2648, %v2106
        %v2650 = vpop.permute.xlu0 %2649
        %2653 = vset.pattern.permute.xlu0 0
        %2654 = vperm.xlu0 %2653, %v2107
        %v2655 = vpop.permute.xlu0 %2654
        %2658 = vset.pattern.permute.xlu0 0
        %2659 = vperm.xlu0 %2658, %v2108
        %v2660 = vpop.permute.xlu0 %2659
        %2663 = vset.pattern.permute.xlu0 0
        %2664 = vperm.xlu0 %2663, %v2109
        %v2665 = vpop.permute.xlu0 %2664
        %2668 = vset.pattern.permute.xlu0 0
        %2669 = vperm.xlu0 %2668, %v2110
        %v2670 = vpop.permute.xlu0 %2669
        %v2672 = vperm.slane %v2111, 0
        %v2673 = vmul.f32 %v2115, %v2672
        %v2674 = vmul.f32 %v2120, %v2672
        %v2675 = vmul.f32 %v2125, %v2672
        %v2676 = vmul.f32 %v2130, %v2672
        %v2677 = vmul.f32 %v2135, %v2672
        %v2678 = vmul.f32 %v2140, %v2672
        %v2679 = vmul.f32 %v2145, %v2672
        %v2680 = vmul.f32 %v2150, %v2672
        %v2681 = vmul.f32 %v2155, %v2672
        %v2682 = vmul.f32 %v2160, %v2672
        %v2683 = vmul.f32 %v2165, %v2672
        %v2684 = vmul.f32 %v2170, %v2672
        %v2685 = vmul.f32 %v2175, %v2672
        %v2686 = vmul.f32 %v2180, %v2672
        %v2687 = vmul.f32 %v2185, %v2672
        %v2688 = vmul.f32 %v2190, %v2672
        %v2689 = vmul.f32 %v2195, %v2672
        %v2690 = vmul.f32 %v2200, %v2672
        %v2691 = vmul.f32 %v2205, %v2672
        %v2692 = vmul.f32 %v2210, %v2672
        %v2693 = vmul.f32 %v2215, %v2672
        %v2694 = vmul.f32 %v2220, %v2672
        %v2695 = vmul.f32 %v2225, %v2672
        %v2696 = vmul.f32 %v2230, %v2672
        %v2697 = vmul.f32 %v2235, %v2672
        %v2698 = vmul.f32 %v2240, %v2672
        %v2699 = vmul.f32 %v2245, %v2672
        %v2700 = vmul.f32 %v2250, %v2672
        %v2701 = vmul.f32 %v2255, %v2672
        %v2702 = vmul.f32 %v2260, %v2672
        %v2703 = vmul.f32 %v2265, %v2672
        %v2704 = vmul.f32 %v2270, %v2672
        %v2705 = vmul.f32 %v2275, %v2672
        %v2706 = vmul.f32 %v2280, %v2672
        %v2707 = vmul.f32 %v2285, %v2672
        %v2708 = vmul.f32 %v2290, %v2672
        %v2709 = vmul.f32 %v2295, %v2672
        %v2710 = vmul.f32 %v2300, %v2672
        %v2711 = vmul.f32 %v2305, %v2672
        %v2712 = vmul.f32 %v2310, %v2672
        %v2713 = vmul.f32 %v2315, %v2672
        %v2714 = vmul.f32 %v2320, %v2672
        %v2715 = vmul.f32 %v2325, %v2672
        %v2716 = vmul.f32 %v2330, %v2672
        %v2717 = vmul.f32 %v2335, %v2672
        %v2718 = vmul.f32 %v2340, %v2672
        %v2719 = vmul.f32 %v2345, %v2672
        %v2720 = vmul.f32 %v2350, %v2672
        %v2721 = vmul.f32 %v2355, %v2672
        %v2722 = vmul.f32 %v2360, %v2672
        %v2723 = vmul.f32 %v2365, %v2672
        %v2724 = vmul.f32 %v2370, %v2672
        %v2725 = vmul.f32 %v2375, %v2672
        %v2726 = vmul.f32 %v2380, %v2672
        %v2727 = vmul.f32 %v2385, %v2672
        %v2728 = vmul.f32 %v2390, %v2672
        %v2729 = vmul.f32 %v2395, %v2672
        %v2730 = vmul.f32 %v2400, %v2672
        %v2731 = vmul.f32 %v2405, %v2672
        %v2732 = vmul.f32 %v2410, %v2672
        %v2733 = vmul.f32 %v2415, %v2672
        %v2734 = vmul.f32 %v2420, %v2672
        %v2735 = vmul.f32 %v2425, %v2672
        %v2736 = vmul.f32 %v2430, %v2672
        %v2737 = vmul.f32 %v2435, %v2672
        %v2738 = vmul.f32 %v2440, %v2672
        %v2739 = vmul.f32 %v2445, %v2672
        %v2740 = vmul.f32 %v2450, %v2672
        %v2741 = vmul.f32 %v2455, %v2672
        %v2742 = vmul.f32 %v2460, %v2672
        %v2743 = vmul.f32 %v2465, %v2672
        %v2744 = vmul.f32 %v2470, %v2672
        %v2745 = vmul.f32 %v2475, %v2672
        %v2746 = vmul.f32 %v2480, %v2672
        %v2747 = vmul.f32 %v2485, %v2672
        %v2748 = vmul.f32 %v2490, %v2672
        %v2749 = vmul.f32 %v2495, %v2672
        %v2750 = vmul.f32 %v2500, %v2672
        %v2751 = vmul.f32 %v2505, %v2672
        %v2752 = vmul.f32 %v2510, %v2672
        %v2753 = vmul.f32 %v2515, %v2672
        %v2754 = vmul.f32 %v2520, %v2672
        %v2755 = vmul.f32 %v2525, %v2672
        %v2756 = vmul.f32 %v2530, %v2672
        %v2757 = vmul.f32 %v2535, %v2672
        %v2758 = vmul.f32 %v2540, %v2672
        %v2759 = vmul.f32 %v2545, %v2672
        %v2760 = vmul.f32 %v2550, %v2672
        %v2761 = vmul.f32 %v2555, %v2672
        %v2762 = vmul.f32 %v2560, %v2672
        %v2763 = vmul.f32 %v2565, %v2672
        %v2764 = vmul.f32 %v2570, %v2672
        %v2765 = vmul.f32 %v2575, %v2672
        %v2766 = vmul.f32 %v2580, %v2672
        %v2767 = vmul.f32 %v2585, %v2672
        %v2768 = vmul.f32 %v2590, %v2672
        %v2769 = vmul.f32 %v2595, %v2672
        %v2770 = vmul.f32 %v2600, %v2672
        %v2771 = vmul.f32 %v2605, %v2672
        %v2772 = vmul.f32 %v2610, %v2672
        %v2773 = vmul.f32 %v2615, %v2672
        %v2774 = vmul.f32 %v2620, %v2672
        %v2775 = vmul.f32 %v2625, %v2672
        %v2776 = vmul.f32 %v2630, %v2672
        %v2777 = vmul.f32 %v2635, %v2672
        %v2778 = vmul.f32 %v2640, %v2672
        %v2779 = vmul.f32 %v2645, %v2672
        %v2780 = vmul.f32 %v2650, %v2672
        %v2781 = vmul.f32 %v2655, %v2672
        %v2782 = vmul.f32 %v2660, %v2672
        %v2783 = vmul.f32 %v2665, %v2672
        %v2784 = vmul.f32 %v2670, %v2672
        %v2785 = vadd.f32 %v1887, %v2673
        %v2786 = vadd.f32 %v1888, %v2674
        %v2787 = vadd.f32 %v1889, %v2675
        %v2788 = vadd.f32 %v1890, %v2676
        %v2789 = vadd.f32 %v1891, %v2677
        %v2790 = vadd.f32 %v1892, %v2678
        %v2791 = vadd.f32 %v1893, %v2679
        %v2792 = vadd.f32 %v1894, %v2680
        %v2793 = vadd.f32 %v1895, %v2681
        %v2794 = vadd.f32 %v1896, %v2682
        %v2795 = vadd.f32 %v1897, %v2683
        %v2796 = vadd.f32 %v1898, %v2684
        %v2797 = vadd.f32 %v1899, %v2685
        %v2798 = vadd.f32 %v1900, %v2686
        %v2799 = vadd.f32 %v1901, %v2687
        %v2800 = vadd.f32 %v1902, %v2688
        %v2801 = vadd.f32 %v1903, %v2689
        %v2802 = vadd.f32 %v1904, %v2690
        %v2803 = vadd.f32 %v1905, %v2691
        %v2804 = vadd.f32 %v1906, %v2692
        %v2805 = vadd.f32 %v1907, %v2693
        %v2806 = vadd.f32 %v1908, %v2694
        %v2807 = vadd.f32 %v1909, %v2695
        %v2808 = vadd.f32 %v1910, %v2696
        %v2809 = vadd.f32 %v1911, %v2697
        %v2810 = vadd.f32 %v1912, %v2698
        %v2811 = vadd.f32 %v1913, %v2699
        %v2812 = vadd.f32 %v1914, %v2700
        %v2813 = vadd.f32 %v1915, %v2701
        %v2814 = vadd.f32 %v1916, %v2702
        %v2815 = vadd.f32 %v1917, %v2703
        %v2816 = vadd.f32 %v1918, %v2704
        %v2817 = vadd.f32 %v1919, %v2705
        %v2818 = vadd.f32 %v1920, %v2706
        %v2819 = vadd.f32 %v1921, %v2707
        %v2820 = vadd.f32 %v1922, %v2708
        %v2821 = vadd.f32 %v1923, %v2709
        %v2822 = vadd.f32 %v1924, %v2710
        %v2823 = vadd.f32 %v1925, %v2711
        %v2824 = vadd.f32 %v1926, %v2712
        %v2825 = vadd.f32 %v1927, %v2713
        %v2826 = vadd.f32 %v1928, %v2714
        %v2827 = vadd.f32 %v1929, %v2715
        %v2828 = vadd.f32 %v1930, %v2716
        %v2829 = vadd.f32 %v1931, %v2717
        %v2830 = vadd.f32 %v1932, %v2718
        %v2831 = vadd.f32 %v1933, %v2719
        %v2832 = vadd.f32 %v1934, %v2720
        %v2833 = vadd.f32 %v1935, %v2721
        %v2834 = vadd.f32 %v1936, %v2722
        %v2835 = vadd.f32 %v1937, %v2723
        %v2836 = vadd.f32 %v1938, %v2724
        %v2837 = vadd.f32 %v1939, %v2725
        %v2838 = vadd.f32 %v1940, %v2726
        %v2839 = vadd.f32 %v1941, %v2727
        %v2840 = vadd.f32 %v1942, %v2728
        %v2841 = vadd.f32 %v1943, %v2729
        %v2842 = vadd.f32 %v1944, %v2730
        %v2843 = vadd.f32 %v1945, %v2731
        %v2844 = vadd.f32 %v1946, %v2732
        %v2845 = vadd.f32 %v1947, %v2733
        %v2846 = vadd.f32 %v1948, %v2734
        %v2847 = vadd.f32 %v1949, %v2735
        %v2848 = vadd.f32 %v1950, %v2736
        %v2849 = vadd.f32 %v1951, %v2737
        %v2850 = vadd.f32 %v1952, %v2738
        %v2851 = vadd.f32 %v1953, %v2739
        %v2852 = vadd.f32 %v1954, %v2740
        %v2853 = vadd.f32 %v1955, %v2741
        %v2854 = vadd.f32 %v1956, %v2742
        %v2855 = vadd.f32 %v1957, %v2743
        %v2856 = vadd.f32 %v1958, %v2744
        %v2857 = vadd.f32 %v1959, %v2745
        %v2858 = vadd.f32 %v1960, %v2746
        %v2859 = vadd.f32 %v1961, %v2747
        %v2860 = vadd.f32 %v1962, %v2748
        %v2861 = vadd.f32 %v1963, %v2749
        %v2862 = vadd.f32 %v1964, %v2750
        %v2863 = vadd.f32 %v1965, %v2751
        %v2864 = vadd.f32 %v1966, %v2752
        %v2865 = vadd.f32 %v1967, %v2753
        %v2866 = vadd.f32 %v1968, %v2754
        %v2867 = vadd.f32 %v1969, %v2755
        %v2868 = vadd.f32 %v1970, %v2756
        %v2869 = vadd.f32 %v1971, %v2757
        %v2870 = vadd.f32 %v1972, %v2758
        %v2871 = vadd.f32 %v1973, %v2759
        %v2872 = vadd.f32 %v1974, %v2760
        %v2873 = vadd.f32 %v1975, %v2761
        %v2874 = vadd.f32 %v1976, %v2762
        %v2875 = vadd.f32 %v1977, %v2763
        %v2876 = vadd.f32 %v1978, %v2764
        %v2877 = vadd.f32 %v1979, %v2765
        %v2878 = vadd.f32 %v1980, %v2766
        %v2879 = vadd.f32 %v1981, %v2767
        %v2880 = vadd.f32 %v1982, %v2768
        %v2881 = vadd.f32 %v1983, %v2769
        %v2882 = vadd.f32 %v1984, %v2770
        %v2883 = vadd.f32 %v1985, %v2771
        %v2884 = vadd.f32 %v1986, %v2772
        %v2885 = vadd.f32 %v1987, %v2773
        %v2886 = vadd.f32 %v1988, %v2774
        %v2887 = vadd.f32 %v1989, %v2775
        %v2888 = vadd.f32 %v1990, %v2776
        %v2889 = vadd.f32 %v1991, %v2777
        %v2890 = vadd.f32 %v1992, %v2778
        %v2891 = vadd.f32 %v1993, %v2779
        %v2892 = vadd.f32 %v1994, %v2780
        %v2893 = vadd.f32 %v1995, %v2781
        %v2894 = vadd.f32 %v1996, %v2782
        %v2895 = vadd.f32 %v1997, %v2783
        %v2896 = vadd.f32 %v1998, %v2784
        %v2897 = vld [vmem:[%s197 + $0x20] sm:$0xff]
        %v2898 = vld [vmem:[%s197 + $0x28] sm:$0xff]
        %v2899 = vld [vmem:[%s197 + $0x30] sm:$0xff]
        %v2900 = vld [vmem:[%s197 + $0x38] sm:$0xff]
        %v2901 = vld [vmem:[%s197 + $0x40] sm:$0xff]
        %v2902 = vld [vmem:[%s197 + $0x48] sm:$0xff]
        %v2903 = vld [vmem:[%s197 + $0x50] sm:$0xff]
        %v2904 = vld [vmem:[%s197 + $0x58] sm:$0xff]
        %v2905 = vld [vmem:[%s197 + $0x60] sm:$0xff]
        %v2906 = vld [vmem:[%s197 + $0x68] sm:$0xff]
        %v2907 = vld [vmem:[%s197 + $0x70] sm:$0xff]
        %v2908 = vld [vmem:[%s197 + $0x78] sm:$0xff]
        %v2909 = vld [vmem:[%s197 + $0x80] sm:$0xff]
        %v2910 = vld [vmem:[%s197 + $0x88] sm:$0xff]
        %v2911 = vld [vmem:[%s197 + $0x90] sm:$0xff]
        %v2912 = vld [vmem:[%s197 + $0x98] sm:$0xff]
        %v2913 = vld [vmem:[%s197 + $0xa0] sm:$0xff]
        %v2914 = vld [vmem:[%s197 + $0xa8] sm:$0xff]
        %v2915 = vld [vmem:[%s197 + $0xb0] sm:$0xff]
        %v2916 = vld [vmem:[%s197 + $0xb8] sm:$0xff]
        %v2917 = vld [vmem:[%s197 + $0xc0] sm:$0xff]
        %v2918 = vld [vmem:[%s197 + $0xc8] sm:$0xff]
        %v2919 = vld [vmem:[%s197 + $0xd0] sm:$0xff]
        %v2920 = vld [vmem:[%s197 + $0xd8] sm:$0xff]
        %v2921 = vld [vmem:[%s197 + $0xe0] sm:$0xff]
        %v2922 = vld [vmem:[%s197 + $0xe8] sm:$0xff]
        %v2923 = vld [vmem:[%s197 + $0xf0] sm:$0xff]
        %v2924 = vld [vmem:[%s197 + $0xf8] sm:$0xff]
        %v2925 = vld [vmem:[%s197 + $0x100] sm:$0xff]
        %v2926 = vld [vmem:[%s197 + $0x108] sm:$0xff]
        %v2927 = vld [vmem:[%s197 + $0x110] sm:$0xff]
        %v2928 = vld [vmem:[%s197 + $0x118] sm:$0xff]
        %v2929 = vld [vmem:[%s197 + $0x120] sm:$0xff]
        %v2930 = vld [vmem:[%s197 + $0x128] sm:$0xff]
        %v2931 = vld [vmem:[%s197 + $0x130] sm:$0xff]
        %v2932 = vld [vmem:[%s197 + $0x138] sm:$0xff]
        %v2933 = vld [vmem:[%s197 + $0x140] sm:$0xff]
        %v2934 = vld [vmem:[%s197 + $0x148] sm:$0xff]
        %v2935 = vld [vmem:[%s197 + $0x150] sm:$0xff]
        %v2936 = vld [vmem:[%s197 + $0x158] sm:$0xff]
        %v2937 = vld [vmem:[%s197 + $0x160] sm:$0xff]
        %v2938 = vld [vmem:[%s197 + $0x168] sm:$0xff]
        %v2939 = vld [vmem:[%s197 + $0x170] sm:$0xff]
        %v2940 = vld [vmem:[%s197 + $0x178] sm:$0xff]
        %v2941 = vld [vmem:[%s197 + $0x180] sm:$0xff]
        %v2942 = vld [vmem:[%s197 + $0x188] sm:$0xff]
        %v2943 = vld [vmem:[%s197 + $0x190] sm:$0xff]
        %v2944 = vld [vmem:[%s197 + $0x198] sm:$0xff]
        %v2945 = vld [vmem:[%s197 + $0x1a0] sm:$0xff]
        %v2946 = vld [vmem:[%s197 + $0x1a8] sm:$0xff]
        %v2947 = vld [vmem:[%s197 + $0x1b0] sm:$0xff]
        %v2948 = vld [vmem:[%s197 + $0x1b8] sm:$0xff]
        %v2949 = vld [vmem:[%s197 + $0x1c0] sm:$0xff]
        %v2950 = vld [vmem:[%s197 + $0x1c8] sm:$0xff]
        %v2951 = vld [vmem:[%s197 + $0x1d0] sm:$0xff]
        %v2952 = vld [vmem:[%s197 + $0x1d8] sm:$0xff]
        %v2953 = vld [vmem:[%s197 + $0x1e0] sm:$0xff]
        %v2954 = vld [vmem:[%s197 + $0x1e8] sm:$0xff]
        %v2955 = vld [vmem:[%s197 + $0x1f0] sm:$0xff]
        %v2956 = vld [vmem:[%s197 + $0x1f8] sm:$0xff]
        %v2957 = vld [vmem:[%s197 + $0x200] sm:$0xff]
        %v2958 = vld [vmem:[%s197 + $0x208] sm:$0xff]
        %v2959 = vld [vmem:[%s197 + $0x210] sm:$0xff]
        %v2960 = vld [vmem:[%s197 + $0x218] sm:$0xff]
        %v2961 = vld [vmem:[%s197 + $0x220] sm:$0xff]
        %v2962 = vld [vmem:[%s197 + $0x228] sm:$0xff]
        %v2963 = vld [vmem:[%s197 + $0x230] sm:$0xff]
        %v2964 = vld [vmem:[%s197 + $0x238] sm:$0xff]
        %v2965 = vld [vmem:[%s197 + $0x240] sm:$0xff]
        %v2966 = vld [vmem:[%s197 + $0x248] sm:$0xff]
        %v2967 = vld [vmem:[%s197 + $0x250] sm:$0xff]
        %v2968 = vld [vmem:[%s197 + $0x258] sm:$0xff]
        %v2969 = vld [vmem:[%s197 + $0x260] sm:$0xff]
        %v2970 = vld [vmem:[%s197 + $0x268] sm:$0xff]
        %v2971 = vld [vmem:[%s197 + $0x270] sm:$0xff]
        %v2972 = vld [vmem:[%s197 + $0x278] sm:$0xff]
        %v2973 = vld [vmem:[%s197 + $0x280] sm:$0xff]
        %v2974 = vld [vmem:[%s197 + $0x288] sm:$0xff]
        %v2975 = vld [vmem:[%s197 + $0x290] sm:$0xff]
        %v2976 = vld [vmem:[%s197 + $0x298] sm:$0xff]
        %v2977 = vld [vmem:[%s197 + $0x2a0] sm:$0xff]
        %v2978 = vld [vmem:[%s197 + $0x2a8] sm:$0xff]
        %v2979 = vld [vmem:[%s197 + $0x2b0] sm:$0xff]
        %v2980 = vld [vmem:[%s197 + $0x2b8] sm:$0xff]
        %v2981 = vld [vmem:[%s197 + $0x2c0] sm:$0xff]
        %v2982 = vld [vmem:[%s197 + $0x2c8] sm:$0xff]
        %v2983 = vld [vmem:[%s197 + $0x2d0] sm:$0xff]
        %v2984 = vld [vmem:[%s197 + $0x2d8] sm:$0xff]
        %v2985 = vld [vmem:[%s197 + $0x2e0] sm:$0xff]
        %v2986 = vld [vmem:[%s197 + $0x2e8] sm:$0xff]
        %v2987 = vld [vmem:[%s197 + $0x2f0] sm:$0xff]
        %v2988 = vld [vmem:[%s197 + $0x2f8] sm:$0xff]
        %v2989 = vld [vmem:[%s197 + $0x300] sm:$0xff]
        %v2990 = vld [vmem:[%s197 + $0x308] sm:$0xff]
        %v2991 = vld [vmem:[%s197 + $0x310] sm:$0xff]
        %v2992 = vld [vmem:[%s197 + $0x318] sm:$0xff]
        %v2993 = vld [vmem:[%s197 + $0x320] sm:$0xff]
        %v2994 = vld [vmem:[%s197 + $0x328] sm:$0xff]
        %v2995 = vld [vmem:[%s197 + $0x330] sm:$0xff]
        %v2996 = vld [vmem:[%s197 + $0x338] sm:$0xff]
        %v2997 = vld [vmem:[%s197 + $0x340] sm:$0xff]
        %v2998 = vld [vmem:[%s197 + $0x348] sm:$0xff]
        %v2999 = vld [vmem:[%s197 + $0x350] sm:$0xff]
        %v3000 = vld [vmem:[%s197 + $0x358] sm:$0xff]
        %v3001 = vld [vmem:[%s197 + $0x360] sm:$0xff]
        %v3002 = vld [vmem:[%s197 + $0x368] sm:$0xff]
        %v3003 = vld [vmem:[%s197 + $0x370] sm:$0xff]
        %v3004 = vld [vmem:[%s197 + $0x378] sm:$0xff]
        %v3005 = vld [vmem:[%s197 + $0x380] sm:$0xff]
        %v3006 = vld [vmem:[%s197 + $0x388] sm:$0xff]
        %v3007 = vld [vmem:[%s197 + $0x390] sm:$0xff]
        %v3008 = vld [vmem:[%s197 + $0x398] sm:$0xff]
        %v3009 = vld [vmem:[#allocation3 + $0x3] sm:$0x1]
        %3011 = vset.pattern.permute.xlu0 0
        %3012 = vperm.xlu0 %3011, %v2897
        %v3013 = vpop.permute.xlu0 %3012
        %3016 = vset.pattern.permute.xlu0 0
        %3017 = vperm.xlu0 %3016, %v2898
        %v3018 = vpop.permute.xlu0 %3017
        %3021 = vset.pattern.permute.xlu0 0
        %3022 = vperm.xlu0 %3021, %v2899
        %v3023 = vpop.permute.xlu0 %3022
        %3026 = vset.pattern.permute.xlu0 0
        %3027 = vperm.xlu0 %3026, %v2900
        %v3028 = vpop.permute.xlu0 %3027
        %3031 = vset.pattern.permute.xlu0 0
        %3032 = vperm.xlu0 %3031, %v2901
        %v3033 = vpop.permute.xlu0 %3032
        %3036 = vset.pattern.permute.xlu0 0
        %3037 = vperm.xlu0 %3036, %v2902
        %v3038 = vpop.permute.xlu0 %3037
        %3041 = vset.pattern.permute.xlu0 0
        %3042 = vperm.xlu0 %3041, %v2903
        %v3043 = vpop.permute.xlu0 %3042
        %3046 = vset.pattern.permute.xlu0 0
        %3047 = vperm.xlu0 %3046, %v2904
        %v3048 = vpop.permute.xlu0 %3047
        %3051 = vset.pattern.permute.xlu0 0
        %3052 = vperm.xlu0 %3051, %v2905
        %v3053 = vpop.permute.xlu0 %3052
        %3056 = vset.pattern.permute.xlu0 0
        %3057 = vperm.xlu0 %3056, %v2906
        %v3058 = vpop.permute.xlu0 %3057
        %3061 = vset.pattern.permute.xlu0 0
        %3062 = vperm.xlu0 %3061, %v2907
        %v3063 = vpop.permute.xlu0 %3062
        %3066 = vset.pattern.permute.xlu0 0
        %3067 = vperm.xlu0 %3066, %v2908
        %v3068 = vpop.permute.xlu0 %3067
        %3071 = vset.pattern.permute.xlu0 0
        %3072 = vperm.xlu0 %3071, %v2909
        %v3073 = vpop.permute.xlu0 %3072
        %3076 = vset.pattern.permute.xlu0 0
        %3077 = vperm.xlu0 %3076, %v2910
        %v3078 = vpop.permute.xlu0 %3077
        %3081 = vset.pattern.permute.xlu0 0
        %3082 = vperm.xlu0 %3081, %v2911
        %v3083 = vpop.permute.xlu0 %3082
        %3086 = vset.pattern.permute.xlu0 0
        %3087 = vperm.xlu0 %3086, %v2912
        %v3088 = vpop.permute.xlu0 %3087
        %3091 = vset.pattern.permute.xlu0 0
        %3092 = vperm.xlu0 %3091, %v2913
        %v3093 = vpop.permute.xlu0 %3092
        %3096 = vset.pattern.permute.xlu0 0
        %3097 = vperm.xlu0 %3096, %v2914
        %v3098 = vpop.permute.xlu0 %3097
        %3101 = vset.pattern.permute.xlu0 0
        %3102 = vperm.xlu0 %3101, %v2915
        %v3103 = vpop.permute.xlu0 %3102
        %3106 = vset.pattern.permute.xlu0 0
        %3107 = vperm.xlu0 %3106, %v2916
        %v3108 = vpop.permute.xlu0 %3107
        %3111 = vset.pattern.permute.xlu0 0
        %3112 = vperm.xlu0 %3111, %v2917
        %v3113 = vpop.permute.xlu0 %3112
        %3116 = vset.pattern.permute.xlu0 0
        %3117 = vperm.xlu0 %3116, %v2918
        %v3118 = vpop.permute.xlu0 %3117
        %3121 = vset.pattern.permute.xlu0 0
        %3122 = vperm.xlu0 %3121, %v2919
        %v3123 = vpop.permute.xlu0 %3122
        %3126 = vset.pattern.permute.xlu0 0
        %3127 = vperm.xlu0 %3126, %v2920
        %v3128 = vpop.permute.xlu0 %3127
        %3131 = vset.pattern.permute.xlu0 0
        %3132 = vperm.xlu0 %3131, %v2921
        %v3133 = vpop.permute.xlu0 %3132
        %3136 = vset.pattern.permute.xlu0 0
        %3137 = vperm.xlu0 %3136, %v2922
        %v3138 = vpop.permute.xlu0 %3137
        %3141 = vset.pattern.permute.xlu0 0
        %3142 = vperm.xlu0 %3141, %v2923
        %v3143 = vpop.permute.xlu0 %3142
        %3146 = vset.pattern.permute.xlu0 0
        %3147 = vperm.xlu0 %3146, %v2924
        %v3148 = vpop.permute.xlu0 %3147
        %3151 = vset.pattern.permute.xlu0 0
        %3152 = vperm.xlu0 %3151, %v2925
        %v3153 = vpop.permute.xlu0 %3152
        %3156 = vset.pattern.permute.xlu0 0
        %3157 = vperm.xlu0 %3156, %v2926
        %v3158 = vpop.permute.xlu0 %3157
        %3161 = vset.pattern.permute.xlu0 0
        %3162 = vperm.xlu0 %3161, %v2927
        %v3163 = vpop.permute.xlu0 %3162
        %3166 = vset.pattern.permute.xlu0 0
        %3167 = vperm.xlu0 %3166, %v2928
        %v3168 = vpop.permute.xlu0 %3167
        %3171 = vset.pattern.permute.xlu0 0
        %3172 = vperm.xlu0 %3171, %v2929
        %v3173 = vpop.permute.xlu0 %3172
        %3176 = vset.pattern.permute.xlu0 0
        %3177 = vperm.xlu0 %3176, %v2930
        %v3178 = vpop.permute.xlu0 %3177
        %3181 = vset.pattern.permute.xlu0 0
        %3182 = vperm.xlu0 %3181, %v2931
        %v3183 = vpop.permute.xlu0 %3182
        %3186 = vset.pattern.permute.xlu0 0
        %3187 = vperm.xlu0 %3186, %v2932
        %v3188 = vpop.permute.xlu0 %3187
        %3191 = vset.pattern.permute.xlu0 0
        %3192 = vperm.xlu0 %3191, %v2933
        %v3193 = vpop.permute.xlu0 %3192
        %3196 = vset.pattern.permute.xlu0 0
        %3197 = vperm.xlu0 %3196, %v2934
        %v3198 = vpop.permute.xlu0 %3197
        %3201 = vset.pattern.permute.xlu0 0
        %3202 = vperm.xlu0 %3201, %v2935
        %v3203 = vpop.permute.xlu0 %3202
        %3206 = vset.pattern.permute.xlu0 0
        %3207 = vperm.xlu0 %3206, %v2936
        %v3208 = vpop.permute.xlu0 %3207
        %3211 = vset.pattern.permute.xlu0 0
        %3212 = vperm.xlu0 %3211, %v2937
        %v3213 = vpop.permute.xlu0 %3212
        %3216 = vset.pattern.permute.xlu0 0
        %3217 = vperm.xlu0 %3216, %v2938
        %v3218 = vpop.permute.xlu0 %3217
        %3221 = vset.pattern.permute.xlu0 0
        %3222 = vperm.xlu0 %3221, %v2939
        %v3223 = vpop.permute.xlu0 %3222
        %3226 = vset.pattern.permute.xlu0 0
        %3227 = vperm.xlu0 %3226, %v2940
        %v3228 = vpop.permute.xlu0 %3227
        %3231 = vset.pattern.permute.xlu0 0
        %3232 = vperm.xlu0 %3231, %v2941
        %v3233 = vpop.permute.xlu0 %3232
        %3236 = vset.pattern.permute.xlu0 0
        %3237 = vperm.xlu0 %3236, %v2942
        %v3238 = vpop.permute.xlu0 %3237
        %3241 = vset.pattern.permute.xlu0 0
        %3242 = vperm.xlu0 %3241, %v2943
        %v3243 = vpop.permute.xlu0 %3242
        %3246 = vset.pattern.permute.xlu0 0
        %3247 = vperm.xlu0 %3246, %v2944
        %v3248 = vpop.permute.xlu0 %3247
        %3251 = vset.pattern.permute.xlu0 0
        %3252 = vperm.xlu0 %3251, %v2945
        %v3253 = vpop.permute.xlu0 %3252
        %3256 = vset.pattern.permute.xlu0 0
        %3257 = vperm.xlu0 %3256, %v2946
        %v3258 = vpop.permute.xlu0 %3257
        %3261 = vset.pattern.permute.xlu0 0
        %3262 = vperm.xlu0 %3261, %v2947
        %v3263 = vpop.permute.xlu0 %3262
        %3266 = vset.pattern.permute.xlu0 0
        %3267 = vperm.xlu0 %3266, %v2948
        %v3268 = vpop.permute.xlu0 %3267
        %3271 = vset.pattern.permute.xlu0 0
        %3272 = vperm.xlu0 %3271, %v2949
        %v3273 = vpop.permute.xlu0 %3272
        %3276 = vset.pattern.permute.xlu0 0
        %3277 = vperm.xlu0 %3276, %v2950
        %v3278 = vpop.permute.xlu0 %3277
        %3281 = vset.pattern.permute.xlu0 0
        %3282 = vperm.xlu0 %3281, %v2951
        %v3283 = vpop.permute.xlu0 %3282
        %3286 = vset.pattern.permute.xlu0 0
        %3287 = vperm.xlu0 %3286, %v2952
        %v3288 = vpop.permute.xlu0 %3287
        %3291 = vset.pattern.permute.xlu0 0
        %3292 = vperm.xlu0 %3291, %v2953
        %v3293 = vpop.permute.xlu0 %3292
        %3296 = vset.pattern.permute.xlu0 0
        %3297 = vperm.xlu0 %3296, %v2954
        %v3298 = vpop.permute.xlu0 %3297
        %3301 = vset.pattern.permute.xlu0 0
        %3302 = vperm.xlu0 %3301, %v2955
        %v3303 = vpop.permute.xlu0 %3302
        %3306 = vset.pattern.permute.xlu0 0
        %3307 = vperm.xlu0 %3306, %v2956
        %v3308 = vpop.permute.xlu0 %3307
        %3311 = vset.pattern.permute.xlu0 0
        %3312 = vperm.xlu0 %3311, %v2957
        %v3313 = vpop.permute.xlu0 %3312
        %3316 = vset.pattern.permute.xlu0 0
        %3317 = vperm.xlu0 %3316, %v2958
        %v3318 = vpop.permute.xlu0 %3317
        %3321 = vset.pattern.permute.xlu0 0
        %3322 = vperm.xlu0 %3321, %v2959
        %v3323 = vpop.permute.xlu0 %3322
        %3326 = vset.pattern.permute.xlu0 0
        %3327 = vperm.xlu0 %3326, %v2960
        %v3328 = vpop.permute.xlu0 %3327
        %3331 = vset.pattern.permute.xlu0 0
        %3332 = vperm.xlu0 %3331, %v2961
        %v3333 = vpop.permute.xlu0 %3332
        %3336 = vset.pattern.permute.xlu0 0
        %3337 = vperm.xlu0 %3336, %v2962
        %v3338 = vpop.permute.xlu0 %3337
        %3341 = vset.pattern.permute.xlu0 0
        %3342 = vperm.xlu0 %3341, %v2963
        %v3343 = vpop.permute.xlu0 %3342
        %3346 = vset.pattern.permute.xlu0 0
        %3347 = vperm.xlu0 %3346, %v2964
        %v3348 = vpop.permute.xlu0 %3347
        %3351 = vset.pattern.permute.xlu0 0
        %3352 = vperm.xlu0 %3351, %v2965
        %v3353 = vpop.permute.xlu0 %3352
        %3356 = vset.pattern.permute.xlu0 0
        %3357 = vperm.xlu0 %3356, %v2966
        %v3358 = vpop.permute.xlu0 %3357
        %3361 = vset.pattern.permute.xlu0 0
        %3362 = vperm.xlu0 %3361, %v2967
        %v3363 = vpop.permute.xlu0 %3362
        %3366 = vset.pattern.permute.xlu0 0
        %3367 = vperm.xlu0 %3366, %v2968
        %v3368 = vpop.permute.xlu0 %3367
        %3371 = vset.pattern.permute.xlu0 0
        %3372 = vperm.xlu0 %3371, %v2969
        %v3373 = vpop.permute.xlu0 %3372
        %3376 = vset.pattern.permute.xlu0 0
        %3377 = vperm.xlu0 %3376, %v2970
        %v3378 = vpop.permute.xlu0 %3377
        %3381 = vset.pattern.permute.xlu0 0
        %3382 = vperm.xlu0 %3381, %v2971
        %v3383 = vpop.permute.xlu0 %3382
        %3386 = vset.pattern.permute.xlu0 0
        %3387 = vperm.xlu0 %3386, %v2972
        %v3388 = vpop.permute.xlu0 %3387
        %3391 = vset.pattern.permute.xlu0 0
        %3392 = vperm.xlu0 %3391, %v2973
        %v3393 = vpop.permute.xlu0 %3392
        %3396 = vset.pattern.permute.xlu0 0
        %3397 = vperm.xlu0 %3396, %v2974
        %v3398 = vpop.permute.xlu0 %3397
        %3401 = vset.pattern.permute.xlu0 0
        %3402 = vperm.xlu0 %3401, %v2975
        %v3403 = vpop.permute.xlu0 %3402
        %3406 = vset.pattern.permute.xlu0 0
        %3407 = vperm.xlu0 %3406, %v2976
        %v3408 = vpop.permute.xlu0 %3407
        %3411 = vset.pattern.permute.xlu0 0
        %3412 = vperm.xlu0 %3411, %v2977
        %v3413 = vpop.permute.xlu0 %3412
        %3416 = vset.pattern.permute.xlu0 0
        %3417 = vperm.xlu0 %3416, %v2978
        %v3418 = vpop.permute.xlu0 %3417
        %3421 = vset.pattern.permute.xlu0 0
        %3422 = vperm.xlu0 %3421, %v2979
        %v3423 = vpop.permute.xlu0 %3422
        %3426 = vset.pattern.permute.xlu0 0
        %3427 = vperm.xlu0 %3426, %v2980
        %v3428 = vpop.permute.xlu0 %3427
        %3431 = vset.pattern.permute.xlu0 0
        %3432 = vperm.xlu0 %3431, %v2981
        %v3433 = vpop.permute.xlu0 %3432
        %3436 = vset.pattern.permute.xlu0 0
        %3437 = vperm.xlu0 %3436, %v2982
        %v3438 = vpop.permute.xlu0 %3437
        %3441 = vset.pattern.permute.xlu0 0
        %3442 = vperm.xlu0 %3441, %v2983
        %v3443 = vpop.permute.xlu0 %3442
        %3446 = vset.pattern.permute.xlu0 0
        %3447 = vperm.xlu0 %3446, %v2984
        %v3448 = vpop.permute.xlu0 %3447
        %3451 = vset.pattern.permute.xlu0 0
        %3452 = vperm.xlu0 %3451, %v2985
        %v3453 = vpop.permute.xlu0 %3452
        %3456 = vset.pattern.permute.xlu0 0
        %3457 = vperm.xlu0 %3456, %v2986
        %v3458 = vpop.permute.xlu0 %3457
        %3461 = vset.pattern.permute.xlu0 0
        %3462 = vperm.xlu0 %3461, %v2987
        %v3463 = vpop.permute.xlu0 %3462
        %3466 = vset.pattern.permute.xlu0 0
        %3467 = vperm.xlu0 %3466, %v2988
        %v3468 = vpop.permute.xlu0 %3467
        %3471 = vset.pattern.permute.xlu0 0
        %3472 = vperm.xlu0 %3471, %v2989
        %v3473 = vpop.permute.xlu0 %3472
        %3476 = vset.pattern.permute.xlu0 0
        %3477 = vperm.xlu0 %3476, %v2990
        %v3478 = vpop.permute.xlu0 %3477
        %3481 = vset.pattern.permute.xlu0 0
        %3482 = vperm.xlu0 %3481, %v2991
        %v3483 = vpop.permute.xlu0 %3482
        %3486 = vset.pattern.permute.xlu0 0
        %3487 = vperm.xlu0 %3486, %v2992
        %v3488 = vpop.permute.xlu0 %3487
        %3491 = vset.pattern.permute.xlu0 0
        %3492 = vperm.xlu0 %3491, %v2993
        %v3493 = vpop.permute.xlu0 %3492
        %3496 = vset.pattern.permute.xlu0 0
        %3497 = vperm.xlu0 %3496, %v2994
        %v3498 = vpop.permute.xlu0 %3497
        %3501 = vset.pattern.permute.xlu0 0
        %3502 = vperm.xlu0 %3501, %v2995
        %v3503 = vpop.permute.xlu0 %3502
        %3506 = vset.pattern.permute.xlu0 0
        %3507 = vperm.xlu0 %3506, %v2996
        %v3508 = vpop.permute.xlu0 %3507
        %3511 = vset.pattern.permute.xlu0 0
        %3512 = vperm.xlu0 %3511, %v2997
        %v3513 = vpop.permute.xlu0 %3512
        %3516 = vset.pattern.permute.xlu0 0
        %3517 = vperm.xlu0 %3516, %v2998
        %v3518 = vpop.permute.xlu0 %3517
        %3521 = vset.pattern.permute.xlu0 0
        %3522 = vperm.xlu0 %3521, %v2999
        %v3523 = vpop.permute.xlu0 %3522
        %3526 = vset.pattern.permute.xlu0 0
        %3527 = vperm.xlu0 %3526, %v3000
        %v3528 = vpop.permute.xlu0 %3527
        %3531 = vset.pattern.permute.xlu0 0
        %3532 = vperm.xlu0 %3531, %v3001
        %v3533 = vpop.permute.xlu0 %3532
        %3536 = vset.pattern.permute.xlu0 0
        %3537 = vperm.xlu0 %3536, %v3002
        %v3538 = vpop.permute.xlu0 %3537
        %3541 = vset.pattern.permute.xlu0 0
        %3542 = vperm.xlu0 %3541, %v3003
        %v3543 = vpop.permute.xlu0 %3542
        %3546 = vset.pattern.permute.xlu0 0
        %3547 = vperm.xlu0 %3546, %v3004
        %v3548 = vpop.permute.xlu0 %3547
        %3551 = vset.pattern.permute.xlu0 0
        %3552 = vperm.xlu0 %3551, %v3005
        %v3553 = vpop.permute.xlu0 %3552
        %3556 = vset.pattern.permute.xlu0 0
        %3557 = vperm.xlu0 %3556, %v3006
        %v3558 = vpop.permute.xlu0 %3557
        %3561 = vset.pattern.permute.xlu0 0
        %3562 = vperm.xlu0 %3561, %v3007
        %v3563 = vpop.permute.xlu0 %3562
        %3566 = vset.pattern.permute.xlu0 0
        %3567 = vperm.xlu0 %3566, %v3008
        %v3568 = vpop.permute.xlu0 %3567
        %v3570 = vperm.slane %v3009, 0
        %v3571 = vmul.f32 %v3013, %v3570
        %v3572 = vmul.f32 %v3018, %v3570
        %v3573 = vmul.f32 %v3023, %v3570
        %v3574 = vmul.f32 %v3028, %v3570
        %v3575 = vmul.f32 %v3033, %v3570
        %v3576 = vmul.f32 %v3038, %v3570
        %v3577 = vmul.f32 %v3043, %v3570
        %v3578 = vmul.f32 %v3048, %v3570
        %v3579 = vmul.f32 %v3053, %v3570
        %v3580 = vmul.f32 %v3058, %v3570
        %v3581 = vmul.f32 %v3063, %v3570
        %v3582 = vmul.f32 %v3068, %v3570
        %v3583 = vmul.f32 %v3073, %v3570
        %v3584 = vmul.f32 %v3078, %v3570
        %v3585 = vmul.f32 %v3083, %v3570
        %v3586 = vmul.f32 %v3088, %v3570
        %v3587 = vmul.f32 %v3093, %v3570
        %v3588 = vmul.f32 %v3098, %v3570
        %v3589 = vmul.f32 %v3103, %v3570
        %v3590 = vmul.f32 %v3108, %v3570
        %v3591 = vmul.f32 %v3113, %v3570
        %v3592 = vmul.f32 %v3118, %v3570
        %v3593 = vmul.f32 %v3123, %v3570
        %v3594 = vmul.f32 %v3128, %v3570
        %v3595 = vmul.f32 %v3133, %v3570
        %v3596 = vmul.f32 %v3138, %v3570
        %v3597 = vmul.f32 %v3143, %v3570
        %v3598 = vmul.f32 %v3148, %v3570
        %v3599 = vmul.f32 %v3153, %v3570
        %v3600 = vmul.f32 %v3158, %v3570
        %v3601 = vmul.f32 %v3163, %v3570
        %v3602 = vmul.f32 %v3168, %v3570
        %v3603 = vmul.f32 %v3173, %v3570
        %v3604 = vmul.f32 %v3178, %v3570
        %v3605 = vmul.f32 %v3183, %v3570
        %v3606 = vmul.f32 %v3188, %v3570
        %v3607 = vmul.f32 %v3193, %v3570
        %v3608 = vmul.f32 %v3198, %v3570
        %v3609 = vmul.f32 %v3203, %v3570
        %v3610 = vmul.f32 %v3208, %v3570
        %v3611 = vmul.f32 %v3213, %v3570
        %v3612 = vmul.f32 %v3218, %v3570
        %v3613 = vmul.f32 %v3223, %v3570
        %v3614 = vmul.f32 %v3228, %v3570
        %v3615 = vmul.f32 %v3233, %v3570
        %v3616 = vmul.f32 %v3238, %v3570
        %v3617 = vmul.f32 %v3243, %v3570
        %v3618 = vmul.f32 %v3248, %v3570
        %v3619 = vmul.f32 %v3253, %v3570
        %v3620 = vmul.f32 %v3258, %v3570
        %v3621 = vmul.f32 %v3263, %v3570
        %v3622 = vmul.f32 %v3268, %v3570
        %v3623 = vmul.f32 %v3273, %v3570
        %v3624 = vmul.f32 %v3278, %v3570
        %v3625 = vmul.f32 %v3283, %v3570
        %v3626 = vmul.f32 %v3288, %v3570
        %v3627 = vmul.f32 %v3293, %v3570
        %v3628 = vmul.f32 %v3298, %v3570
        %v3629 = vmul.f32 %v3303, %v3570
        %v3630 = vmul.f32 %v3308, %v3570
        %v3631 = vmul.f32 %v3313, %v3570
        %v3632 = vmul.f32 %v3318, %v3570
        %v3633 = vmul.f32 %v3323, %v3570
        %v3634 = vmul.f32 %v3328, %v3570
        %v3635 = vmul.f32 %v3333, %v3570
        %v3636 = vmul.f32 %v3338, %v3570
        %v3637 = vmul.f32 %v3343, %v3570
        %v3638 = vmul.f32 %v3348, %v3570
        %v3639 = vmul.f32 %v3353, %v3570
        %v3640 = vmul.f32 %v3358, %v3570
        %v3641 = vmul.f32 %v3363, %v3570
        %v3642 = vmul.f32 %v3368, %v3570
        %v3643 = vmul.f32 %v3373, %v3570
        %v3644 = vmul.f32 %v3378, %v3570
        %v3645 = vmul.f32 %v3383, %v3570
        %v3646 = vmul.f32 %v3388, %v3570
        %v3647 = vmul.f32 %v3393, %v3570
        %v3648 = vmul.f32 %v3398, %v3570
        %v3649 = vmul.f32 %v3403, %v3570
        %v3650 = vmul.f32 %v3408, %v3570
        %v3651 = vmul.f32 %v3413, %v3570
        %v3652 = vmul.f32 %v3418, %v3570
        %v3653 = vmul.f32 %v3423, %v3570
        %v3654 = vmul.f32 %v3428, %v3570
        %v3655 = vmul.f32 %v3433, %v3570
        %v3656 = vmul.f32 %v3438, %v3570
        %v3657 = vmul.f32 %v3443, %v3570
        %v3658 = vmul.f32 %v3448, %v3570
        %v3659 = vmul.f32 %v3453, %v3570
        %v3660 = vmul.f32 %v3458, %v3570
        %v3661 = vmul.f32 %v3463, %v3570
        %v3662 = vmul.f32 %v3468, %v3570
        %v3663 = vmul.f32 %v3473, %v3570
        %v3664 = vmul.f32 %v3478, %v3570
        %v3665 = vmul.f32 %v3483, %v3570
        %v3666 = vmul.f32 %v3488, %v3570
        %v3667 = vmul.f32 %v3493, %v3570
        %v3668 = vmul.f32 %v3498, %v3570
        %v3669 = vmul.f32 %v3503, %v3570
        %v3670 = vmul.f32 %v3508, %v3570
        %v3671 = vmul.f32 %v3513, %v3570
        %v3672 = vmul.f32 %v3518, %v3570
        %v3673 = vmul.f32 %v3523, %v3570
        %v3674 = vmul.f32 %v3528, %v3570
        %v3675 = vmul.f32 %v3533, %v3570
        %v3676 = vmul.f32 %v3538, %v3570
        %v3677 = vmul.f32 %v3543, %v3570
        %v3678 = vmul.f32 %v3548, %v3570
        %v3679 = vmul.f32 %v3553, %v3570
        %v3680 = vmul.f32 %v3558, %v3570
        %v3681 = vmul.f32 %v3563, %v3570
        %v3682 = vmul.f32 %v3568, %v3570
        %v3683 = vadd.f32 %v2785, %v3571
        %v3684 = vadd.f32 %v2786, %v3572
        %v3685 = vadd.f32 %v2787, %v3573
        %v3686 = vadd.f32 %v2788, %v3574
        %v3687 = vadd.f32 %v2789, %v3575
        %v3688 = vadd.f32 %v2790, %v3576
        %v3689 = vadd.f32 %v2791, %v3577
        %v3690 = vadd.f32 %v2792, %v3578
        %v3691 = vadd.f32 %v2793, %v3579
        %v3692 = vadd.f32 %v2794, %v3580
        %v3693 = vadd.f32 %v2795, %v3581
        %v3694 = vadd.f32 %v2796, %v3582
        %v3695 = vadd.f32 %v2797, %v3583
        %v3696 = vadd.f32 %v2798, %v3584
        %v3697 = vadd.f32 %v2799, %v3585
        %v3698 = vadd.f32 %v2800, %v3586
        %v3699 = vadd.f32 %v2801, %v3587
        %v3700 = vadd.f32 %v2802, %v3588
        %v3701 = vadd.f32 %v2803, %v3589
        %v3702 = vadd.f32 %v2804, %v3590
        %v3703 = vadd.f32 %v2805, %v3591
        %v3704 = vadd.f32 %v2806, %v3592
        %v3705 = vadd.f32 %v2807, %v3593
        %v3706 = vadd.f32 %v2808, %v3594
        %v3707 = vadd.f32 %v2809, %v3595
        %v3708 = vadd.f32 %v2810, %v3596
        %v3709 = vadd.f32 %v2811, %v3597
        %v3710 = vadd.f32 %v2812, %v3598
        %v3711 = vadd.f32 %v2813, %v3599
        %v3712 = vadd.f32 %v2814, %v3600
        %v3713 = vadd.f32 %v2815, %v3601
        %v3714 = vadd.f32 %v2816, %v3602
        %v3715 = vadd.f32 %v2817, %v3603
        %v3716 = vadd.f32 %v2818, %v3604
        %v3717 = vadd.f32 %v2819, %v3605
        %v3718 = vadd.f32 %v2820, %v3606
        %v3719 = vadd.f32 %v2821, %v3607
        %v3720 = vadd.f32 %v2822, %v3608
        %v3721 = vadd.f32 %v2823, %v3609
        %v3722 = vadd.f32 %v2824, %v3610
        %v3723 = vadd.f32 %v2825, %v3611
        %v3724 = vadd.f32 %v2826, %v3612
        %v3725 = vadd.f32 %v2827, %v3613
        %v3726 = vadd.f32 %v2828, %v3614
        %v3727 = vadd.f32 %v2829, %v3615
        %v3728 = vadd.f32 %v2830, %v3616
        %v3729 = vadd.f32 %v2831, %v3617
        %v3730 = vadd.f32 %v2832, %v3618
        %v3731 = vadd.f32 %v2833, %v3619
        %v3732 = vadd.f32 %v2834, %v3620
        %v3733 = vadd.f32 %v2835, %v3621
        %v3734 = vadd.f32 %v2836, %v3622
        %v3735 = vadd.f32 %v2837, %v3623
        %v3736 = vadd.f32 %v2838, %v3624
        %v3737 = vadd.f32 %v2839, %v3625
        %v3738 = vadd.f32 %v2840, %v3626
        %v3739 = vadd.f32 %v2841, %v3627
        %v3740 = vadd.f32 %v2842, %v3628
        %v3741 = vadd.f32 %v2843, %v3629
        %v3742 = vadd.f32 %v2844, %v3630
        %v3743 = vadd.f32 %v2845, %v3631
        %v3744 = vadd.f32 %v2846, %v3632
        %v3745 = vadd.f32 %v2847, %v3633
        %v3746 = vadd.f32 %v2848, %v3634
        %v3747 = vadd.f32 %v2849, %v3635
        %v3748 = vadd.f32 %v2850, %v3636
        %v3749 = vadd.f32 %v2851, %v3637
        %v3750 = vadd.f32 %v2852, %v3638
        %v3751 = vadd.f32 %v2853, %v3639
        %v3752 = vadd.f32 %v2854, %v3640
        %v3753 = vadd.f32 %v2855, %v3641
        %v3754 = vadd.f32 %v2856, %v3642
        %v3755 = vadd.f32 %v2857, %v3643
        %v3756 = vadd.f32 %v2858, %v3644
        %v3757 = vadd.f32 %v2859, %v3645
        %v3758 = vadd.f32 %v2860, %v3646
        %v3759 = vadd.f32 %v2861, %v3647
        %v3760 = vadd.f32 %v2862, %v3648
        %v3761 = vadd.f32 %v2863, %v3649
        %v3762 = vadd.f32 %v2864, %v3650
        %v3763 = vadd.f32 %v2865, %v3651
        %v3764 = vadd.f32 %v2866, %v3652
        %v3765 = vadd.f32 %v2867, %v3653
        %v3766 = vadd.f32 %v2868, %v3654
        %v3767 = vadd.f32 %v2869, %v3655
        %v3768 = vadd.f32 %v2870, %v3656
        %v3769 = vadd.f32 %v2871, %v3657
        %v3770 = vadd.f32 %v2872, %v3658
        %v3771 = vadd.f32 %v2873, %v3659
        %v3772 = vadd.f32 %v2874, %v3660
        %v3773 = vadd.f32 %v2875, %v3661
        %v3774 = vadd.f32 %v2876, %v3662
        %v3775 = vadd.f32 %v2877, %v3663
        %v3776 = vadd.f32 %v2878, %v3664
        %v3777 = vadd.f32 %v2879, %v3665
        %v3778 = vadd.f32 %v2880, %v3666
        %v3779 = vadd.f32 %v2881, %v3667
        %v3780 = vadd.f32 %v2882, %v3668
        %v3781 = vadd.f32 %v2883, %v3669
        %v3782 = vadd.f32 %v2884, %v3670
        %v3783 = vadd.f32 %v2885, %v3671
        %v3784 = vadd.f32 %v2886, %v3672
        %v3785 = vadd.f32 %v2887, %v3673
        %v3786 = vadd.f32 %v2888, %v3674
        %v3787 = vadd.f32 %v2889, %v3675
        %v3788 = vadd.f32 %v2890, %v3676
        %v3789 = vadd.f32 %v2891, %v3677
        %v3790 = vadd.f32 %v2892, %v3678
        %v3791 = vadd.f32 %v2893, %v3679
        %v3792 = vadd.f32 %v2894, %v3680
        %v3793 = vadd.f32 %v2895, %v3681
        %v3794 = vadd.f32 %v2896, %v3682
        %v3795 = vld [vmem:[%s197 + $0x21] sm:$0xff]
        %v3796 = vld [vmem:[%s197 + $0x29] sm:$0xff]
        %v3797 = vld [vmem:[%s197 + $0x31] sm:$0xff]
        %v3798 = vld [vmem:[%s197 + $0x39] sm:$0xff]
        %v3799 = vld [vmem:[%s197 + $0x41] sm:$0xff]
        %v3800 = vld [vmem:[%s197 + $0x49] sm:$0xff]
        %v3801 = vld [vmem:[%s197 + $0x51] sm:$0xff]
        %v3802 = vld [vmem:[%s197 + $0x59] sm:$0xff]
        %v3803 = vld [vmem:[%s197 + $0x61] sm:$0xff]
        %v3804 = vld [vmem:[%s197 + $0x69] sm:$0xff]
        %v3805 = vld [vmem:[%s197 + $0x71] sm:$0xff]
        %v3806 = vld [vmem:[%s197 + $0x79] sm:$0xff]
        %v3807 = vld [vmem:[%s197 + $0x81] sm:$0xff]
        %v3808 = vld [vmem:[%s197 + $0x89] sm:$0xff]
        %v3809 = vld [vmem:[%s197 + $0x91] sm:$0xff]
        %v3810 = vld [vmem:[%s197 + $0x99] sm:$0xff]
        %v3811 = vld [vmem:[%s197 + $0xa1] sm:$0xff]
        %v3812 = vld [vmem:[%s197 + $0xa9] sm:$0xff]
        %v3813 = vld [vmem:[%s197 + $0xb1] sm:$0xff]
        %v3814 = vld [vmem:[%s197 + $0xb9] sm:$0xff]
        %v3815 = vld [vmem:[%s197 + $0xc1] sm:$0xff]
        %v3816 = vld [vmem:[%s197 + $0xc9] sm:$0xff]
        %v3817 = vld [vmem:[%s197 + $0xd1] sm:$0xff]
        %v3818 = vld [vmem:[%s197 + $0xd9] sm:$0xff]
        %v3819 = vld [vmem:[%s197 + $0xe1] sm:$0xff]
        %v3820 = vld [vmem:[%s197 + $0xe9] sm:$0xff]
        %v3821 = vld [vmem:[%s197 + $0xf1] sm:$0xff]
        %v3822 = vld [vmem:[%s197 + $0xf9] sm:$0xff]
        %v3823 = vld [vmem:[%s197 + $0x101] sm:$0xff]
        %v3824 = vld [vmem:[%s197 + $0x109] sm:$0xff]
        %v3825 = vld [vmem:[%s197 + $0x111] sm:$0xff]
        %v3826 = vld [vmem:[%s197 + $0x119] sm:$0xff]
        %v3827 = vld [vmem:[%s197 + $0x121] sm:$0xff]
        %v3828 = vld [vmem:[%s197 + $0x129] sm:$0xff]
        %v3829 = vld [vmem:[%s197 + $0x131] sm:$0xff]
        %v3830 = vld [vmem:[%s197 + $0x139] sm:$0xff]
        %v3831 = vld [vmem:[%s197 + $0x141] sm:$0xff]
        %v3832 = vld [vmem:[%s197 + $0x149] sm:$0xff]
        %v3833 = vld [vmem:[%s197 + $0x151] sm:$0xff]
        %v3834 = vld [vmem:[%s197 + $0x159] sm:$0xff]
        %v3835 = vld [vmem:[%s197 + $0x161] sm:$0xff]
        %v3836 = vld [vmem:[%s197 + $0x169] sm:$0xff]
        %v3837 = vld [vmem:[%s197 + $0x171] sm:$0xff]
        %v3838 = vld [vmem:[%s197 + $0x179] sm:$0xff]
        %v3839 = vld [vmem:[%s197 + $0x181] sm:$0xff]
        %v3840 = vld [vmem:[%s197 + $0x189] sm:$0xff]
        %v3841 = vld [vmem:[%s197 + $0x191] sm:$0xff]
        %v3842 = vld [vmem:[%s197 + $0x199] sm:$0xff]
        %v3843 = vld [vmem:[%s197 + $0x1a1] sm:$0xff]
        %v3844 = vld [vmem:[%s197 + $0x1a9] sm:$0xff]
        %v3845 = vld [vmem:[%s197 + $0x1b1] sm:$0xff]
        %v3846 = vld [vmem:[%s197 + $0x1b9] sm:$0xff]
        %v3847 = vld [vmem:[%s197 + $0x1c1] sm:$0xff]
        %v3848 = vld [vmem:[%s197 + $0x1c9] sm:$0xff]
        %v3849 = vld [vmem:[%s197 + $0x1d1] sm:$0xff]
        %v3850 = vld [vmem:[%s197 + $0x1d9] sm:$0xff]
        %v3851 = vld [vmem:[%s197 + $0x1e1] sm:$0xff]
        %v3852 = vld [vmem:[%s197 + $0x1e9] sm:$0xff]
        %v3853 = vld [vmem:[%s197 + $0x1f1] sm:$0xff]
        %v3854 = vld [vmem:[%s197 + $0x1f9] sm:$0xff]
        %v3855 = vld [vmem:[%s197 + $0x201] sm:$0xff]
        %v3856 = vld [vmem:[%s197 + $0x209] sm:$0xff]
        %v3857 = vld [vmem:[%s197 + $0x211] sm:$0xff]
        %v3858 = vld [vmem:[%s197 + $0x219] sm:$0xff]
        %v3859 = vld [vmem:[%s197 + $0x221] sm:$0xff]
        %v3860 = vld [vmem:[%s197 + $0x229] sm:$0xff]
        %v3861 = vld [vmem:[%s197 + $0x231] sm:$0xff]
        %v3862 = vld [vmem:[%s197 + $0x239] sm:$0xff]
        %v3863 = vld [vmem:[%s197 + $0x241] sm:$0xff]
        %v3864 = vld [vmem:[%s197 + $0x249] sm:$0xff]
        %v3865 = vld [vmem:[%s197 + $0x251] sm:$0xff]
        %v3866 = vld [vmem:[%s197 + $0x259] sm:$0xff]
        %v3867 = vld [vmem:[%s197 + $0x261] sm:$0xff]
        %v3868 = vld [vmem:[%s197 + $0x269] sm:$0xff]
        %v3869 = vld [vmem:[%s197 + $0x271] sm:$0xff]
        %v3870 = vld [vmem:[%s197 + $0x279] sm:$0xff]
        %v3871 = vld [vmem:[%s197 + $0x281] sm:$0xff]
        %v3872 = vld [vmem:[%s197 + $0x289] sm:$0xff]
        %v3873 = vld [vmem:[%s197 + $0x291] sm:$0xff]
        %v3874 = vld [vmem:[%s197 + $0x299] sm:$0xff]
        %v3875 = vld [vmem:[%s197 + $0x2a1] sm:$0xff]
        %v3876 = vld [vmem:[%s197 + $0x2a9] sm:$0xff]
        %v3877 = vld [vmem:[%s197 + $0x2b1] sm:$0xff]
        %v3878 = vld [vmem:[%s197 + $0x2b9] sm:$0xff]
        %v3879 = vld [vmem:[%s197 + $0x2c1] sm:$0xff]
        %v3880 = vld [vmem:[%s197 + $0x2c9] sm:$0xff]
        %v3881 = vld [vmem:[%s197 + $0x2d1] sm:$0xff]
        %v3882 = vld [vmem:[%s197 + $0x2d9] sm:$0xff]
        %v3883 = vld [vmem:[%s197 + $0x2e1] sm:$0xff]
        %v3884 = vld [vmem:[%s197 + $0x2e9] sm:$0xff]
        %v3885 = vld [vmem:[%s197 + $0x2f1] sm:$0xff]
        %v3886 = vld [vmem:[%s197 + $0x2f9] sm:$0xff]
        %v3887 = vld [vmem:[%s197 + $0x301] sm:$0xff]
        %v3888 = vld [vmem:[%s197 + $0x309] sm:$0xff]
        %v3889 = vld [vmem:[%s197 + $0x311] sm:$0xff]
        %v3890 = vld [vmem:[%s197 + $0x319] sm:$0xff]
        %v3891 = vld [vmem:[%s197 + $0x321] sm:$0xff]
        %v3892 = vld [vmem:[%s197 + $0x329] sm:$0xff]
        %v3893 = vld [vmem:[%s197 + $0x331] sm:$0xff]
        %v3894 = vld [vmem:[%s197 + $0x339] sm:$0xff]
        %v3895 = vld [vmem:[%s197 + $0x341] sm:$0xff]
        %v3896 = vld [vmem:[%s197 + $0x349] sm:$0xff]
        %v3897 = vld [vmem:[%s197 + $0x351] sm:$0xff]
        %v3898 = vld [vmem:[%s197 + $0x359] sm:$0xff]
        %v3899 = vld [vmem:[%s197 + $0x361] sm:$0xff]
        %v3900 = vld [vmem:[%s197 + $0x369] sm:$0xff]
        %v3901 = vld [vmem:[%s197 + $0x371] sm:$0xff]
        %v3902 = vld [vmem:[%s197 + $0x379] sm:$0xff]
        %v3903 = vld [vmem:[%s197 + $0x381] sm:$0xff]
        %v3904 = vld [vmem:[%s197 + $0x389] sm:$0xff]
        %v3905 = vld [vmem:[%s197 + $0x391] sm:$0xff]
        %v3906 = vld [vmem:[%s197 + $0x399] sm:$0xff]
        %v3907 = vld [vmem:[#allocation3 + $0x4] sm:$0x1]
        %3909 = vset.pattern.permute.xlu0 0
        %3910 = vperm.xlu0 %3909, %v3795
        %v3911 = vpop.permute.xlu0 %3910
        %3914 = vset.pattern.permute.xlu0 0
        %3915 = vperm.xlu0 %3914, %v3796
        %v3916 = vpop.permute.xlu0 %3915
        %3919 = vset.pattern.permute.xlu0 0
        %3920 = vperm.xlu0 %3919, %v3797
        %v3921 = vpop.permute.xlu0 %3920
        %3924 = vset.pattern.permute.xlu0 0
        %3925 = vperm.xlu0 %3924, %v3798
        %v3926 = vpop.permute.xlu0 %3925
        %3929 = vset.pattern.permute.xlu0 0
        %3930 = vperm.xlu0 %3929, %v3799
        %v3931 = vpop.permute.xlu0 %3930
        %3934 = vset.pattern.permute.xlu0 0
        %3935 = vperm.xlu0 %3934, %v3800
        %v3936 = vpop.permute.xlu0 %3935
        %3939 = vset.pattern.permute.xlu0 0
        %3940 = vperm.xlu0 %3939, %v3801
        %v3941 = vpop.permute.xlu0 %3940
        %3944 = vset.pattern.permute.xlu0 0
        %3945 = vperm.xlu0 %3944, %v3802
        %v3946 = vpop.permute.xlu0 %3945
        %3949 = vset.pattern.permute.xlu0 0
        %3950 = vperm.xlu0 %3949, %v3803
        %v3951 = vpop.permute.xlu0 %3950
        %3954 = vset.pattern.permute.xlu0 0
        %3955 = vperm.xlu0 %3954, %v3804
        %v3956 = vpop.permute.xlu0 %3955
        %3959 = vset.pattern.permute.xlu0 0
        %3960 = vperm.xlu0 %3959, %v3805
        %v3961 = vpop.permute.xlu0 %3960
        %3964 = vset.pattern.permute.xlu0 0
        %3965 = vperm.xlu0 %3964, %v3806
        %v3966 = vpop.permute.xlu0 %3965
        %3969 = vset.pattern.permute.xlu0 0
        %3970 = vperm.xlu0 %3969, %v3807
        %v3971 = vpop.permute.xlu0 %3970
        %3974 = vset.pattern.permute.xlu0 0
        %3975 = vperm.xlu0 %3974, %v3808
        %v3976 = vpop.permute.xlu0 %3975
        %3979 = vset.pattern.permute.xlu0 0
        %3980 = vperm.xlu0 %3979, %v3809
        %v3981 = vpop.permute.xlu0 %3980
        %3984 = vset.pattern.permute.xlu0 0
        %3985 = vperm.xlu0 %3984, %v3810
        %v3986 = vpop.permute.xlu0 %3985
        %3989 = vset.pattern.permute.xlu0 0
        %3990 = vperm.xlu0 %3989, %v3811
        %v3991 = vpop.permute.xlu0 %3990
        %3994 = vset.pattern.permute.xlu0 0
        %3995 = vperm.xlu0 %3994, %v3812
        %v3996 = vpop.permute.xlu0 %3995
        %3999 = vset.pattern.permute.xlu0 0
        %4000 = vperm.xlu0 %3999, %v3813
        %v4001 = vpop.permute.xlu0 %4000
        %4004 = vset.pattern.permute.xlu0 0
        %4005 = vperm.xlu0 %4004, %v3814
        %v4006 = vpop.permute.xlu0 %4005
        %4009 = vset.pattern.permute.xlu0 0
        %4010 = vperm.xlu0 %4009, %v3815
        %v4011 = vpop.permute.xlu0 %4010
        %4014 = vset.pattern.permute.xlu0 0
        %4015 = vperm.xlu0 %4014, %v3816
        %v4016 = vpop.permute.xlu0 %4015
        %4019 = vset.pattern.permute.xlu0 0
        %4020 = vperm.xlu0 %4019, %v3817
        %v4021 = vpop.permute.xlu0 %4020
        %4024 = vset.pattern.permute.xlu0 0
        %4025 = vperm.xlu0 %4024, %v3818
        %v4026 = vpop.permute.xlu0 %4025
        %4029 = vset.pattern.permute.xlu0 0
        %4030 = vperm.xlu0 %4029, %v3819
        %v4031 = vpop.permute.xlu0 %4030
        %4034 = vset.pattern.permute.xlu0 0
        %4035 = vperm.xlu0 %4034, %v3820
        %v4036 = vpop.permute.xlu0 %4035
        %4039 = vset.pattern.permute.xlu0 0
        %4040 = vperm.xlu0 %4039, %v3821
        %v4041 = vpop.permute.xlu0 %4040
        %4044 = vset.pattern.permute.xlu0 0
        %4045 = vperm.xlu0 %4044, %v3822
        %v4046 = vpop.permute.xlu0 %4045
        %4049 = vset.pattern.permute.xlu0 0
        %4050 = vperm.xlu0 %4049, %v3823
        %v4051 = vpop.permute.xlu0 %4050
        %4054 = vset.pattern.permute.xlu0 0
        %4055 = vperm.xlu0 %4054, %v3824
        %v4056 = vpop.permute.xlu0 %4055
        %4059 = vset.pattern.permute.xlu0 0
        %4060 = vperm.xlu0 %4059, %v3825
        %v4061 = vpop.permute.xlu0 %4060
        %4064 = vset.pattern.permute.xlu0 0
        %4065 = vperm.xlu0 %4064, %v3826
        %v4066 = vpop.permute.xlu0 %4065
        %4069 = vset.pattern.permute.xlu0 0
        %4070 = vperm.xlu0 %4069, %v3827
        %v4071 = vpop.permute.xlu0 %4070
        %4074 = vset.pattern.permute.xlu0 0
        %4075 = vperm.xlu0 %4074, %v3828
        %v4076 = vpop.permute.xlu0 %4075
        %4079 = vset.pattern.permute.xlu0 0
        %4080 = vperm.xlu0 %4079, %v3829
        %v4081 = vpop.permute.xlu0 %4080
        %4084 = vset.pattern.permute.xlu0 0
        %4085 = vperm.xlu0 %4084, %v3830
        %v4086 = vpop.permute.xlu0 %4085
        %4089 = vset.pattern.permute.xlu0 0
        %4090 = vperm.xlu0 %4089, %v3831
        %v4091 = vpop.permute.xlu0 %4090
        %4094 = vset.pattern.permute.xlu0 0
        %4095 = vperm.xlu0 %4094, %v3832
        %v4096 = vpop.permute.xlu0 %4095
        %4099 = vset.pattern.permute.xlu0 0
        %4100 = vperm.xlu0 %4099, %v3833
        %v4101 = vpop.permute.xlu0 %4100
        %4104 = vset.pattern.permute.xlu0 0
        %4105 = vperm.xlu0 %4104, %v3834
        %v4106 = vpop.permute.xlu0 %4105
        %4109 = vset.pattern.permute.xlu0 0
        %4110 = vperm.xlu0 %4109, %v3835
        %v4111 = vpop.permute.xlu0 %4110
        %4114 = vset.pattern.permute.xlu0 0
        %4115 = vperm.xlu0 %4114, %v3836
        %v4116 = vpop.permute.xlu0 %4115
        %4119 = vset.pattern.permute.xlu0 0
        %4120 = vperm.xlu0 %4119, %v3837
        %v4121 = vpop.permute.xlu0 %4120
        %4124 = vset.pattern.permute.xlu0 0
        %4125 = vperm.xlu0 %4124, %v3838
        %v4126 = vpop.permute.xlu0 %4125
        %4129 = vset.pattern.permute.xlu0 0
        %4130 = vperm.xlu0 %4129, %v3839
        %v4131 = vpop.permute.xlu0 %4130
        %4134 = vset.pattern.permute.xlu0 0
        %4135 = vperm.xlu0 %4134, %v3840
        %v4136 = vpop.permute.xlu0 %4135
        %4139 = vset.pattern.permute.xlu0 0
        %4140 = vperm.xlu0 %4139, %v3841
        %v4141 = vpop.permute.xlu0 %4140
        %4144 = vset.pattern.permute.xlu0 0
        %4145 = vperm.xlu0 %4144, %v3842
        %v4146 = vpop.permute.xlu0 %4145
        %4149 = vset.pattern.permute.xlu0 0
        %4150 = vperm.xlu0 %4149, %v3843
        %v4151 = vpop.permute.xlu0 %4150
        %4154 = vset.pattern.permute.xlu0 0
        %4155 = vperm.xlu0 %4154, %v3844
        %v4156 = vpop.permute.xlu0 %4155
        %4159 = vset.pattern.permute.xlu0 0
        %4160 = vperm.xlu0 %4159, %v3845
        %v4161 = vpop.permute.xlu0 %4160
        %4164 = vset.pattern.permute.xlu0 0
        %4165 = vperm.xlu0 %4164, %v3846
        %v4166 = vpop.permute.xlu0 %4165
        %4169 = vset.pattern.permute.xlu0 0
        %4170 = vperm.xlu0 %4169, %v3847
        %v4171 = vpop.permute.xlu0 %4170
        %4174 = vset.pattern.permute.xlu0 0
        %4175 = vperm.xlu0 %4174, %v3848
        %v4176 = vpop.permute.xlu0 %4175
        %4179 = vset.pattern.permute.xlu0 0
        %4180 = vperm.xlu0 %4179, %v3849
        %v4181 = vpop.permute.xlu0 %4180
        %4184 = vset.pattern.permute.xlu0 0
        %4185 = vperm.xlu0 %4184, %v3850
        %v4186 = vpop.permute.xlu0 %4185
        %4189 = vset.pattern.permute.xlu0 0
        %4190 = vperm.xlu0 %4189, %v3851
        %v4191 = vpop.permute.xlu0 %4190
        %4194 = vset.pattern.permute.xlu0 0
        %4195 = vperm.xlu0 %4194, %v3852
        %v4196 = vpop.permute.xlu0 %4195
        %4199 = vset.pattern.permute.xlu0 0
        %4200 = vperm.xlu0 %4199, %v3853
        %v4201 = vpop.permute.xlu0 %4200
        %4204 = vset.pattern.permute.xlu0 0
        %4205 = vperm.xlu0 %4204, %v3854
        %v4206 = vpop.permute.xlu0 %4205
        %4209 = vset.pattern.permute.xlu0 0
        %4210 = vperm.xlu0 %4209, %v3855
        %v4211 = vpop.permute.xlu0 %4210
        %4214 = vset.pattern.permute.xlu0 0
        %4215 = vperm.xlu0 %4214, %v3856
        %v4216 = vpop.permute.xlu0 %4215
        %4219 = vset.pattern.permute.xlu0 0
        %4220 = vperm.xlu0 %4219, %v3857
        %v4221 = vpop.permute.xlu0 %4220
        %4224 = vset.pattern.permute.xlu0 0
        %4225 = vperm.xlu0 %4224, %v3858
        %v4226 = vpop.permute.xlu0 %4225
        %4229 = vset.pattern.permute.xlu0 0
        %4230 = vperm.xlu0 %4229, %v3859
        %v4231 = vpop.permute.xlu0 %4230
        %4234 = vset.pattern.permute.xlu0 0
        %4235 = vperm.xlu0 %4234, %v3860
        %v4236 = vpop.permute.xlu0 %4235
        %4239 = vset.pattern.permute.xlu0 0
        %4240 = vperm.xlu0 %4239, %v3861
        %v4241 = vpop.permute.xlu0 %4240
        %4244 = vset.pattern.permute.xlu0 0
        %4245 = vperm.xlu0 %4244, %v3862
        %v4246 = vpop.permute.xlu0 %4245
        %4249 = vset.pattern.permute.xlu0 0
        %4250 = vperm.xlu0 %4249, %v3863
        %v4251 = vpop.permute.xlu0 %4250
        %4254 = vset.pattern.permute.xlu0 0
        %4255 = vperm.xlu0 %4254, %v3864
        %v4256 = vpop.permute.xlu0 %4255
        %4259 = vset.pattern.permute.xlu0 0
        %4260 = vperm.xlu0 %4259, %v3865
        %v4261 = vpop.permute.xlu0 %4260
        %4264 = vset.pattern.permute.xlu0 0
        %4265 = vperm.xlu0 %4264, %v3866
        %v4266 = vpop.permute.xlu0 %4265
        %4269 = vset.pattern.permute.xlu0 0
        %4270 = vperm.xlu0 %4269, %v3867
        %v4271 = vpop.permute.xlu0 %4270
        %4274 = vset.pattern.permute.xlu0 0
        %4275 = vperm.xlu0 %4274, %v3868
        %v4276 = vpop.permute.xlu0 %4275
        %4279 = vset.pattern.permute.xlu0 0
        %4280 = vperm.xlu0 %4279, %v3869
        %v4281 = vpop.permute.xlu0 %4280
        %4284 = vset.pattern.permute.xlu0 0
        %4285 = vperm.xlu0 %4284, %v3870
        %v4286 = vpop.permute.xlu0 %4285
        %4289 = vset.pattern.permute.xlu0 0
        %4290 = vperm.xlu0 %4289, %v3871
        %v4291 = vpop.permute.xlu0 %4290
        %4294 = vset.pattern.permute.xlu0 0
        %4295 = vperm.xlu0 %4294, %v3872
        %v4296 = vpop.permute.xlu0 %4295
        %4299 = vset.pattern.permute.xlu0 0
        %4300 = vperm.xlu0 %4299, %v3873
        %v4301 = vpop.permute.xlu0 %4300
        %4304 = vset.pattern.permute.xlu0 0
        %4305 = vperm.xlu0 %4304, %v3874
        %v4306 = vpop.permute.xlu0 %4305
        %4309 = vset.pattern.permute.xlu0 0
        %4310 = vperm.xlu0 %4309, %v3875
        %v4311 = vpop.permute.xlu0 %4310
        %4314 = vset.pattern.permute.xlu0 0
        %4315 = vperm.xlu0 %4314, %v3876
        %v4316 = vpop.permute.xlu0 %4315
        %4319 = vset.pattern.permute.xlu0 0
        %4320 = vperm.xlu0 %4319, %v3877
        %v4321 = vpop.permute.xlu0 %4320
        %4324 = vset.pattern.permute.xlu0 0
        %4325 = vperm.xlu0 %4324, %v3878
        %v4326 = vpop.permute.xlu0 %4325
        %4329 = vset.pattern.permute.xlu0 0
        %4330 = vperm.xlu0 %4329, %v3879
        %v4331 = vpop.permute.xlu0 %4330
        %4334 = vset.pattern.permute.xlu0 0
        %4335 = vperm.xlu0 %4334, %v3880
        %v4336 = vpop.permute.xlu0 %4335
        %4339 = vset.pattern.permute.xlu0 0
        %4340 = vperm.xlu0 %4339, %v3881
        %v4341 = vpop.permute.xlu0 %4340
        %4344 = vset.pattern.permute.xlu0 0
        %4345 = vperm.xlu0 %4344, %v3882
        %v4346 = vpop.permute.xlu0 %4345
        %4349 = vset.pattern.permute.xlu0 0
        %4350 = vperm.xlu0 %4349, %v3883
        %v4351 = vpop.permute.xlu0 %4350
        %4354 = vset.pattern.permute.xlu0 0
        %4355 = vperm.xlu0 %4354, %v3884
        %v4356 = vpop.permute.xlu0 %4355
        %4359 = vset.pattern.permute.xlu0 0
        %4360 = vperm.xlu0 %4359, %v3885
        %v4361 = vpop.permute.xlu0 %4360
        %4364 = vset.pattern.permute.xlu0 0
        %4365 = vperm.xlu0 %4364, %v3886
        %v4366 = vpop.permute.xlu0 %4365
        %4369 = vset.pattern.permute.xlu0 0
        %4370 = vperm.xlu0 %4369, %v3887
        %v4371 = vpop.permute.xlu0 %4370
        %4374 = vset.pattern.permute.xlu0 0
        %4375 = vperm.xlu0 %4374, %v3888
        %v4376 = vpop.permute.xlu0 %4375
        %4379 = vset.pattern.permute.xlu0 0
        %4380 = vperm.xlu0 %4379, %v3889
        %v4381 = vpop.permute.xlu0 %4380
        %4384 = vset.pattern.permute.xlu0 0
        %4385 = vperm.xlu0 %4384, %v3890
        %v4386 = vpop.permute.xlu0 %4385
        %4389 = vset.pattern.permute.xlu0 0
        %4390 = vperm.xlu0 %4389, %v3891
        %v4391 = vpop.permute.xlu0 %4390
        %4394 = vset.pattern.permute.xlu0 0
        %4395 = vperm.xlu0 %4394, %v3892
        %v4396 = vpop.permute.xlu0 %4395
        %4399 = vset.pattern.permute.xlu0 0
        %4400 = vperm.xlu0 %4399, %v3893
        %v4401 = vpop.permute.xlu0 %4400
        %4404 = vset.pattern.permute.xlu0 0
        %4405 = vperm.xlu0 %4404, %v3894
        %v4406 = vpop.permute.xlu0 %4405
        %4409 = vset.pattern.permute.xlu0 0
        %4410 = vperm.xlu0 %4409, %v3895
        %v4411 = vpop.permute.xlu0 %4410
        %4414 = vset.pattern.permute.xlu0 0
        %4415 = vperm.xlu0 %4414, %v3896
        %v4416 = vpop.permute.xlu0 %4415
        %4419 = vset.pattern.permute.xlu0 0
        %4420 = vperm.xlu0 %4419, %v3897
        %v4421 = vpop.permute.xlu0 %4420
        %4424 = vset.pattern.permute.xlu0 0
        %4425 = vperm.xlu0 %4424, %v3898
        %v4426 = vpop.permute.xlu0 %4425
        %4429 = vset.pattern.permute.xlu0 0
        %4430 = vperm.xlu0 %4429, %v3899
        %v4431 = vpop.permute.xlu0 %4430
        %4434 = vset.pattern.permute.xlu0 0
        %4435 = vperm.xlu0 %4434, %v3900
        %v4436 = vpop.permute.xlu0 %4435
        %4439 = vset.pattern.permute.xlu0 0
        %4440 = vperm.xlu0 %4439, %v3901
        %v4441 = vpop.permute.xlu0 %4440
        %4444 = vset.pattern.permute.xlu0 0
        %4445 = vperm.xlu0 %4444, %v3902
        %v4446 = vpop.permute.xlu0 %4445
        %4449 = vset.pattern.permute.xlu0 0
        %4450 = vperm.xlu0 %4449, %v3903
        %v4451 = vpop.permute.xlu0 %4450
        %4454 = vset.pattern.permute.xlu0 0
        %4455 = vperm.xlu0 %4454, %v3904
        %v4456 = vpop.permute.xlu0 %4455
        %4459 = vset.pattern.permute.xlu0 0
        %4460 = vperm.xlu0 %4459, %v3905
        %v4461 = vpop.permute.xlu0 %4460
        %4464 = vset.pattern.permute.xlu0 0
        %4465 = vperm.xlu0 %4464, %v3906
        %v4466 = vpop.permute.xlu0 %4465
        %v4468 = vperm.slane %v3907, 0
        %v4469 = vmul.f32 %v3911, %v4468
        %v4470 = vmul.f32 %v3916, %v4468
        %v4471 = vmul.f32 %v3921, %v4468
        %v4472 = vmul.f32 %v3926, %v4468
        %v4473 = vmul.f32 %v3931, %v4468
        %v4474 = vmul.f32 %v3936, %v4468
        %v4475 = vmul.f32 %v3941, %v4468
        %v4476 = vmul.f32 %v3946, %v4468
        %v4477 = vmul.f32 %v3951, %v4468
        %v4478 = vmul.f32 %v3956, %v4468
        %v4479 = vmul.f32 %v3961, %v4468
        %v4480 = vmul.f32 %v3966, %v4468
        %v4481 = vmul.f32 %v3971, %v4468
        %v4482 = vmul.f32 %v3976, %v4468
        %v4483 = vmul.f32 %v3981, %v4468
        %v4484 = vmul.f32 %v3986, %v4468
        %v4485 = vmul.f32 %v3991, %v4468
        %v4486 = vmul.f32 %v3996, %v4468
        %v4487 = vmul.f32 %v4001, %v4468
        %v4488 = vmul.f32 %v4006, %v4468
        %v4489 = vmul.f32 %v4011, %v4468
        %v4490 = vmul.f32 %v4016, %v4468
        %v4491 = vmul.f32 %v4021, %v4468
        %v4492 = vmul.f32 %v4026, %v4468
        %v4493 = vmul.f32 %v4031, %v4468
        %v4494 = vmul.f32 %v4036, %v4468
        %v4495 = vmul.f32 %v4041, %v4468
        %v4496 = vmul.f32 %v4046, %v4468
        %v4497 = vmul.f32 %v4051, %v4468
        %v4498 = vmul.f32 %v4056, %v4468
        %v4499 = vmul.f32 %v4061, %v4468
        %v4500 = vmul.f32 %v4066, %v4468
        %v4501 = vmul.f32 %v4071, %v4468
        %v4502 = vmul.f32 %v4076, %v4468
        %v4503 = vmul.f32 %v4081, %v4468
        %v4504 = vmul.f32 %v4086, %v4468
        %v4505 = vmul.f32 %v4091, %v4468
        %v4506 = vmul.f32 %v4096, %v4468
        %v4507 = vmul.f32 %v4101, %v4468
        %v4508 = vmul.f32 %v4106, %v4468
        %v4509 = vmul.f32 %v4111, %v4468
        %v4510 = vmul.f32 %v4116, %v4468
        %v4511 = vmul.f32 %v4121, %v4468
        %v4512 = vmul.f32 %v4126, %v4468
        %v4513 = vmul.f32 %v4131, %v4468
        %v4514 = vmul.f32 %v4136, %v4468
        %v4515 = vmul.f32 %v4141, %v4468
        %v4516 = vmul.f32 %v4146, %v4468
        %v4517 = vmul.f32 %v4151, %v4468
        %v4518 = vmul.f32 %v4156, %v4468
        %v4519 = vmul.f32 %v4161, %v4468
        %v4520 = vmul.f32 %v4166, %v4468
        %v4521 = vmul.f32 %v4171, %v4468
        %v4522 = vmul.f32 %v4176, %v4468
        %v4523 = vmul.f32 %v4181, %v4468
        %v4524 = vmul.f32 %v4186, %v4468
        %v4525 = vmul.f32 %v4191, %v4468
        %v4526 = vmul.f32 %v4196, %v4468
        %v4527 = vmul.f32 %v4201, %v4468
        %v4528 = vmul.f32 %v4206, %v4468
        %v4529 = vmul.f32 %v4211, %v4468
        %v4530 = vmul.f32 %v4216, %v4468
        %v4531 = vmul.f32 %v4221, %v4468
        %v4532 = vmul.f32 %v4226, %v4468
        %v4533 = vmul.f32 %v4231, %v4468
        %v4534 = vmul.f32 %v4236, %v4468
        %v4535 = vmul.f32 %v4241, %v4468
        %v4536 = vmul.f32 %v4246, %v4468
        %v4537 = vmul.f32 %v4251, %v4468
        %v4538 = vmul.f32 %v4256, %v4468
        %v4539 = vmul.f32 %v4261, %v4468
        %v4540 = vmul.f32 %v4266, %v4468
        %v4541 = vmul.f32 %v4271, %v4468
        %v4542 = vmul.f32 %v4276, %v4468
        %v4543 = vmul.f32 %v4281, %v4468
        %v4544 = vmul.f32 %v4286, %v4468
        %v4545 = vmul.f32 %v4291, %v4468
        %v4546 = vmul.f32 %v4296, %v4468
        %v4547 = vmul.f32 %v4301, %v4468
        %v4548 = vmul.f32 %v4306, %v4468
        %v4549 = vmul.f32 %v4311, %v4468
        %v4550 = vmul.f32 %v4316, %v4468
        %v4551 = vmul.f32 %v4321, %v4468
        %v4552 = vmul.f32 %v4326, %v4468
        %v4553 = vmul.f32 %v4331, %v4468
        %v4554 = vmul.f32 %v4336, %v4468
        %v4555 = vmul.f32 %v4341, %v4468
        %v4556 = vmul.f32 %v4346, %v4468
        %v4557 = vmul.f32 %v4351, %v4468
        %v4558 = vmul.f32 %v4356, %v4468
        %v4559 = vmul.f32 %v4361, %v4468
        %v4560 = vmul.f32 %v4366, %v4468
        %v4561 = vmul.f32 %v4371, %v4468
        %v4562 = vmul.f32 %v4376, %v4468
        %v4563 = vmul.f32 %v4381, %v4468
        %v4564 = vmul.f32 %v4386, %v4468
        %v4565 = vmul.f32 %v4391, %v4468
        %v4566 = vmul.f32 %v4396, %v4468
        %v4567 = vmul.f32 %v4401, %v4468
        %v4568 = vmul.f32 %v4406, %v4468
        %v4569 = vmul.f32 %v4411, %v4468
        %v4570 = vmul.f32 %v4416, %v4468
        %v4571 = vmul.f32 %v4421, %v4468
        %v4572 = vmul.f32 %v4426, %v4468
        %v4573 = vmul.f32 %v4431, %v4468
        %v4574 = vmul.f32 %v4436, %v4468
        %v4575 = vmul.f32 %v4441, %v4468
        %v4576 = vmul.f32 %v4446, %v4468
        %v4577 = vmul.f32 %v4451, %v4468
        %v4578 = vmul.f32 %v4456, %v4468
        %v4579 = vmul.f32 %v4461, %v4468
        %v4580 = vmul.f32 %v4466, %v4468
        %v4581 = vadd.f32 %v3683, %v4469
        %v4582 = vadd.f32 %v3684, %v4470
        %v4583 = vadd.f32 %v3685, %v4471
        %v4584 = vadd.f32 %v3686, %v4472
        %v4585 = vadd.f32 %v3687, %v4473
        %v4586 = vadd.f32 %v3688, %v4474
        %v4587 = vadd.f32 %v3689, %v4475
        %v4588 = vadd.f32 %v3690, %v4476
        %v4589 = vadd.f32 %v3691, %v4477
        %v4590 = vadd.f32 %v3692, %v4478
        %v4591 = vadd.f32 %v3693, %v4479
        %v4592 = vadd.f32 %v3694, %v4480
        %v4593 = vadd.f32 %v3695, %v4481
        %v4594 = vadd.f32 %v3696, %v4482
        %v4595 = vadd.f32 %v3697, %v4483
        %v4596 = vadd.f32 %v3698, %v4484
        %v4597 = vadd.f32 %v3699, %v4485
        %v4598 = vadd.f32 %v3700, %v4486
        %v4599 = vadd.f32 %v3701, %v4487
        %v4600 = vadd.f32 %v3702, %v4488
        %v4601 = vadd.f32 %v3703, %v4489
        %v4602 = vadd.f32 %v3704, %v4490
        %v4603 = vadd.f32 %v3705, %v4491
        %v4604 = vadd.f32 %v3706, %v4492
        %v4605 = vadd.f32 %v3707, %v4493
        %v4606 = vadd.f32 %v3708, %v4494
        %v4607 = vadd.f32 %v3709, %v4495
        %v4608 = vadd.f32 %v3710, %v4496
        %v4609 = vadd.f32 %v3711, %v4497
        %v4610 = vadd.f32 %v3712, %v4498
        %v4611 = vadd.f32 %v3713, %v4499
        %v4612 = vadd.f32 %v3714, %v4500
        %v4613 = vadd.f32 %v3715, %v4501
        %v4614 = vadd.f32 %v3716, %v4502
        %v4615 = vadd.f32 %v3717, %v4503
        %v4616 = vadd.f32 %v3718, %v4504
        %v4617 = vadd.f32 %v3719, %v4505
        %v4618 = vadd.f32 %v3720, %v4506
        %v4619 = vadd.f32 %v3721, %v4507
        %v4620 = vadd.f32 %v3722, %v4508
        %v4621 = vadd.f32 %v3723, %v4509
        %v4622 = vadd.f32 %v3724, %v4510
        %v4623 = vadd.f32 %v3725, %v4511
        %v4624 = vadd.f32 %v3726, %v4512
        %v4625 = vadd.f32 %v3727, %v4513
        %v4626 = vadd.f32 %v3728, %v4514
        %v4627 = vadd.f32 %v3729, %v4515
        %v4628 = vadd.f32 %v3730, %v4516
        %v4629 = vadd.f32 %v3731, %v4517
        %v4630 = vadd.f32 %v3732, %v4518
        %v4631 = vadd.f32 %v3733, %v4519
        %v4632 = vadd.f32 %v3734, %v4520
        %v4633 = vadd.f32 %v3735, %v4521
        %v4634 = vadd.f32 %v3736, %v4522
        %v4635 = vadd.f32 %v3737, %v4523
        %v4636 = vadd.f32 %v3738, %v4524
        %v4637 = vadd.f32 %v3739, %v4525
        %v4638 = vadd.f32 %v3740, %v4526
        %v4639 = vadd.f32 %v3741, %v4527
        %v4640 = vadd.f32 %v3742, %v4528
        %v4641 = vadd.f32 %v3743, %v4529
        %v4642 = vadd.f32 %v3744, %v4530
        %v4643 = vadd.f32 %v3745, %v4531
        %v4644 = vadd.f32 %v3746, %v4532
        %v4645 = vadd.f32 %v3747, %v4533
        %v4646 = vadd.f32 %v3748, %v4534
        %v4647 = vadd.f32 %v3749, %v4535
        %v4648 = vadd.f32 %v3750, %v4536
        %v4649 = vadd.f32 %v3751, %v4537
        %v4650 = vadd.f32 %v3752, %v4538
        %v4651 = vadd.f32 %v3753, %v4539
        %v4652 = vadd.f32 %v3754, %v4540
        %v4653 = vadd.f32 %v3755, %v4541
        %v4654 = vadd.f32 %v3756, %v4542
        %v4655 = vadd.f32 %v3757, %v4543
        %v4656 = vadd.f32 %v3758, %v4544
        %v4657 = vadd.f32 %v3759, %v4545
        %v4658 = vadd.f32 %v3760, %v4546
        %v4659 = vadd.f32 %v3761, %v4547
        %v4660 = vadd.f32 %v3762, %v4548
        %v4661 = vadd.f32 %v3763, %v4549
        %v4662 = vadd.f32 %v3764, %v4550
        %v4663 = vadd.f32 %v3765, %v4551
        %v4664 = vadd.f32 %v3766, %v4552
        %v4665 = vadd.f32 %v3767, %v4553
        %v4666 = vadd.f32 %v3768, %v4554
        %v4667 = vadd.f32 %v3769, %v4555
        %v4668 = vadd.f32 %v3770, %v4556
        %v4669 = vadd.f32 %v3771, %v4557
        %v4670 = vadd.f32 %v3772, %v4558
        %v4671 = vadd.f32 %v3773, %v4559
        %v4672 = vadd.f32 %v3774, %v4560
        %v4673 = vadd.f32 %v3775, %v4561
        %v4674 = vadd.f32 %v3776, %v4562
        %v4675 = vadd.f32 %v3777, %v4563
        %v4676 = vadd.f32 %v3778, %v4564
        %v4677 = vadd.f32 %v3779, %v4565
        %v4678 = vadd.f32 %v3780, %v4566
        %v4679 = vadd.f32 %v3781, %v4567
        %v4680 = vadd.f32 %v3782, %v4568
        %v4681 = vadd.f32 %v3783, %v4569
        %v4682 = vadd.f32 %v3784, %v4570
        %v4683 = vadd.f32 %v3785, %v4571
        %v4684 = vadd.f32 %v3786, %v4572
        %v4685 = vadd.f32 %v3787, %v4573
        %v4686 = vadd.f32 %v3788, %v4574
        %v4687 = vadd.f32 %v3789, %v4575
        %v4688 = vadd.f32 %v3790, %v4576
        %v4689 = vadd.f32 %v3791, %v4577
        %v4690 = vadd.f32 %v3792, %v4578
        %v4691 = vadd.f32 %v3793, %v4579
        %v4692 = vadd.f32 %v3794, %v4580
        %v4693 = vld [vmem:[%s197 + $0x22] sm:$0xff]
        %v4694 = vld [vmem:[%s197 + $0x2a] sm:$0xff]
        %v4695 = vld [vmem:[%s197 + $0x32] sm:$0xff]
        %v4696 = vld [vmem:[%s197 + $0x3a] sm:$0xff]
        %v4697 = vld [vmem:[%s197 + $0x42] sm:$0xff]
        %v4698 = vld [vmem:[%s197 + $0x4a] sm:$0xff]
        %v4699 = vld [vmem:[%s197 + $0x52] sm:$0xff]
        %v4700 = vld [vmem:[%s197 + $0x5a] sm:$0xff]
        %v4701 = vld [vmem:[%s197 + $0x62] sm:$0xff]
        %v4702 = vld [vmem:[%s197 + $0x6a] sm:$0xff]
        %v4703 = vld [vmem:[%s197 + $0x72] sm:$0xff]
        %v4704 = vld [vmem:[%s197 + $0x7a] sm:$0xff]
        %v4705 = vld [vmem:[%s197 + $0x82] sm:$0xff]
        %v4706 = vld [vmem:[%s197 + $0x8a] sm:$0xff]
        %v4707 = vld [vmem:[%s197 + $0x92] sm:$0xff]
        %v4708 = vld [vmem:[%s197 + $0x9a] sm:$0xff]
        %v4709 = vld [vmem:[%s197 + $0xa2] sm:$0xff]
        %v4710 = vld [vmem:[%s197 + $0xaa] sm:$0xff]
        %v4711 = vld [vmem:[%s197 + $0xb2] sm:$0xff]
        %v4712 = vld [vmem:[%s197 + $0xba] sm:$0xff]
        %v4713 = vld [vmem:[%s197 + $0xc2] sm:$0xff]
        %v4714 = vld [vmem:[%s197 + $0xca] sm:$0xff]
        %v4715 = vld [vmem:[%s197 + $0xd2] sm:$0xff]
        %v4716 = vld [vmem:[%s197 + $0xda] sm:$0xff]
        %v4717 = vld [vmem:[%s197 + $0xe2] sm:$0xff]
        %v4718 = vld [vmem:[%s197 + $0xea] sm:$0xff]
        %v4719 = vld [vmem:[%s197 + $0xf2] sm:$0xff]
        %v4720 = vld [vmem:[%s197 + $0xfa] sm:$0xff]
        %v4721 = vld [vmem:[%s197 + $0x102] sm:$0xff]
        %v4722 = vld [vmem:[%s197 + $0x10a] sm:$0xff]
        %v4723 = vld [vmem:[%s197 + $0x112] sm:$0xff]
        %v4724 = vld [vmem:[%s197 + $0x11a] sm:$0xff]
        %v4725 = vld [vmem:[%s197 + $0x122] sm:$0xff]
        %v4726 = vld [vmem:[%s197 + $0x12a] sm:$0xff]
        %v4727 = vld [vmem:[%s197 + $0x132] sm:$0xff]
        %v4728 = vld [vmem:[%s197 + $0x13a] sm:$0xff]
        %v4729 = vld [vmem:[%s197 + $0x142] sm:$0xff]
        %v4730 = vld [vmem:[%s197 + $0x14a] sm:$0xff]
        %v4731 = vld [vmem:[%s197 + $0x152] sm:$0xff]
        %v4732 = vld [vmem:[%s197 + $0x15a] sm:$0xff]
        %v4733 = vld [vmem:[%s197 + $0x162] sm:$0xff]
        %v4734 = vld [vmem:[%s197 + $0x16a] sm:$0xff]
        %v4735 = vld [vmem:[%s197 + $0x172] sm:$0xff]
        %v4736 = vld [vmem:[%s197 + $0x17a] sm:$0xff]
        %v4737 = vld [vmem:[%s197 + $0x182] sm:$0xff]
        %v4738 = vld [vmem:[%s197 + $0x18a] sm:$0xff]
        %v4739 = vld [vmem:[%s197 + $0x192] sm:$0xff]
        %v4740 = vld [vmem:[%s197 + $0x19a] sm:$0xff]
        %v4741 = vld [vmem:[%s197 + $0x1a2] sm:$0xff]
        %v4742 = vld [vmem:[%s197 + $0x1aa] sm:$0xff]
        %v4743 = vld [vmem:[%s197 + $0x1b2] sm:$0xff]
        %v4744 = vld [vmem:[%s197 + $0x1ba] sm:$0xff]
        %v4745 = vld [vmem:[%s197 + $0x1c2] sm:$0xff]
        %v4746 = vld [vmem:[%s197 + $0x1ca] sm:$0xff]
        %v4747 = vld [vmem:[%s197 + $0x1d2] sm:$0xff]
        %v4748 = vld [vmem:[%s197 + $0x1da] sm:$0xff]
        %v4749 = vld [vmem:[%s197 + $0x1e2] sm:$0xff]
        %v4750 = vld [vmem:[%s197 + $0x1ea] sm:$0xff]
        %v4751 = vld [vmem:[%s197 + $0x1f2] sm:$0xff]
        %v4752 = vld [vmem:[%s197 + $0x1fa] sm:$0xff]
        %v4753 = vld [vmem:[%s197 + $0x202] sm:$0xff]
        %v4754 = vld [vmem:[%s197 + $0x20a] sm:$0xff]
        %v4755 = vld [vmem:[%s197 + $0x212] sm:$0xff]
        %v4756 = vld [vmem:[%s197 + $0x21a] sm:$0xff]
        %v4757 = vld [vmem:[%s197 + $0x222] sm:$0xff]
        %v4758 = vld [vmem:[%s197 + $0x22a] sm:$0xff]
        %v4759 = vld [vmem:[%s197 + $0x232] sm:$0xff]
        %v4760 = vld [vmem:[%s197 + $0x23a] sm:$0xff]
        %v4761 = vld [vmem:[%s197 + $0x242] sm:$0xff]
        %v4762 = vld [vmem:[%s197 + $0x24a] sm:$0xff]
        %v4763 = vld [vmem:[%s197 + $0x252] sm:$0xff]
        %v4764 = vld [vmem:[%s197 + $0x25a] sm:$0xff]
        %v4765 = vld [vmem:[%s197 + $0x262] sm:$0xff]
        %v4766 = vld [vmem:[%s197 + $0x26a] sm:$0xff]
        %v4767 = vld [vmem:[%s197 + $0x272] sm:$0xff]
        %v4768 = vld [vmem:[%s197 + $0x27a] sm:$0xff]
        %v4769 = vld [vmem:[%s197 + $0x282] sm:$0xff]
        %v4770 = vld [vmem:[%s197 + $0x28a] sm:$0xff]
        %v4771 = vld [vmem:[%s197 + $0x292] sm:$0xff]
        %v4772 = vld [vmem:[%s197 + $0x29a] sm:$0xff]
        %v4773 = vld [vmem:[%s197 + $0x2a2] sm:$0xff]
        %v4774 = vld [vmem:[%s197 + $0x2aa] sm:$0xff]
        %v4775 = vld [vmem:[%s197 + $0x2b2] sm:$0xff]
        %v4776 = vld [vmem:[%s197 + $0x2ba] sm:$0xff]
        %v4777 = vld [vmem:[%s197 + $0x2c2] sm:$0xff]
        %v4778 = vld [vmem:[%s197 + $0x2ca] sm:$0xff]
        %v4779 = vld [vmem:[%s197 + $0x2d2] sm:$0xff]
        %v4780 = vld [vmem:[%s197 + $0x2da] sm:$0xff]
        %v4781 = vld [vmem:[%s197 + $0x2e2] sm:$0xff]
        %v4782 = vld [vmem:[%s197 + $0x2ea] sm:$0xff]
        %v4783 = vld [vmem:[%s197 + $0x2f2] sm:$0xff]
        %v4784 = vld [vmem:[%s197 + $0x2fa] sm:$0xff]
        %v4785 = vld [vmem:[%s197 + $0x302] sm:$0xff]
        %v4786 = vld [vmem:[%s197 + $0x30a] sm:$0xff]
        %v4787 = vld [vmem:[%s197 + $0x312] sm:$0xff]
        %v4788 = vld [vmem:[%s197 + $0x31a] sm:$0xff]
        %v4789 = vld [vmem:[%s197 + $0x322] sm:$0xff]
        %v4790 = vld [vmem:[%s197 + $0x32a] sm:$0xff]
        %v4791 = vld [vmem:[%s197 + $0x332] sm:$0xff]
        %v4792 = vld [vmem:[%s197 + $0x33a] sm:$0xff]
        %v4793 = vld [vmem:[%s197 + $0x342] sm:$0xff]
        %v4794 = vld [vmem:[%s197 + $0x34a] sm:$0xff]
        %v4795 = vld [vmem:[%s197 + $0x352] sm:$0xff]
        %v4796 = vld [vmem:[%s197 + $0x35a] sm:$0xff]
        %v4797 = vld [vmem:[%s197 + $0x362] sm:$0xff]
        %v4798 = vld [vmem:[%s197 + $0x36a] sm:$0xff]
        %v4799 = vld [vmem:[%s197 + $0x372] sm:$0xff]
        %v4800 = vld [vmem:[%s197 + $0x37a] sm:$0xff]
        %v4801 = vld [vmem:[%s197 + $0x382] sm:$0xff]
        %v4802 = vld [vmem:[%s197 + $0x38a] sm:$0xff]
        %v4803 = vld [vmem:[%s197 + $0x392] sm:$0xff]
        %v4804 = vld [vmem:[%s197 + $0x39a] sm:$0xff]
        %v4805 = vld [vmem:[#allocation3 + $0x5] sm:$0x1]
        %4807 = vset.pattern.permute.xlu0 0
        %4808 = vperm.xlu0 %4807, %v4693
        %v4809 = vpop.permute.xlu0 %4808
        %4812 = vset.pattern.permute.xlu0 0
        %4813 = vperm.xlu0 %4812, %v4694
        %v4814 = vpop.permute.xlu0 %4813
        %4817 = vset.pattern.permute.xlu0 0
        %4818 = vperm.xlu0 %4817, %v4695
        %v4819 = vpop.permute.xlu0 %4818
        %4822 = vset.pattern.permute.xlu0 0
        %4823 = vperm.xlu0 %4822, %v4696
        %v4824 = vpop.permute.xlu0 %4823
        %4827 = vset.pattern.permute.xlu0 0
        %4828 = vperm.xlu0 %4827, %v4697
        %v4829 = vpop.permute.xlu0 %4828
        %4832 = vset.pattern.permute.xlu0 0
        %4833 = vperm.xlu0 %4832, %v4698
        %v4834 = vpop.permute.xlu0 %4833
        %4837 = vset.pattern.permute.xlu0 0
        %4838 = vperm.xlu0 %4837, %v4699
        %v4839 = vpop.permute.xlu0 %4838
        %4842 = vset.pattern.permute.xlu0 0
        %4843 = vperm.xlu0 %4842, %v4700
        %v4844 = vpop.permute.xlu0 %4843
        %4847 = vset.pattern.permute.xlu0 0
        %4848 = vperm.xlu0 %4847, %v4701
        %v4849 = vpop.permute.xlu0 %4848
        %4852 = vset.pattern.permute.xlu0 0
        %4853 = vperm.xlu0 %4852, %v4702
        %v4854 = vpop.permute.xlu0 %4853
        %4857 = vset.pattern.permute.xlu0 0
        %4858 = vperm.xlu0 %4857, %v4703
        %v4859 = vpop.permute.xlu0 %4858
        %4862 = vset.pattern.permute.xlu0 0
        %4863 = vperm.xlu0 %4862, %v4704
        %v4864 = vpop.permute.xlu0 %4863
        %4867 = vset.pattern.permute.xlu0 0
        %4868 = vperm.xlu0 %4867, %v4705
        %v4869 = vpop.permute.xlu0 %4868
        %4872 = vset.pattern.permute.xlu0 0
        %4873 = vperm.xlu0 %4872, %v4706
        %v4874 = vpop.permute.xlu0 %4873
        %4877 = vset.pattern.permute.xlu0 0
        %4878 = vperm.xlu0 %4877, %v4707
        %v4879 = vpop.permute.xlu0 %4878
        %4882 = vset.pattern.permute.xlu0 0
        %4883 = vperm.xlu0 %4882, %v4708
        %v4884 = vpop.permute.xlu0 %4883
        %4887 = vset.pattern.permute.xlu0 0
        %4888 = vperm.xlu0 %4887, %v4709
        %v4889 = vpop.permute.xlu0 %4888
        %4892 = vset.pattern.permute.xlu0 0
        %4893 = vperm.xlu0 %4892, %v4710
        %v4894 = vpop.permute.xlu0 %4893
        %4897 = vset.pattern.permute.xlu0 0
        %4898 = vperm.xlu0 %4897, %v4711
        %v4899 = vpop.permute.xlu0 %4898
        %4902 = vset.pattern.permute.xlu0 0
        %4903 = vperm.xlu0 %4902, %v4712
        %v4904 = vpop.permute.xlu0 %4903
        %4907 = vset.pattern.permute.xlu0 0
        %4908 = vperm.xlu0 %4907, %v4713
        %v4909 = vpop.permute.xlu0 %4908
        %4912 = vset.pattern.permute.xlu0 0
        %4913 = vperm.xlu0 %4912, %v4714
        %v4914 = vpop.permute.xlu0 %4913
        %4917 = vset.pattern.permute.xlu0 0
        %4918 = vperm.xlu0 %4917, %v4715
        %v4919 = vpop.permute.xlu0 %4918
        %4922 = vset.pattern.permute.xlu0 0
        %4923 = vperm.xlu0 %4922, %v4716
        %v4924 = vpop.permute.xlu0 %4923
        %4927 = vset.pattern.permute.xlu0 0
        %4928 = vperm.xlu0 %4927, %v4717
        %v4929 = vpop.permute.xlu0 %4928
        %4932 = vset.pattern.permute.xlu0 0
        %4933 = vperm.xlu0 %4932, %v4718
        %v4934 = vpop.permute.xlu0 %4933
        %4937 = vset.pattern.permute.xlu0 0
        %4938 = vperm.xlu0 %4937, %v4719
        %v4939 = vpop.permute.xlu0 %4938
        %4942 = vset.pattern.permute.xlu0 0
        %4943 = vperm.xlu0 %4942, %v4720
        %v4944 = vpop.permute.xlu0 %4943
        %4947 = vset.pattern.permute.xlu0 0
        %4948 = vperm.xlu0 %4947, %v4721
        %v4949 = vpop.permute.xlu0 %4948
        %4952 = vset.pattern.permute.xlu0 0
        %4953 = vperm.xlu0 %4952, %v4722
        %v4954 = vpop.permute.xlu0 %4953
        %4957 = vset.pattern.permute.xlu0 0
        %4958 = vperm.xlu0 %4957, %v4723
        %v4959 = vpop.permute.xlu0 %4958
        %4962 = vset.pattern.permute.xlu0 0
        %4963 = vperm.xlu0 %4962, %v4724
        %v4964 = vpop.permute.xlu0 %4963
        %4967 = vset.pattern.permute.xlu0 0
        %4968 = vperm.xlu0 %4967, %v4725
        %v4969 = vpop.permute.xlu0 %4968
        %4972 = vset.pattern.permute.xlu0 0
        %4973 = vperm.xlu0 %4972, %v4726
        %v4974 = vpop.permute.xlu0 %4973
        %4977 = vset.pattern.permute.xlu0 0
        %4978 = vperm.xlu0 %4977, %v4727
        %v4979 = vpop.permute.xlu0 %4978
        %4982 = vset.pattern.permute.xlu0 0
        %4983 = vperm.xlu0 %4982, %v4728
        %v4984 = vpop.permute.xlu0 %4983
        %4987 = vset.pattern.permute.xlu0 0
        %4988 = vperm.xlu0 %4987, %v4729
        %v4989 = vpop.permute.xlu0 %4988
        %4992 = vset.pattern.permute.xlu0 0
        %4993 = vperm.xlu0 %4992, %v4730
        %v4994 = vpop.permute.xlu0 %4993
        %4997 = vset.pattern.permute.xlu0 0
        %4998 = vperm.xlu0 %4997, %v4731
        %v4999 = vpop.permute.xlu0 %4998
        %5002 = vset.pattern.permute.xlu0 0
        %5003 = vperm.xlu0 %5002, %v4732
        %v5004 = vpop.permute.xlu0 %5003
        %5007 = vset.pattern.permute.xlu0 0
        %5008 = vperm.xlu0 %5007, %v4733
        %v5009 = vpop.permute.xlu0 %5008
        %5012 = vset.pattern.permute.xlu0 0
        %5013 = vperm.xlu0 %5012, %v4734
        %v5014 = vpop.permute.xlu0 %5013
        %5017 = vset.pattern.permute.xlu0 0
        %5018 = vperm.xlu0 %5017, %v4735
        %v5019 = vpop.permute.xlu0 %5018
        %5022 = vset.pattern.permute.xlu0 0
        %5023 = vperm.xlu0 %5022, %v4736
        %v5024 = vpop.permute.xlu0 %5023
        %5027 = vset.pattern.permute.xlu0 0
        %5028 = vperm.xlu0 %5027, %v4737
        %v5029 = vpop.permute.xlu0 %5028
        %5032 = vset.pattern.permute.xlu0 0
        %5033 = vperm.xlu0 %5032, %v4738
        %v5034 = vpop.permute.xlu0 %5033
        %5037 = vset.pattern.permute.xlu0 0
        %5038 = vperm.xlu0 %5037, %v4739
        %v5039 = vpop.permute.xlu0 %5038
        %5042 = vset.pattern.permute.xlu0 0
        %5043 = vperm.xlu0 %5042, %v4740
        %v5044 = vpop.permute.xlu0 %5043
        %5047 = vset.pattern.permute.xlu0 0
        %5048 = vperm.xlu0 %5047, %v4741
        %v5049 = vpop.permute.xlu0 %5048
        %5052 = vset.pattern.permute.xlu0 0
        %5053 = vperm.xlu0 %5052, %v4742
        %v5054 = vpop.permute.xlu0 %5053
        %5057 = vset.pattern.permute.xlu0 0
        %5058 = vperm.xlu0 %5057, %v4743
        %v5059 = vpop.permute.xlu0 %5058
        %5062 = vset.pattern.permute.xlu0 0
        %5063 = vperm.xlu0 %5062, %v4744
        %v5064 = vpop.permute.xlu0 %5063
        %5067 = vset.pattern.permute.xlu0 0
        %5068 = vperm.xlu0 %5067, %v4745
        %v5069 = vpop.permute.xlu0 %5068
        %5072 = vset.pattern.permute.xlu0 0
        %5073 = vperm.xlu0 %5072, %v4746
        %v5074 = vpop.permute.xlu0 %5073
        %5077 = vset.pattern.permute.xlu0 0
        %5078 = vperm.xlu0 %5077, %v4747
        %v5079 = vpop.permute.xlu0 %5078
        %5082 = vset.pattern.permute.xlu0 0
        %5083 = vperm.xlu0 %5082, %v4748
        %v5084 = vpop.permute.xlu0 %5083
        %5087 = vset.pattern.permute.xlu0 0
        %5088 = vperm.xlu0 %5087, %v4749
        %v5089 = vpop.permute.xlu0 %5088
        %5092 = vset.pattern.permute.xlu0 0
        %5093 = vperm.xlu0 %5092, %v4750
        %v5094 = vpop.permute.xlu0 %5093
        %5097 = vset.pattern.permute.xlu0 0
        %5098 = vperm.xlu0 %5097, %v4751
        %v5099 = vpop.permute.xlu0 %5098
        %5102 = vset.pattern.permute.xlu0 0
        %5103 = vperm.xlu0 %5102, %v4752
        %v5104 = vpop.permute.xlu0 %5103
        %5107 = vset.pattern.permute.xlu0 0
        %5108 = vperm.xlu0 %5107, %v4753
        %v5109 = vpop.permute.xlu0 %5108
        %5112 = vset.pattern.permute.xlu0 0
        %5113 = vperm.xlu0 %5112, %v4754
        %v5114 = vpop.permute.xlu0 %5113
        %5117 = vset.pattern.permute.xlu0 0
        %5118 = vperm.xlu0 %5117, %v4755
        %v5119 = vpop.permute.xlu0 %5118
        %5122 = vset.pattern.permute.xlu0 0
        %5123 = vperm.xlu0 %5122, %v4756
        %v5124 = vpop.permute.xlu0 %5123
        %5127 = vset.pattern.permute.xlu0 0
        %5128 = vperm.xlu0 %5127, %v4757
        %v5129 = vpop.permute.xlu0 %5128
        %5132 = vset.pattern.permute.xlu0 0
        %5133 = vperm.xlu0 %5132, %v4758
        %v5134 = vpop.permute.xlu0 %5133
        %5137 = vset.pattern.permute.xlu0 0
        %5138 = vperm.xlu0 %5137, %v4759
        %v5139 = vpop.permute.xlu0 %5138
        %5142 = vset.pattern.permute.xlu0 0
        %5143 = vperm.xlu0 %5142, %v4760
        %v5144 = vpop.permute.xlu0 %5143
        %5147 = vset.pattern.permute.xlu0 0
        %5148 = vperm.xlu0 %5147, %v4761
        %v5149 = vpop.permute.xlu0 %5148
        %5152 = vset.pattern.permute.xlu0 0
        %5153 = vperm.xlu0 %5152, %v4762
        %v5154 = vpop.permute.xlu0 %5153
        %5157 = vset.pattern.permute.xlu0 0
        %5158 = vperm.xlu0 %5157, %v4763
        %v5159 = vpop.permute.xlu0 %5158
        %5162 = vset.pattern.permute.xlu0 0
        %5163 = vperm.xlu0 %5162, %v4764
        %v5164 = vpop.permute.xlu0 %5163
        %5167 = vset.pattern.permute.xlu0 0
        %5168 = vperm.xlu0 %5167, %v4765
        %v5169 = vpop.permute.xlu0 %5168
        %5172 = vset.pattern.permute.xlu0 0
        %5173 = vperm.xlu0 %5172, %v4766
        %v5174 = vpop.permute.xlu0 %5173
        %5177 = vset.pattern.permute.xlu0 0
        %5178 = vperm.xlu0 %5177, %v4767
        %v5179 = vpop.permute.xlu0 %5178
        %5182 = vset.pattern.permute.xlu0 0
        %5183 = vperm.xlu0 %5182, %v4768
        %v5184 = vpop.permute.xlu0 %5183
        %5187 = vset.pattern.permute.xlu0 0
        %5188 = vperm.xlu0 %5187, %v4769
        %v5189 = vpop.permute.xlu0 %5188
        %5192 = vset.pattern.permute.xlu0 0
        %5193 = vperm.xlu0 %5192, %v4770
        %v5194 = vpop.permute.xlu0 %5193
        %5197 = vset.pattern.permute.xlu0 0
        %5198 = vperm.xlu0 %5197, %v4771
        %v5199 = vpop.permute.xlu0 %5198
        %5202 = vset.pattern.permute.xlu0 0
        %5203 = vperm.xlu0 %5202, %v4772
        %v5204 = vpop.permute.xlu0 %5203
        %5207 = vset.pattern.permute.xlu0 0
        %5208 = vperm.xlu0 %5207, %v4773
        %v5209 = vpop.permute.xlu0 %5208
        %5212 = vset.pattern.permute.xlu0 0
        %5213 = vperm.xlu0 %5212, %v4774
        %v5214 = vpop.permute.xlu0 %5213
        %5217 = vset.pattern.permute.xlu0 0
        %5218 = vperm.xlu0 %5217, %v4775
        %v5219 = vpop.permute.xlu0 %5218
        %5222 = vset.pattern.permute.xlu0 0
        %5223 = vperm.xlu0 %5222, %v4776
        %v5224 = vpop.permute.xlu0 %5223
        %5227 = vset.pattern.permute.xlu0 0
        %5228 = vperm.xlu0 %5227, %v4777
        %v5229 = vpop.permute.xlu0 %5228
        %5232 = vset.pattern.permute.xlu0 0
        %5233 = vperm.xlu0 %5232, %v4778
        %v5234 = vpop.permute.xlu0 %5233
        %5237 = vset.pattern.permute.xlu0 0
        %5238 = vperm.xlu0 %5237, %v4779
        %v5239 = vpop.permute.xlu0 %5238
        %5242 = vset.pattern.permute.xlu0 0
        %5243 = vperm.xlu0 %5242, %v4780
        %v5244 = vpop.permute.xlu0 %5243
        %5247 = vset.pattern.permute.xlu0 0
        %5248 = vperm.xlu0 %5247, %v4781
        %v5249 = vpop.permute.xlu0 %5248
        %5252 = vset.pattern.permute.xlu0 0
        %5253 = vperm.xlu0 %5252, %v4782
        %v5254 = vpop.permute.xlu0 %5253
        %5257 = vset.pattern.permute.xlu0 0
        %5258 = vperm.xlu0 %5257, %v4783
        %v5259 = vpop.permute.xlu0 %5258
        %5262 = vset.pattern.permute.xlu0 0
        %5263 = vperm.xlu0 %5262, %v4784
        %v5264 = vpop.permute.xlu0 %5263
        %5267 = vset.pattern.permute.xlu0 0
        %5268 = vperm.xlu0 %5267, %v4785
        %v5269 = vpop.permute.xlu0 %5268
        %5272 = vset.pattern.permute.xlu0 0
        %5273 = vperm.xlu0 %5272, %v4786
        %v5274 = vpop.permute.xlu0 %5273
        %5277 = vset.pattern.permute.xlu0 0
        %5278 = vperm.xlu0 %5277, %v4787
        %v5279 = vpop.permute.xlu0 %5278
        %5282 = vset.pattern.permute.xlu0 0
        %5283 = vperm.xlu0 %5282, %v4788
        %v5284 = vpop.permute.xlu0 %5283
        %5287 = vset.pattern.permute.xlu0 0
        %5288 = vperm.xlu0 %5287, %v4789
        %v5289 = vpop.permute.xlu0 %5288
        %5292 = vset.pattern.permute.xlu0 0
        %5293 = vperm.xlu0 %5292, %v4790
        %v5294 = vpop.permute.xlu0 %5293
        %5297 = vset.pattern.permute.xlu0 0
        %5298 = vperm.xlu0 %5297, %v4791
        %v5299 = vpop.permute.xlu0 %5298
        %5302 = vset.pattern.permute.xlu0 0
        %5303 = vperm.xlu0 %5302, %v4792
        %v5304 = vpop.permute.xlu0 %5303
        %5307 = vset.pattern.permute.xlu0 0
        %5308 = vperm.xlu0 %5307, %v4793
        %v5309 = vpop.permute.xlu0 %5308
        %5312 = vset.pattern.permute.xlu0 0
        %5313 = vperm.xlu0 %5312, %v4794
        %v5314 = vpop.permute.xlu0 %5313
        %5317 = vset.pattern.permute.xlu0 0
        %5318 = vperm.xlu0 %5317, %v4795
        %v5319 = vpop.permute.xlu0 %5318
        %5322 = vset.pattern.permute.xlu0 0
        %5323 = vperm.xlu0 %5322, %v4796
        %v5324 = vpop.permute.xlu0 %5323
        %5327 = vset.pattern.permute.xlu0 0
        %5328 = vperm.xlu0 %5327, %v4797
        %v5329 = vpop.permute.xlu0 %5328
        %5332 = vset.pattern.permute.xlu0 0
        %5333 = vperm.xlu0 %5332, %v4798
        %v5334 = vpop.permute.xlu0 %5333
        %5337 = vset.pattern.permute.xlu0 0
        %5338 = vperm.xlu0 %5337, %v4799
        %v5339 = vpop.permute.xlu0 %5338
        %5342 = vset.pattern.permute.xlu0 0
        %5343 = vperm.xlu0 %5342, %v4800
        %v5344 = vpop.permute.xlu0 %5343
        %5347 = vset.pattern.permute.xlu0 0
        %5348 = vperm.xlu0 %5347, %v4801
        %v5349 = vpop.permute.xlu0 %5348
        %5352 = vset.pattern.permute.xlu0 0
        %5353 = vperm.xlu0 %5352, %v4802
        %v5354 = vpop.permute.xlu0 %5353
        %5357 = vset.pattern.permute.xlu0 0
        %5358 = vperm.xlu0 %5357, %v4803
        %v5359 = vpop.permute.xlu0 %5358
        %5362 = vset.pattern.permute.xlu0 0
        %5363 = vperm.xlu0 %5362, %v4804
        %v5364 = vpop.permute.xlu0 %5363
        %v5366 = vperm.slane %v4805, 0
        %v5367 = vmul.f32 %v4809, %v5366
        %v5368 = vmul.f32 %v4814, %v5366
        %v5369 = vmul.f32 %v4819, %v5366
        %v5370 = vmul.f32 %v4824, %v5366
        %v5371 = vmul.f32 %v4829, %v5366
        %v5372 = vmul.f32 %v4834, %v5366
        %v5373 = vmul.f32 %v4839, %v5366
        %v5374 = vmul.f32 %v4844, %v5366
        %v5375 = vmul.f32 %v4849, %v5366
        %v5376 = vmul.f32 %v4854, %v5366
        %v5377 = vmul.f32 %v4859, %v5366
        %v5378 = vmul.f32 %v4864, %v5366
        %v5379 = vmul.f32 %v4869, %v5366
        %v5380 = vmul.f32 %v4874, %v5366
        %v5381 = vmul.f32 %v4879, %v5366
        %v5382 = vmul.f32 %v4884, %v5366
        %v5383 = vmul.f32 %v4889, %v5366
        %v5384 = vmul.f32 %v4894, %v5366
        %v5385 = vmul.f32 %v4899, %v5366
        %v5386 = vmul.f32 %v4904, %v5366
        %v5387 = vmul.f32 %v4909, %v5366
        %v5388 = vmul.f32 %v4914, %v5366
        %v5389 = vmul.f32 %v4919, %v5366
        %v5390 = vmul.f32 %v4924, %v5366
        %v5391 = vmul.f32 %v4929, %v5366
        %v5392 = vmul.f32 %v4934, %v5366
        %v5393 = vmul.f32 %v4939, %v5366
        %v5394 = vmul.f32 %v4944, %v5366
        %v5395 = vmul.f32 %v4949, %v5366
        %v5396 = vmul.f32 %v4954, %v5366
        %v5397 = vmul.f32 %v4959, %v5366
        %v5398 = vmul.f32 %v4964, %v5366
        %v5399 = vmul.f32 %v4969, %v5366
        %v5400 = vmul.f32 %v4974, %v5366
        %v5401 = vmul.f32 %v4979, %v5366
        %v5402 = vmul.f32 %v4984, %v5366
        %v5403 = vmul.f32 %v4989, %v5366
        %v5404 = vmul.f32 %v4994, %v5366
        %v5405 = vmul.f32 %v4999, %v5366
        %v5406 = vmul.f32 %v5004, %v5366
        %v5407 = vmul.f32 %v5009, %v5366
        %v5408 = vmul.f32 %v5014, %v5366
        %v5409 = vmul.f32 %v5019, %v5366
        %v5410 = vmul.f32 %v5024, %v5366
        %v5411 = vmul.f32 %v5029, %v5366
        %v5412 = vmul.f32 %v5034, %v5366
        %v5413 = vmul.f32 %v5039, %v5366
        %v5414 = vmul.f32 %v5044, %v5366
        %v5415 = vmul.f32 %v5049, %v5366
        %v5416 = vmul.f32 %v5054, %v5366
        %v5417 = vmul.f32 %v5059, %v5366
        %v5418 = vmul.f32 %v5064, %v5366
        %v5419 = vmul.f32 %v5069, %v5366
        %v5420 = vmul.f32 %v5074, %v5366
        %v5421 = vmul.f32 %v5079, %v5366
        %v5422 = vmul.f32 %v5084, %v5366
        %v5423 = vmul.f32 %v5089, %v5366
        %v5424 = vmul.f32 %v5094, %v5366
        %v5425 = vmul.f32 %v5099, %v5366
        %v5426 = vmul.f32 %v5104, %v5366
        %v5427 = vmul.f32 %v5109, %v5366
        %v5428 = vmul.f32 %v5114, %v5366
        %v5429 = vmul.f32 %v5119, %v5366
        %v5430 = vmul.f32 %v5124, %v5366
        %v5431 = vmul.f32 %v5129, %v5366
        %v5432 = vmul.f32 %v5134, %v5366
        %v5433 = vmul.f32 %v5139, %v5366
        %v5434 = vmul.f32 %v5144, %v5366
        %v5435 = vmul.f32 %v5149, %v5366
        %v5436 = vmul.f32 %v5154, %v5366
        %v5437 = vmul.f32 %v5159, %v5366
        %v5438 = vmul.f32 %v5164, %v5366
        %v5439 = vmul.f32 %v5169, %v5366
        %v5440 = vmul.f32 %v5174, %v5366
        %v5441 = vmul.f32 %v5179, %v5366
        %v5442 = vmul.f32 %v5184, %v5366
        %v5443 = vmul.f32 %v5189, %v5366
        %v5444 = vmul.f32 %v5194, %v5366
        %v5445 = vmul.f32 %v5199, %v5366
        %v5446 = vmul.f32 %v5204, %v5366
        %v5447 = vmul.f32 %v5209, %v5366
        %v5448 = vmul.f32 %v5214, %v5366
        %v5449 = vmul.f32 %v5219, %v5366
        %v5450 = vmul.f32 %v5224, %v5366
        %v5451 = vmul.f32 %v5229, %v5366
        %v5452 = vmul.f32 %v5234, %v5366
        %v5453 = vmul.f32 %v5239, %v5366
        %v5454 = vmul.f32 %v5244, %v5366
        %v5455 = vmul.f32 %v5249, %v5366
        %v5456 = vmul.f32 %v5254, %v5366
        %v5457 = vmul.f32 %v5259, %v5366
        %v5458 = vmul.f32 %v5264, %v5366
        %v5459 = vmul.f32 %v5269, %v5366
        %v5460 = vmul.f32 %v5274, %v5366
        %v5461 = vmul.f32 %v5279, %v5366
        %v5462 = vmul.f32 %v5284, %v5366
        %v5463 = vmul.f32 %v5289, %v5366
        %v5464 = vmul.f32 %v5294, %v5366
        %v5465 = vmul.f32 %v5299, %v5366
        %v5466 = vmul.f32 %v5304, %v5366
        %v5467 = vmul.f32 %v5309, %v5366
        %v5468 = vmul.f32 %v5314, %v5366
        %v5469 = vmul.f32 %v5319, %v5366
        %v5470 = vmul.f32 %v5324, %v5366
        %v5471 = vmul.f32 %v5329, %v5366
        %v5472 = vmul.f32 %v5334, %v5366
        %v5473 = vmul.f32 %v5339, %v5366
        %v5474 = vmul.f32 %v5344, %v5366
        %v5475 = vmul.f32 %v5349, %v5366
        %v5476 = vmul.f32 %v5354, %v5366
        %v5477 = vmul.f32 %v5359, %v5366
        %v5478 = vmul.f32 %v5364, %v5366
        %v5479 = vadd.f32 %v4581, %v5367
        %v5480 = vadd.f32 %v4582, %v5368
        %v5481 = vadd.f32 %v4583, %v5369
        %v5482 = vadd.f32 %v4584, %v5370
        %v5483 = vadd.f32 %v4585, %v5371
        %v5484 = vadd.f32 %v4586, %v5372
        %v5485 = vadd.f32 %v4587, %v5373
        %v5486 = vadd.f32 %v4588, %v5374
        %v5487 = vadd.f32 %v4589, %v5375
        %v5488 = vadd.f32 %v4590, %v5376
        %v5489 = vadd.f32 %v4591, %v5377
        %v5490 = vadd.f32 %v4592, %v5378
        %v5491 = vadd.f32 %v4593, %v5379
        %v5492 = vadd.f32 %v4594, %v5380
        %v5493 = vadd.f32 %v4595, %v5381
        %v5494 = vadd.f32 %v4596, %v5382
        %v5495 = vadd.f32 %v4597, %v5383
        %v5496 = vadd.f32 %v4598, %v5384
        %v5497 = vadd.f32 %v4599, %v5385
        %v5498 = vadd.f32 %v4600, %v5386
        %v5499 = vadd.f32 %v4601, %v5387
        %v5500 = vadd.f32 %v4602, %v5388
        %v5501 = vadd.f32 %v4603, %v5389
        %v5502 = vadd.f32 %v4604, %v5390
        %v5503 = vadd.f32 %v4605, %v5391
        %v5504 = vadd.f32 %v4606, %v5392
        %v5505 = vadd.f32 %v4607, %v5393
        %v5506 = vadd.f32 %v4608, %v5394
        %v5507 = vadd.f32 %v4609, %v5395
        %v5508 = vadd.f32 %v4610, %v5396
        %v5509 = vadd.f32 %v4611, %v5397
        %v5510 = vadd.f32 %v4612, %v5398
        %v5511 = vadd.f32 %v4613, %v5399
        %v5512 = vadd.f32 %v4614, %v5400
        %v5513 = vadd.f32 %v4615, %v5401
        %v5514 = vadd.f32 %v4616, %v5402
        %v5515 = vadd.f32 %v4617, %v5403
        %v5516 = vadd.f32 %v4618, %v5404
        %v5517 = vadd.f32 %v4619, %v5405
        %v5518 = vadd.f32 %v4620, %v5406
        %v5519 = vadd.f32 %v4621, %v5407
        %v5520 = vadd.f32 %v4622, %v5408
        %v5521 = vadd.f32 %v4623, %v5409
        %v5522 = vadd.f32 %v4624, %v5410
        %v5523 = vadd.f32 %v4625, %v5411
        %v5524 = vadd.f32 %v4626, %v5412
        %v5525 = vadd.f32 %v4627, %v5413
        %v5526 = vadd.f32 %v4628, %v5414
        %v5527 = vadd.f32 %v4629, %v5415
        %v5528 = vadd.f32 %v4630, %v5416
        %v5529 = vadd.f32 %v4631, %v5417
        %v5530 = vadd.f32 %v4632, %v5418
        %v5531 = vadd.f32 %v4633, %v5419
        %v5532 = vadd.f32 %v4634, %v5420
        %v5533 = vadd.f32 %v4635, %v5421
        %v5534 = vadd.f32 %v4636, %v5422
        %v5535 = vadd.f32 %v4637, %v5423
        %v5536 = vadd.f32 %v4638, %v5424
        %v5537 = vadd.f32 %v4639, %v5425
        %v5538 = vadd.f32 %v4640, %v5426
        %v5539 = vadd.f32 %v4641, %v5427
        %v5540 = vadd.f32 %v4642, %v5428
        %v5541 = vadd.f32 %v4643, %v5429
        %v5542 = vadd.f32 %v4644, %v5430
        %v5543 = vadd.f32 %v4645, %v5431
        %v5544 = vadd.f32 %v4646, %v5432
        %v5545 = vadd.f32 %v4647, %v5433
        %v5546 = vadd.f32 %v4648, %v5434
        %v5547 = vadd.f32 %v4649, %v5435
        %v5548 = vadd.f32 %v4650, %v5436
        %v5549 = vadd.f32 %v4651, %v5437
        %v5550 = vadd.f32 %v4652, %v5438
        %v5551 = vadd.f32 %v4653, %v5439
        %v5552 = vadd.f32 %v4654, %v5440
        %v5553 = vadd.f32 %v4655, %v5441
        %v5554 = vadd.f32 %v4656, %v5442
        %v5555 = vadd.f32 %v4657, %v5443
        %v5556 = vadd.f32 %v4658, %v5444
        %v5557 = vadd.f32 %v4659, %v5445
        %v5558 = vadd.f32 %v4660, %v5446
        %v5559 = vadd.f32 %v4661, %v5447
        %v5560 = vadd.f32 %v4662, %v5448
        %v5561 = vadd.f32 %v4663, %v5449
        %v5562 = vadd.f32 %v4664, %v5450
        %v5563 = vadd.f32 %v4665, %v5451
        %v5564 = vadd.f32 %v4666, %v5452
        %v5565 = vadd.f32 %v4667, %v5453
        %v5566 = vadd.f32 %v4668, %v5454
        %v5567 = vadd.f32 %v4669, %v5455
        %v5568 = vadd.f32 %v4670, %v5456
        %v5569 = vadd.f32 %v4671, %v5457
        %v5570 = vadd.f32 %v4672, %v5458
        %v5571 = vadd.f32 %v4673, %v5459
        %v5572 = vadd.f32 %v4674, %v5460
        %v5573 = vadd.f32 %v4675, %v5461
        %v5574 = vadd.f32 %v4676, %v5462
        %v5575 = vadd.f32 %v4677, %v5463
        %v5576 = vadd.f32 %v4678, %v5464
        %v5577 = vadd.f32 %v4679, %v5465
        %v5578 = vadd.f32 %v4680, %v5466
        %v5579 = vadd.f32 %v4681, %v5467
        %v5580 = vadd.f32 %v4682, %v5468
        %v5581 = vadd.f32 %v4683, %v5469
        %v5582 = vadd.f32 %v4684, %v5470
        %v5583 = vadd.f32 %v4685, %v5471
        %v5584 = vadd.f32 %v4686, %v5472
        %v5585 = vadd.f32 %v4687, %v5473
        %v5586 = vadd.f32 %v4688, %v5474
        %v5587 = vadd.f32 %v4689, %v5475
        %v5588 = vadd.f32 %v4690, %v5476
        %v5589 = vadd.f32 %v4691, %v5477
        %v5590 = vadd.f32 %v4692, %v5478
        %v5591 = vld [vmem:[%s197 + $0x40] sm:$0xff]
        %v5592 = vld [vmem:[%s197 + $0x48] sm:$0xff]
        %v5593 = vld [vmem:[%s197 + $0x50] sm:$0xff]
        %v5594 = vld [vmem:[%s197 + $0x58] sm:$0xff]
        %v5595 = vld [vmem:[%s197 + $0x60] sm:$0xff]
        %v5596 = vld [vmem:[%s197 + $0x68] sm:$0xff]
        %v5597 = vld [vmem:[%s197 + $0x70] sm:$0xff]
        %v5598 = vld [vmem:[%s197 + $0x78] sm:$0xff]
        %v5599 = vld [vmem:[%s197 + $0x80] sm:$0xff]
        %v5600 = vld [vmem:[%s197 + $0x88] sm:$0xff]
        %v5601 = vld [vmem:[%s197 + $0x90] sm:$0xff]
        %v5602 = vld [vmem:[%s197 + $0x98] sm:$0xff]
        %v5603 = vld [vmem:[%s197 + $0xa0] sm:$0xff]
        %v5604 = vld [vmem:[%s197 + $0xa8] sm:$0xff]
        %v5605 = vld [vmem:[%s197 + $0xb0] sm:$0xff]
        %v5606 = vld [vmem:[%s197 + $0xb8] sm:$0xff]
        %v5607 = vld [vmem:[%s197 + $0xc0] sm:$0xff]
        %v5608 = vld [vmem:[%s197 + $0xc8] sm:$0xff]
        %v5609 = vld [vmem:[%s197 + $0xd0] sm:$0xff]
        %v5610 = vld [vmem:[%s197 + $0xd8] sm:$0xff]
        %v5611 = vld [vmem:[%s197 + $0xe0] sm:$0xff]
        %v5612 = vld [vmem:[%s197 + $0xe8] sm:$0xff]
        %v5613 = vld [vmem:[%s197 + $0xf0] sm:$0xff]
        %v5614 = vld [vmem:[%s197 + $0xf8] sm:$0xff]
        %v5615 = vld [vmem:[%s197 + $0x100] sm:$0xff]
        %v5616 = vld [vmem:[%s197 + $0x108] sm:$0xff]
        %v5617 = vld [vmem:[%s197 + $0x110] sm:$0xff]
        %v5618 = vld [vmem:[%s197 + $0x118] sm:$0xff]
        %v5619 = vld [vmem:[%s197 + $0x120] sm:$0xff]
        %v5620 = vld [vmem:[%s197 + $0x128] sm:$0xff]
        %v5621 = vld [vmem:[%s197 + $0x130] sm:$0xff]
        %v5622 = vld [vmem:[%s197 + $0x138] sm:$0xff]
        %v5623 = vld [vmem:[%s197 + $0x140] sm:$0xff]
        %v5624 = vld [vmem:[%s197 + $0x148] sm:$0xff]
        %v5625 = vld [vmem:[%s197 + $0x150] sm:$0xff]
        %v5626 = vld [vmem:[%s197 + $0x158] sm:$0xff]
        %v5627 = vld [vmem:[%s197 + $0x160] sm:$0xff]
        %v5628 = vld [vmem:[%s197 + $0x168] sm:$0xff]
        %v5629 = vld [vmem:[%s197 + $0x170] sm:$0xff]
        %v5630 = vld [vmem:[%s197 + $0x178] sm:$0xff]
        %v5631 = vld [vmem:[%s197 + $0x180] sm:$0xff]
        %v5632 = vld [vmem:[%s197 + $0x188] sm:$0xff]
        %v5633 = vld [vmem:[%s197 + $0x190] sm:$0xff]
        %v5634 = vld [vmem:[%s197 + $0x198] sm:$0xff]
        %v5635 = vld [vmem:[%s197 + $0x1a0] sm:$0xff]
        %v5636 = vld [vmem:[%s197 + $0x1a8] sm:$0xff]
        %v5637 = vld [vmem:[%s197 + $0x1b0] sm:$0xff]
        %v5638 = vld [vmem:[%s197 + $0x1b8] sm:$0xff]
        %v5639 = vld [vmem:[%s197 + $0x1c0] sm:$0xff]
        %v5640 = vld [vmem:[%s197 + $0x1c8] sm:$0xff]
        %v5641 = vld [vmem:[%s197 + $0x1d0] sm:$0xff]
        %v5642 = vld [vmem:[%s197 + $0x1d8] sm:$0xff]
        %v5643 = vld [vmem:[%s197 + $0x1e0] sm:$0xff]
        %v5644 = vld [vmem:[%s197 + $0x1e8] sm:$0xff]
        %v5645 = vld [vmem:[%s197 + $0x1f0] sm:$0xff]
        %v5646 = vld [vmem:[%s197 + $0x1f8] sm:$0xff]
        %v5647 = vld [vmem:[%s197 + $0x200] sm:$0xff]
        %v5648 = vld [vmem:[%s197 + $0x208] sm:$0xff]
        %v5649 = vld [vmem:[%s197 + $0x210] sm:$0xff]
        %v5650 = vld [vmem:[%s197 + $0x218] sm:$0xff]
        %v5651 = vld [vmem:[%s197 + $0x220] sm:$0xff]
        %v5652 = vld [vmem:[%s197 + $0x228] sm:$0xff]
        %v5653 = vld [vmem:[%s197 + $0x230] sm:$0xff]
        %v5654 = vld [vmem:[%s197 + $0x238] sm:$0xff]
        %v5655 = vld [vmem:[%s197 + $0x240] sm:$0xff]
        %v5656 = vld [vmem:[%s197 + $0x248] sm:$0xff]
        %v5657 = vld [vmem:[%s197 + $0x250] sm:$0xff]
        %v5658 = vld [vmem:[%s197 + $0x258] sm:$0xff]
        %v5659 = vld [vmem:[%s197 + $0x260] sm:$0xff]
        %v5660 = vld [vmem:[%s197 + $0x268] sm:$0xff]
        %v5661 = vld [vmem:[%s197 + $0x270] sm:$0xff]
        %v5662 = vld [vmem:[%s197 + $0x278] sm:$0xff]
        %v5663 = vld [vmem:[%s197 + $0x280] sm:$0xff]
        %v5664 = vld [vmem:[%s197 + $0x288] sm:$0xff]
        %v5665 = vld [vmem:[%s197 + $0x290] sm:$0xff]
        %v5666 = vld [vmem:[%s197 + $0x298] sm:$0xff]
        %v5667 = vld [vmem:[%s197 + $0x2a0] sm:$0xff]
        %v5668 = vld [vmem:[%s197 + $0x2a8] sm:$0xff]
        %v5669 = vld [vmem:[%s197 + $0x2b0] sm:$0xff]
        %v5670 = vld [vmem:[%s197 + $0x2b8] sm:$0xff]
        %v5671 = vld [vmem:[%s197 + $0x2c0] sm:$0xff]
        %v5672 = vld [vmem:[%s197 + $0x2c8] sm:$0xff]
        %v5673 = vld [vmem:[%s197 + $0x2d0] sm:$0xff]
        %v5674 = vld [vmem:[%s197 + $0x2d8] sm:$0xff]
        %v5675 = vld [vmem:[%s197 + $0x2e0] sm:$0xff]
        %v5676 = vld [vmem:[%s197 + $0x2e8] sm:$0xff]
        %v5677 = vld [vmem:[%s197 + $0x2f0] sm:$0xff]
        %v5678 = vld [vmem:[%s197 + $0x2f8] sm:$0xff]
        %v5679 = vld [vmem:[%s197 + $0x300] sm:$0xff]
        %v5680 = vld [vmem:[%s197 + $0x308] sm:$0xff]
        %v5681 = vld [vmem:[%s197 + $0x310] sm:$0xff]
        %v5682 = vld [vmem:[%s197 + $0x318] sm:$0xff]
        %v5683 = vld [vmem:[%s197 + $0x320] sm:$0xff]
        %v5684 = vld [vmem:[%s197 + $0x328] sm:$0xff]
        %v5685 = vld [vmem:[%s197 + $0x330] sm:$0xff]
        %v5686 = vld [vmem:[%s197 + $0x338] sm:$0xff]
        %v5687 = vld [vmem:[%s197 + $0x340] sm:$0xff]
        %v5688 = vld [vmem:[%s197 + $0x348] sm:$0xff]
        %v5689 = vld [vmem:[%s197 + $0x350] sm:$0xff]
        %v5690 = vld [vmem:[%s197 + $0x358] sm:$0xff]
        %v5691 = vld [vmem:[%s197 + $0x360] sm:$0xff]
        %v5692 = vld [vmem:[%s197 + $0x368] sm:$0xff]
        %v5693 = vld [vmem:[%s197 + $0x370] sm:$0xff]
        %v5694 = vld [vmem:[%s197 + $0x378] sm:$0xff]
        %v5695 = vld [vmem:[%s197 + $0x380] sm:$0xff]
        %v5696 = vld [vmem:[%s197 + $0x388] sm:$0xff]
        %v5697 = vld [vmem:[%s197 + $0x390] sm:$0xff]
        %v5698 = vld [vmem:[%s197 + $0x398] sm:$0xff]
        %v5699 = vld [vmem:[%s197 + $0x3a0] sm:$0xff]
        %v5700 = vld [vmem:[%s197 + $0x3a8] sm:$0xff]
        %v5701 = vld [vmem:[%s197 + $0x3b0] sm:$0xff]
        %v5702 = vld [vmem:[%s197 + $0x3b8] sm:$0xff]
        %v5703 = vld [vmem:[#allocation3 + $0x6] sm:$0x1]
        %5705 = vset.pattern.permute.xlu0 0
        %5706 = vperm.xlu0 %5705, %v5591
        %v5707 = vpop.permute.xlu0 %5706
        %5710 = vset.pattern.permute.xlu0 0
        %5711 = vperm.xlu0 %5710, %v5592
        %v5712 = vpop.permute.xlu0 %5711
        %5715 = vset.pattern.permute.xlu0 0
        %5716 = vperm.xlu0 %5715, %v5593
        %v5717 = vpop.permute.xlu0 %5716
        %5720 = vset.pattern.permute.xlu0 0
        %5721 = vperm.xlu0 %5720, %v5594
        %v5722 = vpop.permute.xlu0 %5721
        %5725 = vset.pattern.permute.xlu0 0
        %5726 = vperm.xlu0 %5725, %v5595
        %v5727 = vpop.permute.xlu0 %5726
        %5730 = vset.pattern.permute.xlu0 0
        %5731 = vperm.xlu0 %5730, %v5596
        %v5732 = vpop.permute.xlu0 %5731
        %5735 = vset.pattern.permute.xlu0 0
        %5736 = vperm.xlu0 %5735, %v5597
        %v5737 = vpop.permute.xlu0 %5736
        %5740 = vset.pattern.permute.xlu0 0
        %5741 = vperm.xlu0 %5740, %v5598
        %v5742 = vpop.permute.xlu0 %5741
        %5745 = vset.pattern.permute.xlu0 0
        %5746 = vperm.xlu0 %5745, %v5599
        %v5747 = vpop.permute.xlu0 %5746
        %5750 = vset.pattern.permute.xlu0 0
        %5751 = vperm.xlu0 %5750, %v5600
        %v5752 = vpop.permute.xlu0 %5751
        %5755 = vset.pattern.permute.xlu0 0
        %5756 = vperm.xlu0 %5755, %v5601
        %v5757 = vpop.permute.xlu0 %5756
        %5760 = vset.pattern.permute.xlu0 0
        %5761 = vperm.xlu0 %5760, %v5602
        %v5762 = vpop.permute.xlu0 %5761
        %5765 = vset.pattern.permute.xlu0 0
        %5766 = vperm.xlu0 %5765, %v5603
        %v5767 = vpop.permute.xlu0 %5766
        %5770 = vset.pattern.permute.xlu0 0
        %5771 = vperm.xlu0 %5770, %v5604
        %v5772 = vpop.permute.xlu0 %5771
        %5775 = vset.pattern.permute.xlu0 0
        %5776 = vperm.xlu0 %5775, %v5605
        %v5777 = vpop.permute.xlu0 %5776
        %5780 = vset.pattern.permute.xlu0 0
        %5781 = vperm.xlu0 %5780, %v5606
        %v5782 = vpop.permute.xlu0 %5781
        %5785 = vset.pattern.permute.xlu0 0
        %5786 = vperm.xlu0 %5785, %v5607
        %v5787 = vpop.permute.xlu0 %5786
        %5790 = vset.pattern.permute.xlu0 0
        %5791 = vperm.xlu0 %5790, %v5608
        %v5792 = vpop.permute.xlu0 %5791
        %5795 = vset.pattern.permute.xlu0 0
        %5796 = vperm.xlu0 %5795, %v5609
        %v5797 = vpop.permute.xlu0 %5796
        %5800 = vset.pattern.permute.xlu0 0
        %5801 = vperm.xlu0 %5800, %v5610
        %v5802 = vpop.permute.xlu0 %5801
        %5805 = vset.pattern.permute.xlu0 0
        %5806 = vperm.xlu0 %5805, %v5611
        %v5807 = vpop.permute.xlu0 %5806
        %5810 = vset.pattern.permute.xlu0 0
        %5811 = vperm.xlu0 %5810, %v5612
        %v5812 = vpop.permute.xlu0 %5811
        %5815 = vset.pattern.permute.xlu0 0
        %5816 = vperm.xlu0 %5815, %v5613
        %v5817 = vpop.permute.xlu0 %5816
        %5820 = vset.pattern.permute.xlu0 0
        %5821 = vperm.xlu0 %5820, %v5614
        %v5822 = vpop.permute.xlu0 %5821
        %5825 = vset.pattern.permute.xlu0 0
        %5826 = vperm.xlu0 %5825, %v5615
        %v5827 = vpop.permute.xlu0 %5826
        %5830 = vset.pattern.permute.xlu0 0
        %5831 = vperm.xlu0 %5830, %v5616
        %v5832 = vpop.permute.xlu0 %5831
        %5835 = vset.pattern.permute.xlu0 0
        %5836 = vperm.xlu0 %5835, %v5617
        %v5837 = vpop.permute.xlu0 %5836
        %5840 = vset.pattern.permute.xlu0 0
        %5841 = vperm.xlu0 %5840, %v5618
        %v5842 = vpop.permute.xlu0 %5841
        %5845 = vset.pattern.permute.xlu0 0
        %5846 = vperm.xlu0 %5845, %v5619
        %v5847 = vpop.permute.xlu0 %5846
        %5850 = vset.pattern.permute.xlu0 0
        %5851 = vperm.xlu0 %5850, %v5620
        %v5852 = vpop.permute.xlu0 %5851
        %5855 = vset.pattern.permute.xlu0 0
        %5856 = vperm.xlu0 %5855, %v5621
        %v5857 = vpop.permute.xlu0 %5856
        %5860 = vset.pattern.permute.xlu0 0
        %5861 = vperm.xlu0 %5860, %v5622
        %v5862 = vpop.permute.xlu0 %5861
        %5865 = vset.pattern.permute.xlu0 0
        %5866 = vperm.xlu0 %5865, %v5623
        %v5867 = vpop.permute.xlu0 %5866
        %5870 = vset.pattern.permute.xlu0 0
        %5871 = vperm.xlu0 %5870, %v5624
        %v5872 = vpop.permute.xlu0 %5871
        %5875 = vset.pattern.permute.xlu0 0
        %5876 = vperm.xlu0 %5875, %v5625
        %v5877 = vpop.permute.xlu0 %5876
        %5880 = vset.pattern.permute.xlu0 0
        %5881 = vperm.xlu0 %5880, %v5626
        %v5882 = vpop.permute.xlu0 %5881
        %5885 = vset.pattern.permute.xlu0 0
        %5886 = vperm.xlu0 %5885, %v5627
        %v5887 = vpop.permute.xlu0 %5886
        %5890 = vset.pattern.permute.xlu0 0
        %5891 = vperm.xlu0 %5890, %v5628
        %v5892 = vpop.permute.xlu0 %5891
        %5895 = vset.pattern.permute.xlu0 0
        %5896 = vperm.xlu0 %5895, %v5629
        %v5897 = vpop.permute.xlu0 %5896
        %5900 = vset.pattern.permute.xlu0 0
        %5901 = vperm.xlu0 %5900, %v5630
        %v5902 = vpop.permute.xlu0 %5901
        %5905 = vset.pattern.permute.xlu0 0
        %5906 = vperm.xlu0 %5905, %v5631
        %v5907 = vpop.permute.xlu0 %5906
        %5910 = vset.pattern.permute.xlu0 0
        %5911 = vperm.xlu0 %5910, %v5632
        %v5912 = vpop.permute.xlu0 %5911
        %5915 = vset.pattern.permute.xlu0 0
        %5916 = vperm.xlu0 %5915, %v5633
        %v5917 = vpop.permute.xlu0 %5916
        %5920 = vset.pattern.permute.xlu0 0
        %5921 = vperm.xlu0 %5920, %v5634
        %v5922 = vpop.permute.xlu0 %5921
        %5925 = vset.pattern.permute.xlu0 0
        %5926 = vperm.xlu0 %5925, %v5635
        %v5927 = vpop.permute.xlu0 %5926
        %5930 = vset.pattern.permute.xlu0 0
        %5931 = vperm.xlu0 %5930, %v5636
        %v5932 = vpop.permute.xlu0 %5931
        %5935 = vset.pattern.permute.xlu0 0
        %5936 = vperm.xlu0 %5935, %v5637
        %v5937 = vpop.permute.xlu0 %5936
        %5940 = vset.pattern.permute.xlu0 0
        %5941 = vperm.xlu0 %5940, %v5638
        %v5942 = vpop.permute.xlu0 %5941
        %5945 = vset.pattern.permute.xlu0 0
        %5946 = vperm.xlu0 %5945, %v5639
        %v5947 = vpop.permute.xlu0 %5946
        %5950 = vset.pattern.permute.xlu0 0
        %5951 = vperm.xlu0 %5950, %v5640
        %v5952 = vpop.permute.xlu0 %5951
        %5955 = vset.pattern.permute.xlu0 0
        %5956 = vperm.xlu0 %5955, %v5641
        %v5957 = vpop.permute.xlu0 %5956
        %5960 = vset.pattern.permute.xlu0 0
        %5961 = vperm.xlu0 %5960, %v5642
        %v5962 = vpop.permute.xlu0 %5961
        %5965 = vset.pattern.permute.xlu0 0
        %5966 = vperm.xlu0 %5965, %v5643
        %v5967 = vpop.permute.xlu0 %5966
        %5970 = vset.pattern.permute.xlu0 0
        %5971 = vperm.xlu0 %5970, %v5644
        %v5972 = vpop.permute.xlu0 %5971
        %5975 = vset.pattern.permute.xlu0 0
        %5976 = vperm.xlu0 %5975, %v5645
        %v5977 = vpop.permute.xlu0 %5976
        %5980 = vset.pattern.permute.xlu0 0
        %5981 = vperm.xlu0 %5980, %v5646
        %v5982 = vpop.permute.xlu0 %5981
        %5985 = vset.pattern.permute.xlu0 0
        %5986 = vperm.xlu0 %5985, %v5647
        %v5987 = vpop.permute.xlu0 %5986
        %5990 = vset.pattern.permute.xlu0 0
        %5991 = vperm.xlu0 %5990, %v5648
        %v5992 = vpop.permute.xlu0 %5991
        %5995 = vset.pattern.permute.xlu0 0
        %5996 = vperm.xlu0 %5995, %v5649
        %v5997 = vpop.permute.xlu0 %5996
        %6000 = vset.pattern.permute.xlu0 0
        %6001 = vperm.xlu0 %6000, %v5650
        %v6002 = vpop.permute.xlu0 %6001
        %6005 = vset.pattern.permute.xlu0 0
        %6006 = vperm.xlu0 %6005, %v5651
        %v6007 = vpop.permute.xlu0 %6006
        %6010 = vset.pattern.permute.xlu0 0
        %6011 = vperm.xlu0 %6010, %v5652
        %v6012 = vpop.permute.xlu0 %6011
        %6015 = vset.pattern.permute.xlu0 0
        %6016 = vperm.xlu0 %6015, %v5653
        %v6017 = vpop.permute.xlu0 %6016
        %6020 = vset.pattern.permute.xlu0 0
        %6021 = vperm.xlu0 %6020, %v5654
        %v6022 = vpop.permute.xlu0 %6021
        %6025 = vset.pattern.permute.xlu0 0
        %6026 = vperm.xlu0 %6025, %v5655
        %v6027 = vpop.permute.xlu0 %6026
        %6030 = vset.pattern.permute.xlu0 0
        %6031 = vperm.xlu0 %6030, %v5656
        %v6032 = vpop.permute.xlu0 %6031
        %6035 = vset.pattern.permute.xlu0 0
        %6036 = vperm.xlu0 %6035, %v5657
        %v6037 = vpop.permute.xlu0 %6036
        %6040 = vset.pattern.permute.xlu0 0
        %6041 = vperm.xlu0 %6040, %v5658
        %v6042 = vpop.permute.xlu0 %6041
        %6045 = vset.pattern.permute.xlu0 0
        %6046 = vperm.xlu0 %6045, %v5659
        %v6047 = vpop.permute.xlu0 %6046
        %6050 = vset.pattern.permute.xlu0 0
        %6051 = vperm.xlu0 %6050, %v5660
        %v6052 = vpop.permute.xlu0 %6051
        %6055 = vset.pattern.permute.xlu0 0
        %6056 = vperm.xlu0 %6055, %v5661
        %v6057 = vpop.permute.xlu0 %6056
        %6060 = vset.pattern.permute.xlu0 0
        %6061 = vperm.xlu0 %6060, %v5662
        %v6062 = vpop.permute.xlu0 %6061
        %6065 = vset.pattern.permute.xlu0 0
        %6066 = vperm.xlu0 %6065, %v5663
        %v6067 = vpop.permute.xlu0 %6066
        %6070 = vset.pattern.permute.xlu0 0
        %6071 = vperm.xlu0 %6070, %v5664
        %v6072 = vpop.permute.xlu0 %6071
        %6075 = vset.pattern.permute.xlu0 0
        %6076 = vperm.xlu0 %6075, %v5665
        %v6077 = vpop.permute.xlu0 %6076
        %6080 = vset.pattern.permute.xlu0 0
        %6081 = vperm.xlu0 %6080, %v5666
        %v6082 = vpop.permute.xlu0 %6081
        %6085 = vset.pattern.permute.xlu0 0
        %6086 = vperm.xlu0 %6085, %v5667
        %v6087 = vpop.permute.xlu0 %6086
        %6090 = vset.pattern.permute.xlu0 0
        %6091 = vperm.xlu0 %6090, %v5668
        %v6092 = vpop.permute.xlu0 %6091
        %6095 = vset.pattern.permute.xlu0 0
        %6096 = vperm.xlu0 %6095, %v5669
        %v6097 = vpop.permute.xlu0 %6096
        %6100 = vset.pattern.permute.xlu0 0
        %6101 = vperm.xlu0 %6100, %v5670
        %v6102 = vpop.permute.xlu0 %6101
        %6105 = vset.pattern.permute.xlu0 0
        %6106 = vperm.xlu0 %6105, %v5671
        %v6107 = vpop.permute.xlu0 %6106
        %6110 = vset.pattern.permute.xlu0 0
        %6111 = vperm.xlu0 %6110, %v5672
        %v6112 = vpop.permute.xlu0 %6111
        %6115 = vset.pattern.permute.xlu0 0
        %6116 = vperm.xlu0 %6115, %v5673
        %v6117 = vpop.permute.xlu0 %6116
        %6120 = vset.pattern.permute.xlu0 0
        %6121 = vperm.xlu0 %6120, %v5674
        %v6122 = vpop.permute.xlu0 %6121
        %6125 = vset.pattern.permute.xlu0 0
        %6126 = vperm.xlu0 %6125, %v5675
        %v6127 = vpop.permute.xlu0 %6126
        %6130 = vset.pattern.permute.xlu0 0
        %6131 = vperm.xlu0 %6130, %v5676
        %v6132 = vpop.permute.xlu0 %6131
        %6135 = vset.pattern.permute.xlu0 0
        %6136 = vperm.xlu0 %6135, %v5677
        %v6137 = vpop.permute.xlu0 %6136
        %6140 = vset.pattern.permute.xlu0 0
        %6141 = vperm.xlu0 %6140, %v5678
        %v6142 = vpop.permute.xlu0 %6141
        %6145 = vset.pattern.permute.xlu0 0
        %6146 = vperm.xlu0 %6145, %v5679
        %v6147 = vpop.permute.xlu0 %6146
        %6150 = vset.pattern.permute.xlu0 0
        %6151 = vperm.xlu0 %6150, %v5680
        %v6152 = vpop.permute.xlu0 %6151
        %6155 = vset.pattern.permute.xlu0 0
        %6156 = vperm.xlu0 %6155, %v5681
        %v6157 = vpop.permute.xlu0 %6156
        %6160 = vset.pattern.permute.xlu0 0
        %6161 = vperm.xlu0 %6160, %v5682
        %v6162 = vpop.permute.xlu0 %6161
        %6165 = vset.pattern.permute.xlu0 0
        %6166 = vperm.xlu0 %6165, %v5683
        %v6167 = vpop.permute.xlu0 %6166
        %6170 = vset.pattern.permute.xlu0 0
        %6171 = vperm.xlu0 %6170, %v5684
        %v6172 = vpop.permute.xlu0 %6171
        %6175 = vset.pattern.permute.xlu0 0
        %6176 = vperm.xlu0 %6175, %v5685
        %v6177 = vpop.permute.xlu0 %6176
        %6180 = vset.pattern.permute.xlu0 0
        %6181 = vperm.xlu0 %6180, %v5686
        %v6182 = vpop.permute.xlu0 %6181
        %6185 = vset.pattern.permute.xlu0 0
        %6186 = vperm.xlu0 %6185, %v5687
        %v6187 = vpop.permute.xlu0 %6186
        %6190 = vset.pattern.permute.xlu0 0
        %6191 = vperm.xlu0 %6190, %v5688
        %v6192 = vpop.permute.xlu0 %6191
        %6195 = vset.pattern.permute.xlu0 0
        %6196 = vperm.xlu0 %6195, %v5689
        %v6197 = vpop.permute.xlu0 %6196
        %6200 = vset.pattern.permute.xlu0 0
        %6201 = vperm.xlu0 %6200, %v5690
        %v6202 = vpop.permute.xlu0 %6201
        %6205 = vset.pattern.permute.xlu0 0
        %6206 = vperm.xlu0 %6205, %v5691
        %v6207 = vpop.permute.xlu0 %6206
        %6210 = vset.pattern.permute.xlu0 0
        %6211 = vperm.xlu0 %6210, %v5692
        %v6212 = vpop.permute.xlu0 %6211
        %6215 = vset.pattern.permute.xlu0 0
        %6216 = vperm.xlu0 %6215, %v5693
        %v6217 = vpop.permute.xlu0 %6216
        %6220 = vset.pattern.permute.xlu0 0
        %6221 = vperm.xlu0 %6220, %v5694
        %v6222 = vpop.permute.xlu0 %6221
        %6225 = vset.pattern.permute.xlu0 0
        %6226 = vperm.xlu0 %6225, %v5695
        %v6227 = vpop.permute.xlu0 %6226
        %6230 = vset.pattern.permute.xlu0 0
        %6231 = vperm.xlu0 %6230, %v5696
        %v6232 = vpop.permute.xlu0 %6231
        %6235 = vset.pattern.permute.xlu0 0
        %6236 = vperm.xlu0 %6235, %v5697
        %v6237 = vpop.permute.xlu0 %6236
        %6240 = vset.pattern.permute.xlu0 0
        %6241 = vperm.xlu0 %6240, %v5698
        %v6242 = vpop.permute.xlu0 %6241
        %6245 = vset.pattern.permute.xlu0 0
        %6246 = vperm.xlu0 %6245, %v5699
        %v6247 = vpop.permute.xlu0 %6246
        %6250 = vset.pattern.permute.xlu0 0
        %6251 = vperm.xlu0 %6250, %v5700
        %v6252 = vpop.permute.xlu0 %6251
        %6255 = vset.pattern.permute.xlu0 0
        %6256 = vperm.xlu0 %6255, %v5701
        %v6257 = vpop.permute.xlu0 %6256
        %6260 = vset.pattern.permute.xlu0 0
        %6261 = vperm.xlu0 %6260, %v5702
        %v6262 = vpop.permute.xlu0 %6261
        %v6264 = vperm.slane %v5703, 0
        %v6265 = vmul.f32 %v5707, %v6264
        %v6266 = vmul.f32 %v5712, %v6264
        %v6267 = vmul.f32 %v5717, %v6264
        %v6268 = vmul.f32 %v5722, %v6264
        %v6269 = vmul.f32 %v5727, %v6264
        %v6270 = vmul.f32 %v5732, %v6264
        %v6271 = vmul.f32 %v5737, %v6264
        %v6272 = vmul.f32 %v5742, %v6264
        %v6273 = vmul.f32 %v5747, %v6264
        %v6274 = vmul.f32 %v5752, %v6264
        %v6275 = vmul.f32 %v5757, %v6264
        %v6276 = vmul.f32 %v5762, %v6264
        %v6277 = vmul.f32 %v5767, %v6264
        %v6278 = vmul.f32 %v5772, %v6264
        %v6279 = vmul.f32 %v5777, %v6264
        %v6280 = vmul.f32 %v5782, %v6264
        %v6281 = vmul.f32 %v5787, %v6264
        %v6282 = vmul.f32 %v5792, %v6264
        %v6283 = vmul.f32 %v5797, %v6264
        %v6284 = vmul.f32 %v5802, %v6264
        %v6285 = vmul.f32 %v5807, %v6264
        %v6286 = vmul.f32 %v5812, %v6264
        %v6287 = vmul.f32 %v5817, %v6264
        %v6288 = vmul.f32 %v5822, %v6264
        %v6289 = vmul.f32 %v5827, %v6264
        %v6290 = vmul.f32 %v5832, %v6264
        %v6291 = vmul.f32 %v5837, %v6264
        %v6292 = vmul.f32 %v5842, %v6264
        %v6293 = vmul.f32 %v5847, %v6264
        %v6294 = vmul.f32 %v5852, %v6264
        %v6295 = vmul.f32 %v5857, %v6264
        %v6296 = vmul.f32 %v5862, %v6264
        %v6297 = vmul.f32 %v5867, %v6264
        %v6298 = vmul.f32 %v5872, %v6264
        %v6299 = vmul.f32 %v5877, %v6264
        %v6300 = vmul.f32 %v5882, %v6264
        %v6301 = vmul.f32 %v5887, %v6264
        %v6302 = vmul.f32 %v5892, %v6264
        %v6303 = vmul.f32 %v5897, %v6264
        %v6304 = vmul.f32 %v5902, %v6264
        %v6305 = vmul.f32 %v5907, %v6264
        %v6306 = vmul.f32 %v5912, %v6264
        %v6307 = vmul.f32 %v5917, %v6264
        %v6308 = vmul.f32 %v5922, %v6264
        %v6309 = vmul.f32 %v5927, %v6264
        %v6310 = vmul.f32 %v5932, %v6264
        %v6311 = vmul.f32 %v5937, %v6264
        %v6312 = vmul.f32 %v5942, %v6264
        %v6313 = vmul.f32 %v5947, %v6264
        %v6314 = vmul.f32 %v5952, %v6264
        %v6315 = vmul.f32 %v5957, %v6264
        %v6316 = vmul.f32 %v5962, %v6264
        %v6317 = vmul.f32 %v5967, %v6264
        %v6318 = vmul.f32 %v5972, %v6264
        %v6319 = vmul.f32 %v5977, %v6264
        %v6320 = vmul.f32 %v5982, %v6264
        %v6321 = vmul.f32 %v5987, %v6264
        %v6322 = vmul.f32 %v5992, %v6264
        %v6323 = vmul.f32 %v5997, %v6264
        %v6324 = vmul.f32 %v6002, %v6264
        %v6325 = vmul.f32 %v6007, %v6264
        %v6326 = vmul.f32 %v6012, %v6264
        %v6327 = vmul.f32 %v6017, %v6264
        %v6328 = vmul.f32 %v6022, %v6264
        %v6329 = vmul.f32 %v6027, %v6264
        %v6330 = vmul.f32 %v6032, %v6264
        %v6331 = vmul.f32 %v6037, %v6264
        %v6332 = vmul.f32 %v6042, %v6264
        %v6333 = vmul.f32 %v6047, %v6264
        %v6334 = vmul.f32 %v6052, %v6264
        %v6335 = vmul.f32 %v6057, %v6264
        %v6336 = vmul.f32 %v6062, %v6264
        %v6337 = vmul.f32 %v6067, %v6264
        %v6338 = vmul.f32 %v6072, %v6264
        %v6339 = vmul.f32 %v6077, %v6264
        %v6340 = vmul.f32 %v6082, %v6264
        %v6341 = vmul.f32 %v6087, %v6264
        %v6342 = vmul.f32 %v6092, %v6264
        %v6343 = vmul.f32 %v6097, %v6264
        %v6344 = vmul.f32 %v6102, %v6264
        %v6345 = vmul.f32 %v6107, %v6264
        %v6346 = vmul.f32 %v6112, %v6264
        %v6347 = vmul.f32 %v6117, %v6264
        %v6348 = vmul.f32 %v6122, %v6264
        %v6349 = vmul.f32 %v6127, %v6264
        %v6350 = vmul.f32 %v6132, %v6264
        %v6351 = vmul.f32 %v6137, %v6264
        %v6352 = vmul.f32 %v6142, %v6264
        %v6353 = vmul.f32 %v6147, %v6264
        %v6354 = vmul.f32 %v6152, %v6264
        %v6355 = vmul.f32 %v6157, %v6264
        %v6356 = vmul.f32 %v6162, %v6264
        %v6357 = vmul.f32 %v6167, %v6264
        %v6358 = vmul.f32 %v6172, %v6264
        %v6359 = vmul.f32 %v6177, %v6264
        %v6360 = vmul.f32 %v6182, %v6264
        %v6361 = vmul.f32 %v6187, %v6264
        %v6362 = vmul.f32 %v6192, %v6264
        %v6363 = vmul.f32 %v6197, %v6264
        %v6364 = vmul.f32 %v6202, %v6264
        %v6365 = vmul.f32 %v6207, %v6264
        %v6366 = vmul.f32 %v6212, %v6264
        %v6367 = vmul.f32 %v6217, %v6264
        %v6368 = vmul.f32 %v6222, %v6264
        %v6369 = vmul.f32 %v6227, %v6264
        %v6370 = vmul.f32 %v6232, %v6264
        %v6371 = vmul.f32 %v6237, %v6264
        %v6372 = vmul.f32 %v6242, %v6264
        %v6373 = vmul.f32 %v6247, %v6264
        %v6374 = vmul.f32 %v6252, %v6264
        %v6375 = vmul.f32 %v6257, %v6264
        %v6376 = vmul.f32 %v6262, %v6264
        %v6377 = vadd.f32 %v5479, %v6265
        %v6378 = vadd.f32 %v5480, %v6266
        %v6379 = vadd.f32 %v5481, %v6267
        %v6380 = vadd.f32 %v5482, %v6268
        %v6381 = vadd.f32 %v5483, %v6269
        %v6382 = vadd.f32 %v5484, %v6270
        %v6383 = vadd.f32 %v5485, %v6271
        %v6384 = vadd.f32 %v5486, %v6272
        %v6385 = vadd.f32 %v5487, %v6273
        %v6386 = vadd.f32 %v5488, %v6274
        %v6387 = vadd.f32 %v5489, %v6275
        %v6388 = vadd.f32 %v5490, %v6276
        %v6389 = vadd.f32 %v5491, %v6277
        %v6390 = vadd.f32 %v5492, %v6278
        %v6391 = vadd.f32 %v5493, %v6279
        %v6392 = vadd.f32 %v5494, %v6280
        %v6393 = vadd.f32 %v5495, %v6281
        %v6394 = vadd.f32 %v5496, %v6282
        %v6395 = vadd.f32 %v5497, %v6283
        %v6396 = vadd.f32 %v5498, %v6284
        %v6397 = vadd.f32 %v5499, %v6285
        %v6398 = vadd.f32 %v5500, %v6286
        %v6399 = vadd.f32 %v5501, %v6287
        %v6400 = vadd.f32 %v5502, %v6288
        %v6401 = vadd.f32 %v5503, %v6289
        %v6402 = vadd.f32 %v5504, %v6290
        %v6403 = vadd.f32 %v5505, %v6291
        %v6404 = vadd.f32 %v5506, %v6292
        %v6405 = vadd.f32 %v5507, %v6293
        %v6406 = vadd.f32 %v5508, %v6294
        %v6407 = vadd.f32 %v5509, %v6295
        %v6408 = vadd.f32 %v5510, %v6296
        %v6409 = vadd.f32 %v5511, %v6297
        %v6410 = vadd.f32 %v5512, %v6298
        %v6411 = vadd.f32 %v5513, %v6299
        %v6412 = vadd.f32 %v5514, %v6300
        %v6413 = vadd.f32 %v5515, %v6301
        %v6414 = vadd.f32 %v5516, %v6302
        %v6415 = vadd.f32 %v5517, %v6303
        %v6416 = vadd.f32 %v5518, %v6304
        %v6417 = vadd.f32 %v5519, %v6305
        %v6418 = vadd.f32 %v5520, %v6306
        %v6419 = vadd.f32 %v5521, %v6307
        %v6420 = vadd.f32 %v5522, %v6308
        %v6421 = vadd.f32 %v5523, %v6309
        %v6422 = vadd.f32 %v5524, %v6310
        %v6423 = vadd.f32 %v5525, %v6311
        %v6424 = vadd.f32 %v5526, %v6312
        %v6425 = vadd.f32 %v5527, %v6313
        %v6426 = vadd.f32 %v5528, %v6314
        %v6427 = vadd.f32 %v5529, %v6315
        %v6428 = vadd.f32 %v5530, %v6316
        %v6429 = vadd.f32 %v5531, %v6317
        %v6430 = vadd.f32 %v5532, %v6318
        %v6431 = vadd.f32 %v5533, %v6319
        %v6432 = vadd.f32 %v5534, %v6320
        %v6433 = vadd.f32 %v5535, %v6321
        %v6434 = vadd.f32 %v5536, %v6322
        %v6435 = vadd.f32 %v5537, %v6323
        %v6436 = vadd.f32 %v5538, %v6324
        %v6437 = vadd.f32 %v5539, %v6325
        %v6438 = vadd.f32 %v5540, %v6326
        %v6439 = vadd.f32 %v5541, %v6327
        %v6440 = vadd.f32 %v5542, %v6328
        %v6441 = vadd.f32 %v5543, %v6329
        %v6442 = vadd.f32 %v5544, %v6330
        %v6443 = vadd.f32 %v5545, %v6331
        %v6444 = vadd.f32 %v5546, %v6332
        %v6445 = vadd.f32 %v5547, %v6333
        %v6446 = vadd.f32 %v5548, %v6334
        %v6447 = vadd.f32 %v5549, %v6335
        %v6448 = vadd.f32 %v5550, %v6336
        %v6449 = vadd.f32 %v5551, %v6337
        %v6450 = vadd.f32 %v5552, %v6338
        %v6451 = vadd.f32 %v5553, %v6339
        %v6452 = vadd.f32 %v5554, %v6340
        %v6453 = vadd.f32 %v5555, %v6341
        %v6454 = vadd.f32 %v5556, %v6342
        %v6455 = vadd.f32 %v5557, %v6343
        %v6456 = vadd.f32 %v5558, %v6344
        %v6457 = vadd.f32 %v5559, %v6345
        %v6458 = vadd.f32 %v5560, %v6346
        %v6459 = vadd.f32 %v5561, %v6347
        %v6460 = vadd.f32 %v5562, %v6348
        %v6461 = vadd.f32 %v5563, %v6349
        %v6462 = vadd.f32 %v5564, %v6350
        %v6463 = vadd.f32 %v5565, %v6351
        %v6464 = vadd.f32 %v5566, %v6352
        %v6465 = vadd.f32 %v5567, %v6353
        %v6466 = vadd.f32 %v5568, %v6354
        %v6467 = vadd.f32 %v5569, %v6355
        %v6468 = vadd.f32 %v5570, %v6356
        %v6469 = vadd.f32 %v5571, %v6357
        %v6470 = vadd.f32 %v5572, %v6358
        %v6471 = vadd.f32 %v5573, %v6359
        %v6472 = vadd.f32 %v5574, %v6360
        %v6473 = vadd.f32 %v5575, %v6361
        %v6474 = vadd.f32 %v5576, %v6362
        %v6475 = vadd.f32 %v5577, %v6363
        %v6476 = vadd.f32 %v5578, %v6364
        %v6477 = vadd.f32 %v5579, %v6365
        %v6478 = vadd.f32 %v5580, %v6366
        %v6479 = vadd.f32 %v5581, %v6367
        %v6480 = vadd.f32 %v5582, %v6368
        %v6481 = vadd.f32 %v5583, %v6369
        %v6482 = vadd.f32 %v5584, %v6370
        %v6483 = vadd.f32 %v5585, %v6371
        %v6484 = vadd.f32 %v5586, %v6372
        %v6485 = vadd.f32 %v5587, %v6373
        %v6486 = vadd.f32 %v5588, %v6374
        %v6487 = vadd.f32 %v5589, %v6375
        %v6488 = vadd.f32 %v5590, %v6376
        %v6489 = vld [vmem:[%s197 + $0x41] sm:$0xff]
        %v6490 = vld [vmem:[%s197 + $0x49] sm:$0xff]
        %v6491 = vld [vmem:[%s197 + $0x51] sm:$0xff]
        %v6492 = vld [vmem:[%s197 + $0x59] sm:$0xff]
        %v6493 = vld [vmem:[%s197 + $0x61] sm:$0xff]
        %v6494 = vld [vmem:[%s197 + $0x69] sm:$0xff]
        %v6495 = vld [vmem:[%s197 + $0x71] sm:$0xff]
        %v6496 = vld [vmem:[%s197 + $0x79] sm:$0xff]
        %v6497 = vld [vmem:[%s197 + $0x81] sm:$0xff]
        %v6498 = vld [vmem:[%s197 + $0x89] sm:$0xff]
        %v6499 = vld [vmem:[%s197 + $0x91] sm:$0xff]
        %v6500 = vld [vmem:[%s197 + $0x99] sm:$0xff]
        %v6501 = vld [vmem:[%s197 + $0xa1] sm:$0xff]
        %v6502 = vld [vmem:[%s197 + $0xa9] sm:$0xff]
        %v6503 = vld [vmem:[%s197 + $0xb1] sm:$0xff]
        %v6504 = vld [vmem:[%s197 + $0xb9] sm:$0xff]
        %v6505 = vld [vmem:[%s197 + $0xc1] sm:$0xff]
        %v6506 = vld [vmem:[%s197 + $0xc9] sm:$0xff]
        %v6507 = vld [vmem:[%s197 + $0xd1] sm:$0xff]
        %v6508 = vld [vmem:[%s197 + $0xd9] sm:$0xff]
        %v6509 = vld [vmem:[%s197 + $0xe1] sm:$0xff]
        %v6510 = vld [vmem:[%s197 + $0xe9] sm:$0xff]
        %v6511 = vld [vmem:[%s197 + $0xf1] sm:$0xff]
        %v6512 = vld [vmem:[%s197 + $0xf9] sm:$0xff]
        %v6513 = vld [vmem:[%s197 + $0x101] sm:$0xff]
        %v6514 = vld [vmem:[%s197 + $0x109] sm:$0xff]
        %v6515 = vld [vmem:[%s197 + $0x111] sm:$0xff]
        %v6516 = vld [vmem:[%s197 + $0x119] sm:$0xff]
        %v6517 = vld [vmem:[%s197 + $0x121] sm:$0xff]
        %v6518 = vld [vmem:[%s197 + $0x129] sm:$0xff]
        %v6519 = vld [vmem:[%s197 + $0x131] sm:$0xff]
        %v6520 = vld [vmem:[%s197 + $0x139] sm:$0xff]
        %v6521 = vld [vmem:[%s197 + $0x141] sm:$0xff]
        %v6522 = vld [vmem:[%s197 + $0x149] sm:$0xff]
        %v6523 = vld [vmem:[%s197 + $0x151] sm:$0xff]
        %v6524 = vld [vmem:[%s197 + $0x159] sm:$0xff]
        %v6525 = vld [vmem:[%s197 + $0x161] sm:$0xff]
        %v6526 = vld [vmem:[%s197 + $0x169] sm:$0xff]
        %v6527 = vld [vmem:[%s197 + $0x171] sm:$0xff]
        %v6528 = vld [vmem:[%s197 + $0x179] sm:$0xff]
        %v6529 = vld [vmem:[%s197 + $0x181] sm:$0xff]
        %v6530 = vld [vmem:[%s197 + $0x189] sm:$0xff]
        %v6531 = vld [vmem:[%s197 + $0x191] sm:$0xff]
        %v6532 = vld [vmem:[%s197 + $0x199] sm:$0xff]
        %v6533 = vld [vmem:[%s197 + $0x1a1] sm:$0xff]
        %v6534 = vld [vmem:[%s197 + $0x1a9] sm:$0xff]
        %v6535 = vld [vmem:[%s197 + $0x1b1] sm:$0xff]
        %v6536 = vld [vmem:[%s197 + $0x1b9] sm:$0xff]
        %v6537 = vld [vmem:[%s197 + $0x1c1] sm:$0xff]
        %v6538 = vld [vmem:[%s197 + $0x1c9] sm:$0xff]
        %v6539 = vld [vmem:[%s197 + $0x1d1] sm:$0xff]
        %v6540 = vld [vmem:[%s197 + $0x1d9] sm:$0xff]
        %v6541 = vld [vmem:[%s197 + $0x1e1] sm:$0xff]
        %v6542 = vld [vmem:[%s197 + $0x1e9] sm:$0xff]
        %v6543 = vld [vmem:[%s197 + $0x1f1] sm:$0xff]
        %v6544 = vld [vmem:[%s197 + $0x1f9] sm:$0xff]
        %v6545 = vld [vmem:[%s197 + $0x201] sm:$0xff]
        %v6546 = vld [vmem:[%s197 + $0x209] sm:$0xff]
        %v6547 = vld [vmem:[%s197 + $0x211] sm:$0xff]
        %v6548 = vld [vmem:[%s197 + $0x219] sm:$0xff]
        %v6549 = vld [vmem:[%s197 + $0x221] sm:$0xff]
        %v6550 = vld [vmem:[%s197 + $0x229] sm:$0xff]
        %v6551 = vld [vmem:[%s197 + $0x231] sm:$0xff]
        %v6552 = vld [vmem:[%s197 + $0x239] sm:$0xff]
        %v6553 = vld [vmem:[%s197 + $0x241] sm:$0xff]
        %v6554 = vld [vmem:[%s197 + $0x249] sm:$0xff]
        %v6555 = vld [vmem:[%s197 + $0x251] sm:$0xff]
        %v6556 = vld [vmem:[%s197 + $0x259] sm:$0xff]
        %v6557 = vld [vmem:[%s197 + $0x261] sm:$0xff]
        %v6558 = vld [vmem:[%s197 + $0x269] sm:$0xff]
        %v6559 = vld [vmem:[%s197 + $0x271] sm:$0xff]
        %v6560 = vld [vmem:[%s197 + $0x279] sm:$0xff]
        %v6561 = vld [vmem:[%s197 + $0x281] sm:$0xff]
        %v6562 = vld [vmem:[%s197 + $0x289] sm:$0xff]
        %v6563 = vld [vmem:[%s197 + $0x291] sm:$0xff]
        %v6564 = vld [vmem:[%s197 + $0x299] sm:$0xff]
        %v6565 = vld [vmem:[%s197 + $0x2a1] sm:$0xff]
        %v6566 = vld [vmem:[%s197 + $0x2a9] sm:$0xff]
        %v6567 = vld [vmem:[%s197 + $0x2b1] sm:$0xff]
        %v6568 = vld [vmem:[%s197 + $0x2b9] sm:$0xff]
        %v6569 = vld [vmem:[%s197 + $0x2c1] sm:$0xff]
        %v6570 = vld [vmem:[%s197 + $0x2c9] sm:$0xff]
        %v6571 = vld [vmem:[%s197 + $0x2d1] sm:$0xff]
        %v6572 = vld [vmem:[%s197 + $0x2d9] sm:$0xff]
        %v6573 = vld [vmem:[%s197 + $0x2e1] sm:$0xff]
        %v6574 = vld [vmem:[%s197 + $0x2e9] sm:$0xff]
        %v6575 = vld [vmem:[%s197 + $0x2f1] sm:$0xff]
        %v6576 = vld [vmem:[%s197 + $0x2f9] sm:$0xff]
        %v6577 = vld [vmem:[%s197 + $0x301] sm:$0xff]
        %v6578 = vld [vmem:[%s197 + $0x309] sm:$0xff]
        %v6579 = vld [vmem:[%s197 + $0x311] sm:$0xff]
        %v6580 = vld [vmem:[%s197 + $0x319] sm:$0xff]
        %v6581 = vld [vmem:[%s197 + $0x321] sm:$0xff]
        %v6582 = vld [vmem:[%s197 + $0x329] sm:$0xff]
        %v6583 = vld [vmem:[%s197 + $0x331] sm:$0xff]
        %v6584 = vld [vmem:[%s197 + $0x339] sm:$0xff]
        %v6585 = vld [vmem:[%s197 + $0x341] sm:$0xff]
        %v6586 = vld [vmem:[%s197 + $0x349] sm:$0xff]
        %v6587 = vld [vmem:[%s197 + $0x351] sm:$0xff]
        %v6588 = vld [vmem:[%s197 + $0x359] sm:$0xff]
        %v6589 = vld [vmem:[%s197 + $0x361] sm:$0xff]
        %v6590 = vld [vmem:[%s197 + $0x369] sm:$0xff]
        %v6591 = vld [vmem:[%s197 + $0x371] sm:$0xff]
        %v6592 = vld [vmem:[%s197 + $0x379] sm:$0xff]
        %v6593 = vld [vmem:[%s197 + $0x381] sm:$0xff]
        %v6594 = vld [vmem:[%s197 + $0x389] sm:$0xff]
        %v6595 = vld [vmem:[%s197 + $0x391] sm:$0xff]
        %v6596 = vld [vmem:[%s197 + $0x399] sm:$0xff]
        %v6597 = vld [vmem:[%s197 + $0x3a1] sm:$0xff]
        %v6598 = vld [vmem:[%s197 + $0x3a9] sm:$0xff]
        %v6599 = vld [vmem:[%s197 + $0x3b1] sm:$0xff]
        %v6600 = vld [vmem:[%s197 + $0x3b9] sm:$0xff]
        %v6601 = vld [vmem:[#allocation3 + $0x7] sm:$0x1]
        %6603 = vset.pattern.permute.xlu0 0
        %6604 = vperm.xlu0 %6603, %v6489
        %v6605 = vpop.permute.xlu0 %6604
        %6608 = vset.pattern.permute.xlu0 0
        %6609 = vperm.xlu0 %6608, %v6490
        %v6610 = vpop.permute.xlu0 %6609
        %6613 = vset.pattern.permute.xlu0 0
        %6614 = vperm.xlu0 %6613, %v6491
        %v6615 = vpop.permute.xlu0 %6614
        %6618 = vset.pattern.permute.xlu0 0
        %6619 = vperm.xlu0 %6618, %v6492
        %v6620 = vpop.permute.xlu0 %6619
        %6623 = vset.pattern.permute.xlu0 0
        %6624 = vperm.xlu0 %6623, %v6493
        %v6625 = vpop.permute.xlu0 %6624
        %6628 = vset.pattern.permute.xlu0 0
        %6629 = vperm.xlu0 %6628, %v6494
        %v6630 = vpop.permute.xlu0 %6629
        %6633 = vset.pattern.permute.xlu0 0
        %6634 = vperm.xlu0 %6633, %v6495
        %v6635 = vpop.permute.xlu0 %6634
        %6638 = vset.pattern.permute.xlu0 0
        %6639 = vperm.xlu0 %6638, %v6496
        %v6640 = vpop.permute.xlu0 %6639
        %6643 = vset.pattern.permute.xlu0 0
        %6644 = vperm.xlu0 %6643, %v6497
        %v6645 = vpop.permute.xlu0 %6644
        %6648 = vset.pattern.permute.xlu0 0
        %6649 = vperm.xlu0 %6648, %v6498
        %v6650 = vpop.permute.xlu0 %6649
        %6653 = vset.pattern.permute.xlu0 0
        %6654 = vperm.xlu0 %6653, %v6499
        %v6655 = vpop.permute.xlu0 %6654
        %6658 = vset.pattern.permute.xlu0 0
        %6659 = vperm.xlu0 %6658, %v6500
        %v6660 = vpop.permute.xlu0 %6659
        %6663 = vset.pattern.permute.xlu0 0
        %6664 = vperm.xlu0 %6663, %v6501
        %v6665 = vpop.permute.xlu0 %6664
        %6668 = vset.pattern.permute.xlu0 0
        %6669 = vperm.xlu0 %6668, %v6502
        %v6670 = vpop.permute.xlu0 %6669
        %6673 = vset.pattern.permute.xlu0 0
        %6674 = vperm.xlu0 %6673, %v6503
        %v6675 = vpop.permute.xlu0 %6674
        %6678 = vset.pattern.permute.xlu0 0
        %6679 = vperm.xlu0 %6678, %v6504
        %v6680 = vpop.permute.xlu0 %6679
        %6683 = vset.pattern.permute.xlu0 0
        %6684 = vperm.xlu0 %6683, %v6505
        %v6685 = vpop.permute.xlu0 %6684
        %6688 = vset.pattern.permute.xlu0 0
        %6689 = vperm.xlu0 %6688, %v6506
        %v6690 = vpop.permute.xlu0 %6689
        %6693 = vset.pattern.permute.xlu0 0
        %6694 = vperm.xlu0 %6693, %v6507
        %v6695 = vpop.permute.xlu0 %6694
        %6698 = vset.pattern.permute.xlu0 0
        %6699 = vperm.xlu0 %6698, %v6508
        %v6700 = vpop.permute.xlu0 %6699
        %6703 = vset.pattern.permute.xlu0 0
        %6704 = vperm.xlu0 %6703, %v6509
        %v6705 = vpop.permute.xlu0 %6704
        %6708 = vset.pattern.permute.xlu0 0
        %6709 = vperm.xlu0 %6708, %v6510
        %v6710 = vpop.permute.xlu0 %6709
        %6713 = vset.pattern.permute.xlu0 0
        %6714 = vperm.xlu0 %6713, %v6511
        %v6715 = vpop.permute.xlu0 %6714
        %6718 = vset.pattern.permute.xlu0 0
        %6719 = vperm.xlu0 %6718, %v6512
        %v6720 = vpop.permute.xlu0 %6719
        %6723 = vset.pattern.permute.xlu0 0
        %6724 = vperm.xlu0 %6723, %v6513
        %v6725 = vpop.permute.xlu0 %6724
        %6728 = vset.pattern.permute.xlu0 0
        %6729 = vperm.xlu0 %6728, %v6514
        %v6730 = vpop.permute.xlu0 %6729
        %6733 = vset.pattern.permute.xlu0 0
        %6734 = vperm.xlu0 %6733, %v6515
        %v6735 = vpop.permute.xlu0 %6734
        %6738 = vset.pattern.permute.xlu0 0
        %6739 = vperm.xlu0 %6738, %v6516
        %v6740 = vpop.permute.xlu0 %6739
        %6743 = vset.pattern.permute.xlu0 0
        %6744 = vperm.xlu0 %6743, %v6517
        %v6745 = vpop.permute.xlu0 %6744
        %6748 = vset.pattern.permute.xlu0 0
        %6749 = vperm.xlu0 %6748, %v6518
        %v6750 = vpop.permute.xlu0 %6749
        %6753 = vset.pattern.permute.xlu0 0
        %6754 = vperm.xlu0 %6753, %v6519
        %v6755 = vpop.permute.xlu0 %6754
        %6758 = vset.pattern.permute.xlu0 0
        %6759 = vperm.xlu0 %6758, %v6520
        %v6760 = vpop.permute.xlu0 %6759
        %6763 = vset.pattern.permute.xlu0 0
        %6764 = vperm.xlu0 %6763, %v6521
        %v6765 = vpop.permute.xlu0 %6764
        %6768 = vset.pattern.permute.xlu0 0
        %6769 = vperm.xlu0 %6768, %v6522
        %v6770 = vpop.permute.xlu0 %6769
        %6773 = vset.pattern.permute.xlu0 0
        %6774 = vperm.xlu0 %6773, %v6523
        %v6775 = vpop.permute.xlu0 %6774
        %6778 = vset.pattern.permute.xlu0 0
        %6779 = vperm.xlu0 %6778, %v6524
        %v6780 = vpop.permute.xlu0 %6779
        %6783 = vset.pattern.permute.xlu0 0
        %6784 = vperm.xlu0 %6783, %v6525
        %v6785 = vpop.permute.xlu0 %6784
        %6788 = vset.pattern.permute.xlu0 0
        %6789 = vperm.xlu0 %6788, %v6526
        %v6790 = vpop.permute.xlu0 %6789
        %6793 = vset.pattern.permute.xlu0 0
        %6794 = vperm.xlu0 %6793, %v6527
        %v6795 = vpop.permute.xlu0 %6794
        %6798 = vset.pattern.permute.xlu0 0
        %6799 = vperm.xlu0 %6798, %v6528
        %v6800 = vpop.permute.xlu0 %6799
        %6803 = vset.pattern.permute.xlu0 0
        %6804 = vperm.xlu0 %6803, %v6529
        %v6805 = vpop.permute.xlu0 %6804
        %6808 = vset.pattern.permute.xlu0 0
        %6809 = vperm.xlu0 %6808, %v6530
        %v6810 = vpop.permute.xlu0 %6809
        %6813 = vset.pattern.permute.xlu0 0
        %6814 = vperm.xlu0 %6813, %v6531
        %v6815 = vpop.permute.xlu0 %6814
        %6818 = vset.pattern.permute.xlu0 0
        %6819 = vperm.xlu0 %6818, %v6532
        %v6820 = vpop.permute.xlu0 %6819
        %6823 = vset.pattern.permute.xlu0 0
        %6824 = vperm.xlu0 %6823, %v6533
        %v6825 = vpop.permute.xlu0 %6824
        %6828 = vset.pattern.permute.xlu0 0
        %6829 = vperm.xlu0 %6828, %v6534
        %v6830 = vpop.permute.xlu0 %6829
        %6833 = vset.pattern.permute.xlu0 0
        %6834 = vperm.xlu0 %6833, %v6535
        %v6835 = vpop.permute.xlu0 %6834
        %6838 = vset.pattern.permute.xlu0 0
        %6839 = vperm.xlu0 %6838, %v6536
        %v6840 = vpop.permute.xlu0 %6839
        %6843 = vset.pattern.permute.xlu0 0
        %6844 = vperm.xlu0 %6843, %v6537
        %v6845 = vpop.permute.xlu0 %6844
        %6848 = vset.pattern.permute.xlu0 0
        %6849 = vperm.xlu0 %6848, %v6538
        %v6850 = vpop.permute.xlu0 %6849
        %6853 = vset.pattern.permute.xlu0 0
        %6854 = vperm.xlu0 %6853, %v6539
        %v6855 = vpop.permute.xlu0 %6854
        %6858 = vset.pattern.permute.xlu0 0
        %6859 = vperm.xlu0 %6858, %v6540
        %v6860 = vpop.permute.xlu0 %6859
        %6863 = vset.pattern.permute.xlu0 0
        %6864 = vperm.xlu0 %6863, %v6541
        %v6865 = vpop.permute.xlu0 %6864
        %6868 = vset.pattern.permute.xlu0 0
        %6869 = vperm.xlu0 %6868, %v6542
        %v6870 = vpop.permute.xlu0 %6869
        %6873 = vset.pattern.permute.xlu0 0
        %6874 = vperm.xlu0 %6873, %v6543
        %v6875 = vpop.permute.xlu0 %6874
        %6878 = vset.pattern.permute.xlu0 0
        %6879 = vperm.xlu0 %6878, %v6544
        %v6880 = vpop.permute.xlu0 %6879
        %6883 = vset.pattern.permute.xlu0 0
        %6884 = vperm.xlu0 %6883, %v6545
        %v6885 = vpop.permute.xlu0 %6884
        %6888 = vset.pattern.permute.xlu0 0
        %6889 = vperm.xlu0 %6888, %v6546
        %v6890 = vpop.permute.xlu0 %6889
        %6893 = vset.pattern.permute.xlu0 0
        %6894 = vperm.xlu0 %6893, %v6547
        %v6895 = vpop.permute.xlu0 %6894
        %6898 = vset.pattern.permute.xlu0 0
        %6899 = vperm.xlu0 %6898, %v6548
        %v6900 = vpop.permute.xlu0 %6899
        %6903 = vset.pattern.permute.xlu0 0
        %6904 = vperm.xlu0 %6903, %v6549
        %v6905 = vpop.permute.xlu0 %6904
        %6908 = vset.pattern.permute.xlu0 0
        %6909 = vperm.xlu0 %6908, %v6550
        %v6910 = vpop.permute.xlu0 %6909
        %6913 = vset.pattern.permute.xlu0 0
        %6914 = vperm.xlu0 %6913, %v6551
        %v6915 = vpop.permute.xlu0 %6914
        %6918 = vset.pattern.permute.xlu0 0
        %6919 = vperm.xlu0 %6918, %v6552
        %v6920 = vpop.permute.xlu0 %6919
        %6923 = vset.pattern.permute.xlu0 0
        %6924 = vperm.xlu0 %6923, %v6553
        %v6925 = vpop.permute.xlu0 %6924
        %6928 = vset.pattern.permute.xlu0 0
        %6929 = vperm.xlu0 %6928, %v6554
        %v6930 = vpop.permute.xlu0 %6929
        %6933 = vset.pattern.permute.xlu0 0
        %6934 = vperm.xlu0 %6933, %v6555
        %v6935 = vpop.permute.xlu0 %6934
        %6938 = vset.pattern.permute.xlu0 0
        %6939 = vperm.xlu0 %6938, %v6556
        %v6940 = vpop.permute.xlu0 %6939
        %6943 = vset.pattern.permute.xlu0 0
        %6944 = vperm.xlu0 %6943, %v6557
        %v6945 = vpop.permute.xlu0 %6944
        %6948 = vset.pattern.permute.xlu0 0
        %6949 = vperm.xlu0 %6948, %v6558
        %v6950 = vpop.permute.xlu0 %6949
        %6953 = vset.pattern.permute.xlu0 0
        %6954 = vperm.xlu0 %6953, %v6559
        %v6955 = vpop.permute.xlu0 %6954
        %6958 = vset.pattern.permute.xlu0 0
        %6959 = vperm.xlu0 %6958, %v6560
        %v6960 = vpop.permute.xlu0 %6959
        %6963 = vset.pattern.permute.xlu0 0
        %6964 = vperm.xlu0 %6963, %v6561
        %v6965 = vpop.permute.xlu0 %6964
        %6968 = vset.pattern.permute.xlu0 0
        %6969 = vperm.xlu0 %6968, %v6562
        %v6970 = vpop.permute.xlu0 %6969
        %6973 = vset.pattern.permute.xlu0 0
        %6974 = vperm.xlu0 %6973, %v6563
        %v6975 = vpop.permute.xlu0 %6974
        %6978 = vset.pattern.permute.xlu0 0
        %6979 = vperm.xlu0 %6978, %v6564
        %v6980 = vpop.permute.xlu0 %6979
        %6983 = vset.pattern.permute.xlu0 0
        %6984 = vperm.xlu0 %6983, %v6565
        %v6985 = vpop.permute.xlu0 %6984
        %6988 = vset.pattern.permute.xlu0 0
        %6989 = vperm.xlu0 %6988, %v6566
        %v6990 = vpop.permute.xlu0 %6989
        %6993 = vset.pattern.permute.xlu0 0
        %6994 = vperm.xlu0 %6993, %v6567
        %v6995 = vpop.permute.xlu0 %6994
        %6998 = vset.pattern.permute.xlu0 0
        %6999 = vperm.xlu0 %6998, %v6568
        %v7000 = vpop.permute.xlu0 %6999
        %7003 = vset.pattern.permute.xlu0 0
        %7004 = vperm.xlu0 %7003, %v6569
        %v7005 = vpop.permute.xlu0 %7004
        %7008 = vset.pattern.permute.xlu0 0
        %7009 = vperm.xlu0 %7008, %v6570
        %v7010 = vpop.permute.xlu0 %7009
        %7013 = vset.pattern.permute.xlu0 0
        %7014 = vperm.xlu0 %7013, %v6571
        %v7015 = vpop.permute.xlu0 %7014
        %7018 = vset.pattern.permute.xlu0 0
        %7019 = vperm.xlu0 %7018, %v6572
        %v7020 = vpop.permute.xlu0 %7019
        %7023 = vset.pattern.permute.xlu0 0
        %7024 = vperm.xlu0 %7023, %v6573
        %v7025 = vpop.permute.xlu0 %7024
        %7028 = vset.pattern.permute.xlu0 0
        %7029 = vperm.xlu0 %7028, %v6574
        %v7030 = vpop.permute.xlu0 %7029
        %7033 = vset.pattern.permute.xlu0 0
        %7034 = vperm.xlu0 %7033, %v6575
        %v7035 = vpop.permute.xlu0 %7034
        %7038 = vset.pattern.permute.xlu0 0
        %7039 = vperm.xlu0 %7038, %v6576
        %v7040 = vpop.permute.xlu0 %7039
        %7043 = vset.pattern.permute.xlu0 0
        %7044 = vperm.xlu0 %7043, %v6577
        %v7045 = vpop.permute.xlu0 %7044
        %7048 = vset.pattern.permute.xlu0 0
        %7049 = vperm.xlu0 %7048, %v6578
        %v7050 = vpop.permute.xlu0 %7049
        %7053 = vset.pattern.permute.xlu0 0
        %7054 = vperm.xlu0 %7053, %v6579
        %v7055 = vpop.permute.xlu0 %7054
        %7058 = vset.pattern.permute.xlu0 0
        %7059 = vperm.xlu0 %7058, %v6580
        %v7060 = vpop.permute.xlu0 %7059
        %7063 = vset.pattern.permute.xlu0 0
        %7064 = vperm.xlu0 %7063, %v6581
        %v7065 = vpop.permute.xlu0 %7064
        %7068 = vset.pattern.permute.xlu0 0
        %7069 = vperm.xlu0 %7068, %v6582
        %v7070 = vpop.permute.xlu0 %7069
        %7073 = vset.pattern.permute.xlu0 0
        %7074 = vperm.xlu0 %7073, %v6583
        %v7075 = vpop.permute.xlu0 %7074
        %7078 = vset.pattern.permute.xlu0 0
        %7079 = vperm.xlu0 %7078, %v6584
        %v7080 = vpop.permute.xlu0 %7079
        %7083 = vset.pattern.permute.xlu0 0
        %7084 = vperm.xlu0 %7083, %v6585
        %v7085 = vpop.permute.xlu0 %7084
        %7088 = vset.pattern.permute.xlu0 0
        %7089 = vperm.xlu0 %7088, %v6586
        %v7090 = vpop.permute.xlu0 %7089
        %7093 = vset.pattern.permute.xlu0 0
        %7094 = vperm.xlu0 %7093, %v6587
        %v7095 = vpop.permute.xlu0 %7094
        %7098 = vset.pattern.permute.xlu0 0
        %7099 = vperm.xlu0 %7098, %v6588
        %v7100 = vpop.permute.xlu0 %7099
        %7103 = vset.pattern.permute.xlu0 0
        %7104 = vperm.xlu0 %7103, %v6589
        %v7105 = vpop.permute.xlu0 %7104
        %7108 = vset.pattern.permute.xlu0 0
        %7109 = vperm.xlu0 %7108, %v6590
        %v7110 = vpop.permute.xlu0 %7109
        %7113 = vset.pattern.permute.xlu0 0
        %7114 = vperm.xlu0 %7113, %v6591
        %v7115 = vpop.permute.xlu0 %7114
        %7118 = vset.pattern.permute.xlu0 0
        %7119 = vperm.xlu0 %7118, %v6592
        %v7120 = vpop.permute.xlu0 %7119
        %7123 = vset.pattern.permute.xlu0 0
        %7124 = vperm.xlu0 %7123, %v6593
        %v7125 = vpop.permute.xlu0 %7124
        %7128 = vset.pattern.permute.xlu0 0
        %7129 = vperm.xlu0 %7128, %v6594
        %v7130 = vpop.permute.xlu0 %7129
        %7133 = vset.pattern.permute.xlu0 0
        %7134 = vperm.xlu0 %7133, %v6595
        %v7135 = vpop.permute.xlu0 %7134
        %7138 = vset.pattern.permute.xlu0 0
        %7139 = vperm.xlu0 %7138, %v6596
        %v7140 = vpop.permute.xlu0 %7139
        %7143 = vset.pattern.permute.xlu0 0
        %7144 = vperm.xlu0 %7143, %v6597
        %v7145 = vpop.permute.xlu0 %7144
        %7148 = vset.pattern.permute.xlu0 0
        %7149 = vperm.xlu0 %7148, %v6598
        %v7150 = vpop.permute.xlu0 %7149
        %7153 = vset.pattern.permute.xlu0 0
        %7154 = vperm.xlu0 %7153, %v6599
        %v7155 = vpop.permute.xlu0 %7154
        %7158 = vset.pattern.permute.xlu0 0
        %7159 = vperm.xlu0 %7158, %v6600
        %v7160 = vpop.permute.xlu0 %7159
        %v7162 = vperm.slane %v6601, 0
        %v7163 = vmul.f32 %v6605, %v7162
        %v7164 = vmul.f32 %v6610, %v7162
        %v7165 = vmul.f32 %v6615, %v7162
        %v7166 = vmul.f32 %v6620, %v7162
        %v7167 = vmul.f32 %v6625, %v7162
        %v7168 = vmul.f32 %v6630, %v7162
        %v7169 = vmul.f32 %v6635, %v7162
        %v7170 = vmul.f32 %v6640, %v7162
        %v7171 = vmul.f32 %v6645, %v7162
        %v7172 = vmul.f32 %v6650, %v7162
        %v7173 = vmul.f32 %v6655, %v7162
        %v7174 = vmul.f32 %v6660, %v7162
        %v7175 = vmul.f32 %v6665, %v7162
        %v7176 = vmul.f32 %v6670, %v7162
        %v7177 = vmul.f32 %v6675, %v7162
        %v7178 = vmul.f32 %v6680, %v7162
        %v7179 = vmul.f32 %v6685, %v7162
        %v7180 = vmul.f32 %v6690, %v7162
        %v7181 = vmul.f32 %v6695, %v7162
        %v7182 = vmul.f32 %v6700, %v7162
        %v7183 = vmul.f32 %v6705, %v7162
        %v7184 = vmul.f32 %v6710, %v7162
        %v7185 = vmul.f32 %v6715, %v7162
        %v7186 = vmul.f32 %v6720, %v7162
        %v7187 = vmul.f32 %v6725, %v7162
        %v7188 = vmul.f32 %v6730, %v7162
        %v7189 = vmul.f32 %v6735, %v7162
        %v7190 = vmul.f32 %v6740, %v7162
        %v7191 = vmul.f32 %v6745, %v7162
        %v7192 = vmul.f32 %v6750, %v7162
        %v7193 = vmul.f32 %v6755, %v7162
        %v7194 = vmul.f32 %v6760, %v7162
        %v7195 = vmul.f32 %v6765, %v7162
        %v7196 = vmul.f32 %v6770, %v7162
        %v7197 = vmul.f32 %v6775, %v7162
        %v7198 = vmul.f32 %v6780, %v7162
        %v7199 = vmul.f32 %v6785, %v7162
        %v7200 = vmul.f32 %v6790, %v7162
        %v7201 = vmul.f32 %v6795, %v7162
        %v7202 = vmul.f32 %v6800, %v7162
        %v7203 = vmul.f32 %v6805, %v7162
        %v7204 = vmul.f32 %v6810, %v7162
        %v7205 = vmul.f32 %v6815, %v7162
        %v7206 = vmul.f32 %v6820, %v7162
        %v7207 = vmul.f32 %v6825, %v7162
        %v7208 = vmul.f32 %v6830, %v7162
        %v7209 = vmul.f32 %v6835, %v7162
        %v7210 = vmul.f32 %v6840, %v7162
        %v7211 = vmul.f32 %v6845, %v7162
        %v7212 = vmul.f32 %v6850, %v7162
        %v7213 = vmul.f32 %v6855, %v7162
        %v7214 = vmul.f32 %v6860, %v7162
        %v7215 = vmul.f32 %v6865, %v7162
        %v7216 = vmul.f32 %v6870, %v7162
        %v7217 = vmul.f32 %v6875, %v7162
        %v7218 = vmul.f32 %v6880, %v7162
        %v7219 = vmul.f32 %v6885, %v7162
        %v7220 = vmul.f32 %v6890, %v7162
        %v7221 = vmul.f32 %v6895, %v7162
        %v7222 = vmul.f32 %v6900, %v7162
        %v7223 = vmul.f32 %v6905, %v7162
        %v7224 = vmul.f32 %v6910, %v7162
        %v7225 = vmul.f32 %v6915, %v7162
        %v7226 = vmul.f32 %v6920, %v7162
        %v7227 = vmul.f32 %v6925, %v7162
        %v7228 = vmul.f32 %v6930, %v7162
        %v7229 = vmul.f32 %v6935, %v7162
        %v7230 = vmul.f32 %v6940, %v7162
        %v7231 = vmul.f32 %v6945, %v7162
        %v7232 = vmul.f32 %v6950, %v7162
        %v7233 = vmul.f32 %v6955, %v7162
        %v7234 = vmul.f32 %v6960, %v7162
        %v7235 = vmul.f32 %v6965, %v7162
        %v7236 = vmul.f32 %v6970, %v7162
        %v7237 = vmul.f32 %v6975, %v7162
        %v7238 = vmul.f32 %v6980, %v7162
        %v7239 = vmul.f32 %v6985, %v7162
        %v7240 = vmul.f32 %v6990, %v7162
        %v7241 = vmul.f32 %v6995, %v7162
        %v7242 = vmul.f32 %v7000, %v7162
        %v7243 = vmul.f32 %v7005, %v7162
        %v7244 = vmul.f32 %v7010, %v7162
        %v7245 = vmul.f32 %v7015, %v7162
        %v7246 = vmul.f32 %v7020, %v7162
        %v7247 = vmul.f32 %v7025, %v7162
        %v7248 = vmul.f32 %v7030, %v7162
        %v7249 = vmul.f32 %v7035, %v7162
        %v7250 = vmul.f32 %v7040, %v7162
        %v7251 = vmul.f32 %v7045, %v7162
        %v7252 = vmul.f32 %v7050, %v7162
        %v7253 = vmul.f32 %v7055, %v7162
        %v7254 = vmul.f32 %v7060, %v7162
        %v7255 = vmul.f32 %v7065, %v7162
        %v7256 = vmul.f32 %v7070, %v7162
        %v7257 = vmul.f32 %v7075, %v7162
        %v7258 = vmul.f32 %v7080, %v7162
        %v7259 = vmul.f32 %v7085, %v7162
        %v7260 = vmul.f32 %v7090, %v7162
        %v7261 = vmul.f32 %v7095, %v7162
        %v7262 = vmul.f32 %v7100, %v7162
        %v7263 = vmul.f32 %v7105, %v7162
        %v7264 = vmul.f32 %v7110, %v7162
        %v7265 = vmul.f32 %v7115, %v7162
        %v7266 = vmul.f32 %v7120, %v7162
        %v7267 = vmul.f32 %v7125, %v7162
        %v7268 = vmul.f32 %v7130, %v7162
        %v7269 = vmul.f32 %v7135, %v7162
        %v7270 = vmul.f32 %v7140, %v7162
        %v7271 = vmul.f32 %v7145, %v7162
        %v7272 = vmul.f32 %v7150, %v7162
        %v7273 = vmul.f32 %v7155, %v7162
        %v7274 = vmul.f32 %v7160, %v7162
        %v7275 = vadd.f32 %v6377, %v7163
        %v7276 = vadd.f32 %v6378, %v7164
        %v7277 = vadd.f32 %v6379, %v7165
        %v7278 = vadd.f32 %v6380, %v7166
        %v7279 = vadd.f32 %v6381, %v7167
        %v7280 = vadd.f32 %v6382, %v7168
        %v7281 = vadd.f32 %v6383, %v7169
        %v7282 = vadd.f32 %v6384, %v7170
        %v7283 = vadd.f32 %v6385, %v7171
        %v7284 = vadd.f32 %v6386, %v7172
        %v7285 = vadd.f32 %v6387, %v7173
        %v7286 = vadd.f32 %v6388, %v7174
        %v7287 = vadd.f32 %v6389, %v7175
        %v7288 = vadd.f32 %v6390, %v7176
        %v7289 = vadd.f32 %v6391, %v7177
        %v7290 = vadd.f32 %v6392, %v7178
        %v7291 = vadd.f32 %v6393, %v7179
        %v7292 = vadd.f32 %v6394, %v7180
        %v7293 = vadd.f32 %v6395, %v7181
        %v7294 = vadd.f32 %v6396, %v7182
        %v7295 = vadd.f32 %v6397, %v7183
        %v7296 = vadd.f32 %v6398, %v7184
        %v7297 = vadd.f32 %v6399, %v7185
        %v7298 = vadd.f32 %v6400, %v7186
        %v7299 = vadd.f32 %v6401, %v7187
        %v7300 = vadd.f32 %v6402, %v7188
        %v7301 = vadd.f32 %v6403, %v7189
        %v7302 = vadd.f32 %v6404, %v7190
        %v7303 = vadd.f32 %v6405, %v7191
        %v7304 = vadd.f32 %v6406, %v7192
        %v7305 = vadd.f32 %v6407, %v7193
        %v7306 = vadd.f32 %v6408, %v7194
        %v7307 = vadd.f32 %v6409, %v7195
        %v7308 = vadd.f32 %v6410, %v7196
        %v7309 = vadd.f32 %v6411, %v7197
        %v7310 = vadd.f32 %v6412, %v7198
        %v7311 = vadd.f32 %v6413, %v7199
        %v7312 = vadd.f32 %v6414, %v7200
        %v7313 = vadd.f32 %v6415, %v7201
        %v7314 = vadd.f32 %v6416, %v7202
        %v7315 = vadd.f32 %v6417, %v7203
        %v7316 = vadd.f32 %v6418, %v7204
        %v7317 = vadd.f32 %v6419, %v7205
        %v7318 = vadd.f32 %v6420, %v7206
        %v7319 = vadd.f32 %v6421, %v7207
        %v7320 = vadd.f32 %v6422, %v7208
        %v7321 = vadd.f32 %v6423, %v7209
        %v7322 = vadd.f32 %v6424, %v7210
        %v7323 = vadd.f32 %v6425, %v7211
        %v7324 = vadd.f32 %v6426, %v7212
        %v7325 = vadd.f32 %v6427, %v7213
        %v7326 = vadd.f32 %v6428, %v7214
        %v7327 = vadd.f32 %v6429, %v7215
        %v7328 = vadd.f32 %v6430, %v7216
        %v7329 = vadd.f32 %v6431, %v7217
        %v7330 = vadd.f32 %v6432, %v7218
        %v7331 = vadd.f32 %v6433, %v7219
        %v7332 = vadd.f32 %v6434, %v7220
        %v7333 = vadd.f32 %v6435, %v7221
        %v7334 = vadd.f32 %v6436, %v7222
        %v7335 = vadd.f32 %v6437, %v7223
        %v7336 = vadd.f32 %v6438, %v7224
        %v7337 = vadd.f32 %v6439, %v7225
        %v7338 = vadd.f32 %v6440, %v7226
        %v7339 = vadd.f32 %v6441, %v7227
        %v7340 = vadd.f32 %v6442, %v7228
        %v7341 = vadd.f32 %v6443, %v7229
        %v7342 = vadd.f32 %v6444, %v7230
        %v7343 = vadd.f32 %v6445, %v7231
        %v7344 = vadd.f32 %v6446, %v7232
        %v7345 = vadd.f32 %v6447, %v7233
        %v7346 = vadd.f32 %v6448, %v7234
        %v7347 = vadd.f32 %v6449, %v7235
        %v7348 = vadd.f32 %v6450, %v7236
        %v7349 = vadd.f32 %v6451, %v7237
        %v7350 = vadd.f32 %v6452, %v7238
        %v7351 = vadd.f32 %v6453, %v7239
        %v7352 = vadd.f32 %v6454, %v7240
        %v7353 = vadd.f32 %v6455, %v7241
        %v7354 = vadd.f32 %v6456, %v7242
        %v7355 = vadd.f32 %v6457, %v7243
        %v7356 = vadd.f32 %v6458, %v7244
        %v7357 = vadd.f32 %v6459, %v7245
        %v7358 = vadd.f32 %v6460, %v7246
        %v7359 = vadd.f32 %v6461, %v7247
        %v7360 = vadd.f32 %v6462, %v7248
        %v7361 = vadd.f32 %v6463, %v7249
        %v7362 = vadd.f32 %v6464, %v7250
        %v7363 = vadd.f32 %v6465, %v7251
        %v7364 = vadd.f32 %v6466, %v7252
        %v7365 = vadd.f32 %v6467, %v7253
        %v7366 = vadd.f32 %v6468, %v7254
        %v7367 = vadd.f32 %v6469, %v7255
        %v7368 = vadd.f32 %v6470, %v7256
        %v7369 = vadd.f32 %v6471, %v7257
        %v7370 = vadd.f32 %v6472, %v7258
        %v7371 = vadd.f32 %v6473, %v7259
        %v7372 = vadd.f32 %v6474, %v7260
        %v7373 = vadd.f32 %v6475, %v7261
        %v7374 = vadd.f32 %v6476, %v7262
        %v7375 = vadd.f32 %v6477, %v7263
        %v7376 = vadd.f32 %v6478, %v7264
        %v7377 = vadd.f32 %v6479, %v7265
        %v7378 = vadd.f32 %v6480, %v7266
        %v7379 = vadd.f32 %v6481, %v7267
        %v7380 = vadd.f32 %v6482, %v7268
        %v7381 = vadd.f32 %v6483, %v7269
        %v7382 = vadd.f32 %v6484, %v7270
        %v7383 = vadd.f32 %v6485, %v7271
        %v7384 = vadd.f32 %v6486, %v7272
        %v7385 = vadd.f32 %v6487, %v7273
        %v7386 = vadd.f32 %v6488, %v7274
        %v7387 = vld [vmem:[%s197 + $0x42] sm:$0xff]
        %v7388 = vld [vmem:[%s197 + $0x4a] sm:$0xff]
        %v7389 = vld [vmem:[%s197 + $0x52] sm:$0xff]
        %v7390 = vld [vmem:[%s197 + $0x5a] sm:$0xff]
        %v7391 = vld [vmem:[%s197 + $0x62] sm:$0xff]
        %v7392 = vld [vmem:[%s197 + $0x6a] sm:$0xff]
        %v7393 = vld [vmem:[%s197 + $0x72] sm:$0xff]
        %v7394 = vld [vmem:[%s197 + $0x7a] sm:$0xff]
        %v7395 = vld [vmem:[%s197 + $0x82] sm:$0xff]
        %v7396 = vld [vmem:[%s197 + $0x8a] sm:$0xff]
        %v7397 = vld [vmem:[%s197 + $0x92] sm:$0xff]
        %v7398 = vld [vmem:[%s197 + $0x9a] sm:$0xff]
        %v7399 = vld [vmem:[%s197 + $0xa2] sm:$0xff]
        %v7400 = vld [vmem:[%s197 + $0xaa] sm:$0xff]
        %v7401 = vld [vmem:[%s197 + $0xb2] sm:$0xff]
        %v7402 = vld [vmem:[%s197 + $0xba] sm:$0xff]
        %v7403 = vld [vmem:[%s197 + $0xc2] sm:$0xff]
        %v7404 = vld [vmem:[%s197 + $0xca] sm:$0xff]
        %v7405 = vld [vmem:[%s197 + $0xd2] sm:$0xff]
        %v7406 = vld [vmem:[%s197 + $0xda] sm:$0xff]
        %v7407 = vld [vmem:[%s197 + $0xe2] sm:$0xff]
        %v7408 = vld [vmem:[%s197 + $0xea] sm:$0xff]
        %v7409 = vld [vmem:[%s197 + $0xf2] sm:$0xff]
        %v7410 = vld [vmem:[%s197 + $0xfa] sm:$0xff]
        %v7411 = vld [vmem:[%s197 + $0x102] sm:$0xff]
        %v7412 = vld [vmem:[%s197 + $0x10a] sm:$0xff]
        %v7413 = vld [vmem:[%s197 + $0x112] sm:$0xff]
        %v7414 = vld [vmem:[%s197 + $0x11a] sm:$0xff]
        %v7415 = vld [vmem:[%s197 + $0x122] sm:$0xff]
        %v7416 = vld [vmem:[%s197 + $0x12a] sm:$0xff]
        %v7417 = vld [vmem:[%s197 + $0x132] sm:$0xff]
        %v7418 = vld [vmem:[%s197 + $0x13a] sm:$0xff]
        %v7419 = vld [vmem:[%s197 + $0x142] sm:$0xff]
        %v7420 = vld [vmem:[%s197 + $0x14a] sm:$0xff]
        %v7421 = vld [vmem:[%s197 + $0x152] sm:$0xff]
        %v7422 = vld [vmem:[%s197 + $0x15a] sm:$0xff]
        %v7423 = vld [vmem:[%s197 + $0x162] sm:$0xff]
        %v7424 = vld [vmem:[%s197 + $0x16a] sm:$0xff]
        %v7425 = vld [vmem:[%s197 + $0x172] sm:$0xff]
        %v7426 = vld [vmem:[%s197 + $0x17a] sm:$0xff]
        %v7427 = vld [vmem:[%s197 + $0x182] sm:$0xff]
        %v7428 = vld [vmem:[%s197 + $0x18a] sm:$0xff]
        %v7429 = vld [vmem:[%s197 + $0x192] sm:$0xff]
        %v7430 = vld [vmem:[%s197 + $0x19a] sm:$0xff]
        %v7431 = vld [vmem:[%s197 + $0x1a2] sm:$0xff]
        %v7432 = vld [vmem:[%s197 + $0x1aa] sm:$0xff]
        %v7433 = vld [vmem:[%s197 + $0x1b2] sm:$0xff]
        %v7434 = vld [vmem:[%s197 + $0x1ba] sm:$0xff]
        %v7435 = vld [vmem:[%s197 + $0x1c2] sm:$0xff]
        %v7436 = vld [vmem:[%s197 + $0x1ca] sm:$0xff]
        %v7437 = vld [vmem:[%s197 + $0x1d2] sm:$0xff]
        %v7438 = vld [vmem:[%s197 + $0x1da] sm:$0xff]
        %v7439 = vld [vmem:[%s197 + $0x1e2] sm:$0xff]
        %v7440 = vld [vmem:[%s197 + $0x1ea] sm:$0xff]
        %v7441 = vld [vmem:[%s197 + $0x1f2] sm:$0xff]
        %v7442 = vld [vmem:[%s197 + $0x1fa] sm:$0xff]
        %v7443 = vld [vmem:[%s197 + $0x202] sm:$0xff]
        %v7444 = vld [vmem:[%s197 + $0x20a] sm:$0xff]
        %v7445 = vld [vmem:[%s197 + $0x212] sm:$0xff]
        %v7446 = vld [vmem:[%s197 + $0x21a] sm:$0xff]
        %v7447 = vld [vmem:[%s197 + $0x222] sm:$0xff]
        %v7448 = vld [vmem:[%s197 + $0x22a] sm:$0xff]
        %v7449 = vld [vmem:[%s197 + $0x232] sm:$0xff]
        %v7450 = vld [vmem:[%s197 + $0x23a] sm:$0xff]
        %v7451 = vld [vmem:[%s197 + $0x242] sm:$0xff]
        %v7452 = vld [vmem:[%s197 + $0x24a] sm:$0xff]
        %v7453 = vld [vmem:[%s197 + $0x252] sm:$0xff]
        %v7454 = vld [vmem:[%s197 + $0x25a] sm:$0xff]
        %v7455 = vld [vmem:[%s197 + $0x262] sm:$0xff]
        %v7456 = vld [vmem:[%s197 + $0x26a] sm:$0xff]
        %v7457 = vld [vmem:[%s197 + $0x272] sm:$0xff]
        %v7458 = vld [vmem:[%s197 + $0x27a] sm:$0xff]
        %v7459 = vld [vmem:[%s197 + $0x282] sm:$0xff]
        %v7460 = vld [vmem:[%s197 + $0x28a] sm:$0xff]
        %v7461 = vld [vmem:[%s197 + $0x292] sm:$0xff]
        %v7462 = vld [vmem:[%s197 + $0x29a] sm:$0xff]
        %v7463 = vld [vmem:[%s197 + $0x2a2] sm:$0xff]
        %v7464 = vld [vmem:[%s197 + $0x2aa] sm:$0xff]
        %v7465 = vld [vmem:[%s197 + $0x2b2] sm:$0xff]
        %v7466 = vld [vmem:[%s197 + $0x2ba] sm:$0xff]
        %v7467 = vld [vmem:[%s197 + $0x2c2] sm:$0xff]
        %v7468 = vld [vmem:[%s197 + $0x2ca] sm:$0xff]
        %v7469 = vld [vmem:[%s197 + $0x2d2] sm:$0xff]
        %v7470 = vld [vmem:[%s197 + $0x2da] sm:$0xff]
        %v7471 = vld [vmem:[%s197 + $0x2e2] sm:$0xff]
        %v7472 = vld [vmem:[%s197 + $0x2ea] sm:$0xff]
        %v7473 = vld [vmem:[%s197 + $0x2f2] sm:$0xff]
        %v7474 = vld [vmem:[%s197 + $0x2fa] sm:$0xff]
        %v7475 = vld [vmem:[%s197 + $0x302] sm:$0xff]
        %v7476 = vld [vmem:[%s197 + $0x30a] sm:$0xff]
        %v7477 = vld [vmem:[%s197 + $0x312] sm:$0xff]
        %v7478 = vld [vmem:[%s197 + $0x31a] sm:$0xff]
        %v7479 = vld [vmem:[%s197 + $0x322] sm:$0xff]
        %v7480 = vld [vmem:[%s197 + $0x32a] sm:$0xff]
        %v7481 = vld [vmem:[%s197 + $0x332] sm:$0xff]
        %v7482 = vld [vmem:[%s197 + $0x33a] sm:$0xff]
        %v7483 = vld [vmem:[%s197 + $0x342] sm:$0xff]
        %v7484 = vld [vmem:[%s197 + $0x34a] sm:$0xff]
        %v7485 = vld [vmem:[%s197 + $0x352] sm:$0xff]
        %v7486 = vld [vmem:[%s197 + $0x35a] sm:$0xff]
        %v7487 = vld [vmem:[%s197 + $0x362] sm:$0xff]
        %v7488 = vld [vmem:[%s197 + $0x36a] sm:$0xff]
        %v7489 = vld [vmem:[%s197 + $0x372] sm:$0xff]
        %v7490 = vld [vmem:[%s197 + $0x37a] sm:$0xff]
        %v7491 = vld [vmem:[%s197 + $0x382] sm:$0xff]
        %v7492 = vld [vmem:[%s197 + $0x38a] sm:$0xff]
        %v7493 = vld [vmem:[%s197 + $0x392] sm:$0xff]
        %v7494 = vld [vmem:[%s197 + $0x39a] sm:$0xff]
        %v7495 = vld [vmem:[%s197 + $0x3a2] sm:$0xff]
        %v7496 = vld [vmem:[%s197 + $0x3aa] sm:$0xff]
        %v7497 = vld [vmem:[%s197 + $0x3b2] sm:$0xff]
        %v7498 = vld [vmem:[%s197 + $0x3ba] sm:$0xff]
        %v7499 = vld [vmem:[#allocation3 + $0x8] sm:$0x1]
        %7501 = vset.pattern.permute.xlu0 0
        %7502 = vperm.xlu0 %7501, %v7387
        %v7503 = vpop.permute.xlu0 %7502
        %7506 = vset.pattern.permute.xlu0 0
        %7507 = vperm.xlu0 %7506, %v7388
        %v7508 = vpop.permute.xlu0 %7507
        %7511 = vset.pattern.permute.xlu0 0
        %7512 = vperm.xlu0 %7511, %v7389
        %v7513 = vpop.permute.xlu0 %7512
        %7516 = vset.pattern.permute.xlu0 0
        %7517 = vperm.xlu0 %7516, %v7390
        %v7518 = vpop.permute.xlu0 %7517
        %7521 = vset.pattern.permute.xlu0 0
        %7522 = vperm.xlu0 %7521, %v7391
        %v7523 = vpop.permute.xlu0 %7522
        %7526 = vset.pattern.permute.xlu0 0
        %7527 = vperm.xlu0 %7526, %v7392
        %v7528 = vpop.permute.xlu0 %7527
        %7531 = vset.pattern.permute.xlu0 0
        %7532 = vperm.xlu0 %7531, %v7393
        %v7533 = vpop.permute.xlu0 %7532
        %7536 = vset.pattern.permute.xlu0 0
        %7537 = vperm.xlu0 %7536, %v7394
        %v7538 = vpop.permute.xlu0 %7537
        %7541 = vset.pattern.permute.xlu0 0
        %7542 = vperm.xlu0 %7541, %v7395
        %v7543 = vpop.permute.xlu0 %7542
        %7546 = vset.pattern.permute.xlu0 0
        %7547 = vperm.xlu0 %7546, %v7396
        %v7548 = vpop.permute.xlu0 %7547
        %7551 = vset.pattern.permute.xlu0 0
        %7552 = vperm.xlu0 %7551, %v7397
        %v7553 = vpop.permute.xlu0 %7552
        %7556 = vset.pattern.permute.xlu0 0
        %7557 = vperm.xlu0 %7556, %v7398
        %v7558 = vpop.permute.xlu0 %7557
        %7561 = vset.pattern.permute.xlu0 0
        %7562 = vperm.xlu0 %7561, %v7399
        %v7563 = vpop.permute.xlu0 %7562
        %7566 = vset.pattern.permute.xlu0 0
        %7567 = vperm.xlu0 %7566, %v7400
        %v7568 = vpop.permute.xlu0 %7567
        %7571 = vset.pattern.permute.xlu0 0
        %7572 = vperm.xlu0 %7571, %v7401
        %v7573 = vpop.permute.xlu0 %7572
        %7576 = vset.pattern.permute.xlu0 0
        %7577 = vperm.xlu0 %7576, %v7402
        %v7578 = vpop.permute.xlu0 %7577
        %7581 = vset.pattern.permute.xlu0 0
        %7582 = vperm.xlu0 %7581, %v7403
        %v7583 = vpop.permute.xlu0 %7582
        %7586 = vset.pattern.permute.xlu0 0
        %7587 = vperm.xlu0 %7586, %v7404
        %v7588 = vpop.permute.xlu0 %7587
        %7591 = vset.pattern.permute.xlu0 0
        %7592 = vperm.xlu0 %7591, %v7405
        %v7593 = vpop.permute.xlu0 %7592
        %7596 = vset.pattern.permute.xlu0 0
        %7597 = vperm.xlu0 %7596, %v7406
        %v7598 = vpop.permute.xlu0 %7597
        %7601 = vset.pattern.permute.xlu0 0
        %7602 = vperm.xlu0 %7601, %v7407
        %v7603 = vpop.permute.xlu0 %7602
        %7606 = vset.pattern.permute.xlu0 0
        %7607 = vperm.xlu0 %7606, %v7408
        %v7608 = vpop.permute.xlu0 %7607
        %7611 = vset.pattern.permute.xlu0 0
        %7612 = vperm.xlu0 %7611, %v7409
        %v7613 = vpop.permute.xlu0 %7612
        %7616 = vset.pattern.permute.xlu0 0
        %7617 = vperm.xlu0 %7616, %v7410
        %v7618 = vpop.permute.xlu0 %7617
        %7621 = vset.pattern.permute.xlu0 0
        %7622 = vperm.xlu0 %7621, %v7411
        %v7623 = vpop.permute.xlu0 %7622
        %7626 = vset.pattern.permute.xlu0 0
        %7627 = vperm.xlu0 %7626, %v7412
        %v7628 = vpop.permute.xlu0 %7627
        %7631 = vset.pattern.permute.xlu0 0
        %7632 = vperm.xlu0 %7631, %v7413
        %v7633 = vpop.permute.xlu0 %7632
        %7636 = vset.pattern.permute.xlu0 0
        %7637 = vperm.xlu0 %7636, %v7414
        %v7638 = vpop.permute.xlu0 %7637
        %7641 = vset.pattern.permute.xlu0 0
        %7642 = vperm.xlu0 %7641, %v7415
        %v7643 = vpop.permute.xlu0 %7642
        %7646 = vset.pattern.permute.xlu0 0
        %7647 = vperm.xlu0 %7646, %v7416
        %v7648 = vpop.permute.xlu0 %7647
        %7651 = vset.pattern.permute.xlu0 0
        %7652 = vperm.xlu0 %7651, %v7417
        %v7653 = vpop.permute.xlu0 %7652
        %7656 = vset.pattern.permute.xlu0 0
        %7657 = vperm.xlu0 %7656, %v7418
        %v7658 = vpop.permute.xlu0 %7657
        %7661 = vset.pattern.permute.xlu0 0
        %7662 = vperm.xlu0 %7661, %v7419
        %v7663 = vpop.permute.xlu0 %7662
        %7666 = vset.pattern.permute.xlu0 0
        %7667 = vperm.xlu0 %7666, %v7420
        %v7668 = vpop.permute.xlu0 %7667
        %7671 = vset.pattern.permute.xlu0 0
        %7672 = vperm.xlu0 %7671, %v7421
        %v7673 = vpop.permute.xlu0 %7672
        %7676 = vset.pattern.permute.xlu0 0
        %7677 = vperm.xlu0 %7676, %v7422
        %v7678 = vpop.permute.xlu0 %7677
        %7681 = vset.pattern.permute.xlu0 0
        %7682 = vperm.xlu0 %7681, %v7423
        %v7683 = vpop.permute.xlu0 %7682
        %7686 = vset.pattern.permute.xlu0 0
        %7687 = vperm.xlu0 %7686, %v7424
        %v7688 = vpop.permute.xlu0 %7687
        %7691 = vset.pattern.permute.xlu0 0
        %7692 = vperm.xlu0 %7691, %v7425
        %v7693 = vpop.permute.xlu0 %7692
        %7696 = vset.pattern.permute.xlu0 0
        %7697 = vperm.xlu0 %7696, %v7426
        %v7698 = vpop.permute.xlu0 %7697
        %7701 = vset.pattern.permute.xlu0 0
        %7702 = vperm.xlu0 %7701, %v7427
        %v7703 = vpop.permute.xlu0 %7702
        %7706 = vset.pattern.permute.xlu0 0
        %7707 = vperm.xlu0 %7706, %v7428
        %v7708 = vpop.permute.xlu0 %7707
        %7711 = vset.pattern.permute.xlu0 0
        %7712 = vperm.xlu0 %7711, %v7429
        %v7713 = vpop.permute.xlu0 %7712
        %7716 = vset.pattern.permute.xlu0 0
        %7717 = vperm.xlu0 %7716, %v7430
        %v7718 = vpop.permute.xlu0 %7717
        %7721 = vset.pattern.permute.xlu0 0
        %7722 = vperm.xlu0 %7721, %v7431
        %v7723 = vpop.permute.xlu0 %7722
        %7726 = vset.pattern.permute.xlu0 0
        %7727 = vperm.xlu0 %7726, %v7432
        %v7728 = vpop.permute.xlu0 %7727
        %7731 = vset.pattern.permute.xlu0 0
        %7732 = vperm.xlu0 %7731, %v7433
        %v7733 = vpop.permute.xlu0 %7732
        %7736 = vset.pattern.permute.xlu0 0
        %7737 = vperm.xlu0 %7736, %v7434
        %v7738 = vpop.permute.xlu0 %7737
        %7741 = vset.pattern.permute.xlu0 0
        %7742 = vperm.xlu0 %7741, %v7435
        %v7743 = vpop.permute.xlu0 %7742
        %7746 = vset.pattern.permute.xlu0 0
        %7747 = vperm.xlu0 %7746, %v7436
        %v7748 = vpop.permute.xlu0 %7747
        %7751 = vset.pattern.permute.xlu0 0
        %7752 = vperm.xlu0 %7751, %v7437
        %v7753 = vpop.permute.xlu0 %7752
        %7756 = vset.pattern.permute.xlu0 0
        %7757 = vperm.xlu0 %7756, %v7438
        %v7758 = vpop.permute.xlu0 %7757
        %7761 = vset.pattern.permute.xlu0 0
        %7762 = vperm.xlu0 %7761, %v7439
        %v7763 = vpop.permute.xlu0 %7762
        %7766 = vset.pattern.permute.xlu0 0
        %7767 = vperm.xlu0 %7766, %v7440
        %v7768 = vpop.permute.xlu0 %7767
        %7771 = vset.pattern.permute.xlu0 0
        %7772 = vperm.xlu0 %7771, %v7441
        %v7773 = vpop.permute.xlu0 %7772
        %7776 = vset.pattern.permute.xlu0 0
        %7777 = vperm.xlu0 %7776, %v7442
        %v7778 = vpop.permute.xlu0 %7777
        %7781 = vset.pattern.permute.xlu0 0
        %7782 = vperm.xlu0 %7781, %v7443
        %v7783 = vpop.permute.xlu0 %7782
        %7786 = vset.pattern.permute.xlu0 0
        %7787 = vperm.xlu0 %7786, %v7444
        %v7788 = vpop.permute.xlu0 %7787
        %7791 = vset.pattern.permute.xlu0 0
        %7792 = vperm.xlu0 %7791, %v7445
        %v7793 = vpop.permute.xlu0 %7792
        %7796 = vset.pattern.permute.xlu0 0
        %7797 = vperm.xlu0 %7796, %v7446
        %v7798 = vpop.permute.xlu0 %7797
        %7801 = vset.pattern.permute.xlu0 0
        %7802 = vperm.xlu0 %7801, %v7447
        %v7803 = vpop.permute.xlu0 %7802
        %7806 = vset.pattern.permute.xlu0 0
        %7807 = vperm.xlu0 %7806, %v7448
        %v7808 = vpop.permute.xlu0 %7807
        %7811 = vset.pattern.permute.xlu0 0
        %7812 = vperm.xlu0 %7811, %v7449
        %v7813 = vpop.permute.xlu0 %7812
        %7816 = vset.pattern.permute.xlu0 0
        %7817 = vperm.xlu0 %7816, %v7450
        %v7818 = vpop.permute.xlu0 %7817
        %7821 = vset.pattern.permute.xlu0 0
        %7822 = vperm.xlu0 %7821, %v7451
        %v7823 = vpop.permute.xlu0 %7822
        %7826 = vset.pattern.permute.xlu0 0
        %7827 = vperm.xlu0 %7826, %v7452
        %v7828 = vpop.permute.xlu0 %7827
        %7831 = vset.pattern.permute.xlu0 0
        %7832 = vperm.xlu0 %7831, %v7453
        %v7833 = vpop.permute.xlu0 %7832
        %7836 = vset.pattern.permute.xlu0 0
        %7837 = vperm.xlu0 %7836, %v7454
        %v7838 = vpop.permute.xlu0 %7837
        %7841 = vset.pattern.permute.xlu0 0
        %7842 = vperm.xlu0 %7841, %v7455
        %v7843 = vpop.permute.xlu0 %7842
        %7846 = vset.pattern.permute.xlu0 0
        %7847 = vperm.xlu0 %7846, %v7456
        %v7848 = vpop.permute.xlu0 %7847
        %7851 = vset.pattern.permute.xlu0 0
        %7852 = vperm.xlu0 %7851, %v7457
        %v7853 = vpop.permute.xlu0 %7852
        %7856 = vset.pattern.permute.xlu0 0
        %7857 = vperm.xlu0 %7856, %v7458
        %v7858 = vpop.permute.xlu0 %7857
        %7861 = vset.pattern.permute.xlu0 0
        %7862 = vperm.xlu0 %7861, %v7459
        %v7863 = vpop.permute.xlu0 %7862
        %7866 = vset.pattern.permute.xlu0 0
        %7867 = vperm.xlu0 %7866, %v7460
        %v7868 = vpop.permute.xlu0 %7867
        %7871 = vset.pattern.permute.xlu0 0
        %7872 = vperm.xlu0 %7871, %v7461
        %v7873 = vpop.permute.xlu0 %7872
        %7876 = vset.pattern.permute.xlu0 0
        %7877 = vperm.xlu0 %7876, %v7462
        %v7878 = vpop.permute.xlu0 %7877
        %7881 = vset.pattern.permute.xlu0 0
        %7882 = vperm.xlu0 %7881, %v7463
        %v7883 = vpop.permute.xlu0 %7882
        %7886 = vset.pattern.permute.xlu0 0
        %7887 = vperm.xlu0 %7886, %v7464
        %v7888 = vpop.permute.xlu0 %7887
        %7891 = vset.pattern.permute.xlu0 0
        %7892 = vperm.xlu0 %7891, %v7465
        %v7893 = vpop.permute.xlu0 %7892
        %7896 = vset.pattern.permute.xlu0 0
        %7897 = vperm.xlu0 %7896, %v7466
        %v7898 = vpop.permute.xlu0 %7897
        %7901 = vset.pattern.permute.xlu0 0
        %7902 = vperm.xlu0 %7901, %v7467
        %v7903 = vpop.permute.xlu0 %7902
        %7906 = vset.pattern.permute.xlu0 0
        %7907 = vperm.xlu0 %7906, %v7468
        %v7908 = vpop.permute.xlu0 %7907
        %7911 = vset.pattern.permute.xlu0 0
        %7912 = vperm.xlu0 %7911, %v7469
        %v7913 = vpop.permute.xlu0 %7912
        %7916 = vset.pattern.permute.xlu0 0
        %7917 = vperm.xlu0 %7916, %v7470
        %v7918 = vpop.permute.xlu0 %7917
        %7921 = vset.pattern.permute.xlu0 0
        %7922 = vperm.xlu0 %7921, %v7471
        %v7923 = vpop.permute.xlu0 %7922
        %7926 = vset.pattern.permute.xlu0 0
        %7927 = vperm.xlu0 %7926, %v7472
        %v7928 = vpop.permute.xlu0 %7927
        %7931 = vset.pattern.permute.xlu0 0
        %7932 = vperm.xlu0 %7931, %v7473
        %v7933 = vpop.permute.xlu0 %7932
        %7936 = vset.pattern.permute.xlu0 0
        %7937 = vperm.xlu0 %7936, %v7474
        %v7938 = vpop.permute.xlu0 %7937
        %7941 = vset.pattern.permute.xlu0 0
        %7942 = vperm.xlu0 %7941, %v7475
        %v7943 = vpop.permute.xlu0 %7942
        %7946 = vset.pattern.permute.xlu0 0
        %7947 = vperm.xlu0 %7946, %v7476
        %v7948 = vpop.permute.xlu0 %7947
        %7951 = vset.pattern.permute.xlu0 0
        %7952 = vperm.xlu0 %7951, %v7477
        %v7953 = vpop.permute.xlu0 %7952
        %7956 = vset.pattern.permute.xlu0 0
        %7957 = vperm.xlu0 %7956, %v7478
        %v7958 = vpop.permute.xlu0 %7957
        %7961 = vset.pattern.permute.xlu0 0
        %7962 = vperm.xlu0 %7961, %v7479
        %v7963 = vpop.permute.xlu0 %7962
        %7966 = vset.pattern.permute.xlu0 0
        %7967 = vperm.xlu0 %7966, %v7480
        %v7968 = vpop.permute.xlu0 %7967
        %7971 = vset.pattern.permute.xlu0 0
        %7972 = vperm.xlu0 %7971, %v7481
        %v7973 = vpop.permute.xlu0 %7972
        %7976 = vset.pattern.permute.xlu0 0
        %7977 = vperm.xlu0 %7976, %v7482
        %v7978 = vpop.permute.xlu0 %7977
        %7981 = vset.pattern.permute.xlu0 0
        %7982 = vperm.xlu0 %7981, %v7483
        %v7983 = vpop.permute.xlu0 %7982
        %7986 = vset.pattern.permute.xlu0 0
        %7987 = vperm.xlu0 %7986, %v7484
        %v7988 = vpop.permute.xlu0 %7987
        %7991 = vset.pattern.permute.xlu0 0
        %7992 = vperm.xlu0 %7991, %v7485
        %v7993 = vpop.permute.xlu0 %7992
        %7996 = vset.pattern.permute.xlu0 0
        %7997 = vperm.xlu0 %7996, %v7486
        %v7998 = vpop.permute.xlu0 %7997
        %8001 = vset.pattern.permute.xlu0 0
        %8002 = vperm.xlu0 %8001, %v7487
        %v8003 = vpop.permute.xlu0 %8002
        %8006 = vset.pattern.permute.xlu0 0
        %8007 = vperm.xlu0 %8006, %v7488
        %v8008 = vpop.permute.xlu0 %8007
        %8011 = vset.pattern.permute.xlu0 0
        %8012 = vperm.xlu0 %8011, %v7489
        %v8013 = vpop.permute.xlu0 %8012
        %8016 = vset.pattern.permute.xlu0 0
        %8017 = vperm.xlu0 %8016, %v7490
        %v8018 = vpop.permute.xlu0 %8017
        %8021 = vset.pattern.permute.xlu0 0
        %8022 = vperm.xlu0 %8021, %v7491
        %v8023 = vpop.permute.xlu0 %8022
        %8026 = vset.pattern.permute.xlu0 0
        %8027 = vperm.xlu0 %8026, %v7492
        %v8028 = vpop.permute.xlu0 %8027
        %8031 = vset.pattern.permute.xlu0 0
        %8032 = vperm.xlu0 %8031, %v7493
        %v8033 = vpop.permute.xlu0 %8032
        %8036 = vset.pattern.permute.xlu0 0
        %8037 = vperm.xlu0 %8036, %v7494
        %v8038 = vpop.permute.xlu0 %8037
        %8041 = vset.pattern.permute.xlu0 0
        %8042 = vperm.xlu0 %8041, %v7495
        %v8043 = vpop.permute.xlu0 %8042
        %8046 = vset.pattern.permute.xlu0 0
        %8047 = vperm.xlu0 %8046, %v7496
        %v8048 = vpop.permute.xlu0 %8047
        %8051 = vset.pattern.permute.xlu0 0
        %8052 = vperm.xlu0 %8051, %v7497
        %v8053 = vpop.permute.xlu0 %8052
        %8056 = vset.pattern.permute.xlu0 0
        %8057 = vperm.xlu0 %8056, %v7498
        %v8058 = vpop.permute.xlu0 %8057
        %v8060 = vperm.slane %v7499, 0
        %v8061 = vmul.f32 %v7503, %v8060
        %v8062 = vmul.f32 %v7508, %v8060
        %v8063 = vmul.f32 %v7513, %v8060
        %v8064 = vmul.f32 %v7518, %v8060
        %v8065 = vmul.f32 %v7523, %v8060
        %v8066 = vmul.f32 %v7528, %v8060
        %v8067 = vmul.f32 %v7533, %v8060
        %v8068 = vmul.f32 %v7538, %v8060
        %v8069 = vmul.f32 %v7543, %v8060
        %v8070 = vmul.f32 %v7548, %v8060
        %v8071 = vmul.f32 %v7553, %v8060
        %v8072 = vmul.f32 %v7558, %v8060
        %v8073 = vmul.f32 %v7563, %v8060
        %v8074 = vmul.f32 %v7568, %v8060
        %v8075 = vmul.f32 %v7573, %v8060
        %v8076 = vmul.f32 %v7578, %v8060
        %v8077 = vmul.f32 %v7583, %v8060
        %v8078 = vmul.f32 %v7588, %v8060
        %v8079 = vmul.f32 %v7593, %v8060
        %v8080 = vmul.f32 %v7598, %v8060
        %v8081 = vmul.f32 %v7603, %v8060
        %v8082 = vmul.f32 %v7608, %v8060
        %v8083 = vmul.f32 %v7613, %v8060
        %v8084 = vmul.f32 %v7618, %v8060
        %v8085 = vmul.f32 %v7623, %v8060
        %v8086 = vmul.f32 %v7628, %v8060
        %v8087 = vmul.f32 %v7633, %v8060
        %v8088 = vmul.f32 %v7638, %v8060
        %v8089 = vmul.f32 %v7643, %v8060
        %v8090 = vmul.f32 %v7648, %v8060
        %v8091 = vmul.f32 %v7653, %v8060
        %v8092 = vmul.f32 %v7658, %v8060
        %v8093 = vmul.f32 %v7663, %v8060
        %v8094 = vmul.f32 %v7668, %v8060
        %v8095 = vmul.f32 %v7673, %v8060
        %v8096 = vmul.f32 %v7678, %v8060
        %v8097 = vmul.f32 %v7683, %v8060
        %v8098 = vmul.f32 %v7688, %v8060
        %v8099 = vmul.f32 %v7693, %v8060
        %v8100 = vmul.f32 %v7698, %v8060
        %v8101 = vmul.f32 %v7703, %v8060
        %v8102 = vmul.f32 %v7708, %v8060
        %v8103 = vmul.f32 %v7713, %v8060
        %v8104 = vmul.f32 %v7718, %v8060
        %v8105 = vmul.f32 %v7723, %v8060
        %v8106 = vmul.f32 %v7728, %v8060
        %v8107 = vmul.f32 %v7733, %v8060
        %v8108 = vmul.f32 %v7738, %v8060
        %v8109 = vmul.f32 %v7743, %v8060
        %v8110 = vmul.f32 %v7748, %v8060
        %v8111 = vmul.f32 %v7753, %v8060
        %v8112 = vmul.f32 %v7758, %v8060
        %v8113 = vmul.f32 %v7763, %v8060
        %v8114 = vmul.f32 %v7768, %v8060
        %v8115 = vmul.f32 %v7773, %v8060
        %v8116 = vmul.f32 %v7778, %v8060
        %v8117 = vmul.f32 %v7783, %v8060
        %v8118 = vmul.f32 %v7788, %v8060
        %v8119 = vmul.f32 %v7793, %v8060
        %v8120 = vmul.f32 %v7798, %v8060
        %v8121 = vmul.f32 %v7803, %v8060
        %v8122 = vmul.f32 %v7808, %v8060
        %v8123 = vmul.f32 %v7813, %v8060
        %v8124 = vmul.f32 %v7818, %v8060
        %v8125 = vmul.f32 %v7823, %v8060
        %v8126 = vmul.f32 %v7828, %v8060
        %v8127 = vmul.f32 %v7833, %v8060
        %v8128 = vmul.f32 %v7838, %v8060
        %v8129 = vmul.f32 %v7843, %v8060
        %v8130 = vmul.f32 %v7848, %v8060
        %v8131 = vmul.f32 %v7853, %v8060
        %v8132 = vmul.f32 %v7858, %v8060
        %v8133 = vmul.f32 %v7863, %v8060
        %v8134 = vmul.f32 %v7868, %v8060
        %v8135 = vmul.f32 %v7873, %v8060
        %v8136 = vmul.f32 %v7878, %v8060
        %v8137 = vmul.f32 %v7883, %v8060
        %v8138 = vmul.f32 %v7888, %v8060
        %v8139 = vmul.f32 %v7893, %v8060
        %v8140 = vmul.f32 %v7898, %v8060
        %v8141 = vmul.f32 %v7903, %v8060
        %v8142 = vmul.f32 %v7908, %v8060
        %v8143 = vmul.f32 %v7913, %v8060
        %v8144 = vmul.f32 %v7918, %v8060
        %v8145 = vmul.f32 %v7923, %v8060
        %v8146 = vmul.f32 %v7928, %v8060
        %v8147 = vmul.f32 %v7933, %v8060
        %v8148 = vmul.f32 %v7938, %v8060
        %v8149 = vmul.f32 %v7943, %v8060
        %v8150 = vmul.f32 %v7948, %v8060
        %v8151 = vmul.f32 %v7953, %v8060
        %v8152 = vmul.f32 %v7958, %v8060
        %v8153 = vmul.f32 %v7963, %v8060
        %v8154 = vmul.f32 %v7968, %v8060
        %v8155 = vmul.f32 %v7973, %v8060
        %v8156 = vmul.f32 %v7978, %v8060
        %v8157 = vmul.f32 %v7983, %v8060
        %v8158 = vmul.f32 %v7988, %v8060
        %v8159 = vmul.f32 %v7993, %v8060
        %v8160 = vmul.f32 %v7998, %v8060
        %v8161 = vmul.f32 %v8003, %v8060
        %v8162 = vmul.f32 %v8008, %v8060
        %v8163 = vmul.f32 %v8013, %v8060
        %v8164 = vmul.f32 %v8018, %v8060
        %v8165 = vmul.f32 %v8023, %v8060
        %v8166 = vmul.f32 %v8028, %v8060
        %v8167 = vmul.f32 %v8033, %v8060
        %v8168 = vmul.f32 %v8038, %v8060
        %v8169 = vmul.f32 %v8043, %v8060
        %v8170 = vmul.f32 %v8048, %v8060
        %v8171 = vmul.f32 %v8053, %v8060
        %v8172 = vmul.f32 %v8058, %v8060
        %v8173 = vadd.f32 %v7275, %v8061
        %v8174 = vadd.f32 %v7276, %v8062
        %v8175 = vadd.f32 %v7277, %v8063
        %v8176 = vadd.f32 %v7278, %v8064
        %v8177 = vadd.f32 %v7279, %v8065
        %v8178 = vadd.f32 %v7280, %v8066
        %v8179 = vadd.f32 %v7281, %v8067
        %v8180 = vadd.f32 %v7282, %v8068
        %v8181 = vadd.f32 %v7283, %v8069
        %v8182 = vadd.f32 %v7284, %v8070
        %v8183 = vadd.f32 %v7285, %v8071
        %v8184 = vadd.f32 %v7286, %v8072
        %v8185 = vadd.f32 %v7287, %v8073
        %v8186 = vadd.f32 %v7288, %v8074
        %v8187 = vadd.f32 %v7289, %v8075
        %v8188 = vadd.f32 %v7290, %v8076
        %v8189 = vadd.f32 %v7291, %v8077
        %v8190 = vadd.f32 %v7292, %v8078
        %v8191 = vadd.f32 %v7293, %v8079
        %v8192 = vadd.f32 %v7294, %v8080
        %v8193 = vadd.f32 %v7295, %v8081
        %v8194 = vadd.f32 %v7296, %v8082
        %v8195 = vadd.f32 %v7297, %v8083
        %v8196 = vadd.f32 %v7298, %v8084
        %v8197 = vadd.f32 %v7299, %v8085
        %v8198 = vadd.f32 %v7300, %v8086
        %v8199 = vadd.f32 %v7301, %v8087
        %v8200 = vadd.f32 %v7302, %v8088
        %v8201 = vadd.f32 %v7303, %v8089
        %v8202 = vadd.f32 %v7304, %v8090
        %v8203 = vadd.f32 %v7305, %v8091
        %v8204 = vadd.f32 %v7306, %v8092
        %v8205 = vadd.f32 %v7307, %v8093
        %v8206 = vadd.f32 %v7308, %v8094
        %v8207 = vadd.f32 %v7309, %v8095
        %v8208 = vadd.f32 %v7310, %v8096
        %v8209 = vadd.f32 %v7311, %v8097
        %v8210 = vadd.f32 %v7312, %v8098
        %v8211 = vadd.f32 %v7313, %v8099
        %v8212 = vadd.f32 %v7314, %v8100
        %v8213 = vadd.f32 %v7315, %v8101
        %v8214 = vadd.f32 %v7316, %v8102
        %v8215 = vadd.f32 %v7317, %v8103
        %v8216 = vadd.f32 %v7318, %v8104
        %v8217 = vadd.f32 %v7319, %v8105
        %v8218 = vadd.f32 %v7320, %v8106
        %v8219 = vadd.f32 %v7321, %v8107
        %v8220 = vadd.f32 %v7322, %v8108
        %v8221 = vadd.f32 %v7323, %v8109
        %v8222 = vadd.f32 %v7324, %v8110
        %v8223 = vadd.f32 %v7325, %v8111
        %v8224 = vadd.f32 %v7326, %v8112
        %v8225 = vadd.f32 %v7327, %v8113
        %v8226 = vadd.f32 %v7328, %v8114
        %v8227 = vadd.f32 %v7329, %v8115
        %v8228 = vadd.f32 %v7330, %v8116
        %v8229 = vadd.f32 %v7331, %v8117
        %v8230 = vadd.f32 %v7332, %v8118
        %v8231 = vadd.f32 %v7333, %v8119
        %v8232 = vadd.f32 %v7334, %v8120
        %v8233 = vadd.f32 %v7335, %v8121
        %v8234 = vadd.f32 %v7336, %v8122
        %v8235 = vadd.f32 %v7337, %v8123
        %v8236 = vadd.f32 %v7338, %v8124
        %v8237 = vadd.f32 %v7339, %v8125
        %v8238 = vadd.f32 %v7340, %v8126
        %v8239 = vadd.f32 %v7341, %v8127
        %v8240 = vadd.f32 %v7342, %v8128
        %v8241 = vadd.f32 %v7343, %v8129
        %v8242 = vadd.f32 %v7344, %v8130
        %v8243 = vadd.f32 %v7345, %v8131
        %v8244 = vadd.f32 %v7346, %v8132
        %v8245 = vadd.f32 %v7347, %v8133
        %v8246 = vadd.f32 %v7348, %v8134
        %v8247 = vadd.f32 %v7349, %v8135
        %v8248 = vadd.f32 %v7350, %v8136
        %v8249 = vadd.f32 %v7351, %v8137
        %v8250 = vadd.f32 %v7352, %v8138
        %v8251 = vadd.f32 %v7353, %v8139
        %v8252 = vadd.f32 %v7354, %v8140
        %v8253 = vadd.f32 %v7355, %v8141
        %v8254 = vadd.f32 %v7356, %v8142
        %v8255 = vadd.f32 %v7357, %v8143
        %v8256 = vadd.f32 %v7358, %v8144
        %v8257 = vadd.f32 %v7359, %v8145
        %v8258 = vadd.f32 %v7360, %v8146
        %v8259 = vadd.f32 %v7361, %v8147
        %v8260 = vadd.f32 %v7362, %v8148
        %v8261 = vadd.f32 %v7363, %v8149
        %v8262 = vadd.f32 %v7364, %v8150
        %v8263 = vadd.f32 %v7365, %v8151
        %v8264 = vadd.f32 %v7366, %v8152
        %v8265 = vadd.f32 %v7367, %v8153
        %v8266 = vadd.f32 %v7368, %v8154
        %v8267 = vadd.f32 %v7369, %v8155
        %v8268 = vadd.f32 %v7370, %v8156
        %v8269 = vadd.f32 %v7371, %v8157
        %v8270 = vadd.f32 %v7372, %v8158
        %v8271 = vadd.f32 %v7373, %v8159
        %v8272 = vadd.f32 %v7374, %v8160
        %v8273 = vadd.f32 %v7375, %v8161
        %v8274 = vadd.f32 %v7376, %v8162
        %v8275 = vadd.f32 %v7377, %v8163
        %v8276 = vadd.f32 %v7378, %v8164
        %v8277 = vadd.f32 %v7379, %v8165
        %v8278 = vadd.f32 %v7380, %v8166
        %v8279 = vadd.f32 %v7381, %v8167
        %v8280 = vadd.f32 %v7382, %v8168
        %v8281 = vadd.f32 %v7383, %v8169
        %v8282 = vadd.f32 %v7384, %v8170
        %v8283 = vadd.f32 %v7385, %v8171
        %v8284 = vadd.f32 %v7386, %v8172
        %v8285 = vld [vmem:[#allocation5] sm:$0x1]
        %v8287 = vperm.slane %v8285, 0
        %v8289 = vadd.f32 %v8173, %v8287
        %v8290 = vadd.f32 %v8174, %v8287
        %v8291 = vadd.f32 %v8175, %v8287
        %v8292 = vadd.f32 %v8176, %v8287
        %v8293 = vadd.f32 %v8177, %v8287
        %v8294 = vadd.f32 %v8178, %v8287
        %v8295 = vadd.f32 %v8179, %v8287
        %v8296 = vadd.f32 %v8180, %v8287
        %v8297 = vadd.f32 %v8181, %v8287
        %v8298 = vadd.f32 %v8182, %v8287
        %v8299 = vadd.f32 %v8183, %v8287
        %v8300 = vadd.f32 %v8184, %v8287
        %v8301 = vadd.f32 %v8185, %v8287
        %v8302 = vadd.f32 %v8186, %v8287
        %v8303 = vadd.f32 %v8187, %v8287
        %v8304 = vadd.f32 %v8188, %v8287
        %v8305 = vadd.f32 %v8189, %v8287
        %v8306 = vadd.f32 %v8190, %v8287
        %v8307 = vadd.f32 %v8191, %v8287
        %v8308 = vadd.f32 %v8192, %v8287
        %v8309 = vadd.f32 %v8193, %v8287
        %v8310 = vadd.f32 %v8194, %v8287
        %v8311 = vadd.f32 %v8195, %v8287
        %v8312 = vadd.f32 %v8196, %v8287
        %v8313 = vadd.f32 %v8197, %v8287
        %v8314 = vadd.f32 %v8198, %v8287
        %v8315 = vadd.f32 %v8199, %v8287
        %v8316 = vadd.f32 %v8200, %v8287
        %v8317 = vadd.f32 %v8201, %v8287
        %v8318 = vadd.f32 %v8202, %v8287
        %v8319 = vadd.f32 %v8203, %v8287
        %v8320 = vadd.f32 %v8204, %v8287
        %v8321 = vadd.f32 %v8205, %v8287
        %v8322 = vadd.f32 %v8206, %v8287
        %v8323 = vadd.f32 %v8207, %v8287
        %v8324 = vadd.f32 %v8208, %v8287
        %v8325 = vadd.f32 %v8209, %v8287
        %v8326 = vadd.f32 %v8210, %v8287
        %v8327 = vadd.f32 %v8211, %v8287
        %v8328 = vadd.f32 %v8212, %v8287
        %v8329 = vadd.f32 %v8213, %v8287
        %v8330 = vadd.f32 %v8214, %v8287
        %v8331 = vadd.f32 %v8215, %v8287
        %v8332 = vadd.f32 %v8216, %v8287
        %v8333 = vadd.f32 %v8217, %v8287
        %v8334 = vadd.f32 %v8218, %v8287
        %v8335 = vadd.f32 %v8219, %v8287
        %v8336 = vadd.f32 %v8220, %v8287
        %v8337 = vadd.f32 %v8221, %v8287
        %v8338 = vadd.f32 %v8222, %v8287
        %v8339 = vadd.f32 %v8223, %v8287
        %v8340 = vadd.f32 %v8224, %v8287
        %v8341 = vadd.f32 %v8225, %v8287
        %v8342 = vadd.f32 %v8226, %v8287
        %v8343 = vadd.f32 %v8227, %v8287
        %v8344 = vadd.f32 %v8228, %v8287
        %v8345 = vadd.f32 %v8229, %v8287
        %v8346 = vadd.f32 %v8230, %v8287
        %v8347 = vadd.f32 %v8231, %v8287
        %v8348 = vadd.f32 %v8232, %v8287
        %v8349 = vadd.f32 %v8233, %v8287
        %v8350 = vadd.f32 %v8234, %v8287
        %v8351 = vadd.f32 %v8235, %v8287
        %v8352 = vadd.f32 %v8236, %v8287
        %v8353 = vadd.f32 %v8237, %v8287
        %v8354 = vadd.f32 %v8238, %v8287
        %v8355 = vadd.f32 %v8239, %v8287
        %v8356 = vadd.f32 %v8240, %v8287
        %v8357 = vadd.f32 %v8241, %v8287
        %v8358 = vadd.f32 %v8242, %v8287
        %v8359 = vadd.f32 %v8243, %v8287
        %v8360 = vadd.f32 %v8244, %v8287
        %v8361 = vadd.f32 %v8245, %v8287
        %v8362 = vadd.f32 %v8246, %v8287
        %v8363 = vadd.f32 %v8247, %v8287
        %v8364 = vadd.f32 %v8248, %v8287
        %v8365 = vadd.f32 %v8249, %v8287
        %v8366 = vadd.f32 %v8250, %v8287
        %v8367 = vadd.f32 %v8251, %v8287
        %v8368 = vadd.f32 %v8252, %v8287
        %v8369 = vadd.f32 %v8253, %v8287
        %v8370 = vadd.f32 %v8254, %v8287
        %v8371 = vadd.f32 %v8255, %v8287
        %v8372 = vadd.f32 %v8256, %v8287
        %v8373 = vadd.f32 %v8257, %v8287
        %v8374 = vadd.f32 %v8258, %v8287
        %v8375 = vadd.f32 %v8259, %v8287
        %v8376 = vadd.f32 %v8260, %v8287
        %v8377 = vadd.f32 %v8261, %v8287
        %v8378 = vadd.f32 %v8262, %v8287
        %v8379 = vadd.f32 %v8263, %v8287
        %v8380 = vadd.f32 %v8264, %v8287
        %v8381 = vadd.f32 %v8265, %v8287
        %v8382 = vadd.f32 %v8266, %v8287
        %v8383 = vadd.f32 %v8267, %v8287
        %v8384 = vadd.f32 %v8268, %v8287
        %v8385 = vadd.f32 %v8269, %v8287
        %v8386 = vadd.f32 %v8270, %v8287
        %v8387 = vadd.f32 %v8271, %v8287
        %v8388 = vadd.f32 %v8272, %v8287
        %v8389 = vadd.f32 %v8273, %v8287
        %v8390 = vadd.f32 %v8274, %v8287
        %v8391 = vadd.f32 %v8275, %v8287
        %v8392 = vadd.f32 %v8276, %v8287
        %v8393 = vadd.f32 %v8277, %v8287
        %v8394 = vadd.f32 %v8278, %v8287
        %v8395 = vadd.f32 %v8279, %v8287
        %v8396 = vadd.f32 %v8280, %v8287
        %v8397 = vadd.f32 %v8281, %v8287
        %v8398 = vadd.f32 %v8282, %v8287
        %v8399 = vadd.f32 %v8283, %v8287
        %v8400 = vadd.f32 %v8284, %v8287
        %v8401 = vmax.f32 %v8289, 0.0
        %v8402 = vmax.f32 %v8290, 0.0
        %v8403 = vmax.f32 %v8291, 0.0
        %v8404 = vmax.f32 %v8292, 0.0
        %v8405 = vmax.f32 %v8293, 0.0
        %v8406 = vmax.f32 %v8294, 0.0
        %v8407 = vmax.f32 %v8295, 0.0
        %v8408 = vmax.f32 %v8296, 0.0
        %v8409 = vmax.f32 %v8297, 0.0
        %v8410 = vmax.f32 %v8298, 0.0
        %v8411 = vmax.f32 %v8299, 0.0
        %v8412 = vmax.f32 %v8300, 0.0
        %v8413 = vmax.f32 %v8301, 0.0
        %v8414 = vmax.f32 %v8302, 0.0
        %v8415 = vmax.f32 %v8303, 0.0
        %v8416 = vmax.f32 %v8304, 0.0
        %v8417 = vmax.f32 %v8305, 0.0
        %v8418 = vmax.f32 %v8306, 0.0
        %v8419 = vmax.f32 %v8307, 0.0
        %v8420 = vmax.f32 %v8308, 0.0
        %v8421 = vmax.f32 %v8309, 0.0
        %v8422 = vmax.f32 %v8310, 0.0
        %v8423 = vmax.f32 %v8311, 0.0
        %v8424 = vmax.f32 %v8312, 0.0
        %v8425 = vmax.f32 %v8313, 0.0
        %v8426 = vmax.f32 %v8314, 0.0
        %v8427 = vmax.f32 %v8315, 0.0
        %v8428 = vmax.f32 %v8316, 0.0
        %v8429 = vmax.f32 %v8317, 0.0
        %v8430 = vmax.f32 %v8318, 0.0
        %v8431 = vmax.f32 %v8319, 0.0
        %v8432 = vmax.f32 %v8320, 0.0
        %v8433 = vmax.f32 %v8321, 0.0
        %v8434 = vmax.f32 %v8322, 0.0
        %v8435 = vmax.f32 %v8323, 0.0
        %v8436 = vmax.f32 %v8324, 0.0
        %v8437 = vmax.f32 %v8325, 0.0
        %v8438 = vmax.f32 %v8326, 0.0
        %v8439 = vmax.f32 %v8327, 0.0
        %v8440 = vmax.f32 %v8328, 0.0
        %v8441 = vmax.f32 %v8329, 0.0
        %v8442 = vmax.f32 %v8330, 0.0
        %v8443 = vmax.f32 %v8331, 0.0
        %v8444 = vmax.f32 %v8332, 0.0
        %v8445 = vmax.f32 %v8333, 0.0
        %v8446 = vmax.f32 %v8334, 0.0
        %v8447 = vmax.f32 %v8335, 0.0
        %v8448 = vmax.f32 %v8336, 0.0
        %v8449 = vmax.f32 %v8337, 0.0
        %v8450 = vmax.f32 %v8338, 0.0
        %v8451 = vmax.f32 %v8339, 0.0
        %v8452 = vmax.f32 %v8340, 0.0
        %v8453 = vmax.f32 %v8341, 0.0
        %v8454 = vmax.f32 %v8342, 0.0
        %v8455 = vmax.f32 %v8343, 0.0
        %v8456 = vmax.f32 %v8344, 0.0
        %v8457 = vmax.f32 %v8345, 0.0
        %v8458 = vmax.f32 %v8346, 0.0
        %v8459 = vmax.f32 %v8347, 0.0
        %v8460 = vmax.f32 %v8348, 0.0
        %v8461 = vmax.f32 %v8349, 0.0
        %v8462 = vmax.f32 %v8350, 0.0
        %v8463 = vmax.f32 %v8351, 0.0
        %v8464 = vmax.f32 %v8352, 0.0
        %v8465 = vmax.f32 %v8353, 0.0
        %v8466 = vmax.f32 %v8354, 0.0
        %v8467 = vmax.f32 %v8355, 0.0
        %v8468 = vmax.f32 %v8356, 0.0
        %v8469 = vmax.f32 %v8357, 0.0
        %v8470 = vmax.f32 %v8358, 0.0
        %v8471 = vmax.f32 %v8359, 0.0
        %v8472 = vmax.f32 %v8360, 0.0
        %v8473 = vmax.f32 %v8361, 0.0
        %v8474 = vmax.f32 %v8362, 0.0
        %v8475 = vmax.f32 %v8363, 0.0
        %v8476 = vmax.f32 %v8364, 0.0
        %v8477 = vmax.f32 %v8365, 0.0
        %v8478 = vmax.f32 %v8366, 0.0
        %v8479 = vmax.f32 %v8367, 0.0
        %v8480 = vmax.f32 %v8368, 0.0
        %v8481 = vmax.f32 %v8369, 0.0
        %v8482 = vmax.f32 %v8370, 0.0
        %v8483 = vmax.f32 %v8371, 0.0
        %v8484 = vmax.f32 %v8372, 0.0
        %v8485 = vmax.f32 %v8373, 0.0
        %v8486 = vmax.f32 %v8374, 0.0
        %v8487 = vmax.f32 %v8375, 0.0
        %v8488 = vmax.f32 %v8376, 0.0
        %v8489 = vmax.f32 %v8377, 0.0
        %v8490 = vmax.f32 %v8378, 0.0
        %v8491 = vmax.f32 %v8379, 0.0
        %v8492 = vmax.f32 %v8380, 0.0
        %v8493 = vmax.f32 %v8381, 0.0
        %v8494 = vmax.f32 %v8382, 0.0
        %v8495 = vmax.f32 %v8383, 0.0
        %v8496 = vmax.f32 %v8384, 0.0
        %v8497 = vmax.f32 %v8385, 0.0
        %v8498 = vmax.f32 %v8386, 0.0
        %v8499 = vmax.f32 %v8387, 0.0
        %v8500 = vmax.f32 %v8388, 0.0
        %v8501 = vmax.f32 %v8389, 0.0
        %v8502 = vmax.f32 %v8390, 0.0
        %v8503 = vmax.f32 %v8391, 0.0
        %v8504 = vmax.f32 %v8392, 0.0
        %v8505 = vmax.f32 %v8393, 0.0
        %v8506 = vmax.f32 %v8394, 0.0
        %v8507 = vmax.f32 %v8395, 0.0
        %v8508 = vmax.f32 %v8396, 0.0
        %v8509 = vmax.f32 %v8397, 0.0
        %v8510 = vmax.f32 %v8398, 0.0
        %v8511 = vmax.f32 %v8399, 0.0
        %v8512 = vmax.f32 %v8400, 0.0
        %vm8513 = vcmask 261120
        %8514 = vst.msk [vmem:[#allocation2] sm:$0xff] %vm8513, %v8401
        %8515 = vst.msk [vmem:[#allocation2 + $0x8] sm:$0xff] %vm8513, %v8402
        %8516 = vst.msk [vmem:[#allocation2 + $0x10] sm:$0xff] %vm8513, %v8403
        %8517 = vst.msk [vmem:[#allocation2 + $0x18] sm:$0xff] %vm8513, %v8404
        %8518 = vst.msk [vmem:[#allocation2 + $0x20] sm:$0xff] %vm8513, %v8405
        %8519 = vst.msk [vmem:[#allocation2 + $0x28] sm:$0xff] %vm8513, %v8406
        %8520 = vst.msk [vmem:[#allocation2 + $0x30] sm:$0xff] %vm8513, %v8407
        %8521 = vst.msk [vmem:[#allocation2 + $0x38] sm:$0xff] %vm8513, %v8408
        %8522 = vst.msk [vmem:[#allocation2 + $0x40] sm:$0xff] %vm8513, %v8409
        %8523 = vst.msk [vmem:[#allocation2 + $0x48] sm:$0xff] %vm8513, %v8410
        %8524 = vst.msk [vmem:[#allocation2 + $0x50] sm:$0xff] %vm8513, %v8411
        %8525 = vst.msk [vmem:[#allocation2 + $0x58] sm:$0xff] %vm8513, %v8412
        %8526 = vst.msk [vmem:[#allocation2 + $0x60] sm:$0xff] %vm8513, %v8413
        %8527 = vst.msk [vmem:[#allocation2 + $0x68] sm:$0xff] %vm8513, %v8414
        %8528 = vst.msk [vmem:[#allocation2 + $0x70] sm:$0xff] %vm8513, %v8415
        %8529 = vst.msk [vmem:[#allocation2 + $0x78] sm:$0xff] %vm8513, %v8416
        %8530 = vst.msk [vmem:[#allocation2 + $0x80] sm:$0xff] %vm8513, %v8417
        %8531 = vst.msk [vmem:[#allocation2 + $0x88] sm:$0xff] %vm8513, %v8418
        %8532 = vst.msk [vmem:[#allocation2 + $0x90] sm:$0xff] %vm8513, %v8419
        %8533 = vst.msk [vmem:[#allocation2 + $0x98] sm:$0xff] %vm8513, %v8420
        %8534 = vst.msk [vmem:[#allocation2 + $0xa0] sm:$0xff] %vm8513, %v8421
        %8535 = vst.msk [vmem:[#allocation2 + $0xa8] sm:$0xff] %vm8513, %v8422
        %8536 = vst.msk [vmem:[#allocation2 + $0xb0] sm:$0xff] %vm8513, %v8423
        %8537 = vst.msk [vmem:[#allocation2 + $0xb8] sm:$0xff] %vm8513, %v8424
        %8538 = vst.msk [vmem:[#allocation2 + $0xc0] sm:$0xff] %vm8513, %v8425
        %8539 = vst.msk [vmem:[#allocation2 + $0xc8] sm:$0xff] %vm8513, %v8426
        %8540 = vst.msk [vmem:[#allocation2 + $0xd0] sm:$0xff] %vm8513, %v8427
        %8541 = vst.msk [vmem:[#allocation2 + $0xd8] sm:$0xff] %vm8513, %v8428
        %8542 = vst.msk [vmem:[#allocation2 + $0xe0] sm:$0xff] %vm8513, %v8429
        %8543 = vst.msk [vmem:[#allocation2 + $0xe8] sm:$0xff] %vm8513, %v8430
        %8544 = vst.msk [vmem:[#allocation2 + $0xf0] sm:$0xff] %vm8513, %v8431
        %8545 = vst.msk [vmem:[#allocation2 + $0xf8] sm:$0xff] %vm8513, %v8432
        %8546 = vst.msk [vmem:[#allocation2 + $0x100] sm:$0xff] %vm8513, %v8433
        %8547 = vst.msk [vmem:[#allocation2 + $0x108] sm:$0xff] %vm8513, %v8434
        %8548 = vst.msk [vmem:[#allocation2 + $0x110] sm:$0xff] %vm8513, %v8435
        %8549 = vst.msk [vmem:[#allocation2 + $0x118] sm:$0xff] %vm8513, %v8436
        %8550 = vst.msk [vmem:[#allocation2 + $0x120] sm:$0xff] %vm8513, %v8437
        %8551 = vst.msk [vmem:[#allocation2 + $0x128] sm:$0xff] %vm8513, %v8438
        %8552 = vst.msk [vmem:[#allocation2 + $0x130] sm:$0xff] %vm8513, %v8439
        %8553 = vst.msk [vmem:[#allocation2 + $0x138] sm:$0xff] %vm8513, %v8440
        %8554 = vst.msk [vmem:[#allocation2 + $0x140] sm:$0xff] %vm8513, %v8441
        %8555 = vst.msk [vmem:[#allocation2 + $0x148] sm:$0xff] %vm8513, %v8442
        %8556 = vst.msk [vmem:[#allocation2 + $0x150] sm:$0xff] %vm8513, %v8443
        %8557 = vst.msk [vmem:[#allocation2 + $0x158] sm:$0xff] %vm8513, %v8444
        %8558 = vst.msk [vmem:[#allocation2 + $0x160] sm:$0xff] %vm8513, %v8445
        %8559 = vst.msk [vmem:[#allocation2 + $0x168] sm:$0xff] %vm8513, %v8446
        %8560 = vst.msk [vmem:[#allocation2 + $0x170] sm:$0xff] %vm8513, %v8447
        %8561 = vst.msk [vmem:[#allocation2 + $0x178] sm:$0xff] %vm8513, %v8448
        %8562 = vst.msk [vmem:[#allocation2 + $0x180] sm:$0xff] %vm8513, %v8449
        %8563 = vst.msk [vmem:[#allocation2 + $0x188] sm:$0xff] %vm8513, %v8450
        %8564 = vst.msk [vmem:[#allocation2 + $0x190] sm:$0xff] %vm8513, %v8451
        %8565 = vst.msk [vmem:[#allocation2 + $0x198] sm:$0xff] %vm8513, %v8452
        %8566 = vst.msk [vmem:[#allocation2 + $0x1a0] sm:$0xff] %vm8513, %v8453
        %8567 = vst.msk [vmem:[#allocation2 + $0x1a8] sm:$0xff] %vm8513, %v8454
        %8568 = vst.msk [vmem:[#allocation2 + $0x1b0] sm:$0xff] %vm8513, %v8455
        %8569 = vst.msk [vmem:[#allocation2 + $0x1b8] sm:$0xff] %vm8513, %v8456
        %8570 = vst.msk [vmem:[#allocation2 + $0x1c0] sm:$0xff] %vm8513, %v8457
        %8571 = vst.msk [vmem:[#allocation2 + $0x1c8] sm:$0xff] %vm8513, %v8458
        %8572 = vst.msk [vmem:[#allocation2 + $0x1d0] sm:$0xff] %vm8513, %v8459
        %8573 = vst.msk [vmem:[#allocation2 + $0x1d8] sm:$0xff] %vm8513, %v8460
        %8574 = vst.msk [vmem:[#allocation2 + $0x1e0] sm:$0xff] %vm8513, %v8461
        %8575 = vst.msk [vmem:[#allocation2 + $0x1e8] sm:$0xff] %vm8513, %v8462
        %8576 = vst.msk [vmem:[#allocation2 + $0x1f0] sm:$0xff] %vm8513, %v8463
        %8577 = vst.msk [vmem:[#allocation2 + $0x1f8] sm:$0xff] %vm8513, %v8464
        %8578 = vst.msk [vmem:[#allocation2 + $0x200] sm:$0xff] %vm8513, %v8465
        %8579 = vst.msk [vmem:[#allocation2 + $0x208] sm:$0xff] %vm8513, %v8466
        %8580 = vst.msk [vmem:[#allocation2 + $0x210] sm:$0xff] %vm8513, %v8467
        %8581 = vst.msk [vmem:[#allocation2 + $0x218] sm:$0xff] %vm8513, %v8468
        %8582 = vst.msk [vmem:[#allocation2 + $0x220] sm:$0xff] %vm8513, %v8469
        %8583 = vst.msk [vmem:[#allocation2 + $0x228] sm:$0xff] %vm8513, %v8470
        %8584 = vst.msk [vmem:[#allocation2 + $0x230] sm:$0xff] %vm8513, %v8471
        %8585 = vst.msk [vmem:[#allocation2 + $0x238] sm:$0xff] %vm8513, %v8472
        %8586 = vst.msk [vmem:[#allocation2 + $0x240] sm:$0xff] %vm8513, %v8473
        %8587 = vst.msk [vmem:[#allocation2 + $0x248] sm:$0xff] %vm8513, %v8474
        %8588 = vst.msk [vmem:[#allocation2 + $0x250] sm:$0xff] %vm8513, %v8475
        %8589 = vst.msk [vmem:[#allocation2 + $0x258] sm:$0xff] %vm8513, %v8476
        %8590 = vst.msk [vmem:[#allocation2 + $0x260] sm:$0xff] %vm8513, %v8477
        %8591 = vst.msk [vmem:[#allocation2 + $0x268] sm:$0xff] %vm8513, %v8478
        %8592 = vst.msk [vmem:[#allocation2 + $0x270] sm:$0xff] %vm8513, %v8479
        %8593 = vst.msk [vmem:[#allocation2 + $0x278] sm:$0xff] %vm8513, %v8480
        %8594 = vst.msk [vmem:[#allocation2 + $0x280] sm:$0xff] %vm8513, %v8481
        %8595 = vst.msk [vmem:[#allocation2 + $0x288] sm:$0xff] %vm8513, %v8482
        %8596 = vst.msk [vmem:[#allocation2 + $0x290] sm:$0xff] %vm8513, %v8483
        %8597 = vst.msk [vmem:[#allocation2 + $0x298] sm:$0xff] %vm8513, %v8484
        %8598 = vst.msk [vmem:[#allocation2 + $0x2a0] sm:$0xff] %vm8513, %v8485
        %8599 = vst.msk [vmem:[#allocation2 + $0x2a8] sm:$0xff] %vm8513, %v8486
        %8600 = vst.msk [vmem:[#allocation2 + $0x2b0] sm:$0xff] %vm8513, %v8487
        %8601 = vst.msk [vmem:[#allocation2 + $0x2b8] sm:$0xff] %vm8513, %v8488
        %8602 = vst.msk [vmem:[#allocation2 + $0x2c0] sm:$0xff] %vm8513, %v8489
        %8603 = vst.msk [vmem:[#allocation2 + $0x2c8] sm:$0xff] %vm8513, %v8490
        %8604 = vst.msk [vmem:[#allocation2 + $0x2d0] sm:$0xff] %vm8513, %v8491
        %8605 = vst.msk [vmem:[#allocation2 + $0x2d8] sm:$0xff] %vm8513, %v8492
        %8606 = vst.msk [vmem:[#allocation2 + $0x2e0] sm:$0xff] %vm8513, %v8493
        %8607 = vst.msk [vmem:[#allocation2 + $0x2e8] sm:$0xff] %vm8513, %v8494
        %8608 = vst.msk [vmem:[#allocation2 + $0x2f0] sm:$0xff] %vm8513, %v8495
        %8609 = vst.msk [vmem:[#allocation2 + $0x2f8] sm:$0xff] %vm8513, %v8496
        %8610 = vst.msk [vmem:[#allocation2 + $0x300] sm:$0xff] %vm8513, %v8497
        %8611 = vst.msk [vmem:[#allocation2 + $0x308] sm:$0xff] %vm8513, %v8498
        %8612 = vst.msk [vmem:[#allocation2 + $0x310] sm:$0xff] %vm8513, %v8499
        %8613 = vst.msk [vmem:[#allocation2 + $0x318] sm:$0xff] %vm8513, %v8500
        %8614 = vst.msk [vmem:[#allocation2 + $0x320] sm:$0xff] %vm8513, %v8501
        %8615 = vst.msk [vmem:[#allocation2 + $0x328] sm:$0xff] %vm8513, %v8502
        %8616 = vst.msk [vmem:[#allocation2 + $0x330] sm:$0xff] %vm8513, %v8503
        %8617 = vst.msk [vmem:[#allocation2 + $0x338] sm:$0xff] %vm8513, %v8504
        %8618 = vst.msk [vmem:[#allocation2 + $0x340] sm:$0xff] %vm8513, %v8505
        %8619 = vst.msk [vmem:[#allocation2 + $0x348] sm:$0xff] %vm8513, %v8506
        %8620 = vst.msk [vmem:[#allocation2 + $0x350] sm:$0xff] %vm8513, %v8507
        %8621 = vst.msk [vmem:[#allocation2 + $0x358] sm:$0xff] %vm8513, %v8508
        %8622 = vst.msk [vmem:[#allocation2 + $0x360] sm:$0xff] %vm8513, %v8509
        %8623 = vst.msk [vmem:[#allocation2 + $0x368] sm:$0xff] %vm8513, %v8510
        %8624 = vst.msk [vmem:[#allocation2 + $0x370] sm:$0xff] %vm8513, %v8511
        %8625 = vst.msk [vmem:[#allocation2 + $0x378] sm:$0xff] %vm8513, %v8512
        %8626 = vst.msk [vmem:[#allocation2 + $0x380] sm:$0xff] %vm8513, 0.0
        %v8627 = vld [vmem:[#allocation2] sm:$0xff]
        %v8628 = vld [vmem:[#allocation2 + $0x8] sm:$0xff]
        %v8629 = vld [vmem:[#allocation2 + $0x10] sm:$0xff]
        %v8630 = vld [vmem:[#allocation2 + $0x18] sm:$0xff]
        %v8631 = vld [vmem:[#allocation2 + $0x20] sm:$0xff]
        %v8632 = vld [vmem:[#allocation2 + $0x28] sm:$0xff]
        %v8633 = vld [vmem:[#allocation2 + $0x30] sm:$0xff]
        %v8634 = vld [vmem:[#allocation2 + $0x38] sm:$0xff]
        %v8635 = vld [vmem:[#allocation2 + $0x40] sm:$0xff]
        %v8636 = vld [vmem:[#allocation2 + $0x48] sm:$0xff]
        %v8637 = vld [vmem:[#allocation2 + $0x50] sm:$0xff]
        %v8638 = vld [vmem:[#allocation2 + $0x58] sm:$0xff]
        %v8639 = vld [vmem:[#allocation2 + $0x60] sm:$0xff]
        %v8640 = vld [vmem:[#allocation2 + $0x68] sm:$0xff]
        %v8641 = vld [vmem:[#allocation2 + $0x70] sm:$0xff]
        %v8642 = vld [vmem:[#allocation2 + $0x78] sm:$0xff]
        %v8643 = vld [vmem:[#allocation2 + $0x80] sm:$0xff]
        %v8644 = vld [vmem:[#allocation2 + $0x88] sm:$0xff]
        %v8645 = vld [vmem:[#allocation2 + $0x90] sm:$0xff]
        %v8646 = vld [vmem:[#allocation2 + $0x98] sm:$0xff]
        %v8647 = vld [vmem:[#allocation2 + $0xa0] sm:$0xff]
        %v8648 = vld [vmem:[#allocation2 + $0xa8] sm:$0xff]
        %v8649 = vld [vmem:[#allocation2 + $0xb0] sm:$0xff]
        %v8650 = vld [vmem:[#allocation2 + $0xb8] sm:$0xff]
        %v8651 = vld [vmem:[#allocation2 + $0xc0] sm:$0xff]
        %v8652 = vld [vmem:[#allocation2 + $0xc8] sm:$0xff]
        %v8653 = vld [vmem:[#allocation2 + $0xd0] sm:$0xff]
        %v8654 = vld [vmem:[#allocation2 + $0xd8] sm:$0xff]
        %v8655 = vld [vmem:[#allocation2 + $0xe0] sm:$0xff]
        %v8656 = vld [vmem:[#allocation2 + $0xe8] sm:$0xff]
        %v8657 = vld [vmem:[#allocation2 + $0xf0] sm:$0xff]
        %v8658 = vld [vmem:[#allocation2 + $0xf8] sm:$0xff]
        %v8659 = vld [vmem:[#allocation2 + $0x100] sm:$0xff]
        %v8660 = vld [vmem:[#allocation2 + $0x108] sm:$0xff]
        %v8661 = vld [vmem:[#allocation2 + $0x110] sm:$0xff]
        %v8662 = vld [vmem:[#allocation2 + $0x118] sm:$0xff]
        %v8663 = vld [vmem:[#allocation2 + $0x120] sm:$0xff]
        %v8664 = vld [vmem:[#allocation2 + $0x128] sm:$0xff]
        %v8665 = vld [vmem:[#allocation2 + $0x130] sm:$0xff]
        %v8666 = vld [vmem:[#allocation2 + $0x138] sm:$0xff]
        %v8667 = vld [vmem:[#allocation2 + $0x140] sm:$0xff]
        %v8668 = vld [vmem:[#allocation2 + $0x148] sm:$0xff]
        %v8669 = vld [vmem:[#allocation2 + $0x150] sm:$0xff]
        %v8670 = vld [vmem:[#allocation2 + $0x158] sm:$0xff]
        %v8671 = vld [vmem:[#allocation2 + $0x160] sm:$0xff]
        %v8672 = vld [vmem:[#allocation2 + $0x168] sm:$0xff]
        %v8673 = vld [vmem:[#allocation2 + $0x170] sm:$0xff]
        %v8674 = vld [vmem:[#allocation2 + $0x178] sm:$0xff]
        %v8675 = vld [vmem:[#allocation2 + $0x180] sm:$0xff]
        %v8676 = vld [vmem:[#allocation2 + $0x188] sm:$0xff]
        %v8677 = vld [vmem:[#allocation2 + $0x190] sm:$0xff]
        %v8678 = vld [vmem:[#allocation2 + $0x198] sm:$0xff]
        %v8679 = vld [vmem:[#allocation2 + $0x1a0] sm:$0xff]
        %v8680 = vld [vmem:[#allocation2 + $0x1a8] sm:$0xff]
        %v8681 = vld [vmem:[#allocation2 + $0x1b0] sm:$0xff]
        %v8682 = vld [vmem:[#allocation2 + $0x1b8] sm:$0xff]
        %v8683 = vld [vmem:[#allocation2 + $0x1c0] sm:$0xff]
        %v8684 = vld [vmem:[#allocation2 + $0x1c8] sm:$0xff]
        %v8685 = vld [vmem:[#allocation2 + $0x1d0] sm:$0xff]
        %v8686 = vld [vmem:[#allocation2 + $0x1d8] sm:$0xff]
        %v8687 = vld [vmem:[#allocation2 + $0x1e0] sm:$0xff]
        %v8688 = vld [vmem:[#allocation2 + $0x1e8] sm:$0xff]
        %v8689 = vld [vmem:[#allocation2 + $0x1f0] sm:$0xff]
        %v8690 = vld [vmem:[#allocation2 + $0x1f8] sm:$0xff]
        %v8691 = vld [vmem:[#allocation2 + $0x200] sm:$0xff]
        %v8692 = vld [vmem:[#allocation2 + $0x208] sm:$0xff]
        %v8693 = vld [vmem:[#allocation2 + $0x210] sm:$0xff]
        %v8694 = vld [vmem:[#allocation2 + $0x218] sm:$0xff]
        %v8695 = vld [vmem:[#allocation2 + $0x220] sm:$0xff]
        %v8696 = vld [vmem:[#allocation2 + $0x228] sm:$0xff]
        %v8697 = vld [vmem:[#allocation2 + $0x230] sm:$0xff]
        %v8698 = vld [vmem:[#allocation2 + $0x238] sm:$0xff]
        %v8699 = vld [vmem:[#allocation2 + $0x240] sm:$0xff]
        %v8700 = vld [vmem:[#allocation2 + $0x248] sm:$0xff]
        %v8701 = vld [vmem:[#allocation2 + $0x250] sm:$0xff]
        %v8702 = vld [vmem:[#allocation2 + $0x258] sm:$0xff]
        %v8703 = vld [vmem:[#allocation2 + $0x260] sm:$0xff]
        %v8704 = vld [vmem:[#allocation2 + $0x268] sm:$0xff]
        %v8705 = vld [vmem:[#allocation2 + $0x270] sm:$0xff]
        %v8706 = vld [vmem:[#allocation2 + $0x278] sm:$0xff]
        %v8707 = vld [vmem:[#allocation2 + $0x280] sm:$0xff]
        %v8708 = vld [vmem:[#allocation2 + $0x288] sm:$0xff]
        %v8709 = vld [vmem:[#allocation2 + $0x290] sm:$0xff]
        %v8710 = vld [vmem:[#allocation2 + $0x298] sm:$0xff]
        %v8711 = vld [vmem:[#allocation2 + $0x2a0] sm:$0xff]
        %v8712 = vld [vmem:[#allocation2 + $0x2a8] sm:$0xff]
        %v8713 = vld [vmem:[#allocation2 + $0x2b0] sm:$0xff]
        %v8714 = vld [vmem:[#allocation2 + $0x2b8] sm:$0xff]
        %v8715 = vld [vmem:[#allocation2 + $0x2c0] sm:$0xff]
        %v8716 = vld [vmem:[#allocation2 + $0x2c8] sm:$0xff]
        %v8717 = vld [vmem:[#allocation2 + $0x2d0] sm:$0xff]
        %v8718 = vld [vmem:[#allocation2 + $0x2d8] sm:$0xff]
        %v8719 = vld [vmem:[#allocation2 + $0x2e0] sm:$0xff]
        %v8720 = vld [vmem:[#allocation2 + $0x2e8] sm:$0xff]
        %v8721 = vld [vmem:[#allocation2 + $0x2f0] sm:$0xff]
        %v8722 = vld [vmem:[#allocation2 + $0x2f8] sm:$0xff]
        %v8723 = vld [vmem:[#allocation2 + $0x300] sm:$0xff]
        %v8724 = vld [vmem:[#allocation2 + $0x308] sm:$0xff]
        %v8725 = vld [vmem:[#allocation2 + $0x310] sm:$0xff]
        %v8726 = vld [vmem:[#allocation2 + $0x318] sm:$0xff]
        %v8727 = vld [vmem:[#allocation2 + $0x320] sm:$0xff]
        %v8728 = vld [vmem:[#allocation2 + $0x328] sm:$0xff]
        %v8729 = vld [vmem:[#allocation2 + $0x330] sm:$0xff]
        %v8730 = vld [vmem:[#allocation2 + $0x338] sm:$0xff]
        %v8731 = vld [vmem:[#allocation2 + $0x340] sm:$0xff]
        %v8732 = vld [vmem:[#allocation2 + $0x348] sm:$0xff]
        %v8733 = vld [vmem:[#allocation2 + $0x350] sm:$0xff]
        %v8734 = vld [vmem:[#allocation2 + $0x358] sm:$0xff]
        %v8735 = vld [vmem:[#allocation2 + $0x360] sm:$0xff]
        %v8736 = vld [vmem:[#allocation2 + $0x368] sm:$0xff]
        %v8737 = vld [vmem:[#allocation2 + $0x370] sm:$0xff]
        %v8738 = vld [vmem:[#allocation2 + $0x378] sm:$0xff]
        %v8739 = vld [vmem:[#allocation2 + $0x1] sm:$0xff]
        %v8740 = vld [vmem:[#allocation2 + $0x9] sm:$0xff]
        %v8741 = vld [vmem:[#allocation2 + $0x11] sm:$0xff]
        %v8742 = vld [vmem:[#allocation2 + $0x19] sm:$0xff]
        %v8743 = vld [vmem:[#allocation2 + $0x21] sm:$0xff]
        %v8744 = vld [vmem:[#allocation2 + $0x29] sm:$0xff]
        %v8745 = vld [vmem:[#allocation2 + $0x31] sm:$0xff]
        %v8746 = vld [vmem:[#allocation2 + $0x39] sm:$0xff]
        %v8747 = vld [vmem:[#allocation2 + $0x41] sm:$0xff]
        %v8748 = vld [vmem:[#allocation2 + $0x49] sm:$0xff]
        %v8749 = vld [vmem:[#allocation2 + $0x51] sm:$0xff]
        %v8750 = vld [vmem:[#allocation2 + $0x59] sm:$0xff]
        %v8751 = vld [vmem:[#allocation2 + $0x61] sm:$0xff]
        %v8752 = vld [vmem:[#allocation2 + $0x69] sm:$0xff]
        %v8753 = vld [vmem:[#allocation2 + $0x71] sm:$0xff]
        %v8754 = vld [vmem:[#allocation2 + $0x79] sm:$0xff]
        %v8755 = vld [vmem:[#allocation2 + $0x81] sm:$0xff]
        %v8756 = vld [vmem:[#allocation2 + $0x89] sm:$0xff]
        %v8757 = vld [vmem:[#allocation2 + $0x91] sm:$0xff]
        %v8758 = vld [vmem:[#allocation2 + $0x99] sm:$0xff]
        %v8759 = vld [vmem:[#allocation2 + $0xa1] sm:$0xff]
        %v8760 = vld [vmem:[#allocation2 + $0xa9] sm:$0xff]
        %v8761 = vld [vmem:[#allocation2 + $0xb1] sm:$0xff]
        %v8762 = vld [vmem:[#allocation2 + $0xb9] sm:$0xff]
        %v8763 = vld [vmem:[#allocation2 + $0xc1] sm:$0xff]
        %v8764 = vld [vmem:[#allocation2 + $0xc9] sm:$0xff]
        %v8765 = vld [vmem:[#allocation2 + $0xd1] sm:$0xff]
        %v8766 = vld [vmem:[#allocation2 + $0xd9] sm:$0xff]
        %v8767 = vld [vmem:[#allocation2 + $0xe1] sm:$0xff]
        %v8768 = vld [vmem:[#allocation2 + $0xe9] sm:$0xff]
        %v8769 = vld [vmem:[#allocation2 + $0xf1] sm:$0xff]
        %v8770 = vld [vmem:[#allocation2 + $0xf9] sm:$0xff]
        %v8771 = vld [vmem:[#allocation2 + $0x101] sm:$0xff]
        %v8772 = vld [vmem:[#allocation2 + $0x109] sm:$0xff]
        %v8773 = vld [vmem:[#allocation2 + $0x111] sm:$0xff]
        %v8774 = vld [vmem:[#allocation2 + $0x119] sm:$0xff]
        %v8775 = vld [vmem:[#allocation2 + $0x121] sm:$0xff]
        %v8776 = vld [vmem:[#allocation2 + $0x129] sm:$0xff]
        %v8777 = vld [vmem:[#allocation2 + $0x131] sm:$0xff]
        %v8778 = vld [vmem:[#allocation2 + $0x139] sm:$0xff]
        %v8779 = vld [vmem:[#allocation2 + $0x141] sm:$0xff]
        %v8780 = vld [vmem:[#allocation2 + $0x149] sm:$0xff]
        %v8781 = vld [vmem:[#allocation2 + $0x151] sm:$0xff]
        %v8782 = vld [vmem:[#allocation2 + $0x159] sm:$0xff]
        %v8783 = vld [vmem:[#allocation2 + $0x161] sm:$0xff]
        %v8784 = vld [vmem:[#allocation2 + $0x169] sm:$0xff]
        %v8785 = vld [vmem:[#allocation2 + $0x171] sm:$0xff]
        %v8786 = vld [vmem:[#allocation2 + $0x179] sm:$0xff]
        %v8787 = vld [vmem:[#allocation2 + $0x181] sm:$0xff]
        %v8788 = vld [vmem:[#allocation2 + $0x189] sm:$0xff]
        %v8789 = vld [vmem:[#allocation2 + $0x191] sm:$0xff]
        %v8790 = vld [vmem:[#allocation2 + $0x199] sm:$0xff]
        %v8791 = vld [vmem:[#allocation2 + $0x1a1] sm:$0xff]
        %v8792 = vld [vmem:[#allocation2 + $0x1a9] sm:$0xff]
        %v8793 = vld [vmem:[#allocation2 + $0x1b1] sm:$0xff]
        %v8794 = vld [vmem:[#allocation2 + $0x1b9] sm:$0xff]
        %v8795 = vld [vmem:[#allocation2 + $0x1c1] sm:$0xff]
        %v8796 = vld [vmem:[#allocation2 + $0x1c9] sm:$0xff]
        %v8797 = vld [vmem:[#allocation2 + $0x1d1] sm:$0xff]
        %v8798 = vld [vmem:[#allocation2 + $0x1d9] sm:$0xff]
        %v8799 = vld [vmem:[#allocation2 + $0x1e1] sm:$0xff]
        %v8800 = vld [vmem:[#allocation2 + $0x1e9] sm:$0xff]
        %v8801 = vld [vmem:[#allocation2 + $0x1f1] sm:$0xff]
        %v8802 = vld [vmem:[#allocation2 + $0x1f9] sm:$0xff]
        %v8803 = vld [vmem:[#allocation2 + $0x201] sm:$0xff]
        %v8804 = vld [vmem:[#allocation2 + $0x209] sm:$0xff]
        %v8805 = vld [vmem:[#allocation2 + $0x211] sm:$0xff]
        %v8806 = vld [vmem:[#allocation2 + $0x219] sm:$0xff]
        %v8807 = vld [vmem:[#allocation2 + $0x221] sm:$0xff]
        %v8808 = vld [vmem:[#allocation2 + $0x229] sm:$0xff]
        %v8809 = vld [vmem:[#allocation2 + $0x231] sm:$0xff]
        %v8810 = vld [vmem:[#allocation2 + $0x239] sm:$0xff]
        %v8811 = vld [vmem:[#allocation2 + $0x241] sm:$0xff]
        %v8812 = vld [vmem:[#allocation2 + $0x249] sm:$0xff]
        %v8813 = vld [vmem:[#allocation2 + $0x251] sm:$0xff]
        %v8814 = vld [vmem:[#allocation2 + $0x259] sm:$0xff]
        %v8815 = vld [vmem:[#allocation2 + $0x261] sm:$0xff]
        %v8816 = vld [vmem:[#allocation2 + $0x269] sm:$0xff]
        %v8817 = vld [vmem:[#allocation2 + $0x271] sm:$0xff]
        %v8818 = vld [vmem:[#allocation2 + $0x279] sm:$0xff]
        %v8819 = vld [vmem:[#allocation2 + $0x281] sm:$0xff]
        %v8820 = vld [vmem:[#allocation2 + $0x289] sm:$0xff]
        %v8821 = vld [vmem:[#allocation2 + $0x291] sm:$0xff]
        %v8822 = vld [vmem:[#allocation2 + $0x299] sm:$0xff]
        %v8823 = vld [vmem:[#allocation2 + $0x2a1] sm:$0xff]
        %v8824 = vld [vmem:[#allocation2 + $0x2a9] sm:$0xff]
        %v8825 = vld [vmem:[#allocation2 + $0x2b1] sm:$0xff]
        %v8826 = vld [vmem:[#allocation2 + $0x2b9] sm:$0xff]
        %v8827 = vld [vmem:[#allocation2 + $0x2c1] sm:$0xff]
        %v8828 = vld [vmem:[#allocation2 + $0x2c9] sm:$0xff]
        %v8829 = vld [vmem:[#allocation2 + $0x2d1] sm:$0xff]
        %v8830 = vld [vmem:[#allocation2 + $0x2d9] sm:$0xff]
        %v8831 = vld [vmem:[#allocation2 + $0x2e1] sm:$0xff]
        %v8832 = vld [vmem:[#allocation2 + $0x2e9] sm:$0xff]
        %v8833 = vld [vmem:[#allocation2 + $0x2f1] sm:$0xff]
        %v8834 = vld [vmem:[#allocation2 + $0x2f9] sm:$0xff]
        %v8835 = vld [vmem:[#allocation2 + $0x301] sm:$0xff]
        %v8836 = vld [vmem:[#allocation2 + $0x309] sm:$0xff]
        %v8837 = vld [vmem:[#allocation2 + $0x311] sm:$0xff]
        %v8838 = vld [vmem:[#allocation2 + $0x319] sm:$0xff]
        %v8839 = vld [vmem:[#allocation2 + $0x321] sm:$0xff]
        %v8840 = vld [vmem:[#allocation2 + $0x329] sm:$0xff]
        %v8841 = vld [vmem:[#allocation2 + $0x331] sm:$0xff]
        %v8842 = vld [vmem:[#allocation2 + $0x339] sm:$0xff]
        %v8843 = vld [vmem:[#allocation2 + $0x341] sm:$0xff]
        %v8844 = vld [vmem:[#allocation2 + $0x349] sm:$0xff]
        %v8845 = vld [vmem:[#allocation2 + $0x351] sm:$0xff]
        %v8846 = vld [vmem:[#allocation2 + $0x359] sm:$0xff]
        %v8847 = vld [vmem:[#allocation2 + $0x361] sm:$0xff]
        %v8848 = vld [vmem:[#allocation2 + $0x369] sm:$0xff]
        %v8849 = vld [vmem:[#allocation2 + $0x371] sm:$0xff]
        %v8850 = vld [vmem:[#allocation2 + $0x379] sm:$0xff]
        %v8851 = vmax.f32 %v8627, %v8739
        %v8852 = vmax.f32 %v8628, %v8740
        %v8853 = vmax.f32 %v8629, %v8741
        %v8854 = vmax.f32 %v8630, %v8742
        %v8855 = vmax.f32 %v8631, %v8743
        %v8856 = vmax.f32 %v8632, %v8744
        %v8857 = vmax.f32 %v8633, %v8745
        %v8858 = vmax.f32 %v8634, %v8746
        %v8859 = vmax.f32 %v8635, %v8747
        %v8860 = vmax.f32 %v8636, %v8748
        %v8861 = vmax.f32 %v8637, %v8749
        %v8862 = vmax.f32 %v8638, %v8750
        %v8863 = vmax.f32 %v8639, %v8751
        %v8864 = vmax.f32 %v8640, %v8752
        %v8865 = vmax.f32 %v8641, %v8753
        %v8866 = vmax.f32 %v8642, %v8754
        %v8867 = vmax.f32 %v8643, %v8755
        %v8868 = vmax.f32 %v8644, %v8756
        %v8869 = vmax.f32 %v8645, %v8757
        %v8870 = vmax.f32 %v8646, %v8758
        %v8871 = vmax.f32 %v8647, %v8759
        %v8872 = vmax.f32 %v8648, %v8760
        %v8873 = vmax.f32 %v8649, %v8761
        %v8874 = vmax.f32 %v8650, %v8762
        %v8875 = vmax.f32 %v8651, %v8763
        %v8876 = vmax.f32 %v8652, %v8764
        %v8877 = vmax.f32 %v8653, %v8765
        %v8878 = vmax.f32 %v8654, %v8766
        %v8879 = vmax.f32 %v8655, %v8767
        %v8880 = vmax.f32 %v8656, %v8768
        %v8881 = vmax.f32 %v8657, %v8769
        %v8882 = vmax.f32 %v8658, %v8770
        %v8883 = vmax.f32 %v8659, %v8771
        %v8884 = vmax.f32 %v8660, %v8772
        %v8885 = vmax.f32 %v8661, %v8773
        %v8886 = vmax.f32 %v8662, %v8774
        %v8887 = vmax.f32 %v8663, %v8775
        %v8888 = vmax.f32 %v8664, %v8776
        %v8889 = vmax.f32 %v8665, %v8777
        %v8890 = vmax.f32 %v8666, %v8778
        %v8891 = vmax.f32 %v8667, %v8779
        %v8892 = vmax.f32 %v8668, %v8780
        %v8893 = vmax.f32 %v8669, %v8781
        %v8894 = vmax.f32 %v8670, %v8782
        %v8895 = vmax.f32 %v8671, %v8783
        %v8896 = vmax.f32 %v8672, %v8784
        %v8897 = vmax.f32 %v8673, %v8785
        %v8898 = vmax.f32 %v8674, %v8786
        %v8899 = vmax.f32 %v8675, %v8787
        %v8900 = vmax.f32 %v8676, %v8788
        %v8901 = vmax.f32 %v8677, %v8789
        %v8902 = vmax.f32 %v8678, %v8790
        %v8903 = vmax.f32 %v8679, %v8791
        %v8904 = vmax.f32 %v8680, %v8792
        %v8905 = vmax.f32 %v8681, %v8793
        %v8906 = vmax.f32 %v8682, %v8794
        %v8907 = vmax.f32 %v8683, %v8795
        %v8908 = vmax.f32 %v8684, %v8796
        %v8909 = vmax.f32 %v8685, %v8797
        %v8910 = vmax.f32 %v8686, %v8798
        %v8911 = vmax.f32 %v8687, %v8799
        %v8912 = vmax.f32 %v8688, %v8800
        %v8913 = vmax.f32 %v8689, %v8801
        %v8914 = vmax.f32 %v8690, %v8802
        %v8915 = vmax.f32 %v8691, %v8803
        %v8916 = vmax.f32 %v8692, %v8804
        %v8917 = vmax.f32 %v8693, %v8805
        %v8918 = vmax.f32 %v8694, %v8806
        %v8919 = vmax.f32 %v8695, %v8807
        %v8920 = vmax.f32 %v8696, %v8808
        %v8921 = vmax.f32 %v8697, %v8809
        %v8922 = vmax.f32 %v8698, %v8810
        %v8923 = vmax.f32 %v8699, %v8811
        %v8924 = vmax.f32 %v8700, %v8812
        %v8925 = vmax.f32 %v8701, %v8813
        %v8926 = vmax.f32 %v8702, %v8814
        %v8927 = vmax.f32 %v8703, %v8815
        %v8928 = vmax.f32 %v8704, %v8816
        %v8929 = vmax.f32 %v8705, %v8817
        %v8930 = vmax.f32 %v8706, %v8818
        %v8931 = vmax.f32 %v8707, %v8819
        %v8932 = vmax.f32 %v8708, %v8820
        %v8933 = vmax.f32 %v8709, %v8821
        %v8934 = vmax.f32 %v8710, %v8822
        %v8935 = vmax.f32 %v8711, %v8823
        %v8936 = vmax.f32 %v8712, %v8824
        %v8937 = vmax.f32 %v8713, %v8825
        %v8938 = vmax.f32 %v8714, %v8826
        %v8939 = vmax.f32 %v8715, %v8827
        %v8940 = vmax.f32 %v8716, %v8828
        %v8941 = vmax.f32 %v8717, %v8829
        %v8942 = vmax.f32 %v8718, %v8830
        %v8943 = vmax.f32 %v8719, %v8831
        %v8944 = vmax.f32 %v8720, %v8832
        %v8945 = vmax.f32 %v8721, %v8833
        %v8946 = vmax.f32 %v8722, %v8834
        %v8947 = vmax.f32 %v8723, %v8835
        %v8948 = vmax.f32 %v8724, %v8836
        %v8949 = vmax.f32 %v8725, %v8837
        %v8950 = vmax.f32 %v8726, %v8838
        %v8951 = vmax.f32 %v8727, %v8839
        %v8952 = vmax.f32 %v8728, %v8840
        %v8953 = vmax.f32 %v8729, %v8841
        %v8954 = vmax.f32 %v8730, %v8842
        %v8955 = vmax.f32 %v8731, %v8843
        %v8956 = vmax.f32 %v8732, %v8844
        %v8957 = vmax.f32 %v8733, %v8845
        %v8958 = vmax.f32 %v8734, %v8846
        %v8959 = vmax.f32 %v8735, %v8847
        %v8960 = vmax.f32 %v8736, %v8848
        %v8961 = vmax.f32 %v8737, %v8849
        %v8962 = vmax.f32 %v8738, %v8850
        %v8963 = vmax.f32 %v8851, %v8855
        %v8964 = vmax.f32 %v8852, %v8856
        %v8965 = vmax.f32 %v8853, %v8857
        %v8966 = vmax.f32 %v8854, %v8858
        %v8967 = vmax.f32 %v8859, %v8863
        %v8968 = vmax.f32 %v8860, %v8864
        %v8969 = vmax.f32 %v8861, %v8865
        %v8970 = vmax.f32 %v8862, %v8866
        %v8971 = vmax.f32 %v8867, %v8871
        %v8972 = vmax.f32 %v8868, %v8872
        %v8973 = vmax.f32 %v8869, %v8873
        %v8974 = vmax.f32 %v8870, %v8874
        %v8975 = vmax.f32 %v8875, %v8879
        %v8976 = vmax.f32 %v8876, %v8880
        %v8977 = vmax.f32 %v8877, %v8881
        %v8978 = vmax.f32 %v8878, %v8882
        %v8979 = vmax.f32 %v8883, %v8887
        %v8980 = vmax.f32 %v8884, %v8888
        %v8981 = vmax.f32 %v8885, %v8889
        %v8982 = vmax.f32 %v8886, %v8890
        %v8983 = vmax.f32 %v8891, %v8895
        %v8984 = vmax.f32 %v8892, %v8896
        %v8985 = vmax.f32 %v8893, %v8897
        %v8986 = vmax.f32 %v8894, %v8898
        %v8987 = vmax.f32 %v8899, %v8903
        %v8988 = vmax.f32 %v8900, %v8904
        %v8989 = vmax.f32 %v8901, %v8905
        %v8990 = vmax.f32 %v8902, %v8906
        %v8991 = vmax.f32 %v8907, %v8911
        %v8992 = vmax.f32 %v8908, %v8912
        %v8993 = vmax.f32 %v8909, %v8913
        %v8994 = vmax.f32 %v8910, %v8914
        %v8995 = vmax.f32 %v8915, %v8919
        %v8996 = vmax.f32 %v8916, %v8920
        %v8997 = vmax.f32 %v8917, %v8921
        %v8998 = vmax.f32 %v8918, %v8922
        %v8999 = vmax.f32 %v8923, %v8927
        %v9000 = vmax.f32 %v8924, %v8928
        %v9001 = vmax.f32 %v8925, %v8929
        %v9002 = vmax.f32 %v8926, %v8930
        %v9003 = vmax.f32 %v8931, %v8935
        %v9004 = vmax.f32 %v8932, %v8936
        %v9005 = vmax.f32 %v8933, %v8937
        %v9006 = vmax.f32 %v8934, %v8938
        %v9007 = vmax.f32 %v8939, %v8943
        %v9008 = vmax.f32 %v8940, %v8944
        %v9009 = vmax.f32 %v8941, %v8945
        %v9010 = vmax.f32 %v8942, %v8946
        %v9011 = vmax.f32 %v8947, %v8951
        %v9012 = vmax.f32 %v8948, %v8952
        %v9013 = vmax.f32 %v8949, %v8953
        %v9014 = vmax.f32 %v8950, %v8954
        %v9015 = vmax.f32 %v8955, %v8959
        %v9016 = vmax.f32 %v8956, %v8960
        %v9017 = vmax.f32 %v8957, %v8961
        %v9018 = vmax.f32 %v8958, %v8962
        %9019 = vst.msk [vmem:[%s202] sm:$0xff] %vm8513, %v8963
        %9020 = vst.msk [vmem:[%s202 + $0x8] sm:$0xff] %vm8513, %v8964
        %9021 = vst.msk [vmem:[%s202 + $0x10] sm:$0xff] %vm8513, %v8965
        %9022 = vst.msk [vmem:[%s202 + $0x18] sm:$0xff] %vm8513, %v8966
        %9023 = vst.msk [vmem:[%s202 + $0x20] sm:$0xff] %vm8513, %v8967
        %9024 = vst.msk [vmem:[%s202 + $0x28] sm:$0xff] %vm8513, %v8968
        %9025 = vst.msk [vmem:[%s202 + $0x30] sm:$0xff] %vm8513, %v8969
        %9026 = vst.msk [vmem:[%s202 + $0x38] sm:$0xff] %vm8513, %v8970
        %9027 = vst.msk [vmem:[%s202 + $0x40] sm:$0xff] %vm8513, %v8971
        %9028 = vst.msk [vmem:[%s202 + $0x48] sm:$0xff] %vm8513, %v8972
        %9029 = vst.msk [vmem:[%s202 + $0x50] sm:$0xff] %vm8513, %v8973
        %9030 = vst.msk [vmem:[%s202 + $0x58] sm:$0xff] %vm8513, %v8974
        %9031 = vst.msk [vmem:[%s202 + $0x60] sm:$0xff] %vm8513, %v8975
        %9032 = vst.msk [vmem:[%s202 + $0x68] sm:$0xff] %vm8513, %v8976
        %9033 = vst.msk [vmem:[%s202 + $0x70] sm:$0xff] %vm8513, %v8977
        %9034 = vst.msk [vmem:[%s202 + $0x78] sm:$0xff] %vm8513, %v8978
        %9035 = vst.msk [vmem:[%s202 + $0x80] sm:$0xff] %vm8513, %v8979
        %9036 = vst.msk [vmem:[%s202 + $0x88] sm:$0xff] %vm8513, %v8980
        %9037 = vst.msk [vmem:[%s202 + $0x90] sm:$0xff] %vm8513, %v8981
        %9038 = vst.msk [vmem:[%s202 + $0x98] sm:$0xff] %vm8513, %v8982
        %9039 = vst.msk [vmem:[%s202 + $0xa0] sm:$0xff] %vm8513, %v8983
        %9040 = vst.msk [vmem:[%s202 + $0xa8] sm:$0xff] %vm8513, %v8984
        %9041 = vst.msk [vmem:[%s202 + $0xb0] sm:$0xff] %vm8513, %v8985
        %9042 = vst.msk [vmem:[%s202 + $0xb8] sm:$0xff] %vm8513, %v8986
        %9043 = vst.msk [vmem:[%s202 + $0xc0] sm:$0xff] %vm8513, %v8987
        %9044 = vst.msk [vmem:[%s202 + $0xc8] sm:$0xff] %vm8513, %v8988
        %9045 = vst.msk [vmem:[%s202 + $0xd0] sm:$0xff] %vm8513, %v8989
        %9046 = vst.msk [vmem:[%s202 + $0xd8] sm:$0xff] %vm8513, %v8990
        %9047 = vst.msk [vmem:[%s202 + $0xe0] sm:$0xff] %vm8513, %v8991
        %9048 = vst.msk [vmem:[%s202 + $0xe8] sm:$0xff] %vm8513, %v8992
        %9049 = vst.msk [vmem:[%s202 + $0xf0] sm:$0xff] %vm8513, %v8993
        %9050 = vst.msk [vmem:[%s202 + $0xf8] sm:$0xff] %vm8513, %v8994
        %9051 = vst.msk [vmem:[%s202 + $0x100] sm:$0xff] %vm8513, %v8995
        %9052 = vst.msk [vmem:[%s202 + $0x108] sm:$0xff] %vm8513, %v8996
        %9053 = vst.msk [vmem:[%s202 + $0x110] sm:$0xff] %vm8513, %v8997
        %9054 = vst.msk [vmem:[%s202 + $0x118] sm:$0xff] %vm8513, %v8998
        %9055 = vst.msk [vmem:[%s202 + $0x120] sm:$0xff] %vm8513, %v8999
        %9056 = vst.msk [vmem:[%s202 + $0x128] sm:$0xff] %vm8513, %v9000
        %9057 = vst.msk [vmem:[%s202 + $0x130] sm:$0xff] %vm8513, %v9001
        %9058 = vst.msk [vmem:[%s202 + $0x138] sm:$0xff] %vm8513, %v9002
        %9059 = vst.msk [vmem:[%s202 + $0x140] sm:$0xff] %vm8513, %v9003
        %9060 = vst.msk [vmem:[%s202 + $0x148] sm:$0xff] %vm8513, %v9004
        %9061 = vst.msk [vmem:[%s202 + $0x150] sm:$0xff] %vm8513, %v9005
        %9062 = vst.msk [vmem:[%s202 + $0x158] sm:$0xff] %vm8513, %v9006
        %9063 = vst.msk [vmem:[%s202 + $0x160] sm:$0xff] %vm8513, %v9007
        %9064 = vst.msk [vmem:[%s202 + $0x168] sm:$0xff] %vm8513, %v9008
        %9065 = vst.msk [vmem:[%s202 + $0x170] sm:$0xff] %vm8513, %v9009
        %9066 = vst.msk [vmem:[%s202 + $0x178] sm:$0xff] %vm8513, %v9010
        %9067 = vst.msk [vmem:[%s202 + $0x180] sm:$0xff] %vm8513, %v9011
        %9068 = vst.msk [vmem:[%s202 + $0x188] sm:$0xff] %vm8513, %v9012
        %9069 = vst.msk [vmem:[%s202 + $0x190] sm:$0xff] %vm8513, %v9013
        %9070 = vst.msk [vmem:[%s202 + $0x198] sm:$0xff] %vm8513, %v9014
        %9071 = vst.msk [vmem:[%s202 + $0x1a0] sm:$0xff] %vm8513, %v9015
        %9072 = vst.msk [vmem:[%s202 + $0x1a8] sm:$0xff] %vm8513, %v9016
        %9073 = vst.msk [vmem:[%s202 + $0x1b0] sm:$0xff] %vm8513, %v9017
        %9074 = vst.msk [vmem:[%s202 + $0x1b8] sm:$0xff] %vm8513, %v9018
        %p9075 = scmp.lt.s32.totalorder %s16, 1
        %s9076 = scalar_select %p9075, %s16, 1
        %s9077 = smul.addr %s9076, 56
        %s9078 = smul.addr %s9077, 8
        %s9079 = scalar_lea.vmem %s3, %s9078
        // Predicated region
        $region41: #{simple_cnn_forward.3} parent=31 // pred_check
          %p9080 = pneg %p102
        $region42: #{simple_cnn_forward.3} parent=31 // pred_check_branch
          %9082 = sbr.rel (%p9080) target = $region44
        $region43: #{simple_cnn_forward.3} parent=31 // pred_region
          _
        $region44: #{simple_cnn_forward.3} parent=31 // pred_fallthru
          _
      $region32: #{simple_cnn_forward.3} parent=5 // pred_fallthru
        _
      %p9083 = scmp.le.s32.totalorder 2, %s11
      // Predicated region
      $region45: #{simple_cnn_forward.3} parent=5 // pred_check
        %p9084 = pneg %p9083
      $region46: #{simple_cnn_forward.3} parent=5 // pred_check_branch
        %9086 = sbr.rel (%p9084) target = $region48
      $region47: #{simple_cnn_forward.3} parent=5 // pred_region
        %s9087 = ssub.s32 %s11, 2
        // Predicated region
        $region49: #{simple_cnn_forward.3} parent=47 // pred_check
          %p9088 = pneg %p108
        $region50: #{simple_cnn_forward.3} parent=47 // pred_check_branch
          %9090 = sbr.rel (%p9088) target = $region52
        $region51: #{simple_cnn_forward.3} parent=47 // pred_region
          %p9091 = scmp.lt.s32.totalorder %s17, 1
          %s9092 = scalar_select %p9091, %s17, 1
          %s9093 = smul.addr %s9092, 56
          %s9094 = smul.addr %s9093, 8
          %s9095 = scalar_lea.vmem %s3, %s9094
        $region52: #{simple_cnn_forward.3} parent=47 // pred_fallthru
          _
      $region48: #{simple_cnn_forward.3} parent=5 // pred_fallthru
        _
    $region6: #{simple_cnn_forward.3} parent=1 // loop_footer
      %s15 = sadd.s32 1, %s11
    $region7: #{simple_cnn_forward.3} parent=1 // loop_footer_branch
      %10 = sbr.rel target = $region3
    $region8: #{simple_cnn_forward.3} parent=1 // loop_exit
      _
    %9096 = vsyncpa [#allocation4], 1
    %s9097 = scalar_lea.sflag [#allocation4], 1
    %9098 = vsyncpa %s9097, 1
    %9099 = vsyncpa [#allocation6], 1

</llo_original>
